<compile_context>
chip_gen: v6e
topology: v6e:2x2x1
jax: 0.10.0
libtpu: 0.0.40
codegen_flags: <defaults>
</compile_context>

<pallas_src>
import numpy as np
import jax
import jax.numpy as jnp
from jax import lax
from jax.experimental import pallas as pl
from jax.experimental.pallas import tpu as pltpu


# ----------------------------------------------------------------------------------
# Host-side constant builders (numpy, run once in the wrapper).
# ----------------------------------------------------------------------------------
def _dft_constants(N, l, lc, n_chunks, dtype=jnp.float32):
    """Truncated real-DFT operators, chunk-major over the kept modes.

    Ft: (n_chunks, 2*lc, N)  -- per chunk rows [cos | -sin]  so  Ft[c] @ x = [Xr; Xi]
    Gt: (n_chunks, N, 2*lc)  -- per chunk cols [cf*cos/N | -cf*sin/N]
                                so  sum_c Gt[c] @ [Yr; Yi]_c = irfft(Y, n=N)
    Padded modes (index >= l) are zeroed and contribute nothing.
    """
    l_pad = lc * n_chunks
    f = np.arange(l_pad, dtype=np.float64)[:, None]
    n = np.arange(N, dtype=np.float64)[None, :]
    theta = 2.0 * np.pi * f * n / N                             # (l_pad, N)
    keep = (np.arange(l_pad) < l).astype(np.float64)[:, None]
    cos = np.cos(theta) * keep
    sin = np.sin(theta) * keep

    # One-sided Hermitian inverse weights: 1 for DC and Nyquist, 2 otherwise.
    cf = np.where(np.arange(l_pad) == 0, 1.0, 2.0)
    if N % 2 == 0 and l - 1 == N // 2:
        cf[l - 1] = 1.0
    cf = cf * keep[:, 0]

    Ft = np.concatenate([cos.reshape(n_chunks, lc, N),
                         (-sin).reshape(n_chunks, lc, N)], axis=1)        # (nc, 2lc, N)
    icos = (cf[:, None] * cos / N).reshape(n_chunks, lc, N)
    isin = (-cf[:, None] * sin / N).reshape(n_chunks, lc, N)
    Gt = np.concatenate([np.transpose(icos, (0, 2, 1)),
                         np.transpose(isin, (0, 2, 1))], axis=2)          # (nc, N, 2lc)
    return jnp.asarray(Ft, dtype), jnp.asarray(Gt, dtype)


def _pack_weights(wr, wi, l, l_pad, dtype=jnp.float32):
    """Mode-leading packed real operator for the complex channel mixing.

    Wbig[f] is (2CK, 2CK) with  [Xr | Xi] @ Wbig[f] = [Yr | Yi]
    (W indexed [i, o, f]:  Yr = Xr@Wr - Xi@Wi,  Yi = Xr@Wi + Xi@Wr).
    Padded modes are zero.
    """
    CK = wr.shape[0]
    Wr = jnp.zeros((l_pad, CK, CK), dtype).at[:l].set(
        jnp.transpose(wr[:, :, :l].astype(dtype), (2, 0, 1)))            # (l, i, o)
    Wi = jnp.zeros((l_pad, CK, CK), dtype).at[:l].set(
        jnp.transpose(wi[:, :, :l].astype(dtype), (2, 0, 1)))
    top = jnp.concatenate([Wr, Wi], axis=2)                              # (l_pad, CK, 2CK)
    bot = jnp.concatenate([-Wi, Wr], axis=2)
    return jnp.concatenate([top, bot], axis=1)                           # (l_pad, 2CK, 2CK)


# ----------------------------------------------------------------------------------
# Tiling choices against the device's real VMEM capacity.
# ----------------------------------------------------------------------------------
def _vmem_capacity_bytes():
    try:
        return int(pltpu.get_tpu_info().vmem_capacity_bytes)
    except Exception:
        return 64 << 20   # conservative fallback (v7x physical VMEM)


def _choose_tiling(B, N, CK, l):
    """Pick (Bt, lc, n_chunks).

    * Bt (rows of the dominant mixing matmul) as large as the budget allows, <= 32.
    * lc = l (no streaming) whenever packed W fits; otherwise stream W over a trailing
      "arbitrary" mode-chunk grid axis (output block accumulates the contributions).
    """
    cap = _vmem_capacity_bytes()
    budget = max(16 << 20, min(int(cap * 0.6), 48 << 20))

    per_mode_w = 4 * (2 * CK) * (2 * CK)
    if l * per_mode_w <= budget // 2:
        lc, n_chunks = l, 1
        w_bytes = l * per_mode_w
    else:
        lc = max(1, (budget // 2) // (2 * per_mode_w))      # double-buffered chunks
        if lc >= 8:
            lc = (lc // 8) * 8                              # sublane-friendly chunks
        lc = min(lc, l)
        n_chunks = -(-l // lc)
        w_bytes = 2 * lc * per_mode_w

    per_batch = 4 * (2 * 2 * N * CK         # x + out blocks, double-buffered
                     + 8 * lc * CK          # X / Xm / Ym / Y slabs
                     + N * CK)              # partial inverse-DFT result
    remaining = max(budget - w_bytes - 4 * 4 * lc * N, 4 << 20)
    cap_bt = max(1, min(B, remaining // per_batch, 32))

    valid = [d for d in range(1, B + 1)
             if B % d == 0 and (d == B or (d * CK) % 128 == 0)]
    fitting = [d for d in valid if d <= cap_bt]
    bt = max(fitting) if fitting else min(valid)
    return bt, lc, n_chunks


# ----------------------------------------------------------------------------------
# Kernel
# ----------------------------------------------------------------------------------
def _make_kernel(Bt, lc, CK, n_chunks):
    def kernel(x_ref, ft_ref, gt_ref, w_ref, o_ref):
        # x_ref: (N, Bt*CK)  ft_ref: (1, 2lc, N)  gt_ref: (1, N, 2lc)
        # w_ref: (lc, 2CK, 2CK)  o_ref: (N, Bt*CK)
        x = x_ref[...]
        ft = ft_ref[0]
        gt = gt_ref[0]

        # Forward truncated rDFT for the whole batch tile: ONE wide MXU matmul.
        X = jnp.dot(ft, x, preferred_element_type=jnp.float32)            # (2lc, Bt*CK)

        # Single slab relayout into the mixing layout (lc, Bt, 2CK) = [Xr | Xi].
        Xr = X[:lc].reshape(lc, Bt, CK)
        Xi = X[lc:].reshape(lc, Bt, CK)
        Xm = jnp.concatenate([Xr, Xi], axis=2)                            # (lc, Bt, 2CK)

        # Complex per-mode channel mixing: ONE batched MXU matmul (batch dim = lc).
        Ym = lax.dot_general(Xm, w_ref[...],
                             dimension_numbers=(((2,), (1,)), ((0,), (0,))),
                             preferred_element_type=jnp.float32)          # (lc, Bt, 2CK)

        # Back to slab form and ONE inverse-DFT matmul; single lane-dense store.
        Y = jnp.concatenate([Ym[:, :, :CK].reshape(lc, Bt * CK),
                             Ym[:, :, CK:].reshape(lc, Bt * CK)], axis=0)  # (2lc, Bt*CK)
        part = jnp.dot(gt, Y, preferred_element_type=jnp.float32)          # (N, Bt*CK)

        if n_chunks == 1:
            o_ref[...] = part.astype(o_ref.dtype)
        else:
            # W streamed over the trailing "arbitrary" mode-chunk axis: the output
            # block index is constant along it, so it stays resident and accumulates.
            m = pl.program_id(1)

            @pl.when(m == 0)
            def _():
                o_ref[...] = part.astype(o_ref.dtype)

            @pl.when(m != 0)
            def _():
                o_ref[...] = o_ref[...] + part.astype(o_ref.dtype)

    return kernel


# ----------------------------------------------------------------------------------
# Wrapper
# ----------------------------------------------------------------------------------
def sparse_kernel_ft1d(x, wr, wi, modes1, *, bt=None, lc=None):
    """x: (B, N, c, k) float32.  wr, wi: (c*k, c*k, modes1) float32 (real/imag of W)."""
    B, N, c, k = x.shape
    CK = c * k
    l = min(modes1, N // 2 + 1)

    bt_auto, lc_auto, _ = _choose_tiling(B, N, CK, l)
    Bt = bt if bt is not None else bt_auto
    lc_ = lc if lc is not None else lc_auto
    n_chunks = -(-l // lc_)
    l_pad = lc_ * n_chunks
    if B % Bt != 0:
        raise ValueError(f"batch tile {Bt} must divide B={B}")
    if Bt != B and (Bt * CK) % 128 != 0:
        raise ValueError("Bt*CK must be a multiple of 128 unless Bt == B")

    # One XLA transpose so every kernel matmul / store sees a lane-dense (N, Bt*CK) slab.
    x_t = jnp.transpose(x.reshape(B, N, CK), (1, 0, 2)).reshape(N, B * CK)
    x_t = x_t.astype(jnp.float32)

    Ft, Gt = _dft_constants(N, l, lc_, n_chunks)       # (nc, 2lc, N), (nc, N, 2lc)
    Wbig = _pack_weights(wr, wi, l, l_pad)             # (l_pad, 2CK, 2CK)

    # Only raise the scoped-VMEM limit when needed, clamped to the device's real
    # capacity (64 MiB physical on v7x -- never request more than exists).
    vmem_cap = _vmem_capacity_bytes()
    w_buf = (2 if n_chunks > 1 else 1) * lc_ * 4 * (2 * CK) * (2 * CK)
    est = (w_buf + 4 * 4 * lc_ * N
           + 4 * (4 * N * Bt * CK + 8 * lc_ * Bt * CK + N * Bt * CK))
    cp_kwargs = dict(dimension_semantics=("parallel", "arbitrary"))
    if est > 30 * 1024 * 1024:
        cp_kwargs["vmem_limit_bytes"] = int(min(est + (8 << 20), vmem_cap - (4 << 20)))

    kernel = _make_kernel(Bt, lc_, CK, n_chunks)
    out_shape = jax.ShapeDtypeStruct((N, B * CK), jnp.float32)

    def _call(single_buffer_consts):
        # Grid-invariant operands (no mode streaming) do not need double buffers.
        const_pm = ({"pipeline_mode": pl.Buffered(1)}
                    if (single_buffer_consts and n_chunks == 1) else {})
        in_specs = [
            pl.BlockSpec((N, Bt * CK), lambda g, m: (0, g)),                     # x slab
            pl.BlockSpec((1, 2 * lc_, N), lambda g, m: (m, 0, 0), **const_pm),   # Ft
            pl.BlockSpec((1, N, 2 * lc_), lambda g, m: (m, 0, 0), **const_pm),   # Gt
            pl.BlockSpec((lc_, 2 * CK, 2 * CK), lambda g, m: (m, 0, 0), **const_pm),  # W
        ]
        return pl.pallas_call(
            kernel,
            out_shape=out_shape,
            grid_spec=pltpu.PrefetchScalarGridSpec(
                num_scalar_prefetch=0,
                grid=(B // Bt, n_chunks),
                in_specs=in_specs,
                out_specs=pl.BlockSpec((N, Bt * CK), lambda g, m: (0, g)),
            ),
            compiler_params=pltpu.CompilerParams(**cp_kwargs),
        )(x_t, Ft, Gt, Wbig)

    try:
        out_t = _call(True)
    except Exception:
        # pl.Buffered(1) rejected by this jax build -> fall back to default buffering.
        out_t = _call(False)

    return jnp.transpose(out_t.reshape(N, B, CK), (1, 0, 2)).reshape(B, N, c, k)


# ----------------------------------------------------------------------------------
# Plain-JAX reference (mirrors the torch forward), for validation.
# ----------------------------------------------------------------------------------
def _reference(x, wr, wi, modes1):
    B, N, c, k = x.shape
    CK = c * k
    l = min(modes1, N // 2 + 1)
    xt = jnp.transpose(x.reshape(B, N, CK), (0, 2, 1))
    X = jnp.fft.rfft(xt, axis=-1)
    W = (wr + 1j * wi)[:, :, :l]
    Y = jnp.einsum('bix,iox->box', X[:, :, :l], W)
    out_ft = jnp.zeros((B, CK, N // 2 + 1), dtype=jnp.complex64).at[:, :, :l].set(Y)
    xo = jnp.fft.irfft(out_ft, n=N, axis=-1)
    return jnp.transpose(xo, (0, 2, 1)).reshape(B, N, c, k)


if __name__ == "__main__":
    # Small shapes consistent with the module: CK = c*k = 128 keeps every load/store
    # lane-dense; l = modes1 = 16 modes are kept out of N//2+1 = 17.
    k_dim = 8
    c_dim = 16
    alpha = 16            # modes1
    B, N = 4, 32
    CK = c_dim * k_dim
    scale = 1.0 / (CK * CK)

    key = jax.random.PRNGKey(0)
    kx, kwr, kwi = jax.random.split(key, 3)

    # torch.rand(..., dtype=cfloat) draws real & imag ~ U[0, 1)
    wr = scale * jax.random.uniform(kwr, (CK, CK, alpha), dtype=jnp.float32)
    wi = scale * jax.random.uniform(kwi, (CK, CK, alpha), dtype=jnp.float32)
    x = jax.random.normal(kx, (B, N, c_dim, k_dim), dtype=jnp.float32)

    ref = jax.block_until_ready(_reference(x, wr, wi, alpha))

    # Default (fused, single-chunk) path.
    out = jax.block_until_ready(sparse_kernel_ft1d(x, wr, wi, alpha))
    np.testing.assert_allclose(np.asarray(out), np.asarray(ref), rtol=5e-3, atol=1e-5)

    # Exercise the W-streaming path (mode-chunk grid axis + resident-output accumulate),
    # multi-batch-tile grid, and mode padding: Bt=2, lc=6 -> grid (2, 3), l_pad=18.
    out2 = jax.block_until_ready(sparse_kernel_ft1d(x, wr, wi, alpha, bt=2, lc=6))
    np.testing.assert_allclose(np.asarray(out2), np.asarray(ref), rtol=5e-3, atol=1e-5)

    print("KERNEL_OK")
</pallas_src>

<mosaic_0001>
module attributes {stable_mosaic.version = 11 : i64} {
  func.func @kernel(%arg0: i32, %arg1: i32, %arg2: memref<32x512xf32, #tpu.memory_space<vmem>>, %arg3: memref<1x32x32xf32, #tpu.memory_space<vmem>>, %arg4: memref<1x32x32xf32, #tpu.memory_space<vmem>>, %arg5: memref<16x256x256xf32, #tpu.memory_space<vmem>>, %arg6: memref<32x512xf32, #tpu.memory_space<vmem>>) attributes {dimension_semantics = [#tpu.dimension_semantics<parallel>, #tpu.dimension_semantics<arbitrary>], iteration_bounds = array<i64: 1, 1>, scalar_prefetch = 0 : i64, scratch_operands = 0 : i64, tpu.core_type = #tpu.core_type<tc>, window_params = [{transform_indices = @transform_0, window_bounds = array<i64: 32, 512>}, {pipeline_mode = #tpu.pipeline_mode<synchronous>, transform_indices = @transform_1, window_bounds = array<i64: 1, 32, 32>}, {pipeline_mode = #tpu.pipeline_mode<synchronous>, transform_indices = @transform_2, window_bounds = array<i64: 1, 32, 32>}, {pipeline_mode = #tpu.pipeline_mode<synchronous>, transform_indices = @transform_3, window_bounds = array<i64: 16, 256, 256>}, {transform_indices = @transform_4, window_bounds = array<i64: 32, 512>}]} {
    %c0 = arith.constant 0 : index
    %c0_0 = arith.constant 0 : index
    %0 = vector.load %arg2[%c0, %c0_0] : memref<32x512xf32, #tpu.memory_space<vmem>>, vector<32x512xf32>
    %c0_1 = arith.constant 0 : index
    %c0_2 = arith.constant 0 : index
    %c0_3 = arith.constant 0 : index
    %1 = vector.load %arg3[%c0_1, %c0_2, %c0_3] : memref<1x32x32xf32, #tpu.memory_space<vmem>>, vector<1x32x32xf32>
    %2 = vector.shape_cast %1 : vector<1x32x32xf32> to vector<32x32xf32>
    %c0_4 = arith.constant 0 : index
    %c0_5 = arith.constant 0 : index
    %c0_6 = arith.constant 0 : index
    %3 = vector.load %arg4[%c0_4, %c0_5, %c0_6] : memref<1x32x32xf32, #tpu.memory_space<vmem>>, vector<1x32x32xf32>
    %4 = vector.shape_cast %3 : vector<1x32x32xf32> to vector<32x32xf32>
    %cst = arith.constant dense<0.000000e+00> : vector<32x512xf32>
    %5 = tpu.matmul %2, %0, %cst {dimension_numbers = #tpu.dot_dimension_numbers<[1], [0], [0], [1], [0, 0, 1, 1], [], []>} : vector<32x32xf32>, vector<32x512xf32>, vector<32x512xf32> -> vector<32x512xf32>
    %6 = vector.extract_strided_slice %5 {offsets = [0, 0], sizes = [16, 512], strides = [1, 1]} : vector<32x512xf32> to vector<16x512xf32>
    %7 = vector.shape_cast %6 : vector<16x512xf32> to vector<16x4x128xf32>
    %8 = vector.extract_strided_slice %5 {offsets = [16, 0], sizes = [16, 512], strides = [1, 1]} : vector<32x512xf32> to vector<16x512xf32>
    %9 = vector.shape_cast %8 : vector<16x512xf32> to vector<16x4x128xf32>
    %10 = tpu.concatenate %7, %9 in 2 : vector<16x4x128xf32>, vector<16x4x128xf32> -> vector<16x4x256xf32>
    %c0_7 = arith.constant 0 : index
    %c0_8 = arith.constant 0 : index
    %c0_9 = arith.constant 0 : index
    %11 = vector.load %arg5[%c0_7, %c0_8, %c0_9] : memref<16x256x256xf32, #tpu.memory_space<vmem>>, vector<16x256x256xf32>
    %cst_10 = arith.constant dense<0.000000e+00> : vector<16x4x256xf32>
    %12 = tpu.matmul %10, %11, %cst_10 {dimension_numbers = #tpu.dot_dimension_numbers<[2], [1], [1], [2], [0, 0, 0, 1, 1, 2], [0], [0]>} : vector<16x4x256xf32>, vector<16x256x256xf32>, vector<16x4x256xf32> -> vector<16x4x256xf32>
    %13 = vector.extract_strided_slice %12 {offsets = [0, 0, 0], sizes = [16, 4, 128], strides = [1, 1, 1]} : vector<16x4x256xf32> to vector<16x4x128xf32>
    %14 = vector.shape_cast %13 : vector<16x4x128xf32> to vector<16x512xf32>
    %15 = vector.extract_strided_slice %12 {offsets = [0, 0, 128], sizes = [16, 4, 128], strides = [1, 1, 1]} : vector<16x4x256xf32> to vector<16x4x128xf32>
    %16 = vector.shape_cast %15 : vector<16x4x128xf32> to vector<16x512xf32>
    %17 = tpu.concatenate %14, %16 in 0 : vector<16x512xf32>, vector<16x512xf32> -> vector<32x512xf32>
    %cst_11 = arith.constant dense<0.000000e+00> : vector<32x512xf32>
    %18 = tpu.matmul %4, %17, %cst_11 {dimension_numbers = #tpu.dot_dimension_numbers<[1], [0], [0], [1], [0, 0, 1, 1], [], []>} : vector<32x32xf32>, vector<32x512xf32>, vector<32x512xf32> -> vector<32x512xf32>
    %c0_12 = arith.constant 0 : index
    %c0_13 = arith.constant 0 : index
    %19 = vector.load %arg6[%c0_12, %c0_13] : memref<32x512xf32, #tpu.memory_space<vmem>>, vector<32x512xf32>
    tpu.vector_store %arg6[%c0_12, %c0_13], %18 {strides = array<i32>} : memref<32x512xf32, #tpu.memory_space<vmem>>, vector<32x512xf32>,
    return
  }
  func.func @transform_0(%arg0: i32, %arg1: i32) -> (i32, i32) {
    %c0_i32 = arith.constant 0 : i32
    %c0_i32_0 = arith.constant 0 : i32
    return %c0_i32, %arg0 : i32, i32
  }
  func.func @transform_1(%arg0: i32, %arg1: i32) -> (i32, i32, i32) {
    %c0_i32 = arith.constant 0 : i32
    %c0_i32_0 = arith.constant 0 : i32
    %c0_i32_1 = arith.constant 0 : i32
    return %arg1, %c0_i32, %c0_i32_0 : i32, i32, i32
  }
  func.func @transform_2(%arg0: i32, %arg1: i32) -> (i32, i32, i32) {
    %c0_i32 = arith.constant 0 : i32
    %c0_i32_0 = arith.constant 0 : i32
    %c0_i32_1 = arith.constant 0 : i32
    return %arg1, %c0_i32, %c0_i32_0 : i32, i32, i32
  }
  func.func @transform_3(%arg0: i32, %arg1: i32) -> (i32, i32, i32) {
    %c0_i32 = arith.constant 0 : i32
    %c0_i32_0 = arith.constant 0 : i32
    %c0_i32_1 = arith.constant 0 : i32
    return %arg1, %c0_i32, %c0_i32_0 : i32, i32, i32
  }
  func.func @transform_4(%arg0: i32, %arg1: i32) -> (i32, i32) {
    %c0_i32 = arith.constant 0 : i32
    %c0_i32_0 = arith.constant 0 : i32
    return %c0_i32, %arg0 : i32, i32
  }
}

module attributes {stable_mosaic.version = 11 : i64} {
  func.func @kernel(%arg0: i32, %arg1: i32, %arg2: memref<32x512xf32, #tpu.memory_space<vmem>>, %arg3: memref<1x32x32xf32, #tpu.memory_space<vmem>>, %arg4: memref<1x32x32xf32, #tpu.memory_space<vmem>>, %arg5: memref<16x256x256xf32, #tpu.memory_space<vmem>>, %arg6: memref<32x512xf32, #tpu.memory_space<vmem>>) attributes {dimension_semantics = [#tpu.dimension_semantics<parallel>, #tpu.dimension_semantics<arbitrary>], iteration_bounds = array<i64: 1, 1>, scalar_prefetch = 0 : i64, scratch_operands = 0 : i64, tpu.core_type = #tpu.core_type<tc>, window_params = [{transform_indices = @transform_0, window_bounds = array<i64: 32, 512>}, {transform_indices = @transform_1, window_bounds = array<i64: 1, 32, 32>}, {transform_indices = @transform_2, window_bounds = array<i64: 1, 32, 32>}, {transform_indices = @transform_3, window_bounds = array<i64: 16, 256, 256>}, {transform_indices = @transform_4, window_bounds = array<i64: 32, 512>}]} {
    %c0 = arith.constant 0 : index
    %c0_0 = arith.constant 0 : index
    %0 = vector.load %arg2[%c0, %c0_0] : memref<32x512xf32, #tpu.memory_space<vmem>>, vector<32x512xf32>
    %c0_1 = arith.constant 0 : index
    %c0_2 = arith.constant 0 : index
    %c0_3 = arith.constant 0 : index
    %1 = vector.load %arg3[%c0_1, %c0_2, %c0_3] : memref<1x32x32xf32, #tpu.memory_space<vmem>>, vector<1x32x32xf32>
    %2 = vector.shape_cast %1 : vector<1x32x32xf32> to vector<32x32xf32>
    %c0_4 = arith.constant 0 : index
    %c0_5 = arith.constant 0 : index
    %c0_6 = arith.constant 0 : index
    %3 = vector.load %arg4[%c0_4, %c0_5, %c0_6] : memref<1x32x32xf32, #tpu.memory_space<vmem>>, vector<1x32x32xf32>
    %4 = vector.shape_cast %3 : vector<1x32x32xf32> to vector<32x32xf32>
    %cst = arith.constant dense<0.000000e+00> : vector<32x512xf32>
    %5 = tpu.matmul %2, %0, %cst {dimension_numbers = #tpu.dot_dimension_numbers<[1], [0], [0], [1], [0, 0, 1, 1], [], []>} : vector<32x32xf32>, vector<32x512xf32>, vector<32x512xf32> -> vector<32x512xf32>
    %6 = vector.extract_strided_slice %5 {offsets = [0, 0], sizes = [16, 512], strides = [1, 1]} : vector<32x512xf32> to vector<16x512xf32>
    %7 = vector.shape_cast %6 : vector<16x512xf32> to vector<16x4x128xf32>
    %8 = vector.extract_strided_slice %5 {offsets = [16, 0], sizes = [16, 512], strides = [1, 1]} : vector<32x512xf32> to vector<16x512xf32>
    %9 = vector.shape_cast %8 : vector<16x512xf32> to vector<16x4x128xf32>
    %10 = tpu.concatenate %7, %9 in 2 : vector<16x4x128xf32>, vector<16x4x128xf32> -> vector<16x4x256xf32>
    %c0_7 = arith.constant 0 : index
    %c0_8 = arith.constant 0 : index
    %c0_9 = arith.constant 0 : index
    %11 = vector.load %arg5[%c0_7, %c0_8, %c0_9] : memref<16x256x256xf32, #tpu.memory_space<vmem>>, vector<16x256x256xf32>
    %cst_10 = arith.constant dense<0.000000e+00> : vector<16x4x256xf32>
    %12 = tpu.matmul %10, %11, %cst_10 {dimension_numbers = #tpu.dot_dimension_numbers<[2], [1], [1], [2], [0, 0, 0, 1, 1, 2], [0], [0]>} : vector<16x4x256xf32>, vector<16x256x256xf32>, vector<16x4x256xf32> -> vector<16x4x256xf32>
    %13 = vector.extract_strided_slice %12 {offsets = [0, 0, 0], sizes = [16, 4, 128], strides = [1, 1, 1]} : vector<16x4x256xf32> to vector<16x4x128xf32>
    %14 = vector.shape_cast %13 : vector<16x4x128xf32> to vector<16x512xf32>
    %15 = vector.extract_strided_slice %12 {offsets = [0, 0, 128], sizes = [16, 4, 128], strides = [1, 1, 1]} : vector<16x4x256xf32> to vector<16x4x128xf32>
    %16 = vector.shape_cast %15 : vector<16x4x128xf32> to vector<16x512xf32>
    %17 = tpu.concatenate %14, %16 in 0 : vector<16x512xf32>, vector<16x512xf32> -> vector<32x512xf32>
    %cst_11 = arith.constant dense<0.000000e+00> : vector<32x512xf32>
    %18 = tpu.matmul %4, %17, %cst_11 {dimension_numbers = #tpu.dot_dimension_numbers<[1], [0], [0], [1], [0, 0, 1, 1], [], []>} : vector<32x32xf32>, vector<32x512xf32>, vector<32x512xf32> -> vector<32x512xf32>
    %c0_12 = arith.constant 0 : index
    %c0_13 = arith.constant 0 : index
    %19 = vector.load %arg6[%c0_12, %c0_13] : memref<32x512xf32, #tpu.memory_space<vmem>>, vector<32x512xf32>
    tpu.vector_store %arg6[%c0_12, %c0_13], %18 {strides = array<i32>} : memref<32x512xf32, #tpu.memory_space<vmem>>, vector<32x512xf32>,
    return
  }
  func.func @transform_0(%arg0: i32, %arg1: i32) -> (i32, i32) {
    %c0_i32 = arith.constant 0 : i32
    %c0_i32_0 = arith.constant 0 : i32
    return %c0_i32, %arg0 : i32, i32
  }
  func.func @transform_1(%arg0: i32, %arg1: i32) -> (i32, i32, i32) {
    %c0_i32 = arith.constant 0 : i32
    %c0_i32_0 = arith.constant 0 : i32
    %c0_i32_1 = arith.constant 0 : i32
    return %arg1, %c0_i32, %c0_i32_0 : i32, i32, i32
  }
  func.func @transform_2(%arg0: i32, %arg1: i32) -> (i32, i32, i32) {
    %c0_i32 = arith.constant 0 : i32
    %c0_i32_0 = arith.constant 0 : i32
    %c0_i32_1 = arith.constant 0 : i32
    return %arg1, %c0_i32, %c0_i32_0 : i32, i32, i32
  }
  func.func @transform_3(%arg0: i32, %arg1: i32) -> (i32, i32, i32) {
    %c0_i32 = arith.constant 0 : i32
    %c0_i32_0 = arith.constant 0 : i32
    %c0_i32_1 = arith.constant 0 : i32
    return %arg1, %c0_i32, %c0_i32_0 : i32, i32, i32
  }
  func.func @transform_4(%arg0: i32, %arg1: i32) -> (i32, i32) {
    %c0_i32 = arith.constant 0 : i32
    %c0_i32_0 = arith.constant 0 : i32
    return %c0_i32, %arg0 : i32, i32
  }
}

</mosaic_0001>

<llo_original>
// kernel: tpu_custom_call.1
$region0: #{tpu_custom_call.1}
  #allocation0 [shape = 'u32[]', space=smem, size = 0x4, offset = 0x4, fixed_abs, tag = 'smem constant byte address 0x4 - core index']
  #allocation1 [shape = 'u32[144,128]{1,0:T(1,128)}', space=vmem, size = 0x12000, scoped, tag = 'internal scratch']
  %s0 = inlined_call_operand.hbm [shape: f32[32,512], index: 0, kind: input, shape index: {}]
  %s1 = inlined_call_operand.hbm [shape: f32[1,32,32], index: 1, kind: input, shape index: {}]
  %s2 = inlined_call_operand.hbm [shape: f32[1,32,32], index: 2, kind: input, shape index: {}]
  %s3 = inlined_call_operand.hbm [shape: f32[16,256,256], index: 3, kind: input, shape index: {}]
  %s4 = inlined_call_operand.hbm [shape: f32[32,512], index: 4, kind: output, shape index: {}]
  %s5 = sld [smem:[#allocation0]]
  $region42: #{tpu_custom_call.1} parent=0
    _
  %s7 = ssub.s32 1, %s5
  %s8 = scalar_select 0, %s7, %s5
  $region1: #{tpu_custom_call.1} parent=0
    #allocation2 [shape = 'u8[65536]{0}', space=vmem, size = 0x10000, scoped, tag = 'input window, operand 0, single buffered']
    #allocation3 [shape = 's32[1]{0}', space=sflag, size = 0x4, scoped, tag = 'scoped memory for tpu_custom_call.1']
    #allocation4 [shape = 's32[1]{0}', space=sflag, size = 0x4, scoped, tag = 'scoped memory for tpu_custom_call.1']
    #allocation5 [shape = 'u8[16384]{0}', space=vmem, size = 0x4000, scoped, tag = 'input window, operand 1, single buffered']
    #allocation6 [shape = 's32[1]{0}', space=sflag, size = 0x4, scoped, tag = 'scoped memory for tpu_custom_call.1']
    #allocation7 [shape = 'u8[16384]{0}', space=vmem, size = 0x4000, scoped, tag = 'input window, operand 2, single buffered']
    #allocation8 [shape = 'u8[4194304]{0}', space=vmem, size = 0x400000, scoped, tag = 'input window, operand 3, single buffered']
    #allocation9 [shape = 's32[1]{0}', space=sflag, size = 0x4, scoped, tag = 'scoped memory for tpu_custom_call.1']
    #allocation10 [shape = 'u8[65536]{0}', space=vmem, size = 0x10000, scoped, tag = 'output window, operand 0, single buffered']
    %9 = vsyncpa [#allocation3], 0
    %10 = vsyncpa [#allocation6], 0
    %11 = vsyncpa [#allocation9], 0
    %12 = vsyncpa [#allocation4], 0
    // Predicated region
    $region2: #{tpu_custom_call.1} parent=1 // pred_check
      _
    $region3: #{tpu_custom_call.1} parent=1 // pred_check_branch
      %14 = sbr.rel (0) target = $region5
    $region4: #{tpu_custom_call.1} parent=1 // pred_region
      %s16 = ssub.s32 2048, 2048
      %17 = vsyncadd [#allocation3], %s16
      %s18 = sshll.u32 [#allocation2], 4
      %s19 = int_to_ptr.vmem [resolvable:$true] %s18
      %24 = dma.hbm_to_vmem [thread:$0]  %s0, 2048, %s19, [#allocation3], 512, 512, 32
    $region5: #{tpu_custom_call.1} parent=1 // pred_fallthru
      _
    // Predicated region
    $region6: #{tpu_custom_call.1} parent=1 // pred_check
      _
    $region7: #{tpu_custom_call.1} parent=1 // pred_check_branch
      %26 = sbr.rel (0) target = $region9
    $region8: #{tpu_custom_call.1} parent=1 // pred_region
      %s28 = ssub.s32 512, 512
      %29 = vsyncadd [#allocation6], %s28
      %s30 = sshll.u32 [#allocation5], 4
      %s31 = int_to_ptr.vmem [resolvable:$true] %s30
      %36 = dma.hbm_to_vmem [thread:$0]  %s1, 512, %s31, [#allocation6], 128, 128, 8
    $region9: #{tpu_custom_call.1} parent=1 // pred_fallthru
      _
    // Predicated region
    $region10: #{tpu_custom_call.1} parent=1 // pred_check
      _
    $region11: #{tpu_custom_call.1} parent=1 // pred_check_branch
      %38 = sbr.rel (0) target = $region13
    $region12: #{tpu_custom_call.1} parent=1 // pred_region
      %s40 = ssub.s32 512, 512
      %41 = vsyncadd [#allocation6], %s40
      %s42 = sshll.u32 [#allocation7], 4
      %s43 = int_to_ptr.vmem [resolvable:$true] %s42
      %48 = dma.hbm_to_vmem [thread:$0]  %s2, 512, %s43, [#allocation6], 128, 128, 8
    $region13: #{tpu_custom_call.1} parent=1 // pred_fallthru
      _
    // Predicated region
    $region14: #{tpu_custom_call.1} parent=1 // pred_check
      _
    $region15: #{tpu_custom_call.1} parent=1 // pred_check_branch
      %50 = sbr.rel (0) target = $region17
    $region16: #{tpu_custom_call.1} parent=1 // pred_region
      %s52 = ssub.s32 131072, 131072
      %53 = vsyncadd [#allocation9], %s52
      %s54 = sshll.u32 [#allocation8], 4
      %s55 = int_to_ptr.vmem [resolvable:$true] %s54
      %60 = dma.hbm_to_vmem [thread:$0]  %s3, 131072, %s55, [#allocation9], 256, 256, 16
    $region17: #{tpu_custom_call.1} parent=1 // pred_fallthru
      _
    // Predicated region
    $region18: #{tpu_custom_call.1} parent=1 // pred_check
      _
    $region19: #{tpu_custom_call.1} parent=1 // pred_check_branch
      %62 = sbr.rel (0) target = $region21
    $region20: #{tpu_custom_call.1} parent=1 // pred_region
      %63 = dma.done [#allocation3], 2048
    $region21: #{tpu_custom_call.1} parent=1 // pred_fallthru
      _
    // Predicated region
    $region22: #{tpu_custom_call.1} parent=1 // pred_check
      _
    $region23: #{tpu_custom_call.1} parent=1 // pred_check_branch
      %65 = sbr.rel (0) target = $region25
    $region24: #{tpu_custom_call.1} parent=1 // pred_region
      %66 = dma.done [#allocation6], 512
    $region25: #{tpu_custom_call.1} parent=1 // pred_fallthru
      _
    // Predicated region
    $region26: #{tpu_custom_call.1} parent=1 // pred_check
      _
    $region27: #{tpu_custom_call.1} parent=1 // pred_check_branch
      %68 = sbr.rel (0) target = $region29
    $region28: #{tpu_custom_call.1} parent=1 // pred_region
      %69 = dma.done [#allocation6], 512
    $region29: #{tpu_custom_call.1} parent=1 // pred_fallthru
      _
    // Predicated region
    $region30: #{tpu_custom_call.1} parent=1 // pred_check
      _
    $region31: #{tpu_custom_call.1} parent=1 // pred_check_branch
      %71 = sbr.rel (0) target = $region33
    $region32: #{tpu_custom_call.1} parent=1 // pred_region
      %72 = dma.done [#allocation9], 131072
    $region33: #{tpu_custom_call.1} parent=1 // pred_fallthru
      _
    %v73 = vld [vmem:[#allocation2] sm:$0xff]
    %v74 = vld [vmem:[#allocation2 + $0x8] sm:$0xff]
    %v75 = vld [vmem:[#allocation2 + $0x10] sm:$0xff]
    %v76 = vld [vmem:[#allocation2 + $0x18] sm:$0xff]
    %v77 = vld [vmem:[#allocation2 + $0x20] sm:$0xff]
    %v78 = vld [vmem:[#allocation2 + $0x28] sm:$0xff]
    %v79 = vld [vmem:[#allocation2 + $0x30] sm:$0xff]
    %v80 = vld [vmem:[#allocation2 + $0x38] sm:$0xff]
    %v81 = vld [vmem:[#allocation2 + $0x40] sm:$0xff]
    %v82 = vld [vmem:[#allocation2 + $0x48] sm:$0xff]
    %v83 = vld [vmem:[#allocation2 + $0x50] sm:$0xff]
    %v84 = vld [vmem:[#allocation2 + $0x58] sm:$0xff]
    %v85 = vld [vmem:[#allocation2 + $0x60] sm:$0xff]
    %v86 = vld [vmem:[#allocation2 + $0x68] sm:$0xff]
    %v87 = vld [vmem:[#allocation2 + $0x70] sm:$0xff]
    %v88 = vld [vmem:[#allocation2 + $0x78] sm:$0xff]
    %v89 = vld [vmem:[#allocation5] sm:$0xff]
    %v90 = vld [vmem:[#allocation5 + $0x8] sm:$0xff]
    %v91 = vld [vmem:[#allocation5 + $0x10] sm:$0xff]
    %v92 = vld [vmem:[#allocation5 + $0x18] sm:$0xff]
    %v93 = vld [vmem:[#allocation7] sm:$0xff]
    %v94 = vld [vmem:[#allocation7 + $0x8] sm:$0xff]
    %v95 = vld [vmem:[#allocation7 + $0x10] sm:$0xff]
    %v96 = vld [vmem:[#allocation7 + $0x18] sm:$0xff]
    %vm97 = vcmask 261120
    %v99 = vsel %vm97, %v89, 0
    %v102 = vsel %vm97, %v90, 0
    %v105 = vsel %vm97, %v91, 0
    %v108 = vsel %vm97, %v92, 0
    %110 = vmatprep.subr.mxu0 0.0
    %111 = vmatpush1.msra.mxu0 0.0
    %112 = vmatprep.subr.mxu0 0.0
    %113 = vmatpush1.msra.mxu0 0.0
    %114 = vmatprep.subr.mxu0 0.0
    %115 = vmatpush1.msra.mxu0 0.0
    %116 = vmatprep.subr.mxu0 0.0
    %117 = vmatpush1.msra.mxu0 0.0
    %118 = vmatprep.subr.mxu0 0.0
    %119 = vmatpush1.msra.mxu0 0.0
    %120 = vmatprep.subr.mxu0 0.0
    %121 = vmatpush1.msra.mxu0 0.0
    %122 = vmatprep.subr.mxu0 0.0
    %123 = vmatpush1.msra.mxu0 0.0
    %124 = vmatprep.subr.mxu0 0.0
    %125 = vmatpush1.msra.mxu0 0.0
    %126 = vmatprep.subr.mxu0 0.0
    %127 = vmatpush1.msra.mxu0 0.0
    %128 = vmatprep.subr.mxu0 0.0
    %129 = vmatpush1.msra.mxu0 0.0
    %130 = vmatprep.subr.mxu0 0.0
    %131 = vmatpush1.msra.mxu0 0.0
    %132 = vmatprep.subr.mxu0 0.0
    %133 = vmatpush1.msra.mxu0 0.0
    %134 = vmatprep.subr.mxu0 %v86
    %135 = vmatpush1.msra.mxu0 %v85
    %136 = vmatprep.subr.mxu0 %v82
    %137 = vmatpush1.msra.mxu0 %v81
    %138 = vmatprep.subr.mxu0 %v78
    %139 = vmatpush1.msra.mxu0 %v77
    %140 = vmatprep.subr.mxu0 %v74
    %141 = vmatpush1.msra.mxu0 %v73
    %142 = vmatprep.subr.mxu0 0.0
    %143 = vmatpush2.msra.mxu0 0.0
    %144 = vmatprep.subr.mxu0 0.0
    %145 = vmatpush2.msra.mxu0 0.0
    %146 = vmatprep.subr.mxu0 0.0
    %147 = vmatpush2.msra.mxu0 0.0
    %148 = vmatprep.subr.mxu0 0.0
    %149 = vmatpush2.msra.mxu0 0.0
    %150 = vmatprep.subr.mxu0 0.0
    %151 = vmatpush2.msra.mxu0 0.0
    %152 = vmatprep.subr.mxu0 0.0
    %153 = vmatpush2.msra.mxu0 0.0
    %154 = vmatprep.subr.mxu0 0.0
    %155 = vmatpush2.msra.mxu0 0.0
    %156 = vmatprep.subr.mxu0 0.0
    %157 = vmatpush2.msra.mxu0 0.0
    %158 = vmatprep.subr.mxu0 0.0
    %159 = vmatpush2.msra.mxu0 0.0
    %160 = vmatprep.subr.mxu0 0.0
    %161 = vmatpush2.msra.mxu0 0.0
    %162 = vmatprep.subr.mxu0 0.0
    %163 = vmatpush2.msra.mxu0 0.0
    %164 = vmatprep.subr.mxu0 0.0
    %165 = vmatpush2.msra.mxu0 0.0
    %166 = vmatprep.subr.mxu0 0.0
    %167 = vmatpush2.msra.mxu0 0.0
    %168 = vmatprep.subr.mxu0 0.0
    %169 = vmatpush2.msra.mxu0 0.0
    %170 = vmatprep.subr.mxu0 0.0
    %171 = vmatpush2.msra.mxu0 0.0
    %172 = vmatprep.subr.mxu0 0.0
    %173 = vmatpush2.msra.mxu0 0.0
    %174 = vmatprep.mubr.f32.mxu0 0.0
    %175 = vmatmul.mubr.f32.gmra.mxu0 %v99
    %v176 = vpop.f32.mrf.mxu0
    %v177 = vadd.f32 0.0, %v176
    %v178 = vpop.f32.mrf.mxu0
    %v179 = vadd.f32 0.0, %v178
    %180 = vmatprep.mubr.f32.mxu0 0.0
    %181 = vmatmul.mubr.f32.gmra.mxu0 %v102
    %v182 = vpop.f32.mrf.mxu0
    %v183 = vadd.f32 0.0, %v182
    %v184 = vpop.f32.mrf.mxu0
    %v185 = vadd.f32 0.0, %v184
    %186 = vmatprep.mubr.f32.mxu0 0.0
    %187 = vmatmul.mubr.f32.gmra.mxu0 %v105
    %v188 = vpop.f32.mrf.mxu0
    %v189 = vadd.f32 0.0, %v188
    %v190 = vpop.f32.mrf.mxu0
    %v191 = vadd.f32 0.0, %v190
    %192 = vmatprep.mubr.f32.mxu0 0.0
    %193 = vmatmul.mubr.f32.gmra.mxu0 %v108
    %v194 = vpop.f32.mrf.mxu0
    %v195 = vadd.f32 0.0, %v194
    %v196 = vpop.f32.mrf.mxu0
    %v197 = vadd.f32 0.0, %v196
    %198 = vdwg.mxu0
    %199 = vmatprep.subr.mxu0 0.0
    %200 = vmatpush1.msra.mxu0 0.0
    %201 = vmatprep.subr.mxu0 0.0
    %202 = vmatpush1.msra.mxu0 0.0
    %203 = vmatprep.subr.mxu0 0.0
    %204 = vmatpush1.msra.mxu0 0.0
    %205 = vmatprep.subr.mxu0 0.0
    %206 = vmatpush1.msra.mxu0 0.0
    %207 = vmatprep.subr.mxu0 0.0
    %208 = vmatpush1.msra.mxu0 0.0
    %209 = vmatprep.subr.mxu0 0.0
    %210 = vmatpush1.msra.mxu0 0.0
    %211 = vmatprep.subr.mxu0 0.0
    %212 = vmatpush1.msra.mxu0 0.0
    %213 = vmatprep.subr.mxu0 0.0
    %214 = vmatpush1.msra.mxu0 0.0
    %215 = vmatprep.subr.mxu0 0.0
    %216 = vmatpush1.msra.mxu0 0.0
    %217 = vmatprep.subr.mxu0 0.0
    %218 = vmatpush1.msra.mxu0 0.0
    %219 = vmatprep.subr.mxu0 0.0
    %220 = vmatpush1.msra.mxu0 0.0
    %221 = vmatprep.subr.mxu0 0.0
    %222 = vmatpush1.msra.mxu0 0.0
    %223 = vmatprep.subr.mxu0 %v88
    %224 = vmatpush1.msra.mxu0 %v87
    %225 = vmatprep.subr.mxu0 %v84
    %226 = vmatpush1.msra.mxu0 %v83
    %227 = vmatprep.subr.mxu0 %v80
    %228 = vmatpush1.msra.mxu0 %v79
    %229 = vmatprep.subr.mxu0 %v76
    %230 = vmatpush1.msra.mxu0 %v75
    %231 = vmatprep.subr.mxu0 0.0
    %232 = vmatpush2.msra.mxu0 0.0
    %233 = vmatprep.subr.mxu0 0.0
    %234 = vmatpush2.msra.mxu0 0.0
    %235 = vmatprep.subr.mxu0 0.0
    %236 = vmatpush2.msra.mxu0 0.0
    %237 = vmatprep.subr.mxu0 0.0
    %238 = vmatpush2.msra.mxu0 0.0
    %239 = vmatprep.subr.mxu0 0.0
    %240 = vmatpush2.msra.mxu0 0.0
    %241 = vmatprep.subr.mxu0 0.0
    %242 = vmatpush2.msra.mxu0 0.0
    %243 = vmatprep.subr.mxu0 0.0
    %244 = vmatpush2.msra.mxu0 0.0
    %245 = vmatprep.subr.mxu0 0.0
    %246 = vmatpush2.msra.mxu0 0.0
    %247 = vmatprep.subr.mxu0 0.0
    %248 = vmatpush2.msra.mxu0 0.0
    %249 = vmatprep.subr.mxu0 0.0
    %250 = vmatpush2.msra.mxu0 0.0
    %251 = vmatprep.subr.mxu0 0.0
    %252 = vmatpush2.msra.mxu0 0.0
    %253 = vmatprep.subr.mxu0 0.0
    %254 = vmatpush2.msra.mxu0 0.0
    %255 = vmatprep.subr.mxu0 0.0
    %256 = vmatpush2.msra.mxu0 0.0
    %257 = vmatprep.subr.mxu0 0.0
    %258 = vmatpush2.msra.mxu0 0.0
    %259 = vmatprep.subr.mxu0 0.0
    %260 = vmatpush2.msra.mxu0 0.0
    %261 = vmatprep.subr.mxu0 0.0
    %262 = vmatpush2.msra.mxu0 0.0
    %263 = vmatprep.mubr.f32.mxu0 0.0
    %264 = vmatmul.mubr.f32.gmra.mxu0 %v99
    %v265 = vpop.f32.mrf.mxu0
    %v266 = vadd.f32 0.0, %v265
    %v267 = vpop.f32.mrf.mxu0
    %v268 = vadd.f32 0.0, %v267
    %269 = vmatprep.mubr.f32.mxu0 0.0
    %270 = vmatmul.mubr.f32.gmra.mxu0 %v102
    %v271 = vpop.f32.mrf.mxu0
    %v272 = vadd.f32 0.0, %v271
    %v273 = vpop.f32.mrf.mxu0
    %v274 = vadd.f32 0.0, %v273
    %275 = vmatprep.mubr.f32.mxu0 0.0
    %276 = vmatmul.mubr.f32.gmra.mxu0 %v105
    %v277 = vpop.f32.mrf.mxu0
    %v278 = vadd.f32 0.0, %v277
    %v279 = vpop.f32.mrf.mxu0
    %v280 = vadd.f32 0.0, %v279
    %281 = vmatprep.mubr.f32.mxu0 0.0
    %282 = vmatmul.mubr.f32.gmra.mxu0 %v108
    %v283 = vpop.f32.mrf.mxu0
    %v284 = vadd.f32 0.0, %v283
    %v285 = vpop.f32.mrf.mxu0
    %v286 = vadd.f32 0.0, %v285
    %287 = vdwg.mxu0
    %v288 = vcombine.low %v177, %v266
    %v289 = vcombine.high %v177, %v266
    %v291 = vunpack.c.l.s4 1983009808
    %v292 = vunpack.c.0.s8 %v291
    %v293 = vlaneseq
    %v294 = vshrl.u32 %v293, 7
    %v295 = vsub.s32 %v292, %v294
    %v296 = vrot.slane %v288, %v295
    %v298 = vunpack.c.l.s4 1983009808
    %v299 = vunpack.c.0.s8 %v298
    %v300 = vlaneseq
    %v301 = vshrl.u32 %v300, 7
    %v302 = vsub.s32 %v299, %v301
    %v303 = vrot.slane %v289, %v302
    %v304 = vcombine.low %v179, %v268
    %v305 = vcombine.high %v179, %v268
    %v307 = vunpack.c.l.s4 1983009808
    %v308 = vunpack.c.0.s8 %v307
    %v309 = vlaneseq
    %v310 = vshrl.u32 %v309, 7
    %v311 = vsub.s32 %v308, %v310
    %v312 = vrot.slane %v304, %v311
    %v314 = vunpack.c.l.s4 1983009808
    %v315 = vunpack.c.0.s8 %v314
    %v316 = vlaneseq
    %v317 = vshrl.u32 %v316, 7
    %v318 = vsub.s32 %v315, %v317
    %v319 = vrot.slane %v305, %v318
    %v320 = vcombine.low %v296, %v312
    %v321 = vcombine.high %v296, %v312
    %v323 = vunpack.c.l.s4 1934713408
    %v324 = vunpack.c.0.s8 %v323
    %v325 = vlaneseq
    %v326 = vshrl.u32 %v325, 7
    %v327 = vsub.s32 %v324, %v326
    %v328 = vrot.slane %v320, %v327
    %v330 = vunpack.c.l.s4 1934713408
    %v331 = vunpack.c.0.s8 %v330
    %v332 = vlaneseq
    %v333 = vshrl.u32 %v332, 7
    %v334 = vsub.s32 %v331, %v333
    %v335 = vrot.slane %v321, %v334
    %v336 = vcombine.low %v303, %v319
    %v337 = vcombine.high %v303, %v319
    %v339 = vunpack.c.l.s4 1934713408
    %v340 = vunpack.c.0.s8 %v339
    %v341 = vlaneseq
    %v342 = vshrl.u32 %v341, 7
    %v343 = vsub.s32 %v340, %v342
    %v344 = vrot.slane %v336, %v343
    %v346 = vunpack.c.l.s4 1934713408
    %v347 = vunpack.c.0.s8 %v346
    %v348 = vlaneseq
    %v349 = vshrl.u32 %v348, 7
    %v350 = vsub.s32 %v347, %v349
    %v351 = vrot.slane %v337, %v350
    %v352 = vcombine.high %v328, 0.0
    %v353 = vcombine.high %v335, 0.0
    %v354 = vcombine.high %v344, 0.0
    %v355 = vcombine.high %v351, 0.0
    %v356 = vcombine.low %v183, %v272
    %v357 = vcombine.high %v183, %v272
    %v359 = vunpack.c.l.s4 1983009808
    %v360 = vunpack.c.0.s8 %v359
    %v361 = vlaneseq
    %v362 = vshrl.u32 %v361, 7
    %v363 = vsub.s32 %v360, %v362
    %v364 = vrot.slane %v356, %v363
    %v366 = vunpack.c.l.s4 1983009808
    %v367 = vunpack.c.0.s8 %v366
    %v368 = vlaneseq
    %v369 = vshrl.u32 %v368, 7
    %v370 = vsub.s32 %v367, %v369
    %v371 = vrot.slane %v357, %v370
    %v372 = vcombine.low %v185, %v274
    %v373 = vcombine.high %v185, %v274
    %v375 = vunpack.c.l.s4 1983009808
    %v376 = vunpack.c.0.s8 %v375
    %v377 = vlaneseq
    %v378 = vshrl.u32 %v377, 7
    %v379 = vsub.s32 %v376, %v378
    %v380 = vrot.slane %v372, %v379
    %v382 = vunpack.c.l.s4 1983009808
    %v383 = vunpack.c.0.s8 %v382
    %v384 = vlaneseq
    %v385 = vshrl.u32 %v384, 7
    %v386 = vsub.s32 %v383, %v385
    %v387 = vrot.slane %v373, %v386
    %v388 = vcombine.low %v364, %v380
    %v389 = vcombine.high %v364, %v380
    %v391 = vunpack.c.l.s4 1934713408
    %v392 = vunpack.c.0.s8 %v391
    %v393 = vlaneseq
    %v394 = vshrl.u32 %v393, 7
    %v395 = vsub.s32 %v392, %v394
    %v396 = vrot.slane %v388, %v395
    %v398 = vunpack.c.l.s4 1934713408
    %v399 = vunpack.c.0.s8 %v398
    %v400 = vlaneseq
    %v401 = vshrl.u32 %v400, 7
    %v402 = vsub.s32 %v399, %v401
    %v403 = vrot.slane %v389, %v402
    %v404 = vcombine.low %v371, %v387
    %v405 = vcombine.high %v371, %v387
    %v407 = vunpack.c.l.s4 1934713408
    %v408 = vunpack.c.0.s8 %v407
    %v409 = vlaneseq
    %v410 = vshrl.u32 %v409, 7
    %v411 = vsub.s32 %v408, %v410
    %v412 = vrot.slane %v404, %v411
    %v414 = vunpack.c.l.s4 1934713408
    %v415 = vunpack.c.0.s8 %v414
    %v416 = vlaneseq
    %v417 = vshrl.u32 %v416, 7
    %v418 = vsub.s32 %v415, %v417
    %v419 = vrot.slane %v405, %v418
    %v420 = vcombine.high %v396, 0.0
    %v421 = vcombine.high %v403, 0.0
    %v422 = vcombine.high %v412, 0.0
    %v423 = vcombine.high %v419, 0.0
    %v424 = vcombine.low %v189, %v278
    %v425 = vcombine.high %v189, %v278
    %v427 = vunpack.c.l.s4 1983009808
    %v428 = vunpack.c.0.s8 %v427
    %v429 = vlaneseq
    %v430 = vshrl.u32 %v429, 7
    %v431 = vsub.s32 %v428, %v430
    %v432 = vrot.slane %v424, %v431
    %v434 = vunpack.c.l.s4 1983009808
    %v435 = vunpack.c.0.s8 %v434
    %v436 = vlaneseq
    %v437 = vshrl.u32 %v436, 7
    %v438 = vsub.s32 %v435, %v437
    %v439 = vrot.slane %v425, %v438
    %v440 = vcombine.low %v191, %v280
    %v441 = vcombine.high %v191, %v280
    %v443 = vunpack.c.l.s4 1983009808
    %v444 = vunpack.c.0.s8 %v443
    %v445 = vlaneseq
    %v446 = vshrl.u32 %v445, 7
    %v447 = vsub.s32 %v444, %v446
    %v448 = vrot.slane %v440, %v447
    %v450 = vunpack.c.l.s4 1983009808
    %v451 = vunpack.c.0.s8 %v450
    %v452 = vlaneseq
    %v453 = vshrl.u32 %v452, 7
    %v454 = vsub.s32 %v451, %v453
    %v455 = vrot.slane %v441, %v454
    %v456 = vcombine.low %v432, %v448
    %v457 = vcombine.high %v432, %v448
    %v459 = vunpack.c.l.s4 1934713408
    %v460 = vunpack.c.0.s8 %v459
    %v461 = vlaneseq
    %v462 = vshrl.u32 %v461, 7
    %v463 = vsub.s32 %v460, %v462
    %v464 = vrot.slane %v456, %v463
    %v466 = vunpack.c.l.s4 1934713408
    %v467 = vunpack.c.0.s8 %v466
    %v468 = vlaneseq
    %v469 = vshrl.u32 %v468, 7
    %v470 = vsub.s32 %v467, %v469
    %v471 = vrot.slane %v457, %v470
    %v472 = vcombine.low %v439, %v455
    %v473 = vcombine.high %v439, %v455
    %v475 = vunpack.c.l.s4 1934713408
    %v476 = vunpack.c.0.s8 %v475
    %v477 = vlaneseq
    %v478 = vshrl.u32 %v477, 7
    %v479 = vsub.s32 %v476, %v478
    %v480 = vrot.slane %v472, %v479
    %v482 = vunpack.c.l.s4 1934713408
    %v483 = vunpack.c.0.s8 %v482
    %v484 = vlaneseq
    %v485 = vshrl.u32 %v484, 7
    %v486 = vsub.s32 %v483, %v485
    %v487 = vrot.slane %v473, %v486
    %v488 = vcombine.high %v464, 0.0
    %v489 = vcombine.high %v471, 0.0
    %v490 = vcombine.high %v480, 0.0
    %v491 = vcombine.high %v487, 0.0
    %v492 = vcombine.low %v195, %v284
    %v493 = vcombine.high %v195, %v284
    %v495 = vunpack.c.l.s4 1983009808
    %v496 = vunpack.c.0.s8 %v495
    %v497 = vlaneseq
    %v498 = vshrl.u32 %v497, 7
    %v499 = vsub.s32 %v496, %v498
    %v500 = vrot.slane %v492, %v499
    %v502 = vunpack.c.l.s4 1983009808
    %v503 = vunpack.c.0.s8 %v502
    %v504 = vlaneseq
    %v505 = vshrl.u32 %v504, 7
    %v506 = vsub.s32 %v503, %v505
    %v507 = vrot.slane %v493, %v506
    %v508 = vcombine.low %v197, %v286
    %v509 = vcombine.high %v197, %v286
    %v511 = vunpack.c.l.s4 1983009808
    %v512 = vunpack.c.0.s8 %v511
    %v513 = vlaneseq
    %v514 = vshrl.u32 %v513, 7
    %v515 = vsub.s32 %v512, %v514
    %v516 = vrot.slane %v508, %v515
    %v518 = vunpack.c.l.s4 1983009808
    %v519 = vunpack.c.0.s8 %v518
    %v520 = vlaneseq
    %v521 = vshrl.u32 %v520, 7
    %v522 = vsub.s32 %v519, %v521
    %v523 = vrot.slane %v509, %v522
    %v524 = vcombine.low %v500, %v516
    %v525 = vcombine.high %v500, %v516
    %v527 = vunpack.c.l.s4 1934713408
    %v528 = vunpack.c.0.s8 %v527
    %v529 = vlaneseq
    %v530 = vshrl.u32 %v529, 7
    %v531 = vsub.s32 %v528, %v530
    %v532 = vrot.slane %v524, %v531
    %v534 = vunpack.c.l.s4 1934713408
    %v535 = vunpack.c.0.s8 %v534
    %v536 = vlaneseq
    %v537 = vshrl.u32 %v536, 7
    %v538 = vsub.s32 %v535, %v537
    %v539 = vrot.slane %v525, %v538
    %v540 = vcombine.low %v507, %v523
    %v541 = vcombine.high %v507, %v523
    %v543 = vunpack.c.l.s4 1934713408
    %v544 = vunpack.c.0.s8 %v543
    %v545 = vlaneseq
    %v546 = vshrl.u32 %v545, 7
    %v547 = vsub.s32 %v544, %v546
    %v548 = vrot.slane %v540, %v547
    %v550 = vunpack.c.l.s4 1934713408
    %v551 = vunpack.c.0.s8 %v550
    %v552 = vlaneseq
    %v553 = vshrl.u32 %v552, 7
    %v554 = vsub.s32 %v551, %v553
    %v555 = vrot.slane %v541, %v554
    %v556 = vcombine.high %v532, 0.0
    %v557 = vcombine.high %v539, 0.0
    %v558 = vcombine.high %v548, 0.0
    %v559 = vcombine.high %v555, 0.0
    %v560 = vld [vmem:[#allocation8] sm:$0xff]
    %v561 = vld [vmem:[#allocation8 + $0x8] sm:$0xff]
    %v562 = vld [vmem:[#allocation8 + $0x10] sm:$0xff]
    %v563 = vld [vmem:[#allocation8 + $0x18] sm:$0xff]
    %v564 = vld [vmem:[#allocation8 + $0x20] sm:$0xff]
    %v565 = vld [vmem:[#allocation8 + $0x28] sm:$0xff]
    %v566 = vld [vmem:[#allocation8 + $0x30] sm:$0xff]
    %v567 = vld [vmem:[#allocation8 + $0x38] sm:$0xff]
    %v568 = vld [vmem:[#allocation8 + $0x40] sm:$0xff]
    %v569 = vld [vmem:[#allocation8 + $0x48] sm:$0xff]
    %v570 = vld [vmem:[#allocation8 + $0x50] sm:$0xff]
    %v571 = vld [vmem:[#allocation8 + $0x58] sm:$0xff]
    %v572 = vld [vmem:[#allocation8 + $0x60] sm:$0xff]
    %v573 = vld [vmem:[#allocation8 + $0x68] sm:$0xff]
    %v574 = vld [vmem:[#allocation8 + $0x70] sm:$0xff]
    %v575 = vld [vmem:[#allocation8 + $0x78] sm:$0xff]
    %v576 = vld [vmem:[#allocation8 + $0x80] sm:$0xff]
    %v577 = vld [vmem:[#allocation8 + $0x88] sm:$0xff]
    %v578 = vld [vmem:[#allocation8 + $0x90] sm:$0xff]
    %v579 = vld [vmem:[#allocation8 + $0x98] sm:$0xff]
    %v580 = vld [vmem:[#allocation8 + $0xa0] sm:$0xff]
    %v581 = vld [vmem:[#allocation8 + $0xa8] sm:$0xff]
    %v582 = vld [vmem:[#allocation8 + $0xb0] sm:$0xff]
    %v583 = vld [vmem:[#allocation8 + $0xb8] sm:$0xff]
    %v584 = vld [vmem:[#allocation8 + $0xc0] sm:$0xff]
    %v585 = vld [vmem:[#allocation8 + $0xc8] sm:$0xff]
    %v586 = vld [vmem:[#allocation8 + $0xd0] sm:$0xff]
    %v587 = vld [vmem:[#allocation8 + $0xd8] sm:$0xff]
    %v588 = vld [vmem:[#allocation8 + $0xe0] sm:$0xff]
    %v589 = vld [vmem:[#allocation8 + $0xe8] sm:$0xff]
    %v590 = vld [vmem:[#allocation8 + $0xf0] sm:$0xff]
    %v591 = vld [vmem:[#allocation8 + $0xf8] sm:$0xff]
    %v592 = vld [vmem:[#allocation8 + $0x100] sm:$0xff]
    %v593 = vld [vmem:[#allocation8 + $0x108] sm:$0xff]
    %v594 = vld [vmem:[#allocation8 + $0x110] sm:$0xff]
    %v595 = vld [vmem:[#allocation8 + $0x118] sm:$0xff]
    %v596 = vld [vmem:[#allocation8 + $0x120] sm:$0xff]
    %v597 = vld [vmem:[#allocation8 + $0x128] sm:$0xff]
    %v598 = vld [vmem:[#allocation8 + $0x130] sm:$0xff]
    %v599 = vld [vmem:[#allocation8 + $0x138] sm:$0xff]
    %v600 = vld [vmem:[#allocation8 + $0x140] sm:$0xff]
    %v601 = vld [vmem:[#allocation8 + $0x148] sm:$0xff]
    %v602 = vld [vmem:[#allocation8 + $0x150] sm:$0xff]
    %v603 = vld [vmem:[#allocation8 + $0x158] sm:$0xff]
    %v604 = vld [vmem:[#allocation8 + $0x160] sm:$0xff]
    %v605 = vld [vmem:[#allocation8 + $0x168] sm:$0xff]
    %v606 = vld [vmem:[#allocation8 + $0x170] sm:$0xff]
    %v607 = vld [vmem:[#allocation8 + $0x178] sm:$0xff]
    %v608 = vld [vmem:[#allocation8 + $0x180] sm:$0xff]
    %v609 = vld [vmem:[#allocation8 + $0x188] sm:$0xff]
    %v610 = vld [vmem:[#allocation8 + $0x190] sm:$0xff]
    %v611 = vld [vmem:[#allocation8 + $0x198] sm:$0xff]
    %v612 = vld [vmem:[#allocation8 + $0x1a0] sm:$0xff]
    %v613 = vld [vmem:[#allocation8 + $0x1a8] sm:$0xff]
    %v614 = vld [vmem:[#allocation8 + $0x1b0] sm:$0xff]
    %v615 = vld [vmem:[#allocation8 + $0x1b8] sm:$0xff]
    %v616 = vld [vmem:[#allocation8 + $0x1c0] sm:$0xff]
    %v617 = vld [vmem:[#allocation8 + $0x1c8] sm:$0xff]
    %v618 = vld [vmem:[#allocation8 + $0x1d0] sm:$0xff]
    %v619 = vld [vmem:[#allocation8 + $0x1d8] sm:$0xff]
    %v620 = vld [vmem:[#allocation8 + $0x1e0] sm:$0xff]
    %v621 = vld [vmem:[#allocation8 + $0x1e8] sm:$0xff]
    %v622 = vld [vmem:[#allocation8 + $0x1f0] sm:$0xff]
    %v623 = vld [vmem:[#allocation8 + $0x1f8] sm:$0xff]
    %v624 = vld [vmem:[#allocation8 + $0x200] sm:$0xff]
    %v625 = vld [vmem:[#allocation8 + $0x208] sm:$0xff]
    %v626 = vld [vmem:[#allocation8 + $0x210] sm:$0xff]
    %v627 = vld [vmem:[#allocation8 + $0x218] sm:$0xff]
    %v628 = vld [vmem:[#allocation8 + $0x220] sm:$0xff]
    %v629 = vld [vmem:[#allocation8 + $0x228] sm:$0xff]
    %v630 = vld [vmem:[#allocation8 + $0x230] sm:$0xff]
    %v631 = vld [vmem:[#allocation8 + $0x238] sm:$0xff]
    %v632 = vld [vmem:[#allocation8 + $0x240] sm:$0xff]
    %v633 = vld [vmem:[#allocation8 + $0x248] sm:$0xff]
    %v634 = vld [vmem:[#allocation8 + $0x250] sm:$0xff]
    %v635 = vld [vmem:[#allocation8 + $0x258] sm:$0xff]
    %v636 = vld [vmem:[#allocation8 + $0x260] sm:$0xff]
    %v637 = vld [vmem:[#allocation8 + $0x268] sm:$0xff]
    %v638 = vld [vmem:[#allocation8 + $0x270] sm:$0xff]
    %v639 = vld [vmem:[#allocation8 + $0x278] sm:$0xff]
    %v640 = vld [vmem:[#allocation8 + $0x280] sm:$0xff]
    %v641 = vld [vmem:[#allocation8 + $0x288] sm:$0xff]
    %v642 = vld [vmem:[#allocation8 + $0x290] sm:$0xff]
    %v643 = vld [vmem:[#allocation8 + $0x298] sm:$0xff]
    %v644 = vld [vmem:[#allocation8 + $0x2a0] sm:$0xff]
    %v645 = vld [vmem:[#allocation8 + $0x2a8] sm:$0xff]
    %v646 = vld [vmem:[#allocation8 + $0x2b0] sm:$0xff]
    %v647 = vld [vmem:[#allocation8 + $0x2b8] sm:$0xff]
    %v648 = vld [vmem:[#allocation8 + $0x2c0] sm:$0xff]
    %v649 = vld [vmem:[#allocation8 + $0x2c8] sm:$0xff]
    %v650 = vld [vmem:[#allocation8 + $0x2d0] sm:$0xff]
    %v651 = vld [vmem:[#allocation8 + $0x2d8] sm:$0xff]
    %v652 = vld [vmem:[#allocation8 + $0x2e0] sm:$0xff]
    %v653 = vld [vmem:[#allocation8 + $0x2e8] sm:$0xff]
    %v654 = vld [vmem:[#allocation8 + $0x2f0] sm:$0xff]
    %v655 = vld [vmem:[#allocation8 + $0x2f8] sm:$0xff]
    %v656 = vld [vmem:[#allocation8 + $0x300] sm:$0xff]
    %v657 = vld [vmem:[#allocation8 + $0x308] sm:$0xff]
    %v658 = vld [vmem:[#allocation8 + $0x310] sm:$0xff]
    %v659 = vld [vmem:[#allocation8 + $0x318] sm:$0xff]
    %v660 = vld [vmem:[#allocation8 + $0x320] sm:$0xff]
    %v661 = vld [vmem:[#allocation8 + $0x328] sm:$0xff]
    %v662 = vld [vmem:[#allocation8 + $0x330] sm:$0xff]
    %v663 = vld [vmem:[#allocation8 + $0x338] sm:$0xff]
    %v664 = vld [vmem:[#allocation8 + $0x340] sm:$0xff]
    %v665 = vld [vmem:[#allocation8 + $0x348] sm:$0xff]
    %v666 = vld [vmem:[#allocation8 + $0x350] sm:$0xff]
    %v667 = vld [vmem:[#allocation8 + $0x358] sm:$0xff]
    %v668 = vld [vmem:[#allocation8 + $0x360] sm:$0xff]
    %v669 = vld [vmem:[#allocation8 + $0x368] sm:$0xff]
    %v670 = vld [vmem:[#allocation8 + $0x370] sm:$0xff]
    %v671 = vld [vmem:[#allocation8 + $0x378] sm:$0xff]
    %v672 = vld [vmem:[#allocation8 + $0x380] sm:$0xff]
    %v673 = vld [vmem:[#allocation8 + $0x388] sm:$0xff]
    %v674 = vld [vmem:[#allocation8 + $0x390] sm:$0xff]
    %v675 = vld [vmem:[#allocation8 + $0x398] sm:$0xff]
    %v676 = vld [vmem:[#allocation8 + $0x3a0] sm:$0xff]
    %v677 = vld [vmem:[#allocation8 + $0x3a8] sm:$0xff]
    %v678 = vld [vmem:[#allocation8 + $0x3b0] sm:$0xff]
    %v679 = vld [vmem:[#allocation8 + $0x3b8] sm:$0xff]
    %v680 = vld [vmem:[#allocation8 + $0x3c0] sm:$0xff]
    %v681 = vld [vmem:[#allocation8 + $0x3c8] sm:$0xff]
    %v682 = vld [vmem:[#allocation8 + $0x3d0] sm:$0xff]
    %v683 = vld [vmem:[#allocation8 + $0x3d8] sm:$0xff]
    %v684 = vld [vmem:[#allocation8 + $0x3e0] sm:$0xff]
    %v685 = vld [vmem:[#allocation8 + $0x3e8] sm:$0xff]
    %v686 = vld [vmem:[#allocation8 + $0x3f0] sm:$0xff]
    %v687 = vld [vmem:[#allocation8 + $0x3f8] sm:$0xff]
    %v688 = vld [vmem:[#allocation8 + $0x400] sm:$0xff]
    %v689 = vld [vmem:[#allocation8 + $0x408] sm:$0xff]
    %v690 = vld [vmem:[#allocation8 + $0x410] sm:$0xff]
    %v691 = vld [vmem:[#allocation8 + $0x418] sm:$0xff]
    %v692 = vld [vmem:[#allocation8 + $0x420] sm:$0xff]
    %v693 = vld [vmem:[#allocation8 + $0x428] sm:$0xff]
    %v694 = vld [vmem:[#allocation8 + $0x430] sm:$0xff]
    %v695 = vld [vmem:[#allocation8 + $0x438] sm:$0xff]
    %v696 = vld [vmem:[#allocation8 + $0x440] sm:$0xff]
    %v697 = vld [vmem:[#allocation8 + $0x448] sm:$0xff]
    %v698 = vld [vmem:[#allocation8 + $0x450] sm:$0xff]
    %v699 = vld [vmem:[#allocation8 + $0x458] sm:$0xff]
    %v700 = vld [vmem:[#allocation8 + $0x460] sm:$0xff]
    %v701 = vld [vmem:[#allocation8 + $0x468] sm:$0xff]
    %v702 = vld [vmem:[#allocation8 + $0x470] sm:$0xff]
    %v703 = vld [vmem:[#allocation8 + $0x478] sm:$0xff]
    %v704 = vld [vmem:[#allocation8 + $0x480] sm:$0xff]
    %v705 = vld [vmem:[#allocation8 + $0x488] sm:$0xff]
    %v706 = vld [vmem:[#allocation8 + $0x490] sm:$0xff]
    %v707 = vld [vmem:[#allocation8 + $0x498] sm:$0xff]
    %v708 = vld [vmem:[#allocation8 + $0x4a0] sm:$0xff]
    %v709 = vld [vmem:[#allocation8 + $0x4a8] sm:$0xff]
    %v710 = vld [vmem:[#allocation8 + $0x4b0] sm:$0xff]
    %v711 = vld [vmem:[#allocation8 + $0x4b8] sm:$0xff]
    %v712 = vld [vmem:[#allocation8 + $0x4c0] sm:$0xff]
    %v713 = vld [vmem:[#allocation8 + $0x4c8] sm:$0xff]
    %v714 = vld [vmem:[#allocation8 + $0x4d0] sm:$0xff]
    %v715 = vld [vmem:[#allocation8 + $0x4d8] sm:$0xff]
    %v716 = vld [vmem:[#allocation8 + $0x4e0] sm:$0xff]
    %v717 = vld [vmem:[#allocation8 + $0x4e8] sm:$0xff]
    %v718 = vld [vmem:[#allocation8 + $0x4f0] sm:$0xff]
    %v719 = vld [vmem:[#allocation8 + $0x4f8] sm:$0xff]
    %v720 = vld [vmem:[#allocation8 + $0x500] sm:$0xff]
    %v721 = vld [vmem:[#allocation8 + $0x508] sm:$0xff]
    %v722 = vld [vmem:[#allocation8 + $0x510] sm:$0xff]
    %v723 = vld [vmem:[#allocation8 + $0x518] sm:$0xff]
    %v724 = vld [vmem:[#allocation8 + $0x520] sm:$0xff]
    %v725 = vld [vmem:[#allocation8 + $0x528] sm:$0xff]
    %v726 = vld [vmem:[#allocation8 + $0x530] sm:$0xff]
    %v727 = vld [vmem:[#allocation8 + $0x538] sm:$0xff]
    %v728 = vld [vmem:[#allocation8 + $0x540] sm:$0xff]
    %v729 = vld [vmem:[#allocation8 + $0x548] sm:$0xff]
    %v730 = vld [vmem:[#allocation8 + $0x550] sm:$0xff]
    %v731 = vld [vmem:[#allocation8 + $0x558] sm:$0xff]
    %v732 = vld [vmem:[#allocation8 + $0x560] sm:$0xff]
    %v733 = vld [vmem:[#allocation8 + $0x568] sm:$0xff]
    %v734 = vld [vmem:[#allocation8 + $0x570] sm:$0xff]
    %v735 = vld [vmem:[#allocation8 + $0x578] sm:$0xff]
    %v736 = vld [vmem:[#allocation8 + $0x580] sm:$0xff]
    %v737 = vld [vmem:[#allocation8 + $0x588] sm:$0xff]
    %v738 = vld [vmem:[#allocation8 + $0x590] sm:$0xff]
    %v739 = vld [vmem:[#allocation8 + $0x598] sm:$0xff]
    %v740 = vld [vmem:[#allocation8 + $0x5a0] sm:$0xff]
    %v741 = vld [vmem:[#allocation8 + $0x5a8] sm:$0xff]
    %v742 = vld [vmem:[#allocation8 + $0x5b0] sm:$0xff]
    %v743 = vld [vmem:[#allocation8 + $0x5b8] sm:$0xff]
    %v744 = vld [vmem:[#allocation8 + $0x5c0] sm:$0xff]
    %v745 = vld [vmem:[#allocation8 + $0x5c8] sm:$0xff]
    %v746 = vld [vmem:[#allocation8 + $0x5d0] sm:$0xff]
    %v747 = vld [vmem:[#allocation8 + $0x5d8] sm:$0xff]
    %v748 = vld [vmem:[#allocation8 + $0x5e0] sm:$0xff]
    %v749 = vld [vmem:[#allocation8 + $0x5e8] sm:$0xff]
    %v750 = vld [vmem:[#allocation8 + $0x5f0] sm:$0xff]
    %v751 = vld [vmem:[#allocation8 + $0x5f8] sm:$0xff]
    %v752 = vld [vmem:[#allocation8 + $0x600] sm:$0xff]
    %v753 = vld [vmem:[#allocation8 + $0x608] sm:$0xff]
    %v754 = vld [vmem:[#allocation8 + $0x610] sm:$0xff]
    %v755 = vld [vmem:[#allocation8 + $0x618] sm:$0xff]
    %v756 = vld [vmem:[#allocation8 + $0x620] sm:$0xff]
    %v757 = vld [vmem:[#allocation8 + $0x628] sm:$0xff]
    %v758 = vld [vmem:[#allocation8 + $0x630] sm:$0xff]
    %v759 = vld [vmem:[#allocation8 + $0x638] sm:$0xff]
    %v760 = vld [vmem:[#allocation8 + $0x640] sm:$0xff]
    %v761 = vld [vmem:[#allocation8 + $0x648] sm:$0xff]
    %v762 = vld [vmem:[#allocation8 + $0x650] sm:$0xff]
    %v763 = vld [vmem:[#allocation8 + $0x658] sm:$0xff]
    %v764 = vld [vmem:[#allocation8 + $0x660] sm:$0xff]
    %v765 = vld [vmem:[#allocation8 + $0x668] sm:$0xff]
    %v766 = vld [vmem:[#allocation8 + $0x670] sm:$0xff]
    %v767 = vld [vmem:[#allocation8 + $0x678] sm:$0xff]
    %v768 = vld [vmem:[#allocation8 + $0x680] sm:$0xff]
    %v769 = vld [vmem:[#allocation8 + $0x688] sm:$0xff]
    %v770 = vld [vmem:[#allocation8 + $0x690] sm:$0xff]
    %v771 = vld [vmem:[#allocation8 + $0x698] sm:$0xff]
    %v772 = vld [vmem:[#allocation8 + $0x6a0] sm:$0xff]
    %v773 = vld [vmem:[#allocation8 + $0x6a8] sm:$0xff]
    %v774 = vld [vmem:[#allocation8 + $0x6b0] sm:$0xff]
    %v775 = vld [vmem:[#allocation8 + $0x6b8] sm:$0xff]
    %v776 = vld [vmem:[#allocation8 + $0x6c0] sm:$0xff]
    %v777 = vld [vmem:[#allocation8 + $0x6c8] sm:$0xff]
    %v778 = vld [vmem:[#allocation8 + $0x6d0] sm:$0xff]
    %v779 = vld [vmem:[#allocation8 + $0x6d8] sm:$0xff]
    %v780 = vld [vmem:[#allocation8 + $0x6e0] sm:$0xff]
    %v781 = vld [vmem:[#allocation8 + $0x6e8] sm:$0xff]
    %v782 = vld [vmem:[#allocation8 + $0x6f0] sm:$0xff]
    %v783 = vld [vmem:[#allocation8 + $0x6f8] sm:$0xff]
    %v784 = vld [vmem:[#allocation8 + $0x700] sm:$0xff]
    %v785 = vld [vmem:[#allocation8 + $0x708] sm:$0xff]
    %v786 = vld [vmem:[#allocation8 + $0x710] sm:$0xff]
    %v787 = vld [vmem:[#allocation8 + $0x718] sm:$0xff]
    %v788 = vld [vmem:[#allocation8 + $0x720] sm:$0xff]
    %v789 = vld [vmem:[#allocation8 + $0x728] sm:$0xff]
    %v790 = vld [vmem:[#allocation8 + $0x730] sm:$0xff]
    %v791 = vld [vmem:[#allocation8 + $0x738] sm:$0xff]
    %v792 = vld [vmem:[#allocation8 + $0x740] sm:$0xff]
    %v793 = vld [vmem:[#allocation8 + $0x748] sm:$0xff]
    %v794 = vld [vmem:[#allocation8 + $0x750] sm:$0xff]
    %v795 = vld [vmem:[#allocation8 + $0x758] sm:$0xff]
    %v796 = vld [vmem:[#allocation8 + $0x760] sm:$0xff]
    %v797 = vld [vmem:[#allocation8 + $0x768] sm:$0xff]
    %v798 = vld [vmem:[#allocation8 + $0x770] sm:$0xff]
    %v799 = vld [vmem:[#allocation8 + $0x778] sm:$0xff]
    %v800 = vld [vmem:[#allocation8 + $0x780] sm:$0xff]
    %v801 = vld [vmem:[#allocation8 + $0x788] sm:$0xff]
    %v802 = vld [vmem:[#allocation8 + $0x790] sm:$0xff]
    %v803 = vld [vmem:[#allocation8 + $0x798] sm:$0xff]
    %v804 = vld [vmem:[#allocation8 + $0x7a0] sm:$0xff]
    %v805 = vld [vmem:[#allocation8 + $0x7a8] sm:$0xff]
    %v806 = vld [vmem:[#allocation8 + $0x7b0] sm:$0xff]
    %v807 = vld [vmem:[#allocation8 + $0x7b8] sm:$0xff]
    %v808 = vld [vmem:[#allocation8 + $0x7c0] sm:$0xff]
    %v809 = vld [vmem:[#allocation8 + $0x7c8] sm:$0xff]
    %v810 = vld [vmem:[#allocation8 + $0x7d0] sm:$0xff]
    %v811 = vld [vmem:[#allocation8 + $0x7d8] sm:$0xff]
    %v812 = vld [vmem:[#allocation8 + $0x7e0] sm:$0xff]
    %v813 = vld [vmem:[#allocation8 + $0x7e8] sm:$0xff]
    %v814 = vld [vmem:[#allocation8 + $0x7f0] sm:$0xff]
    %v815 = vld [vmem:[#allocation8 + $0x7f8] sm:$0xff]
    %v816 = vld [vmem:[#allocation8 + $0x800] sm:$0xff]
    %v817 = vld [vmem:[#allocation8 + $0x808] sm:$0xff]
    %v818 = vld [vmem:[#allocation8 + $0x810] sm:$0xff]
    %v819 = vld [vmem:[#allocation8 + $0x818] sm:$0xff]
    %v820 = vld [vmem:[#allocation8 + $0x820] sm:$0xff]
    %v821 = vld [vmem:[#allocation8 + $0x828] sm:$0xff]
    %v822 = vld [vmem:[#allocation8 + $0x830] sm:$0xff]
    %v823 = vld [vmem:[#allocation8 + $0x838] sm:$0xff]
    %v824 = vld [vmem:[#allocation8 + $0x840] sm:$0xff]
    %v825 = vld [vmem:[#allocation8 + $0x848] sm:$0xff]
    %v826 = vld [vmem:[#allocation8 + $0x850] sm:$0xff]
    %v827 = vld [vmem:[#allocation8 + $0x858] sm:$0xff]
    %v828 = vld [vmem:[#allocation8 + $0x860] sm:$0xff]
    %v829 = vld [vmem:[#allocation8 + $0x868] sm:$0xff]
    %v830 = vld [vmem:[#allocation8 + $0x870] sm:$0xff]
    %v831 = vld [vmem:[#allocation8 + $0x878] sm:$0xff]
    %v832 = vld [vmem:[#allocation8 + $0x880] sm:$0xff]
    %v833 = vld [vmem:[#allocation8 + $0x888] sm:$0xff]
    %v834 = vld [vmem:[#allocation8 + $0x890] sm:$0xff]
    %v835 = vld [vmem:[#allocation8 + $0x898] sm:$0xff]
    %v836 = vld [vmem:[#allocation8 + $0x8a0] sm:$0xff]
    %v837 = vld [vmem:[#allocation8 + $0x8a8] sm:$0xff]
    %v838 = vld [vmem:[#allocation8 + $0x8b0] sm:$0xff]
    %v839 = vld [vmem:[#allocation8 + $0x8b8] sm:$0xff]
    %v840 = vld [vmem:[#allocation8 + $0x8c0] sm:$0xff]
    %v841 = vld [vmem:[#allocation8 + $0x8c8] sm:$0xff]
    %v842 = vld [vmem:[#allocation8 + $0x8d0] sm:$0xff]
    %v843 = vld [vmem:[#allocation8 + $0x8d8] sm:$0xff]
    %v844 = vld [vmem:[#allocation8 + $0x8e0] sm:$0xff]
    %v845 = vld [vmem:[#allocation8 + $0x8e8] sm:$0xff]
    %v846 = vld [vmem:[#allocation8 + $0x8f0] sm:$0xff]
    %v847 = vld [vmem:[#allocation8 + $0x8f8] sm:$0xff]
    %v848 = vld [vmem:[#allocation8 + $0x900] sm:$0xff]
    %v849 = vld [vmem:[#allocation8 + $0x908] sm:$0xff]
    %v850 = vld [vmem:[#allocation8 + $0x910] sm:$0xff]
    %v851 = vld [vmem:[#allocation8 + $0x918] sm:$0xff]
    %v852 = vld [vmem:[#allocation8 + $0x920] sm:$0xff]
    %v853 = vld [vmem:[#allocation8 + $0x928] sm:$0xff]
    %v854 = vld [vmem:[#allocation8 + $0x930] sm:$0xff]
    %v855 = vld [vmem:[#allocation8 + $0x938] sm:$0xff]
    %v856 = vld [vmem:[#allocation8 + $0x940] sm:$0xff]
    %v857 = vld [vmem:[#allocation8 + $0x948] sm:$0xff]
    %v858 = vld [vmem:[#allocation8 + $0x950] sm:$0xff]
    %v859 = vld [vmem:[#allocation8 + $0x958] sm:$0xff]
    %v860 = vld [vmem:[#allocation8 + $0x960] sm:$0xff]
    %v861 = vld [vmem:[#allocation8 + $0x968] sm:$0xff]
    %v862 = vld [vmem:[#allocation8 + $0x970] sm:$0xff]
    %v863 = vld [vmem:[#allocation8 + $0x978] sm:$0xff]
    %v864 = vld [vmem:[#allocation8 + $0x980] sm:$0xff]
    %v865 = vld [vmem:[#allocation8 + $0x988] sm:$0xff]
    %v866 = vld [vmem:[#allocation8 + $0x990] sm:$0xff]
    %v867 = vld [vmem:[#allocation8 + $0x998] sm:$0xff]
    %v868 = vld [vmem:[#allocation8 + $0x9a0] sm:$0xff]
    %v869 = vld [vmem:[#allocation8 + $0x9a8] sm:$0xff]
    %v870 = vld [vmem:[#allocation8 + $0x9b0] sm:$0xff]
    %v871 = vld [vmem:[#allocation8 + $0x9b8] sm:$0xff]
    %v872 = vld [vmem:[#allocation8 + $0x9c0] sm:$0xff]
    %v873 = vld [vmem:[#allocation8 + $0x9c8] sm:$0xff]
    %v874 = vld [vmem:[#allocation8 + $0x9d0] sm:$0xff]
    %v875 = vld [vmem:[#allocation8 + $0x9d8] sm:$0xff]
    %v876 = vld [vmem:[#allocation8 + $0x9e0] sm:$0xff]
    %v877 = vld [vmem:[#allocation8 + $0x9e8] sm:$0xff]
    %v878 = vld [vmem:[#allocation8 + $0x9f0] sm:$0xff]
    %v879 = vld [vmem:[#allocation8 + $0x9f8] sm:$0xff]
    %v880 = vld [vmem:[#allocation8 + $0xa00] sm:$0xff]
    %v881 = vld [vmem:[#allocation8 + $0xa08] sm:$0xff]
    %v882 = vld [vmem:[#allocation8 + $0xa10] sm:$0xff]
    %v883 = vld [vmem:[#allocation8 + $0xa18] sm:$0xff]
    %v884 = vld [vmem:[#allocation8 + $0xa20] sm:$0xff]
    %v885 = vld [vmem:[#allocation8 + $0xa28] sm:$0xff]
    %v886 = vld [vmem:[#allocation8 + $0xa30] sm:$0xff]
    %v887 = vld [vmem:[#allocation8 + $0xa38] sm:$0xff]
    %v888 = vld [vmem:[#allocation8 + $0xa40] sm:$0xff]
    %v889 = vld [vmem:[#allocation8 + $0xa48] sm:$0xff]
    %v890 = vld [vmem:[#allocation8 + $0xa50] sm:$0xff]
    %v891 = vld [vmem:[#allocation8 + $0xa58] sm:$0xff]
    %v892 = vld [vmem:[#allocation8 + $0xa60] sm:$0xff]
    %v893 = vld [vmem:[#allocation8 + $0xa68] sm:$0xff]
    %v894 = vld [vmem:[#allocation8 + $0xa70] sm:$0xff]
    %v895 = vld [vmem:[#allocation8 + $0xa78] sm:$0xff]
    %v896 = vld [vmem:[#allocation8 + $0xa80] sm:$0xff]
    %v897 = vld [vmem:[#allocation8 + $0xa88] sm:$0xff]
    %v898 = vld [vmem:[#allocation8 + $0xa90] sm:$0xff]
    %v899 = vld [vmem:[#allocation8 + $0xa98] sm:$0xff]
    %v900 = vld [vmem:[#allocation8 + $0xaa0] sm:$0xff]
    %v901 = vld [vmem:[#allocation8 + $0xaa8] sm:$0xff]
    %v902 = vld [vmem:[#allocation8 + $0xab0] sm:$0xff]
    %v903 = vld [vmem:[#allocation8 + $0xab8] sm:$0xff]
    %v904 = vld [vmem:[#allocation8 + $0xac0] sm:$0xff]
    %v905 = vld [vmem:[#allocation8 + $0xac8] sm:$0xff]
    %v906 = vld [vmem:[#allocation8 + $0xad0] sm:$0xff]
    %v907 = vld [vmem:[#allocation8 + $0xad8] sm:$0xff]
    %v908 = vld [vmem:[#allocation8 + $0xae0] sm:$0xff]
    %v909 = vld [vmem:[#allocation8 + $0xae8] sm:$0xff]
    %v910 = vld [vmem:[#allocation8 + $0xaf0] sm:$0xff]
    %v911 = vld [vmem:[#allocation8 + $0xaf8] sm:$0xff]
    %v912 = vld [vmem:[#allocation8 + $0xb00] sm:$0xff]
    %v913 = vld [vmem:[#allocation8 + $0xb08] sm:$0xff]
    %v914 = vld [vmem:[#allocation8 + $0xb10] sm:$0xff]
    %v915 = vld [vmem:[#allocation8 + $0xb18] sm:$0xff]
    %v916 = vld [vmem:[#allocation8 + $0xb20] sm:$0xff]
    %v917 = vld [vmem:[#allocation8 + $0xb28] sm:$0xff]
    %v918 = vld [vmem:[#allocation8 + $0xb30] sm:$0xff]
    %v919 = vld [vmem:[#allocation8 + $0xb38] sm:$0xff]
    %v920 = vld [vmem:[#allocation8 + $0xb40] sm:$0xff]
    %v921 = vld [vmem:[#allocation8 + $0xb48] sm:$0xff]
    %v922 = vld [vmem:[#allocation8 + $0xb50] sm:$0xff]
    %v923 = vld [vmem:[#allocation8 + $0xb58] sm:$0xff]
    %v924 = vld [vmem:[#allocation8 + $0xb60] sm:$0xff]
    %v925 = vld [vmem:[#allocation8 + $0xb68] sm:$0xff]
    %v926 = vld [vmem:[#allocation8 + $0xb70] sm:$0xff]
    %v927 = vld [vmem:[#allocation8 + $0xb78] sm:$0xff]
    %v928 = vld [vmem:[#allocation8 + $0xb80] sm:$0xff]
    %v929 = vld [vmem:[#allocation8 + $0xb88] sm:$0xff]
    %v930 = vld [vmem:[#allocation8 + $0xb90] sm:$0xff]
    %v931 = vld [vmem:[#allocation8 + $0xb98] sm:$0xff]
    %v932 = vld [vmem:[#allocation8 + $0xba0] sm:$0xff]
    %v933 = vld [vmem:[#allocation8 + $0xba8] sm:$0xff]
    %v934 = vld [vmem:[#allocation8 + $0xbb0] sm:$0xff]
    %v935 = vld [vmem:[#allocation8 + $0xbb8] sm:$0xff]
    %v936 = vld [vmem:[#allocation8 + $0xbc0] sm:$0xff]
    %v937 = vld [vmem:[#allocation8 + $0xbc8] sm:$0xff]
    %v938 = vld [vmem:[#allocation8 + $0xbd0] sm:$0xff]
    %v939 = vld [vmem:[#allocation8 + $0xbd8] sm:$0xff]
    %v940 = vld [vmem:[#allocation8 + $0xbe0] sm:$0xff]
    %v941 = vld [vmem:[#allocation8 + $0xbe8] sm:$0xff]
    %v942 = vld [vmem:[#allocation8 + $0xbf0] sm:$0xff]
    %v943 = vld [vmem:[#allocation8 + $0xbf8] sm:$0xff]
    %v944 = vld [vmem:[#allocation8 + $0xc00] sm:$0xff]
    %v945 = vld [vmem:[#allocation8 + $0xc08] sm:$0xff]
    %v946 = vld [vmem:[#allocation8 + $0xc10] sm:$0xff]
    %v947 = vld [vmem:[#allocation8 + $0xc18] sm:$0xff]
    %v948 = vld [vmem:[#allocation8 + $0xc20] sm:$0xff]
    %v949 = vld [vmem:[#allocation8 + $0xc28] sm:$0xff]
    %v950 = vld [vmem:[#allocation8 + $0xc30] sm:$0xff]
    %v951 = vld [vmem:[#allocation8 + $0xc38] sm:$0xff]
    %v952 = vld [vmem:[#allocation8 + $0xc40] sm:$0xff]
    %v953 = vld [vmem:[#allocation8 + $0xc48] sm:$0xff]
    %v954 = vld [vmem:[#allocation8 + $0xc50] sm:$0xff]
    %v955 = vld [vmem:[#allocation8 + $0xc58] sm:$0xff]
    %v956 = vld [vmem:[#allocation8 + $0xc60] sm:$0xff]
    %v957 = vld [vmem:[#allocation8 + $0xc68] sm:$0xff]
    %v958 = vld [vmem:[#allocation8 + $0xc70] sm:$0xff]
    %v959 = vld [vmem:[#allocation8 + $0xc78] sm:$0xff]
    %v960 = vld [vmem:[#allocation8 + $0xc80] sm:$0xff]
    %v961 = vld [vmem:[#allocation8 + $0xc88] sm:$0xff]
    %v962 = vld [vmem:[#allocation8 + $0xc90] sm:$0xff]
    %v963 = vld [vmem:[#allocation8 + $0xc98] sm:$0xff]
    %v964 = vld [vmem:[#allocation8 + $0xca0] sm:$0xff]
    %v965 = vld [vmem:[#allocation8 + $0xca8] sm:$0xff]
    %v966 = vld [vmem:[#allocation8 + $0xcb0] sm:$0xff]
    %v967 = vld [vmem:[#allocation8 + $0xcb8] sm:$0xff]
    %v968 = vld [vmem:[#allocation8 + $0xcc0] sm:$0xff]
    %v969 = vld [vmem:[#allocation8 + $0xcc8] sm:$0xff]
    %v970 = vld [vmem:[#allocation8 + $0xcd0] sm:$0xff]
    %v971 = vld [vmem:[#allocation8 + $0xcd8] sm:$0xff]
    %v972 = vld [vmem:[#allocation8 + $0xce0] sm:$0xff]
    %v973 = vld [vmem:[#allocation8 + $0xce8] sm:$0xff]
    %v974 = vld [vmem:[#allocation8 + $0xcf0] sm:$0xff]
    %v975 = vld [vmem:[#allocation8 + $0xcf8] sm:$0xff]
    %v976 = vld [vmem:[#allocation8 + $0xd00] sm:$0xff]
    %v977 = vld [vmem:[#allocation8 + $0xd08] sm:$0xff]
    %v978 = vld [vmem:[#allocation8 + $0xd10] sm:$0xff]
    %v979 = vld [vmem:[#allocation8 + $0xd18] sm:$0xff]
    %v980 = vld [vmem:[#allocation8 + $0xd20] sm:$0xff]
    %v981 = vld [vmem:[#allocation8 + $0xd28] sm:$0xff]
    %v982 = vld [vmem:[#allocation8 + $0xd30] sm:$0xff]
    %v983 = vld [vmem:[#allocation8 + $0xd38] sm:$0xff]
    %v984 = vld [vmem:[#allocation8 + $0xd40] sm:$0xff]
    %v985 = vld [vmem:[#allocation8 + $0xd48] sm:$0xff]
    %v986 = vld [vmem:[#allocation8 + $0xd50] sm:$0xff]
    %v987 = vld [vmem:[#allocation8 + $0xd58] sm:$0xff]
    %v988 = vld [vmem:[#allocation8 + $0xd60] sm:$0xff]
    %v989 = vld [vmem:[#allocation8 + $0xd68] sm:$0xff]
    %v990 = vld [vmem:[#allocation8 + $0xd70] sm:$0xff]
    %v991 = vld [vmem:[#allocation8 + $0xd78] sm:$0xff]
    %v992 = vld [vmem:[#allocation8 + $0xd80] sm:$0xff]
    %v993 = vld [vmem:[#allocation8 + $0xd88] sm:$0xff]
    %v994 = vld [vmem:[#allocation8 + $0xd90] sm:$0xff]
    %v995 = vld [vmem:[#allocation8 + $0xd98] sm:$0xff]
    %v996 = vld [vmem:[#allocation8 + $0xda0] sm:$0xff]
    %v997 = vld [vmem:[#allocation8 + $0xda8] sm:$0xff]
    %v998 = vld [vmem:[#allocation8 + $0xdb0] sm:$0xff]
    %v999 = vld [vmem:[#allocation8 + $0xdb8] sm:$0xff]
    %v1000 = vld [vmem:[#allocation8 + $0xdc0] sm:$0xff]
    %v1001 = vld [vmem:[#allocation8 + $0xdc8] sm:$0xff]
    %v1002 = vld [vmem:[#allocation8 + $0xdd0] sm:$0xff]
    %v1003 = vld [vmem:[#allocation8 + $0xdd8] sm:$0xff]
    %v1004 = vld [vmem:[#allocation8 + $0xde0] sm:$0xff]
    %v1005 = vld [vmem:[#allocation8 + $0xde8] sm:$0xff]
    %v1006 = vld [vmem:[#allocation8 + $0xdf0] sm:$0xff]
    %v1007 = vld [vmem:[#allocation8 + $0xdf8] sm:$0xff]
    %v1008 = vld [vmem:[#allocation8 + $0xe00] sm:$0xff]
    %v1009 = vld [vmem:[#allocation8 + $0xe08] sm:$0xff]
    %v1010 = vld [vmem:[#allocation8 + $0xe10] sm:$0xff]
    %v1011 = vld [vmem:[#allocation8 + $0xe18] sm:$0xff]
    %v1012 = vld [vmem:[#allocation8 + $0xe20] sm:$0xff]
    %v1013 = vld [vmem:[#allocation8 + $0xe28] sm:$0xff]
    %v1014 = vld [vmem:[#allocation8 + $0xe30] sm:$0xff]
    %v1015 = vld [vmem:[#allocation8 + $0xe38] sm:$0xff]
    %v1016 = vld [vmem:[#allocation8 + $0xe40] sm:$0xff]
    %v1017 = vld [vmem:[#allocation8 + $0xe48] sm:$0xff]
    %v1018 = vld [vmem:[#allocation8 + $0xe50] sm:$0xff]
    %v1019 = vld [vmem:[#allocation8 + $0xe58] sm:$0xff]
    %v1020 = vld [vmem:[#allocation8 + $0xe60] sm:$0xff]
    %v1021 = vld [vmem:[#allocation8 + $0xe68] sm:$0xff]
    %v1022 = vld [vmem:[#allocation8 + $0xe70] sm:$0xff]
    %v1023 = vld [vmem:[#allocation8 + $0xe78] sm:$0xff]
    %v1024 = vld [vmem:[#allocation8 + $0xe80] sm:$0xff]
    %v1025 = vld [vmem:[#allocation8 + $0xe88] sm:$0xff]
    %v1026 = vld [vmem:[#allocation8 + $0xe90] sm:$0xff]
    %v1027 = vld [vmem:[#allocation8 + $0xe98] sm:$0xff]
    %v1028 = vld [vmem:[#allocation8 + $0xea0] sm:$0xff]
    %v1029 = vld [vmem:[#allocation8 + $0xea8] sm:$0xff]
    %v1030 = vld [vmem:[#allocation8 + $0xeb0] sm:$0xff]
    %v1031 = vld [vmem:[#allocation8 + $0xeb8] sm:$0xff]
    %v1032 = vld [vmem:[#allocation8 + $0xec0] sm:$0xff]
    %v1033 = vld [vmem:[#allocation8 + $0xec8] sm:$0xff]
    %v1034 = vld [vmem:[#allocation8 + $0xed0] sm:$0xff]
    %v1035 = vld [vmem:[#allocation8 + $0xed8] sm:$0xff]
    %v1036 = vld [vmem:[#allocation8 + $0xee0] sm:$0xff]
    %v1037 = vld [vmem:[#allocation8 + $0xee8] sm:$0xff]
    %v1038 = vld [vmem:[#allocation8 + $0xef0] sm:$0xff]
    %v1039 = vld [vmem:[#allocation8 + $0xef8] sm:$0xff]
    %v1040 = vld [vmem:[#allocation8 + $0xf00] sm:$0xff]
    %v1041 = vld [vmem:[#allocation8 + $0xf08] sm:$0xff]
    %v1042 = vld [vmem:[#allocation8 + $0xf10] sm:$0xff]
    %v1043 = vld [vmem:[#allocation8 + $0xf18] sm:$0xff]
    %v1044 = vld [vmem:[#allocation8 + $0xf20] sm:$0xff]
    %v1045 = vld [vmem:[#allocation8 + $0xf28] sm:$0xff]
    %v1046 = vld [vmem:[#allocation8 + $0xf30] sm:$0xff]
    %v1047 = vld [vmem:[#allocation8 + $0xf38] sm:$0xff]
    %v1048 = vld [vmem:[#allocation8 + $0xf40] sm:$0xff]
    %v1049 = vld [vmem:[#allocation8 + $0xf48] sm:$0xff]
    %v1050 = vld [vmem:[#allocation8 + $0xf50] sm:$0xff]
    %v1051 = vld [vmem:[#allocation8 + $0xf58] sm:$0xff]
    %v1052 = vld [vmem:[#allocation8 + $0xf60] sm:$0xff]
    %v1053 = vld [vmem:[#allocation8 + $0xf68] sm:$0xff]
    %v1054 = vld [vmem:[#allocation8 + $0xf70] sm:$0xff]
    %v1055 = vld [vmem:[#allocation8 + $0xf78] sm:$0xff]
    %v1056 = vld [vmem:[#allocation8 + $0xf80] sm:$0xff]
    %v1057 = vld [vmem:[#allocation8 + $0xf88] sm:$0xff]
    %v1058 = vld [vmem:[#allocation8 + $0xf90] sm:$0xff]
    %v1059 = vld [vmem:[#allocation8 + $0xf98] sm:$0xff]
    %v1060 = vld [vmem:[#allocation8 + $0xfa0] sm:$0xff]
    %v1061 = vld [vmem:[#allocation8 + $0xfa8] sm:$0xff]
    %v1062 = vld [vmem:[#allocation8 + $0xfb0] sm:$0xff]
    %v1063 = vld [vmem:[#allocation8 + $0xfb8] sm:$0xff]
    %v1064 = vld [vmem:[#allocation8 + $0xfc0] sm:$0xff]
    %v1065 = vld [vmem:[#allocation8 + $0xfc8] sm:$0xff]
    %v1066 = vld [vmem:[#allocation8 + $0xfd0] sm:$0xff]
    %v1067 = vld [vmem:[#allocation8 + $0xfd8] sm:$0xff]
    %v1068 = vld [vmem:[#allocation8 + $0xfe0] sm:$0xff]
    %v1069 = vld [vmem:[#allocation8 + $0xfe8] sm:$0xff]
    %v1070 = vld [vmem:[#allocation8 + $0xff0] sm:$0xff]
    %v1071 = vld [vmem:[#allocation8 + $0xff8] sm:$0xff]
    %v1072 = vld [vmem:[#allocation8 + $0x1000] sm:$0xff]
    %v1073 = vld [vmem:[#allocation8 + $0x1008] sm:$0xff]
    %v1074 = vld [vmem:[#allocation8 + $0x1010] sm:$0xff]
    %v1075 = vld [vmem:[#allocation8 + $0x1018] sm:$0xff]
    %v1076 = vld [vmem:[#allocation8 + $0x1020] sm:$0xff]
    %v1077 = vld [vmem:[#allocation8 + $0x1028] sm:$0xff]
    %v1078 = vld [vmem:[#allocation8 + $0x1030] sm:$0xff]
    %v1079 = vld [vmem:[#allocation8 + $0x1038] sm:$0xff]
    %v1080 = vld [vmem:[#allocation8 + $0x1040] sm:$0xff]
    %v1081 = vld [vmem:[#allocation8 + $0x1048] sm:$0xff]
    %v1082 = vld [vmem:[#allocation8 + $0x1050] sm:$0xff]
    %v1083 = vld [vmem:[#allocation8 + $0x1058] sm:$0xff]
    %v1084 = vld [vmem:[#allocation8 + $0x1060] sm:$0xff]
    %v1085 = vld [vmem:[#allocation8 + $0x1068] sm:$0xff]
    %v1086 = vld [vmem:[#allocation8 + $0x1070] sm:$0xff]
    %v1087 = vld [vmem:[#allocation8 + $0x1078] sm:$0xff]
    %v1088 = vld [vmem:[#allocation8 + $0x1080] sm:$0xff]
    %v1089 = vld [vmem:[#allocation8 + $0x1088] sm:$0xff]
    %v1090 = vld [vmem:[#allocation8 + $0x1090] sm:$0xff]
    %v1091 = vld [vmem:[#allocation8 + $0x1098] sm:$0xff]
    %v1092 = vld [vmem:[#allocation8 + $0x10a0] sm:$0xff]
    %v1093 = vld [vmem:[#allocation8 + $0x10a8] sm:$0xff]
    %v1094 = vld [vmem:[#allocation8 + $0x10b0] sm:$0xff]
    %v1095 = vld [vmem:[#allocation8 + $0x10b8] sm:$0xff]
    %v1096 = vld [vmem:[#allocation8 + $0x10c0] sm:$0xff]
    %v1097 = vld [vmem:[#allocation8 + $0x10c8] sm:$0xff]
    %v1098 = vld [vmem:[#allocation8 + $0x10d0] sm:$0xff]
    %v1099 = vld [vmem:[#allocation8 + $0x10d8] sm:$0xff]
    %v1100 = vld [vmem:[#allocation8 + $0x10e0] sm:$0xff]
    %v1101 = vld [vmem:[#allocation8 + $0x10e8] sm:$0xff]
    %v1102 = vld [vmem:[#allocation8 + $0x10f0] sm:$0xff]
    %v1103 = vld [vmem:[#allocation8 + $0x10f8] sm:$0xff]
    %v1104 = vld [vmem:[#allocation8 + $0x1100] sm:$0xff]
    %v1105 = vld [vmem:[#allocation8 + $0x1108] sm:$0xff]
    %v1106 = vld [vmem:[#allocation8 + $0x1110] sm:$0xff]
    %v1107 = vld [vmem:[#allocation8 + $0x1118] sm:$0xff]
    %v1108 = vld [vmem:[#allocation8 + $0x1120] sm:$0xff]
    %v1109 = vld [vmem:[#allocation8 + $0x1128] sm:$0xff]
    %v1110 = vld [vmem:[#allocation8 + $0x1130] sm:$0xff]
    %v1111 = vld [vmem:[#allocation8 + $0x1138] sm:$0xff]
    %v1112 = vld [vmem:[#allocation8 + $0x1140] sm:$0xff]
    %v1113 = vld [vmem:[#allocation8 + $0x1148] sm:$0xff]
    %v1114 = vld [vmem:[#allocation8 + $0x1150] sm:$0xff]
    %v1115 = vld [vmem:[#allocation8 + $0x1158] sm:$0xff]
    %v1116 = vld [vmem:[#allocation8 + $0x1160] sm:$0xff]
    %v1117 = vld [vmem:[#allocation8 + $0x1168] sm:$0xff]
    %v1118 = vld [vmem:[#allocation8 + $0x1170] sm:$0xff]
    %v1119 = vld [vmem:[#allocation8 + $0x1178] sm:$0xff]
    %v1120 = vld [vmem:[#allocation8 + $0x1180] sm:$0xff]
    %v1121 = vld [vmem:[#allocation8 + $0x1188] sm:$0xff]
    %v1122 = vld [vmem:[#allocation8 + $0x1190] sm:$0xff]
    %v1123 = vld [vmem:[#allocation8 + $0x1198] sm:$0xff]
    %v1124 = vld [vmem:[#allocation8 + $0x11a0] sm:$0xff]
    %v1125 = vld [vmem:[#allocation8 + $0x11a8] sm:$0xff]
    %v1126 = vld [vmem:[#allocation8 + $0x11b0] sm:$0xff]
    %v1127 = vld [vmem:[#allocation8 + $0x11b8] sm:$0xff]
    %v1128 = vld [vmem:[#allocation8 + $0x11c0] sm:$0xff]
    %v1129 = vld [vmem:[#allocation8 + $0x11c8] sm:$0xff]
    %v1130 = vld [vmem:[#allocation8 + $0x11d0] sm:$0xff]
    %v1131 = vld [vmem:[#allocation8 + $0x11d8] sm:$0xff]
    %v1132 = vld [vmem:[#allocation8 + $0x11e0] sm:$0xff]
    %v1133 = vld [vmem:[#allocation8 + $0x11e8] sm:$0xff]
    %v1134 = vld [vmem:[#allocation8 + $0x11f0] sm:$0xff]
    %v1135 = vld [vmem:[#allocation8 + $0x11f8] sm:$0xff]
    %v1136 = vld [vmem:[#allocation8 + $0x1200] sm:$0xff]
    %v1137 = vld [vmem:[#allocation8 + $0x1208] sm:$0xff]
    %v1138 = vld [vmem:[#allocation8 + $0x1210] sm:$0xff]
    %v1139 = vld [vmem:[#allocation8 + $0x1218] sm:$0xff]
    %v1140 = vld [vmem:[#allocation8 + $0x1220] sm:$0xff]
    %v1141 = vld [vmem:[#allocation8 + $0x1228] sm:$0xff]
    %v1142 = vld [vmem:[#allocation8 + $0x1230] sm:$0xff]
    %v1143 = vld [vmem:[#allocation8 + $0x1238] sm:$0xff]
    %v1144 = vld [vmem:[#allocation8 + $0x1240] sm:$0xff]
    %v1145 = vld [vmem:[#allocation8 + $0x1248] sm:$0xff]
    %v1146 = vld [vmem:[#allocation8 + $0x1250] sm:$0xff]
    %v1147 = vld [vmem:[#allocation8 + $0x1258] sm:$0xff]
    %v1148 = vld [vmem:[#allocation8 + $0x1260] sm:$0xff]
    %v1149 = vld [vmem:[#allocation8 + $0x1268] sm:$0xff]
    %v1150 = vld [vmem:[#allocation8 + $0x1270] sm:$0xff]
    %v1151 = vld [vmem:[#allocation8 + $0x1278] sm:$0xff]
    %v1152 = vld [vmem:[#allocation8 + $0x1280] sm:$0xff]
    %v1153 = vld [vmem:[#allocation8 + $0x1288] sm:$0xff]
    %v1154 = vld [vmem:[#allocation8 + $0x1290] sm:$0xff]
    %v1155 = vld [vmem:[#allocation8 + $0x1298] sm:$0xff]
    %v1156 = vld [vmem:[#allocation8 + $0x12a0] sm:$0xff]
    %v1157 = vld [vmem:[#allocation8 + $0x12a8] sm:$0xff]
    %v1158 = vld [vmem:[#allocation8 + $0x12b0] sm:$0xff]
    %v1159 = vld [vmem:[#allocation8 + $0x12b8] sm:$0xff]
    %v1160 = vld [vmem:[#allocation8 + $0x12c0] sm:$0xff]
    %v1161 = vld [vmem:[#allocation8 + $0x12c8] sm:$0xff]
    %v1162 = vld [vmem:[#allocation8 + $0x12d0] sm:$0xff]
    %v1163 = vld [vmem:[#allocation8 + $0x12d8] sm:$0xff]
    %v1164 = vld [vmem:[#allocation8 + $0x12e0] sm:$0xff]
    %v1165 = vld [vmem:[#allocation8 + $0x12e8] sm:$0xff]
    %v1166 = vld [vmem:[#allocation8 + $0x12f0] sm:$0xff]
    %v1167 = vld [vmem:[#allocation8 + $0x12f8] sm:$0xff]
    %v1168 = vld [vmem:[#allocation8 + $0x1300] sm:$0xff]
    %v1169 = vld [vmem:[#allocation8 + $0x1308] sm:$0xff]
    %v1170 = vld [vmem:[#allocation8 + $0x1310] sm:$0xff]
    %v1171 = vld [vmem:[#allocation8 + $0x1318] sm:$0xff]
    %v1172 = vld [vmem:[#allocation8 + $0x1320] sm:$0xff]
    %v1173 = vld [vmem:[#allocation8 + $0x1328] sm:$0xff]
    %v1174 = vld [vmem:[#allocation8 + $0x1330] sm:$0xff]
    %v1175 = vld [vmem:[#allocation8 + $0x1338] sm:$0xff]
    %v1176 = vld [vmem:[#allocation8 + $0x1340] sm:$0xff]
    %v1177 = vld [vmem:[#allocation8 + $0x1348] sm:$0xff]
    %v1178 = vld [vmem:[#allocation8 + $0x1350] sm:$0xff]
    %v1179 = vld [vmem:[#allocation8 + $0x1358] sm:$0xff]
    %v1180 = vld [vmem:[#allocation8 + $0x1360] sm:$0xff]
    %v1181 = vld [vmem:[#allocation8 + $0x1368] sm:$0xff]
    %v1182 = vld [vmem:[#allocation8 + $0x1370] sm:$0xff]
    %v1183 = vld [vmem:[#allocation8 + $0x1378] sm:$0xff]
    %v1184 = vld [vmem:[#allocation8 + $0x1380] sm:$0xff]
    %v1185 = vld [vmem:[#allocation8 + $0x1388] sm:$0xff]
    %v1186 = vld [vmem:[#allocation8 + $0x1390] sm:$0xff]
    %v1187 = vld [vmem:[#allocation8 + $0x1398] sm:$0xff]
    %v1188 = vld [vmem:[#allocation8 + $0x13a0] sm:$0xff]
    %v1189 = vld [vmem:[#allocation8 + $0x13a8] sm:$0xff]
    %v1190 = vld [vmem:[#allocation8 + $0x13b0] sm:$0xff]
    %v1191 = vld [vmem:[#allocation8 + $0x13b8] sm:$0xff]
    %v1192 = vld [vmem:[#allocation8 + $0x13c0] sm:$0xff]
    %v1193 = vld [vmem:[#allocation8 + $0x13c8] sm:$0xff]
    %v1194 = vld [vmem:[#allocation8 + $0x13d0] sm:$0xff]
    %v1195 = vld [vmem:[#allocation8 + $0x13d8] sm:$0xff]
    %v1196 = vld [vmem:[#allocation8 + $0x13e0] sm:$0xff]
    %v1197 = vld [vmem:[#allocation8 + $0x13e8] sm:$0xff]
    %v1198 = vld [vmem:[#allocation8 + $0x13f0] sm:$0xff]
    %v1199 = vld [vmem:[#allocation8 + $0x13f8] sm:$0xff]
    %v1200 = vld [vmem:[#allocation8 + $0x1400] sm:$0xff]
    %v1201 = vld [vmem:[#allocation8 + $0x1408] sm:$0xff]
    %v1202 = vld [vmem:[#allocation8 + $0x1410] sm:$0xff]
    %v1203 = vld [vmem:[#allocation8 + $0x1418] sm:$0xff]
    %v1204 = vld [vmem:[#allocation8 + $0x1420] sm:$0xff]
    %v1205 = vld [vmem:[#allocation8 + $0x1428] sm:$0xff]
    %v1206 = vld [vmem:[#allocation8 + $0x1430] sm:$0xff]
    %v1207 = vld [vmem:[#allocation8 + $0x1438] sm:$0xff]
    %v1208 = vld [vmem:[#allocation8 + $0x1440] sm:$0xff]
    %v1209 = vld [vmem:[#allocation8 + $0x1448] sm:$0xff]
    %v1210 = vld [vmem:[#allocation8 + $0x1450] sm:$0xff]
    %v1211 = vld [vmem:[#allocation8 + $0x1458] sm:$0xff]
    %v1212 = vld [vmem:[#allocation8 + $0x1460] sm:$0xff]
    %v1213 = vld [vmem:[#allocation8 + $0x1468] sm:$0xff]
    %v1214 = vld [vmem:[#allocation8 + $0x1470] sm:$0xff]
    %v1215 = vld [vmem:[#allocation8 + $0x1478] sm:$0xff]
    %v1216 = vld [vmem:[#allocation8 + $0x1480] sm:$0xff]
    %v1217 = vld [vmem:[#allocation8 + $0x1488] sm:$0xff]
    %v1218 = vld [vmem:[#allocation8 + $0x1490] sm:$0xff]
    %v1219 = vld [vmem:[#allocation8 + $0x1498] sm:$0xff]
    %v1220 = vld [vmem:[#allocation8 + $0x14a0] sm:$0xff]
    %v1221 = vld [vmem:[#allocation8 + $0x14a8] sm:$0xff]
    %v1222 = vld [vmem:[#allocation8 + $0x14b0] sm:$0xff]
    %v1223 = vld [vmem:[#allocation8 + $0x14b8] sm:$0xff]
    %v1224 = vld [vmem:[#allocation8 + $0x14c0] sm:$0xff]
    %v1225 = vld [vmem:[#allocation8 + $0x14c8] sm:$0xff]
    %v1226 = vld [vmem:[#allocation8 + $0x14d0] sm:$0xff]
    %v1227 = vld [vmem:[#allocation8 + $0x14d8] sm:$0xff]
    %v1228 = vld [vmem:[#allocation8 + $0x14e0] sm:$0xff]
    %v1229 = vld [vmem:[#allocation8 + $0x14e8] sm:$0xff]
    %v1230 = vld [vmem:[#allocation8 + $0x14f0] sm:$0xff]
    %v1231 = vld [vmem:[#allocation8 + $0x14f8] sm:$0xff]
    %v1232 = vld [vmem:[#allocation8 + $0x1500] sm:$0xff]
    %v1233 = vld [vmem:[#allocation8 + $0x1508] sm:$0xff]
    %v1234 = vld [vmem:[#allocation8 + $0x1510] sm:$0xff]
    %v1235 = vld [vmem:[#allocation8 + $0x1518] sm:$0xff]
    %v1236 = vld [vmem:[#allocation8 + $0x1520] sm:$0xff]
    %v1237 = vld [vmem:[#allocation8 + $0x1528] sm:$0xff]
    %v1238 = vld [vmem:[#allocation8 + $0x1530] sm:$0xff]
    %v1239 = vld [vmem:[#allocation8 + $0x1538] sm:$0xff]
    %v1240 = vld [vmem:[#allocation8 + $0x1540] sm:$0xff]
    %v1241 = vld [vmem:[#allocation8 + $0x1548] sm:$0xff]
    %v1242 = vld [vmem:[#allocation8 + $0x1550] sm:$0xff]
    %v1243 = vld [vmem:[#allocation8 + $0x1558] sm:$0xff]
    %v1244 = vld [vmem:[#allocation8 + $0x1560] sm:$0xff]
    %v1245 = vld [vmem:[#allocation8 + $0x1568] sm:$0xff]
    %v1246 = vld [vmem:[#allocation8 + $0x1570] sm:$0xff]
    %v1247 = vld [vmem:[#allocation8 + $0x1578] sm:$0xff]
    %v1248 = vld [vmem:[#allocation8 + $0x1580] sm:$0xff]
    %v1249 = vld [vmem:[#allocation8 + $0x1588] sm:$0xff]
    %v1250 = vld [vmem:[#allocation8 + $0x1590] sm:$0xff]
    %v1251 = vld [vmem:[#allocation8 + $0x1598] sm:$0xff]
    %v1252 = vld [vmem:[#allocation8 + $0x15a0] sm:$0xff]
    %v1253 = vld [vmem:[#allocation8 + $0x15a8] sm:$0xff]
    %v1254 = vld [vmem:[#allocation8 + $0x15b0] sm:$0xff]
    %v1255 = vld [vmem:[#allocation8 + $0x15b8] sm:$0xff]
    %v1256 = vld [vmem:[#allocation8 + $0x15c0] sm:$0xff]
    %v1257 = vld [vmem:[#allocation8 + $0x15c8] sm:$0xff]
    %v1258 = vld [vmem:[#allocation8 + $0x15d0] sm:$0xff]
    %v1259 = vld [vmem:[#allocation8 + $0x15d8] sm:$0xff]
    %v1260 = vld [vmem:[#allocation8 + $0x15e0] sm:$0xff]
    %v1261 = vld [vmem:[#allocation8 + $0x15e8] sm:$0xff]
    %v1262 = vld [vmem:[#allocation8 + $0x15f0] sm:$0xff]
    %v1263 = vld [vmem:[#allocation8 + $0x15f8] sm:$0xff]
    %v1264 = vld [vmem:[#allocation8 + $0x1600] sm:$0xff]
    %v1265 = vld [vmem:[#allocation8 + $0x1608] sm:$0xff]
    %v1266 = vld [vmem:[#allocation8 + $0x1610] sm:$0xff]
    %v1267 = vld [vmem:[#allocation8 + $0x1618] sm:$0xff]
    %v1268 = vld [vmem:[#allocation8 + $0x1620] sm:$0xff]
    %v1269 = vld [vmem:[#allocation8 + $0x1628] sm:$0xff]
    %v1270 = vld [vmem:[#allocation8 + $0x1630] sm:$0xff]
    %v1271 = vld [vmem:[#allocation8 + $0x1638] sm:$0xff]
    %v1272 = vld [vmem:[#allocation8 + $0x1640] sm:$0xff]
    %v1273 = vld [vmem:[#allocation8 + $0x1648] sm:$0xff]
    %v1274 = vld [vmem:[#allocation8 + $0x1650] sm:$0xff]
    %v1275 = vld [vmem:[#allocation8 + $0x1658] sm:$0xff]
    %v1276 = vld [vmem:[#allocation8 + $0x1660] sm:$0xff]
    %v1277 = vld [vmem:[#allocation8 + $0x1668] sm:$0xff]
    %v1278 = vld [vmem:[#allocation8 + $0x1670] sm:$0xff]
    %v1279 = vld [vmem:[#allocation8 + $0x1678] sm:$0xff]
    %v1280 = vld [vmem:[#allocation8 + $0x1680] sm:$0xff]
    %v1281 = vld [vmem:[#allocation8 + $0x1688] sm:$0xff]
    %v1282 = vld [vmem:[#allocation8 + $0x1690] sm:$0xff]
    %v1283 = vld [vmem:[#allocation8 + $0x1698] sm:$0xff]
    %v1284 = vld [vmem:[#allocation8 + $0x16a0] sm:$0xff]
    %v1285 = vld [vmem:[#allocation8 + $0x16a8] sm:$0xff]
    %v1286 = vld [vmem:[#allocation8 + $0x16b0] sm:$0xff]
    %v1287 = vld [vmem:[#allocation8 + $0x16b8] sm:$0xff]
    %v1288 = vld [vmem:[#allocation8 + $0x16c0] sm:$0xff]
    %v1289 = vld [vmem:[#allocation8 + $0x16c8] sm:$0xff]
    %v1290 = vld [vmem:[#allocation8 + $0x16d0] sm:$0xff]
    %v1291 = vld [vmem:[#allocation8 + $0x16d8] sm:$0xff]
    %v1292 = vld [vmem:[#allocation8 + $0x16e0] sm:$0xff]
    %v1293 = vld [vmem:[#allocation8 + $0x16e8] sm:$0xff]
    %v1294 = vld [vmem:[#allocation8 + $0x16f0] sm:$0xff]
    %v1295 = vld [vmem:[#allocation8 + $0x16f8] sm:$0xff]
    %v1296 = vld [vmem:[#allocation8 + $0x1700] sm:$0xff]
    %v1297 = vld [vmem:[#allocation8 + $0x1708] sm:$0xff]
    %v1298 = vld [vmem:[#allocation8 + $0x1710] sm:$0xff]
    %v1299 = vld [vmem:[#allocation8 + $0x1718] sm:$0xff]
    %v1300 = vld [vmem:[#allocation8 + $0x1720] sm:$0xff]
    %v1301 = vld [vmem:[#allocation8 + $0x1728] sm:$0xff]
    %v1302 = vld [vmem:[#allocation8 + $0x1730] sm:$0xff]
    %v1303 = vld [vmem:[#allocation8 + $0x1738] sm:$0xff]
    %v1304 = vld [vmem:[#allocation8 + $0x1740] sm:$0xff]
    %v1305 = vld [vmem:[#allocation8 + $0x1748] sm:$0xff]
    %v1306 = vld [vmem:[#allocation8 + $0x1750] sm:$0xff]
    %v1307 = vld [vmem:[#allocation8 + $0x1758] sm:$0xff]
    %v1308 = vld [vmem:[#allocation8 + $0x1760] sm:$0xff]
    %v1309 = vld [vmem:[#allocation8 + $0x1768] sm:$0xff]
    %v1310 = vld [vmem:[#allocation8 + $0x1770] sm:$0xff]
    %v1311 = vld [vmem:[#allocation8 + $0x1778] sm:$0xff]
    %v1312 = vld [vmem:[#allocation8 + $0x1780] sm:$0xff]
    %v1313 = vld [vmem:[#allocation8 + $0x1788] sm:$0xff]
    %v1314 = vld [vmem:[#allocation8 + $0x1790] sm:$0xff]
    %v1315 = vld [vmem:[#allocation8 + $0x1798] sm:$0xff]
    %v1316 = vld [vmem:[#allocation8 + $0x17a0] sm:$0xff]
    %v1317 = vld [vmem:[#allocation8 + $0x17a8] sm:$0xff]
    %v1318 = vld [vmem:[#allocation8 + $0x17b0] sm:$0xff]
    %v1319 = vld [vmem:[#allocation8 + $0x17b8] sm:$0xff]
    %v1320 = vld [vmem:[#allocation8 + $0x17c0] sm:$0xff]
    %v1321 = vld [vmem:[#allocation8 + $0x17c8] sm:$0xff]
    %v1322 = vld [vmem:[#allocation8 + $0x17d0] sm:$0xff]
    %v1323 = vld [vmem:[#allocation8 + $0x17d8] sm:$0xff]
    %v1324 = vld [vmem:[#allocation8 + $0x17e0] sm:$0xff]
    %v1325 = vld [vmem:[#allocation8 + $0x17e8] sm:$0xff]
    %v1326 = vld [vmem:[#allocation8 + $0x17f0] sm:$0xff]
    %v1327 = vld [vmem:[#allocation8 + $0x17f8] sm:$0xff]
    %v1328 = vld [vmem:[#allocation8 + $0x1800] sm:$0xff]
    %v1329 = vld [vmem:[#allocation8 + $0x1808] sm:$0xff]
    %v1330 = vld [vmem:[#allocation8 + $0x1810] sm:$0xff]
    %v1331 = vld [vmem:[#allocation8 + $0x1818] sm:$0xff]
    %v1332 = vld [vmem:[#allocation8 + $0x1820] sm:$0xff]
    %v1333 = vld [vmem:[#allocation8 + $0x1828] sm:$0xff]
    %v1334 = vld [vmem:[#allocation8 + $0x1830] sm:$0xff]
    %v1335 = vld [vmem:[#allocation8 + $0x1838] sm:$0xff]
    %v1336 = vld [vmem:[#allocation8 + $0x1840] sm:$0xff]
    %v1337 = vld [vmem:[#allocation8 + $0x1848] sm:$0xff]
    %v1338 = vld [vmem:[#allocation8 + $0x1850] sm:$0xff]
    %v1339 = vld [vmem:[#allocation8 + $0x1858] sm:$0xff]
    %v1340 = vld [vmem:[#allocation8 + $0x1860] sm:$0xff]
    %v1341 = vld [vmem:[#allocation8 + $0x1868] sm:$0xff]
    %v1342 = vld [vmem:[#allocation8 + $0x1870] sm:$0xff]
    %v1343 = vld [vmem:[#allocation8 + $0x1878] sm:$0xff]
    %v1344 = vld [vmem:[#allocation8 + $0x1880] sm:$0xff]
    %v1345 = vld [vmem:[#allocation8 + $0x1888] sm:$0xff]
    %v1346 = vld [vmem:[#allocation8 + $0x1890] sm:$0xff]
    %v1347 = vld [vmem:[#allocation8 + $0x1898] sm:$0xff]
    %v1348 = vld [vmem:[#allocation8 + $0x18a0] sm:$0xff]
    %v1349 = vld [vmem:[#allocation8 + $0x18a8] sm:$0xff]
    %v1350 = vld [vmem:[#allocation8 + $0x18b0] sm:$0xff]
    %v1351 = vld [vmem:[#allocation8 + $0x18b8] sm:$0xff]
    %v1352 = vld [vmem:[#allocation8 + $0x18c0] sm:$0xff]
    %v1353 = vld [vmem:[#allocation8 + $0x18c8] sm:$0xff]
    %v1354 = vld [vmem:[#allocation8 + $0x18d0] sm:$0xff]
    %v1355 = vld [vmem:[#allocation8 + $0x18d8] sm:$0xff]
    %v1356 = vld [vmem:[#allocation8 + $0x18e0] sm:$0xff]
    %v1357 = vld [vmem:[#allocation8 + $0x18e8] sm:$0xff]
    %v1358 = vld [vmem:[#allocation8 + $0x18f0] sm:$0xff]
    %v1359 = vld [vmem:[#allocation8 + $0x18f8] sm:$0xff]
    %v1360 = vld [vmem:[#allocation8 + $0x1900] sm:$0xff]
    %v1361 = vld [vmem:[#allocation8 + $0x1908] sm:$0xff]
    %v1362 = vld [vmem:[#allocation8 + $0x1910] sm:$0xff]
    %v1363 = vld [vmem:[#allocation8 + $0x1918] sm:$0xff]
    %v1364 = vld [vmem:[#allocation8 + $0x1920] sm:$0xff]
    %v1365 = vld [vmem:[#allocation8 + $0x1928] sm:$0xff]
    %v1366 = vld [vmem:[#allocation8 + $0x1930] sm:$0xff]
    %v1367 = vld [vmem:[#allocation8 + $0x1938] sm:$0xff]
    %v1368 = vld [vmem:[#allocation8 + $0x1940] sm:$0xff]
    %v1369 = vld [vmem:[#allocation8 + $0x1948] sm:$0xff]
    %v1370 = vld [vmem:[#allocation8 + $0x1950] sm:$0xff]
    %v1371 = vld [vmem:[#allocation8 + $0x1958] sm:$0xff]
    %v1372 = vld [vmem:[#allocation8 + $0x1960] sm:$0xff]
    %v1373 = vld [vmem:[#allocation8 + $0x1968] sm:$0xff]
    %v1374 = vld [vmem:[#allocation8 + $0x1970] sm:$0xff]
    %v1375 = vld [vmem:[#allocation8 + $0x1978] sm:$0xff]
    %v1376 = vld [vmem:[#allocation8 + $0x1980] sm:$0xff]
    %v1377 = vld [vmem:[#allocation8 + $0x1988] sm:$0xff]
    %v1378 = vld [vmem:[#allocation8 + $0x1990] sm:$0xff]
    %v1379 = vld [vmem:[#allocation8 + $0x1998] sm:$0xff]
    %v1380 = vld [vmem:[#allocation8 + $0x19a0] sm:$0xff]
    %v1381 = vld [vmem:[#allocation8 + $0x19a8] sm:$0xff]
    %v1382 = vld [vmem:[#allocation8 + $0x19b0] sm:$0xff]
    %v1383 = vld [vmem:[#allocation8 + $0x19b8] sm:$0xff]
    %v1384 = vld [vmem:[#allocation8 + $0x19c0] sm:$0xff]
    %v1385 = vld [vmem:[#allocation8 + $0x19c8] sm:$0xff]
    %v1386 = vld [vmem:[#allocation8 + $0x19d0] sm:$0xff]
    %v1387 = vld [vmem:[#allocation8 + $0x19d8] sm:$0xff]
    %v1388 = vld [vmem:[#allocation8 + $0x19e0] sm:$0xff]
    %v1389 = vld [vmem:[#allocation8 + $0x19e8] sm:$0xff]
    %v1390 = vld [vmem:[#allocation8 + $0x19f0] sm:$0xff]
    %v1391 = vld [vmem:[#allocation8 + $0x19f8] sm:$0xff]
    %v1392 = vld [vmem:[#allocation8 + $0x1a00] sm:$0xff]
    %v1393 = vld [vmem:[#allocation8 + $0x1a08] sm:$0xff]
    %v1394 = vld [vmem:[#allocation8 + $0x1a10] sm:$0xff]
    %v1395 = vld [vmem:[#allocation8 + $0x1a18] sm:$0xff]
    %v1396 = vld [vmem:[#allocation8 + $0x1a20] sm:$0xff]
    %v1397 = vld [vmem:[#allocation8 + $0x1a28] sm:$0xff]
    %v1398 = vld [vmem:[#allocation8 + $0x1a30] sm:$0xff]
    %v1399 = vld [vmem:[#allocation8 + $0x1a38] sm:$0xff]
    %v1400 = vld [vmem:[#allocation8 + $0x1a40] sm:$0xff]
    %v1401 = vld [vmem:[#allocation8 + $0x1a48] sm:$0xff]
    %v1402 = vld [vmem:[#allocation8 + $0x1a50] sm:$0xff]
    %v1403 = vld [vmem:[#allocation8 + $0x1a58] sm:$0xff]
    %v1404 = vld [vmem:[#allocation8 + $0x1a60] sm:$0xff]
    %v1405 = vld [vmem:[#allocation8 + $0x1a68] sm:$0xff]
    %v1406 = vld [vmem:[#allocation8 + $0x1a70] sm:$0xff]
    %v1407 = vld [vmem:[#allocation8 + $0x1a78] sm:$0xff]
    %v1408 = vld [vmem:[#allocation8 + $0x1a80] sm:$0xff]
    %v1409 = vld [vmem:[#allocation8 + $0x1a88] sm:$0xff]
    %v1410 = vld [vmem:[#allocation8 + $0x1a90] sm:$0xff]
    %v1411 = vld [vmem:[#allocation8 + $0x1a98] sm:$0xff]
    %v1412 = vld [vmem:[#allocation8 + $0x1aa0] sm:$0xff]
    %v1413 = vld [vmem:[#allocation8 + $0x1aa8] sm:$0xff]
    %v1414 = vld [vmem:[#allocation8 + $0x1ab0] sm:$0xff]
    %v1415 = vld [vmem:[#allocation8 + $0x1ab8] sm:$0xff]
    %v1416 = vld [vmem:[#allocation8 + $0x1ac0] sm:$0xff]
    %v1417 = vld [vmem:[#allocation8 + $0x1ac8] sm:$0xff]
    %v1418 = vld [vmem:[#allocation8 + $0x1ad0] sm:$0xff]
    %v1419 = vld [vmem:[#allocation8 + $0x1ad8] sm:$0xff]
    %v1420 = vld [vmem:[#allocation8 + $0x1ae0] sm:$0xff]
    %v1421 = vld [vmem:[#allocation8 + $0x1ae8] sm:$0xff]
    %v1422 = vld [vmem:[#allocation8 + $0x1af0] sm:$0xff]
    %v1423 = vld [vmem:[#allocation8 + $0x1af8] sm:$0xff]
    %v1424 = vld [vmem:[#allocation8 + $0x1b00] sm:$0xff]
    %v1425 = vld [vmem:[#allocation8 + $0x1b08] sm:$0xff]
    %v1426 = vld [vmem:[#allocation8 + $0x1b10] sm:$0xff]
    %v1427 = vld [vmem:[#allocation8 + $0x1b18] sm:$0xff]
    %v1428 = vld [vmem:[#allocation8 + $0x1b20] sm:$0xff]
    %v1429 = vld [vmem:[#allocation8 + $0x1b28] sm:$0xff]
    %v1430 = vld [vmem:[#allocation8 + $0x1b30] sm:$0xff]
    %v1431 = vld [vmem:[#allocation8 + $0x1b38] sm:$0xff]
    %v1432 = vld [vmem:[#allocation8 + $0x1b40] sm:$0xff]
    %v1433 = vld [vmem:[#allocation8 + $0x1b48] sm:$0xff]
    %v1434 = vld [vmem:[#allocation8 + $0x1b50] sm:$0xff]
    %v1435 = vld [vmem:[#allocation8 + $0x1b58] sm:$0xff]
    %v1436 = vld [vmem:[#allocation8 + $0x1b60] sm:$0xff]
    %v1437 = vld [vmem:[#allocation8 + $0x1b68] sm:$0xff]
    %v1438 = vld [vmem:[#allocation8 + $0x1b70] sm:$0xff]
    %v1439 = vld [vmem:[#allocation8 + $0x1b78] sm:$0xff]
    %v1440 = vld [vmem:[#allocation8 + $0x1b80] sm:$0xff]
    %v1441 = vld [vmem:[#allocation8 + $0x1b88] sm:$0xff]
    %v1442 = vld [vmem:[#allocation8 + $0x1b90] sm:$0xff]
    %v1443 = vld [vmem:[#allocation8 + $0x1b98] sm:$0xff]
    %v1444 = vld [vmem:[#allocation8 + $0x1ba0] sm:$0xff]
    %v1445 = vld [vmem:[#allocation8 + $0x1ba8] sm:$0xff]
    %v1446 = vld [vmem:[#allocation8 + $0x1bb0] sm:$0xff]
    %v1447 = vld [vmem:[#allocation8 + $0x1bb8] sm:$0xff]
    %v1448 = vld [vmem:[#allocation8 + $0x1bc0] sm:$0xff]
    %v1449 = vld [vmem:[#allocation8 + $0x1bc8] sm:$0xff]
    %v1450 = vld [vmem:[#allocation8 + $0x1bd0] sm:$0xff]
    %v1451 = vld [vmem:[#allocation8 + $0x1bd8] sm:$0xff]
    %v1452 = vld [vmem:[#allocation8 + $0x1be0] sm:$0xff]
    %v1453 = vld [vmem:[#allocation8 + $0x1be8] sm:$0xff]
    %v1454 = vld [vmem:[#allocation8 + $0x1bf0] sm:$0xff]
    %v1455 = vld [vmem:[#allocation8 + $0x1bf8] sm:$0xff]
    %v1456 = vld [vmem:[#allocation8 + $0x1c00] sm:$0xff]
    %v1457 = vld [vmem:[#allocation8 + $0x1c08] sm:$0xff]
    %v1458 = vld [vmem:[#allocation8 + $0x1c10] sm:$0xff]
    %v1459 = vld [vmem:[#allocation8 + $0x1c18] sm:$0xff]
    %v1460 = vld [vmem:[#allocation8 + $0x1c20] sm:$0xff]
    %v1461 = vld [vmem:[#allocation8 + $0x1c28] sm:$0xff]
    %v1462 = vld [vmem:[#allocation8 + $0x1c30] sm:$0xff]
    %v1463 = vld [vmem:[#allocation8 + $0x1c38] sm:$0xff]
    %v1464 = vld [vmem:[#allocation8 + $0x1c40] sm:$0xff]
    %v1465 = vld [vmem:[#allocation8 + $0x1c48] sm:$0xff]
    %v1466 = vld [vmem:[#allocation8 + $0x1c50] sm:$0xff]
    %v1467 = vld [vmem:[#allocation8 + $0x1c58] sm:$0xff]
    %v1468 = vld [vmem:[#allocation8 + $0x1c60] sm:$0xff]
    %v1469 = vld [vmem:[#allocation8 + $0x1c68] sm:$0xff]
    %v1470 = vld [vmem:[#allocation8 + $0x1c70] sm:$0xff]
    %v1471 = vld [vmem:[#allocation8 + $0x1c78] sm:$0xff]
    %v1472 = vld [vmem:[#allocation8 + $0x1c80] sm:$0xff]
    %v1473 = vld [vmem:[#allocation8 + $0x1c88] sm:$0xff]
    %v1474 = vld [vmem:[#allocation8 + $0x1c90] sm:$0xff]
    %v1475 = vld [vmem:[#allocation8 + $0x1c98] sm:$0xff]
    %v1476 = vld [vmem:[#allocation8 + $0x1ca0] sm:$0xff]
    %v1477 = vld [vmem:[#allocation8 + $0x1ca8] sm:$0xff]
    %v1478 = vld [vmem:[#allocation8 + $0x1cb0] sm:$0xff]
    %v1479 = vld [vmem:[#allocation8 + $0x1cb8] sm:$0xff]
    %v1480 = vld [vmem:[#allocation8 + $0x1cc0] sm:$0xff]
    %v1481 = vld [vmem:[#allocation8 + $0x1cc8] sm:$0xff]
    %v1482 = vld [vmem:[#allocation8 + $0x1cd0] sm:$0xff]
    %v1483 = vld [vmem:[#allocation8 + $0x1cd8] sm:$0xff]
    %v1484 = vld [vmem:[#allocation8 + $0x1ce0] sm:$0xff]
    %v1485 = vld [vmem:[#allocation8 + $0x1ce8] sm:$0xff]
    %v1486 = vld [vmem:[#allocation8 + $0x1cf0] sm:$0xff]
    %v1487 = vld [vmem:[#allocation8 + $0x1cf8] sm:$0xff]
    %v1488 = vld [vmem:[#allocation8 + $0x1d00] sm:$0xff]
    %v1489 = vld [vmem:[#allocation8 + $0x1d08] sm:$0xff]
    %v1490 = vld [vmem:[#allocation8 + $0x1d10] sm:$0xff]
    %v1491 = vld [vmem:[#allocation8 + $0x1d18] sm:$0xff]
    %v1492 = vld [vmem:[#allocation8 + $0x1d20] sm:$0xff]
    %v1493 = vld [vmem:[#allocation8 + $0x1d28] sm:$0xff]
    %v1494 = vld [vmem:[#allocation8 + $0x1d30] sm:$0xff]
    %v1495 = vld [vmem:[#allocation8 + $0x1d38] sm:$0xff]
    %v1496 = vld [vmem:[#allocation8 + $0x1d40] sm:$0xff]
    %v1497 = vld [vmem:[#allocation8 + $0x1d48] sm:$0xff]
    %v1498 = vld [vmem:[#allocation8 + $0x1d50] sm:$0xff]
    %v1499 = vld [vmem:[#allocation8 + $0x1d58] sm:$0xff]
    %v1500 = vld [vmem:[#allocation8 + $0x1d60] sm:$0xff]
    %v1501 = vld [vmem:[#allocation8 + $0x1d68] sm:$0xff]
    %v1502 = vld [vmem:[#allocation8 + $0x1d70] sm:$0xff]
    %v1503 = vld [vmem:[#allocation8 + $0x1d78] sm:$0xff]
    %v1504 = vld [vmem:[#allocation8 + $0x1d80] sm:$0xff]
    %v1505 = vld [vmem:[#allocation8 + $0x1d88] sm:$0xff]
    %v1506 = vld [vmem:[#allocation8 + $0x1d90] sm:$0xff]
    %v1507 = vld [vmem:[#allocation8 + $0x1d98] sm:$0xff]
    %v1508 = vld [vmem:[#allocation8 + $0x1da0] sm:$0xff]
    %v1509 = vld [vmem:[#allocation8 + $0x1da8] sm:$0xff]
    %v1510 = vld [vmem:[#allocation8 + $0x1db0] sm:$0xff]
    %v1511 = vld [vmem:[#allocation8 + $0x1db8] sm:$0xff]
    %v1512 = vld [vmem:[#allocation8 + $0x1dc0] sm:$0xff]
    %v1513 = vld [vmem:[#allocation8 + $0x1dc8] sm:$0xff]
    %v1514 = vld [vmem:[#allocation8 + $0x1dd0] sm:$0xff]
    %v1515 = vld [vmem:[#allocation8 + $0x1dd8] sm:$0xff]
    %v1516 = vld [vmem:[#allocation8 + $0x1de0] sm:$0xff]
    %v1517 = vld [vmem:[#allocation8 + $0x1de8] sm:$0xff]
    %v1518 = vld [vmem:[#allocation8 + $0x1df0] sm:$0xff]
    %v1519 = vld [vmem:[#allocation8 + $0x1df8] sm:$0xff]
    %v1520 = vld [vmem:[#allocation8 + $0x1e00] sm:$0xff]
    %v1521 = vld [vmem:[#allocation8 + $0x1e08] sm:$0xff]
    %v1522 = vld [vmem:[#allocation8 + $0x1e10] sm:$0xff]
    %v1523 = vld [vmem:[#allocation8 + $0x1e18] sm:$0xff]
    %v1524 = vld [vmem:[#allocation8 + $0x1e20] sm:$0xff]
    %v1525 = vld [vmem:[#allocation8 + $0x1e28] sm:$0xff]
    %v1526 = vld [vmem:[#allocation8 + $0x1e30] sm:$0xff]
    %v1527 = vld [vmem:[#allocation8 + $0x1e38] sm:$0xff]
    %v1528 = vld [vmem:[#allocation8 + $0x1e40] sm:$0xff]
    %v1529 = vld [vmem:[#allocation8 + $0x1e48] sm:$0xff]
    %v1530 = vld [vmem:[#allocation8 + $0x1e50] sm:$0xff]
    %v1531 = vld [vmem:[#allocation8 + $0x1e58] sm:$0xff]
    %v1532 = vld [vmem:[#allocation8 + $0x1e60] sm:$0xff]
    %v1533 = vld [vmem:[#allocation8 + $0x1e68] sm:$0xff]
    %v1534 = vld [vmem:[#allocation8 + $0x1e70] sm:$0xff]
    %v1535 = vld [vmem:[#allocation8 + $0x1e78] sm:$0xff]
    %v1536 = vld [vmem:[#allocation8 + $0x1e80] sm:$0xff]
    %v1537 = vld [vmem:[#allocation8 + $0x1e88] sm:$0xff]
    %v1538 = vld [vmem:[#allocation8 + $0x1e90] sm:$0xff]
    %v1539 = vld [vmem:[#allocation8 + $0x1e98] sm:$0xff]
    %v1540 = vld [vmem:[#allocation8 + $0x1ea0] sm:$0xff]
    %v1541 = vld [vmem:[#allocation8 + $0x1ea8] sm:$0xff]
    %v1542 = vld [vmem:[#allocation8 + $0x1eb0] sm:$0xff]
    %v1543 = vld [vmem:[#allocation8 + $0x1eb8] sm:$0xff]
    %v1544 = vld [vmem:[#allocation8 + $0x1ec0] sm:$0xff]
    %v1545 = vld [vmem:[#allocation8 + $0x1ec8] sm:$0xff]
    %v1546 = vld [vmem:[#allocation8 + $0x1ed0] sm:$0xff]
    %v1547 = vld [vmem:[#allocation8 + $0x1ed8] sm:$0xff]
    %v1548 = vld [vmem:[#allocation8 + $0x1ee0] sm:$0xff]
    %v1549 = vld [vmem:[#allocation8 + $0x1ee8] sm:$0xff]
    %v1550 = vld [vmem:[#allocation8 + $0x1ef0] sm:$0xff]
    %v1551 = vld [vmem:[#allocation8 + $0x1ef8] sm:$0xff]
    %v1552 = vld [vmem:[#allocation8 + $0x1f00] sm:$0xff]
    %v1553 = vld [vmem:[#allocation8 + $0x1f08] sm:$0xff]
    %v1554 = vld [vmem:[#allocation8 + $0x1f10] sm:$0xff]
    %v1555 = vld [vmem:[#allocation8 + $0x1f18] sm:$0xff]
    %v1556 = vld [vmem:[#allocation8 + $0x1f20] sm:$0xff]
    %v1557 = vld [vmem:[#allocation8 + $0x1f28] sm:$0xff]
    %v1558 = vld [vmem:[#allocation8 + $0x1f30] sm:$0xff]
    %v1559 = vld [vmem:[#allocation8 + $0x1f38] sm:$0xff]
    %v1560 = vld [vmem:[#allocation8 + $0x1f40] sm:$0xff]
    %v1561 = vld [vmem:[#allocation8 + $0x1f48] sm:$0xff]
    %v1562 = vld [vmem:[#allocation8 + $0x1f50] sm:$0xff]
    %v1563 = vld [vmem:[#allocation8 + $0x1f58] sm:$0xff]
    %v1564 = vld [vmem:[#allocation8 + $0x1f60] sm:$0xff]
    %v1565 = vld [vmem:[#allocation8 + $0x1f68] sm:$0xff]
    %v1566 = vld [vmem:[#allocation8 + $0x1f70] sm:$0xff]
    %v1567 = vld [vmem:[#allocation8 + $0x1f78] sm:$0xff]
    %v1568 = vld [vmem:[#allocation8 + $0x1f80] sm:$0xff]
    %v1569 = vld [vmem:[#allocation8 + $0x1f88] sm:$0xff]
    %v1570 = vld [vmem:[#allocation8 + $0x1f90] sm:$0xff]
    %v1571 = vld [vmem:[#allocation8 + $0x1f98] sm:$0xff]
    %v1572 = vld [vmem:[#allocation8 + $0x1fa0] sm:$0xff]
    %v1573 = vld [vmem:[#allocation8 + $0x1fa8] sm:$0xff]
    %v1574 = vld [vmem:[#allocation8 + $0x1fb0] sm:$0xff]
    %v1575 = vld [vmem:[#allocation8 + $0x1fb8] sm:$0xff]
    %v1576 = vld [vmem:[#allocation8 + $0x1fc0] sm:$0xff]
    %v1577 = vld [vmem:[#allocation8 + $0x1fc8] sm:$0xff]
    %v1578 = vld [vmem:[#allocation8 + $0x1fd0] sm:$0xff]
    %v1579 = vld [vmem:[#allocation8 + $0x1fd8] sm:$0xff]
    %v1580 = vld [vmem:[#allocation8 + $0x1fe0] sm:$0xff]
    %v1581 = vld [vmem:[#allocation8 + $0x1fe8] sm:$0xff]
    %v1582 = vld [vmem:[#allocation8 + $0x1ff0] sm:$0xff]
    %v1583 = vld [vmem:[#allocation8 + $0x1ff8] sm:$0xff]
    %1584 = vmatprep.subr.mxu0 %v591
    %1585 = vmatpush1.msra.mxu0 %v590
    %1586 = vmatprep.subr.mxu0 %v589
    %1587 = vmatpush1.msra.mxu0 %v588
    %1588 = vmatprep.subr.mxu0 %v587
    %1589 = vmatpush1.msra.mxu0 %v586
    %1590 = vmatprep.subr.mxu0 %v585
    %1591 = vmatpush1.msra.mxu0 %v584
    %1592 = vmatprep.subr.mxu0 %v583
    %1593 = vmatpush1.msra.mxu0 %v582
    %1594 = vmatprep.subr.mxu0 %v581
    %1595 = vmatpush1.msra.mxu0 %v580
    %1596 = vmatprep.subr.mxu0 %v579
    %1597 = vmatpush1.msra.mxu0 %v578
    %1598 = vmatprep.subr.mxu0 %v577
    %1599 = vmatpush1.msra.mxu0 %v576
    %1600 = vmatprep.subr.mxu0 %v575
    %1601 = vmatpush1.msra.mxu0 %v574
    %1602 = vmatprep.subr.mxu0 %v573
    %1603 = vmatpush1.msra.mxu0 %v572
    %1604 = vmatprep.subr.mxu0 %v571
    %1605 = vmatpush1.msra.mxu0 %v570
    %1606 = vmatprep.subr.mxu0 %v569
    %1607 = vmatpush1.msra.mxu0 %v568
    %1608 = vmatprep.subr.mxu0 %v567
    %1609 = vmatpush1.msra.mxu0 %v566
    %1610 = vmatprep.subr.mxu0 %v565
    %1611 = vmatpush1.msra.mxu0 %v564
    %1612 = vmatprep.subr.mxu0 %v563
    %1613 = vmatpush1.msra.mxu0 %v562
    %1614 = vmatprep.subr.mxu0 %v561
    %1615 = vmatpush1.msra.mxu0 %v560
    %1616 = vmatprep.subr.mxu0 %v623
    %1617 = vmatpush2.msra.mxu0 %v622
    %1618 = vmatprep.subr.mxu0 %v621
    %1619 = vmatpush2.msra.mxu0 %v620
    %1620 = vmatprep.subr.mxu0 %v619
    %1621 = vmatpush2.msra.mxu0 %v618
    %1622 = vmatprep.subr.mxu0 %v617
    %1623 = vmatpush2.msra.mxu0 %v616
    %1624 = vmatprep.subr.mxu0 %v615
    %1625 = vmatpush2.msra.mxu0 %v614
    %1626 = vmatprep.subr.mxu0 %v613
    %1627 = vmatpush2.msra.mxu0 %v612
    %1628 = vmatprep.subr.mxu0 %v611
    %1629 = vmatpush2.msra.mxu0 %v610
    %1630 = vmatprep.subr.mxu0 %v609
    %1631 = vmatpush2.msra.mxu0 %v608
    %1632 = vmatprep.subr.mxu0 %v607
    %1633 = vmatpush2.msra.mxu0 %v606
    %1634 = vmatprep.subr.mxu0 %v605
    %1635 = vmatpush2.msra.mxu0 %v604
    %1636 = vmatprep.subr.mxu0 %v603
    %1637 = vmatpush2.msra.mxu0 %v602
    %1638 = vmatprep.subr.mxu0 %v601
    %1639 = vmatpush2.msra.mxu0 %v600
    %1640 = vmatprep.subr.mxu0 %v599
    %1641 = vmatpush2.msra.mxu0 %v598
    %1642 = vmatprep.subr.mxu0 %v597
    %1643 = vmatpush2.msra.mxu0 %v596
    %1644 = vmatprep.subr.mxu0 %v595
    %1645 = vmatpush2.msra.mxu0 %v594
    %1646 = vmatprep.subr.mxu0 %v593
    %1647 = vmatpush2.msra.mxu0 %v592
    %1648 = vmatprep.mubr.f32.mxu0 %v464
    %1649 = vmatmul.mubr.f32.gmra.mxu0 %v328
    %v1650 = vpop.f32.mrf.mxu0
    %v1651 = vadd.f32 0.0, %v1650
    %v1652 = vpop.f32.mrf.mxu0
    %v1653 = vadd.f32 0.0, %v1652
    %1654 = vdwg.mxu0
    %1655 = vmatprep.subr.mxu0 %v655
    %1656 = vmatpush1.msra.mxu0 %v654
    %1657 = vmatprep.subr.mxu0 %v653
    %1658 = vmatpush1.msra.mxu0 %v652
    %1659 = vmatprep.subr.mxu0 %v651
    %1660 = vmatpush1.msra.mxu0 %v650
    %1661 = vmatprep.subr.mxu0 %v649
    %1662 = vmatpush1.msra.mxu0 %v648
    %1663 = vmatprep.subr.mxu0 %v647
    %1664 = vmatpush1.msra.mxu0 %v646
    %1665 = vmatprep.subr.mxu0 %v645
    %1666 = vmatpush1.msra.mxu0 %v644
    %1667 = vmatprep.subr.mxu0 %v643
    %1668 = vmatpush1.msra.mxu0 %v642
    %1669 = vmatprep.subr.mxu0 %v641
    %1670 = vmatpush1.msra.mxu0 %v640
    %1671 = vmatprep.subr.mxu0 %v639
    %1672 = vmatpush1.msra.mxu0 %v638
    %1673 = vmatprep.subr.mxu0 %v637
    %1674 = vmatpush1.msra.mxu0 %v636
    %1675 = vmatprep.subr.mxu0 %v635
    %1676 = vmatpush1.msra.mxu0 %v634
    %1677 = vmatprep.subr.mxu0 %v633
    %1678 = vmatpush1.msra.mxu0 %v632
    %1679 = vmatprep.subr.mxu0 %v631
    %1680 = vmatpush1.msra.mxu0 %v630
    %1681 = vmatprep.subr.mxu0 %v629
    %1682 = vmatpush1.msra.mxu0 %v628
    %1683 = vmatprep.subr.mxu0 %v627
    %1684 = vmatpush1.msra.mxu0 %v626
    %1685 = vmatprep.subr.mxu0 %v625
    %1686 = vmatpush1.msra.mxu0 %v624
    %1687 = vmatprep.subr.mxu0 %v687
    %1688 = vmatpush2.msra.mxu0 %v686
    %1689 = vmatprep.subr.mxu0 %v685
    %1690 = vmatpush2.msra.mxu0 %v684
    %1691 = vmatprep.subr.mxu0 %v683
    %1692 = vmatpush2.msra.mxu0 %v682
    %1693 = vmatprep.subr.mxu0 %v681
    %1694 = vmatpush2.msra.mxu0 %v680
    %1695 = vmatprep.subr.mxu0 %v679
    %1696 = vmatpush2.msra.mxu0 %v678
    %1697 = vmatprep.subr.mxu0 %v677
    %1698 = vmatpush2.msra.mxu0 %v676
    %1699 = vmatprep.subr.mxu0 %v675
    %1700 = vmatpush2.msra.mxu0 %v674
    %1701 = vmatprep.subr.mxu0 %v673
    %1702 = vmatpush2.msra.mxu0 %v672
    %1703 = vmatprep.subr.mxu0 %v671
    %1704 = vmatpush2.msra.mxu0 %v670
    %1705 = vmatprep.subr.mxu0 %v669
    %1706 = vmatpush2.msra.mxu0 %v668
    %1707 = vmatprep.subr.mxu0 %v667
    %1708 = vmatpush2.msra.mxu0 %v666
    %1709 = vmatprep.subr.mxu0 %v665
    %1710 = vmatpush2.msra.mxu0 %v664
    %1711 = vmatprep.subr.mxu0 %v663
    %1712 = vmatpush2.msra.mxu0 %v662
    %1713 = vmatprep.subr.mxu0 %v661
    %1714 = vmatpush2.msra.mxu0 %v660
    %1715 = vmatprep.subr.mxu0 %v659
    %1716 = vmatpush2.msra.mxu0 %v658
    %1717 = vmatprep.subr.mxu0 %v657
    %1718 = vmatpush2.msra.mxu0 %v656
    %1719 = vmatprep.mubr.f32.mxu0 %v488
    %1720 = vmatmul.mubr.f32.gmra.mxu0 %v352
    %v1721 = vpop.f32.mrf.mxu0
    %v1722 = vadd.f32 0.0, %v1721
    %v1723 = vpop.f32.mrf.mxu0
    %v1724 = vadd.f32 0.0, %v1723
    %1725 = vdwg.mxu0
    %1726 = vmatprep.subr.mxu0 %v719
    %1727 = vmatpush1.msra.mxu0 %v718
    %1728 = vmatprep.subr.mxu0 %v717
    %1729 = vmatpush1.msra.mxu0 %v716
    %1730 = vmatprep.subr.mxu0 %v715
    %1731 = vmatpush1.msra.mxu0 %v714
    %1732 = vmatprep.subr.mxu0 %v713
    %1733 = vmatpush1.msra.mxu0 %v712
    %1734 = vmatprep.subr.mxu0 %v711
    %1735 = vmatpush1.msra.mxu0 %v710
    %1736 = vmatprep.subr.mxu0 %v709
    %1737 = vmatpush1.msra.mxu0 %v708
    %1738 = vmatprep.subr.mxu0 %v707
    %1739 = vmatpush1.msra.mxu0 %v706
    %1740 = vmatprep.subr.mxu0 %v705
    %1741 = vmatpush1.msra.mxu0 %v704
    %1742 = vmatprep.subr.mxu0 %v703
    %1743 = vmatpush1.msra.mxu0 %v702
    %1744 = vmatprep.subr.mxu0 %v701
    %1745 = vmatpush1.msra.mxu0 %v700
    %1746 = vmatprep.subr.mxu0 %v699
    %1747 = vmatpush1.msra.mxu0 %v698
    %1748 = vmatprep.subr.mxu0 %v697
    %1749 = vmatpush1.msra.mxu0 %v696
    %1750 = vmatprep.subr.mxu0 %v695
    %1751 = vmatpush1.msra.mxu0 %v694
    %1752 = vmatprep.subr.mxu0 %v693
    %1753 = vmatpush1.msra.mxu0 %v692
    %1754 = vmatprep.subr.mxu0 %v691
    %1755 = vmatpush1.msra.mxu0 %v690
    %1756 = vmatprep.subr.mxu0 %v689
    %1757 = vmatpush1.msra.mxu0 %v688
    %1758 = vmatprep.subr.mxu0 %v751
    %1759 = vmatpush2.msra.mxu0 %v750
    %1760 = vmatprep.subr.mxu0 %v749
    %1761 = vmatpush2.msra.mxu0 %v748
    %1762 = vmatprep.subr.mxu0 %v747
    %1763 = vmatpush2.msra.mxu0 %v746
    %1764 = vmatprep.subr.mxu0 %v745
    %1765 = vmatpush2.msra.mxu0 %v744
    %1766 = vmatprep.subr.mxu0 %v743
    %1767 = vmatpush2.msra.mxu0 %v742
    %1768 = vmatprep.subr.mxu0 %v741
    %1769 = vmatpush2.msra.mxu0 %v740
    %1770 = vmatprep.subr.mxu0 %v739
    %1771 = vmatpush2.msra.mxu0 %v738
    %1772 = vmatprep.subr.mxu0 %v737
    %1773 = vmatpush2.msra.mxu0 %v736
    %1774 = vmatprep.subr.mxu0 %v735
    %1775 = vmatpush2.msra.mxu0 %v734
    %1776 = vmatprep.subr.mxu0 %v733
    %1777 = vmatpush2.msra.mxu0 %v732
    %1778 = vmatprep.subr.mxu0 %v731
    %1779 = vmatpush2.msra.mxu0 %v730
    %1780 = vmatprep.subr.mxu0 %v729
    %1781 = vmatpush2.msra.mxu0 %v728
    %1782 = vmatprep.subr.mxu0 %v727
    %1783 = vmatpush2.msra.mxu0 %v726
    %1784 = vmatprep.subr.mxu0 %v725
    %1785 = vmatpush2.msra.mxu0 %v724
    %1786 = vmatprep.subr.mxu0 %v723
    %1787 = vmatpush2.msra.mxu0 %v722
    %1788 = vmatprep.subr.mxu0 %v721
    %1789 = vmatpush2.msra.mxu0 %v720
    %1790 = vmatprep.mubr.f32.mxu0 %v471
    %1791 = vmatmul.mubr.f32.gmra.mxu0 %v335
    %v1792 = vpop.f32.mrf.mxu0
    %v1793 = vadd.f32 0.0, %v1792
    %v1794 = vpop.f32.mrf.mxu0
    %v1795 = vadd.f32 0.0, %v1794
    %1796 = vdwg.mxu0
    %1797 = vmatprep.subr.mxu0 %v783
    %1798 = vmatpush1.msra.mxu0 %v782
    %1799 = vmatprep.subr.mxu0 %v781
    %1800 = vmatpush1.msra.mxu0 %v780
    %1801 = vmatprep.subr.mxu0 %v779
    %1802 = vmatpush1.msra.mxu0 %v778
    %1803 = vmatprep.subr.mxu0 %v777
    %1804 = vmatpush1.msra.mxu0 %v776
    %1805 = vmatprep.subr.mxu0 %v775
    %1806 = vmatpush1.msra.mxu0 %v774
    %1807 = vmatprep.subr.mxu0 %v773
    %1808 = vmatpush1.msra.mxu0 %v772
    %1809 = vmatprep.subr.mxu0 %v771
    %1810 = vmatpush1.msra.mxu0 %v770
    %1811 = vmatprep.subr.mxu0 %v769
    %1812 = vmatpush1.msra.mxu0 %v768
    %1813 = vmatprep.subr.mxu0 %v767
    %1814 = vmatpush1.msra.mxu0 %v766
    %1815 = vmatprep.subr.mxu0 %v765
    %1816 = vmatpush1.msra.mxu0 %v764
    %1817 = vmatprep.subr.mxu0 %v763
    %1818 = vmatpush1.msra.mxu0 %v762
    %1819 = vmatprep.subr.mxu0 %v761
    %1820 = vmatpush1.msra.mxu0 %v760
    %1821 = vmatprep.subr.mxu0 %v759
    %1822 = vmatpush1.msra.mxu0 %v758
    %1823 = vmatprep.subr.mxu0 %v757
    %1824 = vmatpush1.msra.mxu0 %v756
    %1825 = vmatprep.subr.mxu0 %v755
    %1826 = vmatpush1.msra.mxu0 %v754
    %1827 = vmatprep.subr.mxu0 %v753
    %1828 = vmatpush1.msra.mxu0 %v752
    %1829 = vmatprep.subr.mxu0 %v815
    %1830 = vmatpush2.msra.mxu0 %v814
    %1831 = vmatprep.subr.mxu0 %v813
    %1832 = vmatpush2.msra.mxu0 %v812
    %1833 = vmatprep.subr.mxu0 %v811
    %1834 = vmatpush2.msra.mxu0 %v810
    %1835 = vmatprep.subr.mxu0 %v809
    %1836 = vmatpush2.msra.mxu0 %v808
    %1837 = vmatprep.subr.mxu0 %v807
    %1838 = vmatpush2.msra.mxu0 %v806
    %1839 = vmatprep.subr.mxu0 %v805
    %1840 = vmatpush2.msra.mxu0 %v804
    %1841 = vmatprep.subr.mxu0 %v803
    %1842 = vmatpush2.msra.mxu0 %v802
    %1843 = vmatprep.subr.mxu0 %v801
    %1844 = vmatpush2.msra.mxu0 %v800
    %1845 = vmatprep.subr.mxu0 %v799
    %1846 = vmatpush2.msra.mxu0 %v798
    %1847 = vmatprep.subr.mxu0 %v797
    %1848 = vmatpush2.msra.mxu0 %v796
    %1849 = vmatprep.subr.mxu0 %v795
    %1850 = vmatpush2.msra.mxu0 %v794
    %1851 = vmatprep.subr.mxu0 %v793
    %1852 = vmatpush2.msra.mxu0 %v792
    %1853 = vmatprep.subr.mxu0 %v791
    %1854 = vmatpush2.msra.mxu0 %v790
    %1855 = vmatprep.subr.mxu0 %v789
    %1856 = vmatpush2.msra.mxu0 %v788
    %1857 = vmatprep.subr.mxu0 %v787
    %1858 = vmatpush2.msra.mxu0 %v786
    %1859 = vmatprep.subr.mxu0 %v785
    %1860 = vmatpush2.msra.mxu0 %v784
    %1861 = vmatprep.mubr.f32.mxu0 %v489
    %1862 = vmatmul.mubr.f32.gmra.mxu0 %v353
    %v1863 = vpop.f32.mrf.mxu0
    %v1864 = vadd.f32 0.0, %v1863
    %v1865 = vpop.f32.mrf.mxu0
    %v1866 = vadd.f32 0.0, %v1865
    %1867 = vdwg.mxu0
    %1868 = vmatprep.subr.mxu0 %v847
    %1869 = vmatpush1.msra.mxu0 %v846
    %1870 = vmatprep.subr.mxu0 %v845
    %1871 = vmatpush1.msra.mxu0 %v844
    %1872 = vmatprep.subr.mxu0 %v843
    %1873 = vmatpush1.msra.mxu0 %v842
    %1874 = vmatprep.subr.mxu0 %v841
    %1875 = vmatpush1.msra.mxu0 %v840
    %1876 = vmatprep.subr.mxu0 %v839
    %1877 = vmatpush1.msra.mxu0 %v838
    %1878 = vmatprep.subr.mxu0 %v837
    %1879 = vmatpush1.msra.mxu0 %v836
    %1880 = vmatprep.subr.mxu0 %v835
    %1881 = vmatpush1.msra.mxu0 %v834
    %1882 = vmatprep.subr.mxu0 %v833
    %1883 = vmatpush1.msra.mxu0 %v832
    %1884 = vmatprep.subr.mxu0 %v831
    %1885 = vmatpush1.msra.mxu0 %v830
    %1886 = vmatprep.subr.mxu0 %v829
    %1887 = vmatpush1.msra.mxu0 %v828
    %1888 = vmatprep.subr.mxu0 %v827
    %1889 = vmatpush1.msra.mxu0 %v826
    %1890 = vmatprep.subr.mxu0 %v825
    %1891 = vmatpush1.msra.mxu0 %v824
    %1892 = vmatprep.subr.mxu0 %v823
    %1893 = vmatpush1.msra.mxu0 %v822
    %1894 = vmatprep.subr.mxu0 %v821
    %1895 = vmatpush1.msra.mxu0 %v820
    %1896 = vmatprep.subr.mxu0 %v819
    %1897 = vmatpush1.msra.mxu0 %v818
    %1898 = vmatprep.subr.mxu0 %v817
    %1899 = vmatpush1.msra.mxu0 %v816
    %1900 = vmatprep.subr.mxu0 %v879
    %1901 = vmatpush2.msra.mxu0 %v878
    %1902 = vmatprep.subr.mxu0 %v877
    %1903 = vmatpush2.msra.mxu0 %v876
    %1904 = vmatprep.subr.mxu0 %v875
    %1905 = vmatpush2.msra.mxu0 %v874
    %1906 = vmatprep.subr.mxu0 %v873
    %1907 = vmatpush2.msra.mxu0 %v872
    %1908 = vmatprep.subr.mxu0 %v871
    %1909 = vmatpush2.msra.mxu0 %v870
    %1910 = vmatprep.subr.mxu0 %v869
    %1911 = vmatpush2.msra.mxu0 %v868
    %1912 = vmatprep.subr.mxu0 %v867
    %1913 = vmatpush2.msra.mxu0 %v866
    %1914 = vmatprep.subr.mxu0 %v865
    %1915 = vmatpush2.msra.mxu0 %v864
    %1916 = vmatprep.subr.mxu0 %v863
    %1917 = vmatpush2.msra.mxu0 %v862
    %1918 = vmatprep.subr.mxu0 %v861
    %1919 = vmatpush2.msra.mxu0 %v860
    %1920 = vmatprep.subr.mxu0 %v859
    %1921 = vmatpush2.msra.mxu0 %v858
    %1922 = vmatprep.subr.mxu0 %v857
    %1923 = vmatpush2.msra.mxu0 %v856
    %1924 = vmatprep.subr.mxu0 %v855
    %1925 = vmatpush2.msra.mxu0 %v854
    %1926 = vmatprep.subr.mxu0 %v853
    %1927 = vmatpush2.msra.mxu0 %v852
    %1928 = vmatprep.subr.mxu0 %v851
    %1929 = vmatpush2.msra.mxu0 %v850
    %1930 = vmatprep.subr.mxu0 %v849
    %1931 = vmatpush2.msra.mxu0 %v848
    %1932 = vmatprep.mubr.f32.mxu0 %v480
    %1933 = vmatmul.mubr.f32.gmra.mxu0 %v344
    %v1934 = vpop.f32.mrf.mxu0
    %v1935 = vadd.f32 0.0, %v1934
    %v1936 = vpop.f32.mrf.mxu0
    %v1937 = vadd.f32 0.0, %v1936
    %1938 = vdwg.mxu0
    %1939 = vmatprep.subr.mxu0 %v911
    %1940 = vmatpush1.msra.mxu0 %v910
    %1941 = vmatprep.subr.mxu0 %v909
    %1942 = vmatpush1.msra.mxu0 %v908
    %1943 = vmatprep.subr.mxu0 %v907
    %1944 = vmatpush1.msra.mxu0 %v906
    %1945 = vmatprep.subr.mxu0 %v905
    %1946 = vmatpush1.msra.mxu0 %v904
    %1947 = vmatprep.subr.mxu0 %v903
    %1948 = vmatpush1.msra.mxu0 %v902
    %1949 = vmatprep.subr.mxu0 %v901
    %1950 = vmatpush1.msra.mxu0 %v900
    %1951 = vmatprep.subr.mxu0 %v899
    %1952 = vmatpush1.msra.mxu0 %v898
    %1953 = vmatprep.subr.mxu0 %v897
    %1954 = vmatpush1.msra.mxu0 %v896
    %1955 = vmatprep.subr.mxu0 %v895
    %1956 = vmatpush1.msra.mxu0 %v894
    %1957 = vmatprep.subr.mxu0 %v893
    %1958 = vmatpush1.msra.mxu0 %v892
    %1959 = vmatprep.subr.mxu0 %v891
    %1960 = vmatpush1.msra.mxu0 %v890
    %1961 = vmatprep.subr.mxu0 %v889
    %1962 = vmatpush1.msra.mxu0 %v888
    %1963 = vmatprep.subr.mxu0 %v887
    %1964 = vmatpush1.msra.mxu0 %v886
    %1965 = vmatprep.subr.mxu0 %v885
    %1966 = vmatpush1.msra.mxu0 %v884
    %1967 = vmatprep.subr.mxu0 %v883
    %1968 = vmatpush1.msra.mxu0 %v882
    %1969 = vmatprep.subr.mxu0 %v881
    %1970 = vmatpush1.msra.mxu0 %v880
    %1971 = vmatprep.subr.mxu0 %v943
    %1972 = vmatpush2.msra.mxu0 %v942
    %1973 = vmatprep.subr.mxu0 %v941
    %1974 = vmatpush2.msra.mxu0 %v940
    %1975 = vmatprep.subr.mxu0 %v939
    %1976 = vmatpush2.msra.mxu0 %v938
    %1977 = vmatprep.subr.mxu0 %v937
    %1978 = vmatpush2.msra.mxu0 %v936
    %1979 = vmatprep.subr.mxu0 %v935
    %1980 = vmatpush2.msra.mxu0 %v934
    %1981 = vmatprep.subr.mxu0 %v933
    %1982 = vmatpush2.msra.mxu0 %v932
    %1983 = vmatprep.subr.mxu0 %v931
    %1984 = vmatpush2.msra.mxu0 %v930
    %1985 = vmatprep.subr.mxu0 %v929
    %1986 = vmatpush2.msra.mxu0 %v928
    %1987 = vmatprep.subr.mxu0 %v927
    %1988 = vmatpush2.msra.mxu0 %v926
    %1989 = vmatprep.subr.mxu0 %v925
    %1990 = vmatpush2.msra.mxu0 %v924
    %1991 = vmatprep.subr.mxu0 %v923
    %1992 = vmatpush2.msra.mxu0 %v922
    %1993 = vmatprep.subr.mxu0 %v921
    %1994 = vmatpush2.msra.mxu0 %v920
    %1995 = vmatprep.subr.mxu0 %v919
    %1996 = vmatpush2.msra.mxu0 %v918
    %1997 = vmatprep.subr.mxu0 %v917
    %1998 = vmatpush2.msra.mxu0 %v916
    %1999 = vmatprep.subr.mxu0 %v915
    %2000 = vmatpush2.msra.mxu0 %v914
    %2001 = vmatprep.subr.mxu0 %v913
    %2002 = vmatpush2.msra.mxu0 %v912
    %2003 = vmatprep.mubr.f32.mxu0 %v490
    %2004 = vmatmul.mubr.f32.gmra.mxu0 %v354
    %v2005 = vpop.f32.mrf.mxu0
    %v2006 = vadd.f32 0.0, %v2005
    %v2007 = vpop.f32.mrf.mxu0
    %v2008 = vadd.f32 0.0, %v2007
    %2009 = vdwg.mxu0
    %2010 = vmatprep.subr.mxu0 %v975
    %2011 = vmatpush1.msra.mxu0 %v974
    %2012 = vmatprep.subr.mxu0 %v973
    %2013 = vmatpush1.msra.mxu0 %v972
    %2014 = vmatprep.subr.mxu0 %v971
    %2015 = vmatpush1.msra.mxu0 %v970
    %2016 = vmatprep.subr.mxu0 %v969
    %2017 = vmatpush1.msra.mxu0 %v968
    %2018 = vmatprep.subr.mxu0 %v967
    %2019 = vmatpush1.msra.mxu0 %v966
    %2020 = vmatprep.subr.mxu0 %v965
    %2021 = vmatpush1.msra.mxu0 %v964
    %2022 = vmatprep.subr.mxu0 %v963
    %2023 = vmatpush1.msra.mxu0 %v962
    %2024 = vmatprep.subr.mxu0 %v961
    %2025 = vmatpush1.msra.mxu0 %v960
    %2026 = vmatprep.subr.mxu0 %v959
    %2027 = vmatpush1.msra.mxu0 %v958
    %2028 = vmatprep.subr.mxu0 %v957
    %2029 = vmatpush1.msra.mxu0 %v956
    %2030 = vmatprep.subr.mxu0 %v955
    %2031 = vmatpush1.msra.mxu0 %v954
    %2032 = vmatprep.subr.mxu0 %v953
    %2033 = vmatpush1.msra.mxu0 %v952
    %2034 = vmatprep.subr.mxu0 %v951
    %2035 = vmatpush1.msra.mxu0 %v950
    %2036 = vmatprep.subr.mxu0 %v949
    %2037 = vmatpush1.msra.mxu0 %v948
    %2038 = vmatprep.subr.mxu0 %v947
    %2039 = vmatpush1.msra.mxu0 %v946
    %2040 = vmatprep.subr.mxu0 %v945
    %2041 = vmatpush1.msra.mxu0 %v944
    %2042 = vmatprep.subr.mxu0 %v1007
    %2043 = vmatpush2.msra.mxu0 %v1006
    %2044 = vmatprep.subr.mxu0 %v1005
    %2045 = vmatpush2.msra.mxu0 %v1004
    %2046 = vmatprep.subr.mxu0 %v1003
    %2047 = vmatpush2.msra.mxu0 %v1002
    %2048 = vmatprep.subr.mxu0 %v1001
    %2049 = vmatpush2.msra.mxu0 %v1000
    %2050 = vmatprep.subr.mxu0 %v999
    %2051 = vmatpush2.msra.mxu0 %v998
    %2052 = vmatprep.subr.mxu0 %v997
    %2053 = vmatpush2.msra.mxu0 %v996
    %2054 = vmatprep.subr.mxu0 %v995
    %2055 = vmatpush2.msra.mxu0 %v994
    %2056 = vmatprep.subr.mxu0 %v993
    %2057 = vmatpush2.msra.mxu0 %v992
    %2058 = vmatprep.subr.mxu0 %v991
    %2059 = vmatpush2.msra.mxu0 %v990
    %2060 = vmatprep.subr.mxu0 %v989
    %2061 = vmatpush2.msra.mxu0 %v988
    %2062 = vmatprep.subr.mxu0 %v987
    %2063 = vmatpush2.msra.mxu0 %v986
    %2064 = vmatprep.subr.mxu0 %v985
    %2065 = vmatpush2.msra.mxu0 %v984
    %2066 = vmatprep.subr.mxu0 %v983
    %2067 = vmatpush2.msra.mxu0 %v982
    %2068 = vmatprep.subr.mxu0 %v981
    %2069 = vmatpush2.msra.mxu0 %v980
    %2070 = vmatprep.subr.mxu0 %v979
    %2071 = vmatpush2.msra.mxu0 %v978
    %2072 = vmatprep.subr.mxu0 %v977
    %2073 = vmatpush2.msra.mxu0 %v976
    %2074 = vmatprep.mubr.f32.mxu0 %v487
    %2075 = vmatmul.mubr.f32.gmra.mxu0 %v351
    %v2076 = vpop.f32.mrf.mxu0
    %v2077 = vadd.f32 0.0, %v2076
    %v2078 = vpop.f32.mrf.mxu0
    %v2079 = vadd.f32 0.0, %v2078
    %2080 = vdwg.mxu0
    %2081 = vmatprep.subr.mxu0 %v1039
    %2082 = vmatpush1.msra.mxu0 %v1038
    %2083 = vmatprep.subr.mxu0 %v1037
    %2084 = vmatpush1.msra.mxu0 %v1036
    %2085 = vmatprep.subr.mxu0 %v1035
    %2086 = vmatpush1.msra.mxu0 %v1034
    %2087 = vmatprep.subr.mxu0 %v1033
    %2088 = vmatpush1.msra.mxu0 %v1032
    %2089 = vmatprep.subr.mxu0 %v1031
    %2090 = vmatpush1.msra.mxu0 %v1030
    %2091 = vmatprep.subr.mxu0 %v1029
    %2092 = vmatpush1.msra.mxu0 %v1028
    %2093 = vmatprep.subr.mxu0 %v1027
    %2094 = vmatpush1.msra.mxu0 %v1026
    %2095 = vmatprep.subr.mxu0 %v1025
    %2096 = vmatpush1.msra.mxu0 %v1024
    %2097 = vmatprep.subr.mxu0 %v1023
    %2098 = vmatpush1.msra.mxu0 %v1022
    %2099 = vmatprep.subr.mxu0 %v1021
    %2100 = vmatpush1.msra.mxu0 %v1020
    %2101 = vmatprep.subr.mxu0 %v1019
    %2102 = vmatpush1.msra.mxu0 %v1018
    %2103 = vmatprep.subr.mxu0 %v1017
    %2104 = vmatpush1.msra.mxu0 %v1016
    %2105 = vmatprep.subr.mxu0 %v1015
    %2106 = vmatpush1.msra.mxu0 %v1014
    %2107 = vmatprep.subr.mxu0 %v1013
    %2108 = vmatpush1.msra.mxu0 %v1012
    %2109 = vmatprep.subr.mxu0 %v1011
    %2110 = vmatpush1.msra.mxu0 %v1010
    %2111 = vmatprep.subr.mxu0 %v1009
    %2112 = vmatpush1.msra.mxu0 %v1008
    %2113 = vmatprep.subr.mxu0 %v1071
    %2114 = vmatpush2.msra.mxu0 %v1070
    %2115 = vmatprep.subr.mxu0 %v1069
    %2116 = vmatpush2.msra.mxu0 %v1068
    %2117 = vmatprep.subr.mxu0 %v1067
    %2118 = vmatpush2.msra.mxu0 %v1066
    %2119 = vmatprep.subr.mxu0 %v1065
    %2120 = vmatpush2.msra.mxu0 %v1064
    %2121 = vmatprep.subr.mxu0 %v1063
    %2122 = vmatpush2.msra.mxu0 %v1062
    %2123 = vmatprep.subr.mxu0 %v1061
    %2124 = vmatpush2.msra.mxu0 %v1060
    %2125 = vmatprep.subr.mxu0 %v1059
    %2126 = vmatpush2.msra.mxu0 %v1058
    %2127 = vmatprep.subr.mxu0 %v1057
    %2128 = vmatpush2.msra.mxu0 %v1056
    %2129 = vmatprep.subr.mxu0 %v1055
    %2130 = vmatpush2.msra.mxu0 %v1054
    %2131 = vmatprep.subr.mxu0 %v1053
    %2132 = vmatpush2.msra.mxu0 %v1052
    %2133 = vmatprep.subr.mxu0 %v1051
    %2134 = vmatpush2.msra.mxu0 %v1050
    %2135 = vmatprep.subr.mxu0 %v1049
    %2136 = vmatpush2.msra.mxu0 %v1048
    %2137 = vmatprep.subr.mxu0 %v1047
    %2138 = vmatpush2.msra.mxu0 %v1046
    %2139 = vmatprep.subr.mxu0 %v1045
    %2140 = vmatpush2.msra.mxu0 %v1044
    %2141 = vmatprep.subr.mxu0 %v1043
    %2142 = vmatpush2.msra.mxu0 %v1042
    %2143 = vmatprep.subr.mxu0 %v1041
    %2144 = vmatpush2.msra.mxu0 %v1040
    %2145 = vmatprep.mubr.f32.mxu0 %v491
    %2146 = vmatmul.mubr.f32.gmra.mxu0 %v355
    %v2147 = vpop.f32.mrf.mxu0
    %v2148 = vadd.f32 0.0, %v2147
    %v2149 = vpop.f32.mrf.mxu0
    %v2150 = vadd.f32 0.0, %v2149
    %2151 = vdwg.mxu0
    %2152 = vmatprep.subr.mxu0 %v1103
    %2153 = vmatpush1.msra.mxu0 %v1102
    %2154 = vmatprep.subr.mxu0 %v1101
    %2155 = vmatpush1.msra.mxu0 %v1100
    %2156 = vmatprep.subr.mxu0 %v1099
    %2157 = vmatpush1.msra.mxu0 %v1098
    %2158 = vmatprep.subr.mxu0 %v1097
    %2159 = vmatpush1.msra.mxu0 %v1096
    %2160 = vmatprep.subr.mxu0 %v1095
    %2161 = vmatpush1.msra.mxu0 %v1094
    %2162 = vmatprep.subr.mxu0 %v1093
    %2163 = vmatpush1.msra.mxu0 %v1092
    %2164 = vmatprep.subr.mxu0 %v1091
    %2165 = vmatpush1.msra.mxu0 %v1090
    %2166 = vmatprep.subr.mxu0 %v1089
    %2167 = vmatpush1.msra.mxu0 %v1088
    %2168 = vmatprep.subr.mxu0 %v1087
    %2169 = vmatpush1.msra.mxu0 %v1086
    %2170 = vmatprep.subr.mxu0 %v1085
    %2171 = vmatpush1.msra.mxu0 %v1084
    %2172 = vmatprep.subr.mxu0 %v1083
    %2173 = vmatpush1.msra.mxu0 %v1082
    %2174 = vmatprep.subr.mxu0 %v1081
    %2175 = vmatpush1.msra.mxu0 %v1080
    %2176 = vmatprep.subr.mxu0 %v1079
    %2177 = vmatpush1.msra.mxu0 %v1078
    %2178 = vmatprep.subr.mxu0 %v1077
    %2179 = vmatpush1.msra.mxu0 %v1076
    %2180 = vmatprep.subr.mxu0 %v1075
    %2181 = vmatpush1.msra.mxu0 %v1074
    %2182 = vmatprep.subr.mxu0 %v1073
    %2183 = vmatpush1.msra.mxu0 %v1072
    %2184 = vmatprep.subr.mxu0 %v1135
    %2185 = vmatpush2.msra.mxu0 %v1134
    %2186 = vmatprep.subr.mxu0 %v1133
    %2187 = vmatpush2.msra.mxu0 %v1132
    %2188 = vmatprep.subr.mxu0 %v1131
    %2189 = vmatpush2.msra.mxu0 %v1130
    %2190 = vmatprep.subr.mxu0 %v1129
    %2191 = vmatpush2.msra.mxu0 %v1128
    %2192 = vmatprep.subr.mxu0 %v1127
    %2193 = vmatpush2.msra.mxu0 %v1126
    %2194 = vmatprep.subr.mxu0 %v1125
    %2195 = vmatpush2.msra.mxu0 %v1124
    %2196 = vmatprep.subr.mxu0 %v1123
    %2197 = vmatpush2.msra.mxu0 %v1122
    %2198 = vmatprep.subr.mxu0 %v1121
    %2199 = vmatpush2.msra.mxu0 %v1120
    %2200 = vmatprep.subr.mxu0 %v1119
    %2201 = vmatpush2.msra.mxu0 %v1118
    %2202 = vmatprep.subr.mxu0 %v1117
    %2203 = vmatpush2.msra.mxu0 %v1116
    %2204 = vmatprep.subr.mxu0 %v1115
    %2205 = vmatpush2.msra.mxu0 %v1114
    %2206 = vmatprep.subr.mxu0 %v1113
    %2207 = vmatpush2.msra.mxu0 %v1112
    %2208 = vmatprep.subr.mxu0 %v1111
    %2209 = vmatpush2.msra.mxu0 %v1110
    %2210 = vmatprep.subr.mxu0 %v1109
    %2211 = vmatpush2.msra.mxu0 %v1108
    %2212 = vmatprep.subr.mxu0 %v1107
    %2213 = vmatpush2.msra.mxu0 %v1106
    %2214 = vmatprep.subr.mxu0 %v1105
    %2215 = vmatpush2.msra.mxu0 %v1104
    %2216 = vmatprep.mubr.f32.mxu0 %v532
    %2217 = vmatmul.mubr.f32.gmra.mxu0 %v396
    %v2218 = vpop.f32.mrf.mxu0
    %v2219 = vadd.f32 0.0, %v2218
    %v2220 = vpop.f32.mrf.mxu0
    %v2221 = vadd.f32 0.0, %v2220
    %2222 = vdwg.mxu0
    %2223 = vmatprep.subr.mxu0 %v1167
    %2224 = vmatpush1.msra.mxu0 %v1166
    %2225 = vmatprep.subr.mxu0 %v1165
    %2226 = vmatpush1.msra.mxu0 %v1164
    %2227 = vmatprep.subr.mxu0 %v1163
    %2228 = vmatpush1.msra.mxu0 %v1162
    %2229 = vmatprep.subr.mxu0 %v1161
    %2230 = vmatpush1.msra.mxu0 %v1160
    %2231 = vmatprep.subr.mxu0 %v1159
    %2232 = vmatpush1.msra.mxu0 %v1158
    %2233 = vmatprep.subr.mxu0 %v1157
    %2234 = vmatpush1.msra.mxu0 %v1156
    %2235 = vmatprep.subr.mxu0 %v1155
    %2236 = vmatpush1.msra.mxu0 %v1154
    %2237 = vmatprep.subr.mxu0 %v1153
    %2238 = vmatpush1.msra.mxu0 %v1152
    %2239 = vmatprep.subr.mxu0 %v1151
    %2240 = vmatpush1.msra.mxu0 %v1150
    %2241 = vmatprep.subr.mxu0 %v1149
    %2242 = vmatpush1.msra.mxu0 %v1148
    %2243 = vmatprep.subr.mxu0 %v1147
    %2244 = vmatpush1.msra.mxu0 %v1146
    %2245 = vmatprep.subr.mxu0 %v1145
    %2246 = vmatpush1.msra.mxu0 %v1144
    %2247 = vmatprep.subr.mxu0 %v1143
    %2248 = vmatpush1.msra.mxu0 %v1142
    %2249 = vmatprep.subr.mxu0 %v1141
    %2250 = vmatpush1.msra.mxu0 %v1140
    %2251 = vmatprep.subr.mxu0 %v1139
    %2252 = vmatpush1.msra.mxu0 %v1138
    %2253 = vmatprep.subr.mxu0 %v1137
    %2254 = vmatpush1.msra.mxu0 %v1136
    %2255 = vmatprep.subr.mxu0 %v1199
    %2256 = vmatpush2.msra.mxu0 %v1198
    %2257 = vmatprep.subr.mxu0 %v1197
    %2258 = vmatpush2.msra.mxu0 %v1196
    %2259 = vmatprep.subr.mxu0 %v1195
    %2260 = vmatpush2.msra.mxu0 %v1194
    %2261 = vmatprep.subr.mxu0 %v1193
    %2262 = vmatpush2.msra.mxu0 %v1192
    %2263 = vmatprep.subr.mxu0 %v1191
    %2264 = vmatpush2.msra.mxu0 %v1190
    %2265 = vmatprep.subr.mxu0 %v1189
    %2266 = vmatpush2.msra.mxu0 %v1188
    %2267 = vmatprep.subr.mxu0 %v1187
    %2268 = vmatpush2.msra.mxu0 %v1186
    %2269 = vmatprep.subr.mxu0 %v1185
    %2270 = vmatpush2.msra.mxu0 %v1184
    %2271 = vmatprep.subr.mxu0 %v1183
    %2272 = vmatpush2.msra.mxu0 %v1182
    %2273 = vmatprep.subr.mxu0 %v1181
    %2274 = vmatpush2.msra.mxu0 %v1180
    %2275 = vmatprep.subr.mxu0 %v1179
    %2276 = vmatpush2.msra.mxu0 %v1178
    %2277 = vmatprep.subr.mxu0 %v1177
    %2278 = vmatpush2.msra.mxu0 %v1176
    %2279 = vmatprep.subr.mxu0 %v1175
    %2280 = vmatpush2.msra.mxu0 %v1174
    %2281 = vmatprep.subr.mxu0 %v1173
    %2282 = vmatpush2.msra.mxu0 %v1172
    %2283 = vmatprep.subr.mxu0 %v1171
    %2284 = vmatpush2.msra.mxu0 %v1170
    %2285 = vmatprep.subr.mxu0 %v1169
    %2286 = vmatpush2.msra.mxu0 %v1168
    %2287 = vmatprep.mubr.f32.mxu0 %v556
    %2288 = vmatmul.mubr.f32.gmra.mxu0 %v420
    %v2289 = vpop.f32.mrf.mxu0
    %v2290 = vadd.f32 0.0, %v2289
    %v2291 = vpop.f32.mrf.mxu0
    %v2292 = vadd.f32 0.0, %v2291
    %2293 = vdwg.mxu0
    %2294 = vmatprep.subr.mxu0 %v1231
    %2295 = vmatpush1.msra.mxu0 %v1230
    %2296 = vmatprep.subr.mxu0 %v1229
    %2297 = vmatpush1.msra.mxu0 %v1228
    %2298 = vmatprep.subr.mxu0 %v1227
    %2299 = vmatpush1.msra.mxu0 %v1226
    %2300 = vmatprep.subr.mxu0 %v1225
    %2301 = vmatpush1.msra.mxu0 %v1224
    %2302 = vmatprep.subr.mxu0 %v1223
    %2303 = vmatpush1.msra.mxu0 %v1222
    %2304 = vmatprep.subr.mxu0 %v1221
    %2305 = vmatpush1.msra.mxu0 %v1220
    %2306 = vmatprep.subr.mxu0 %v1219
    %2307 = vmatpush1.msra.mxu0 %v1218
    %2308 = vmatprep.subr.mxu0 %v1217
    %2309 = vmatpush1.msra.mxu0 %v1216
    %2310 = vmatprep.subr.mxu0 %v1215
    %2311 = vmatpush1.msra.mxu0 %v1214
    %2312 = vmatprep.subr.mxu0 %v1213
    %2313 = vmatpush1.msra.mxu0 %v1212
    %2314 = vmatprep.subr.mxu0 %v1211
    %2315 = vmatpush1.msra.mxu0 %v1210
    %2316 = vmatprep.subr.mxu0 %v1209
    %2317 = vmatpush1.msra.mxu0 %v1208
    %2318 = vmatprep.subr.mxu0 %v1207
    %2319 = vmatpush1.msra.mxu0 %v1206
    %2320 = vmatprep.subr.mxu0 %v1205
    %2321 = vmatpush1.msra.mxu0 %v1204
    %2322 = vmatprep.subr.mxu0 %v1203
    %2323 = vmatpush1.msra.mxu0 %v1202
    %2324 = vmatprep.subr.mxu0 %v1201
    %2325 = vmatpush1.msra.mxu0 %v1200
    %2326 = vmatprep.subr.mxu0 %v1263
    %2327 = vmatpush2.msra.mxu0 %v1262
    %2328 = vmatprep.subr.mxu0 %v1261
    %2329 = vmatpush2.msra.mxu0 %v1260
    %2330 = vmatprep.subr.mxu0 %v1259
    %2331 = vmatpush2.msra.mxu0 %v1258
    %2332 = vmatprep.subr.mxu0 %v1257
    %2333 = vmatpush2.msra.mxu0 %v1256
    %2334 = vmatprep.subr.mxu0 %v1255
    %2335 = vmatpush2.msra.mxu0 %v1254
    %2336 = vmatprep.subr.mxu0 %v1253
    %2337 = vmatpush2.msra.mxu0 %v1252
    %2338 = vmatprep.subr.mxu0 %v1251
    %2339 = vmatpush2.msra.mxu0 %v1250
    %2340 = vmatprep.subr.mxu0 %v1249
    %2341 = vmatpush2.msra.mxu0 %v1248
    %2342 = vmatprep.subr.mxu0 %v1247
    %2343 = vmatpush2.msra.mxu0 %v1246
    %2344 = vmatprep.subr.mxu0 %v1245
    %2345 = vmatpush2.msra.mxu0 %v1244
    %2346 = vmatprep.subr.mxu0 %v1243
    %2347 = vmatpush2.msra.mxu0 %v1242
    %2348 = vmatprep.subr.mxu0 %v1241
    %2349 = vmatpush2.msra.mxu0 %v1240
    %2350 = vmatprep.subr.mxu0 %v1239
    %2351 = vmatpush2.msra.mxu0 %v1238
    %2352 = vmatprep.subr.mxu0 %v1237
    %2353 = vmatpush2.msra.mxu0 %v1236
    %2354 = vmatprep.subr.mxu0 %v1235
    %2355 = vmatpush2.msra.mxu0 %v1234
    %2356 = vmatprep.subr.mxu0 %v1233
    %2357 = vmatpush2.msra.mxu0 %v1232
    %2358 = vmatprep.mubr.f32.mxu0 %v539
    %2359 = vmatmul.mubr.f32.gmra.mxu0 %v403
    %v2360 = vpop.f32.mrf.mxu0
    %v2361 = vadd.f32 0.0, %v2360
    %v2362 = vpop.f32.mrf.mxu0
    %v2363 = vadd.f32 0.0, %v2362
    %2364 = vdwg.mxu0
    %2365 = vmatprep.subr.mxu0 %v1295
    %2366 = vmatpush1.msra.mxu0 %v1294
    %2367 = vmatprep.subr.mxu0 %v1293
    %2368 = vmatpush1.msra.mxu0 %v1292
    %2369 = vmatprep.subr.mxu0 %v1291
    %2370 = vmatpush1.msra.mxu0 %v1290
    %2371 = vmatprep.subr.mxu0 %v1289
    %2372 = vmatpush1.msra.mxu0 %v1288
    %2373 = vmatprep.subr.mxu0 %v1287
    %2374 = vmatpush1.msra.mxu0 %v1286
    %2375 = vmatprep.subr.mxu0 %v1285
    %2376 = vmatpush1.msra.mxu0 %v1284
    %2377 = vmatprep.subr.mxu0 %v1283
    %2378 = vmatpush1.msra.mxu0 %v1282
    %2379 = vmatprep.subr.mxu0 %v1281
    %2380 = vmatpush1.msra.mxu0 %v1280
    %2381 = vmatprep.subr.mxu0 %v1279
    %2382 = vmatpush1.msra.mxu0 %v1278
    %2383 = vmatprep.subr.mxu0 %v1277
    %2384 = vmatpush1.msra.mxu0 %v1276
    %2385 = vmatprep.subr.mxu0 %v1275
    %2386 = vmatpush1.msra.mxu0 %v1274
    %2387 = vmatprep.subr.mxu0 %v1273
    %2388 = vmatpush1.msra.mxu0 %v1272
    %2389 = vmatprep.subr.mxu0 %v1271
    %2390 = vmatpush1.msra.mxu0 %v1270
    %2391 = vmatprep.subr.mxu0 %v1269
    %2392 = vmatpush1.msra.mxu0 %v1268
    %2393 = vmatprep.subr.mxu0 %v1267
    %2394 = vmatpush1.msra.mxu0 %v1266
    %2395 = vmatprep.subr.mxu0 %v1265
    %2396 = vmatpush1.msra.mxu0 %v1264
    %2397 = vmatprep.subr.mxu0 %v1327
    %2398 = vmatpush2.msra.mxu0 %v1326
    %2399 = vmatprep.subr.mxu0 %v1325
    %2400 = vmatpush2.msra.mxu0 %v1324
    %2401 = vmatprep.subr.mxu0 %v1323
    %2402 = vmatpush2.msra.mxu0 %v1322
    %2403 = vmatprep.subr.mxu0 %v1321
    %2404 = vmatpush2.msra.mxu0 %v1320
    %2405 = vmatprep.subr.mxu0 %v1319
    %2406 = vmatpush2.msra.mxu0 %v1318
    %2407 = vmatprep.subr.mxu0 %v1317
    %2408 = vmatpush2.msra.mxu0 %v1316
    %2409 = vmatprep.subr.mxu0 %v1315
    %2410 = vmatpush2.msra.mxu0 %v1314
    %2411 = vmatprep.subr.mxu0 %v1313
    %2412 = vmatpush2.msra.mxu0 %v1312
    %2413 = vmatprep.subr.mxu0 %v1311
    %2414 = vmatpush2.msra.mxu0 %v1310
    %2415 = vmatprep.subr.mxu0 %v1309
    %2416 = vmatpush2.msra.mxu0 %v1308
    %2417 = vmatprep.subr.mxu0 %v1307
    %2418 = vmatpush2.msra.mxu0 %v1306
    %2419 = vmatprep.subr.mxu0 %v1305
    %2420 = vmatpush2.msra.mxu0 %v1304
    %2421 = vmatprep.subr.mxu0 %v1303
    %2422 = vmatpush2.msra.mxu0 %v1302
    %2423 = vmatprep.subr.mxu0 %v1301
    %2424 = vmatpush2.msra.mxu0 %v1300
    %2425 = vmatprep.subr.mxu0 %v1299
    %2426 = vmatpush2.msra.mxu0 %v1298
    %2427 = vmatprep.subr.mxu0 %v1297
    %2428 = vmatpush2.msra.mxu0 %v1296
    %2429 = vmatprep.mubr.f32.mxu0 %v557
    %2430 = vmatmul.mubr.f32.gmra.mxu0 %v421
    %v2431 = vpop.f32.mrf.mxu0
    %v2432 = vadd.f32 0.0, %v2431
    %v2433 = vpop.f32.mrf.mxu0
    %v2434 = vadd.f32 0.0, %v2433
    %2435 = vdwg.mxu0
    %2436 = vmatprep.subr.mxu0 %v1359
    %2437 = vmatpush1.msra.mxu0 %v1358
    %2438 = vmatprep.subr.mxu0 %v1357
    %2439 = vmatpush1.msra.mxu0 %v1356
    %2440 = vmatprep.subr.mxu0 %v1355
    %2441 = vmatpush1.msra.mxu0 %v1354
    %2442 = vmatprep.subr.mxu0 %v1353
    %2443 = vmatpush1.msra.mxu0 %v1352
    %2444 = vmatprep.subr.mxu0 %v1351
    %2445 = vmatpush1.msra.mxu0 %v1350
    %2446 = vmatprep.subr.mxu0 %v1349
    %2447 = vmatpush1.msra.mxu0 %v1348
    %2448 = vmatprep.subr.mxu0 %v1347
    %2449 = vmatpush1.msra.mxu0 %v1346
    %2450 = vmatprep.subr.mxu0 %v1345
    %2451 = vmatpush1.msra.mxu0 %v1344
    %2452 = vmatprep.subr.mxu0 %v1343
    %2453 = vmatpush1.msra.mxu0 %v1342
    %2454 = vmatprep.subr.mxu0 %v1341
    %2455 = vmatpush1.msra.mxu0 %v1340
    %2456 = vmatprep.subr.mxu0 %v1339
    %2457 = vmatpush1.msra.mxu0 %v1338
    %2458 = vmatprep.subr.mxu0 %v1337
    %2459 = vmatpush1.msra.mxu0 %v1336
    %2460 = vmatprep.subr.mxu0 %v1335
    %2461 = vmatpush1.msra.mxu0 %v1334
    %2462 = vmatprep.subr.mxu0 %v1333
    %2463 = vmatpush1.msra.mxu0 %v1332
    %2464 = vmatprep.subr.mxu0 %v1331
    %2465 = vmatpush1.msra.mxu0 %v1330
    %2466 = vmatprep.subr.mxu0 %v1329
    %2467 = vmatpush1.msra.mxu0 %v1328
    %2468 = vmatprep.subr.mxu0 %v1391
    %2469 = vmatpush2.msra.mxu0 %v1390
    %2470 = vmatprep.subr.mxu0 %v1389
    %2471 = vmatpush2.msra.mxu0 %v1388
    %2472 = vmatprep.subr.mxu0 %v1387
    %2473 = vmatpush2.msra.mxu0 %v1386
    %2474 = vmatprep.subr.mxu0 %v1385
    %2475 = vmatpush2.msra.mxu0 %v1384
    %2476 = vmatprep.subr.mxu0 %v1383
    %2477 = vmatpush2.msra.mxu0 %v1382
    %2478 = vmatprep.subr.mxu0 %v1381
    %2479 = vmatpush2.msra.mxu0 %v1380
    %2480 = vmatprep.subr.mxu0 %v1379
    %2481 = vmatpush2.msra.mxu0 %v1378
    %2482 = vmatprep.subr.mxu0 %v1377
    %2483 = vmatpush2.msra.mxu0 %v1376
    %2484 = vmatprep.subr.mxu0 %v1375
    %2485 = vmatpush2.msra.mxu0 %v1374
    %2486 = vmatprep.subr.mxu0 %v1373
    %2487 = vmatpush2.msra.mxu0 %v1372
    %2488 = vmatprep.subr.mxu0 %v1371
    %2489 = vmatpush2.msra.mxu0 %v1370
    %2490 = vmatprep.subr.mxu0 %v1369
    %2491 = vmatpush2.msra.mxu0 %v1368
    %2492 = vmatprep.subr.mxu0 %v1367
    %2493 = vmatpush2.msra.mxu0 %v1366
    %2494 = vmatprep.subr.mxu0 %v1365
    %2495 = vmatpush2.msra.mxu0 %v1364
    %2496 = vmatprep.subr.mxu0 %v1363
    %2497 = vmatpush2.msra.mxu0 %v1362
    %2498 = vmatprep.subr.mxu0 %v1361
    %2499 = vmatpush2.msra.mxu0 %v1360
    %2500 = vmatprep.mubr.f32.mxu0 %v548
    %2501 = vmatmul.mubr.f32.gmra.mxu0 %v412
    %v2502 = vpop.f32.mrf.mxu0
    %v2503 = vadd.f32 0.0, %v2502
    %v2504 = vpop.f32.mrf.mxu0
    %v2505 = vadd.f32 0.0, %v2504
    %2506 = vdwg.mxu0
    %2507 = vmatprep.subr.mxu0 %v1423
    %2508 = vmatpush1.msra.mxu0 %v1422
    %2509 = vmatprep.subr.mxu0 %v1421
    %2510 = vmatpush1.msra.mxu0 %v1420
    %2511 = vmatprep.subr.mxu0 %v1419
    %2512 = vmatpush1.msra.mxu0 %v1418
    %2513 = vmatprep.subr.mxu0 %v1417
    %2514 = vmatpush1.msra.mxu0 %v1416
    %2515 = vmatprep.subr.mxu0 %v1415
    %2516 = vmatpush1.msra.mxu0 %v1414
    %2517 = vmatprep.subr.mxu0 %v1413
    %2518 = vmatpush1.msra.mxu0 %v1412
    %2519 = vmatprep.subr.mxu0 %v1411
    %2520 = vmatpush1.msra.mxu0 %v1410
    %2521 = vmatprep.subr.mxu0 %v1409
    %2522 = vmatpush1.msra.mxu0 %v1408
    %2523 = vmatprep.subr.mxu0 %v1407
    %2524 = vmatpush1.msra.mxu0 %v1406
    %2525 = vmatprep.subr.mxu0 %v1405
    %2526 = vmatpush1.msra.mxu0 %v1404
    %2527 = vmatprep.subr.mxu0 %v1403
    %2528 = vmatpush1.msra.mxu0 %v1402
    %2529 = vmatprep.subr.mxu0 %v1401
    %2530 = vmatpush1.msra.mxu0 %v1400
    %2531 = vmatprep.subr.mxu0 %v1399
    %2532 = vmatpush1.msra.mxu0 %v1398
    %2533 = vmatprep.subr.mxu0 %v1397
    %2534 = vmatpush1.msra.mxu0 %v1396
    %2535 = vmatprep.subr.mxu0 %v1395
    %2536 = vmatpush1.msra.mxu0 %v1394
    %2537 = vmatprep.subr.mxu0 %v1393
    %2538 = vmatpush1.msra.mxu0 %v1392
    %2539 = vmatprep.subr.mxu0 %v1455
    %2540 = vmatpush2.msra.mxu0 %v1454
    %2541 = vmatprep.subr.mxu0 %v1453
    %2542 = vmatpush2.msra.mxu0 %v1452
    %2543 = vmatprep.subr.mxu0 %v1451
    %2544 = vmatpush2.msra.mxu0 %v1450
    %2545 = vmatprep.subr.mxu0 %v1449
    %2546 = vmatpush2.msra.mxu0 %v1448
    %2547 = vmatprep.subr.mxu0 %v1447
    %2548 = vmatpush2.msra.mxu0 %v1446
    %2549 = vmatprep.subr.mxu0 %v1445
    %2550 = vmatpush2.msra.mxu0 %v1444
    %2551 = vmatprep.subr.mxu0 %v1443
    %2552 = vmatpush2.msra.mxu0 %v1442
    %2553 = vmatprep.subr.mxu0 %v1441
    %2554 = vmatpush2.msra.mxu0 %v1440
    %2555 = vmatprep.subr.mxu0 %v1439
    %2556 = vmatpush2.msra.mxu0 %v1438
    %2557 = vmatprep.subr.mxu0 %v1437
    %2558 = vmatpush2.msra.mxu0 %v1436
    %2559 = vmatprep.subr.mxu0 %v1435
    %2560 = vmatpush2.msra.mxu0 %v1434
    %2561 = vmatprep.subr.mxu0 %v1433
    %2562 = vmatpush2.msra.mxu0 %v1432
    %2563 = vmatprep.subr.mxu0 %v1431
    %2564 = vmatpush2.msra.mxu0 %v1430
    %2565 = vmatprep.subr.mxu0 %v1429
    %2566 = vmatpush2.msra.mxu0 %v1428
    %2567 = vmatprep.subr.mxu0 %v1427
    %2568 = vmatpush2.msra.mxu0 %v1426
    %2569 = vmatprep.subr.mxu0 %v1425
    %2570 = vmatpush2.msra.mxu0 %v1424
    %2571 = vmatprep.mubr.f32.mxu0 %v558
    %2572 = vmatmul.mubr.f32.gmra.mxu0 %v422
    %v2573 = vpop.f32.mrf.mxu0
    %v2574 = vadd.f32 0.0, %v2573
    %v2575 = vpop.f32.mrf.mxu0
    %v2576 = vadd.f32 0.0, %v2575
    %2577 = vdwg.mxu0
    %2578 = vmatprep.subr.mxu0 %v1487
    %2579 = vmatpush1.msra.mxu0 %v1486
    %2580 = vmatprep.subr.mxu0 %v1485
    %2581 = vmatpush1.msra.mxu0 %v1484
    %2582 = vmatprep.subr.mxu0 %v1483
    %2583 = vmatpush1.msra.mxu0 %v1482
    %2584 = vmatprep.subr.mxu0 %v1481
    %2585 = vmatpush1.msra.mxu0 %v1480
    %2586 = vmatprep.subr.mxu0 %v1479
    %2587 = vmatpush1.msra.mxu0 %v1478
    %2588 = vmatprep.subr.mxu0 %v1477
    %2589 = vmatpush1.msra.mxu0 %v1476
    %2590 = vmatprep.subr.mxu0 %v1475
    %2591 = vmatpush1.msra.mxu0 %v1474
    %2592 = vmatprep.subr.mxu0 %v1473
    %2593 = vmatpush1.msra.mxu0 %v1472
    %2594 = vmatprep.subr.mxu0 %v1471
    %2595 = vmatpush1.msra.mxu0 %v1470
    %2596 = vmatprep.subr.mxu0 %v1469
    %2597 = vmatpush1.msra.mxu0 %v1468
    %2598 = vmatprep.subr.mxu0 %v1467
    %2599 = vmatpush1.msra.mxu0 %v1466
    %2600 = vmatprep.subr.mxu0 %v1465
    %2601 = vmatpush1.msra.mxu0 %v1464
    %2602 = vmatprep.subr.mxu0 %v1463
    %2603 = vmatpush1.msra.mxu0 %v1462
    %2604 = vmatprep.subr.mxu0 %v1461
    %2605 = vmatpush1.msra.mxu0 %v1460
    %2606 = vmatprep.subr.mxu0 %v1459
    %2607 = vmatpush1.msra.mxu0 %v1458
    %2608 = vmatprep.subr.mxu0 %v1457
    %2609 = vmatpush1.msra.mxu0 %v1456
    %2610 = vmatprep.subr.mxu0 %v1519
    %2611 = vmatpush2.msra.mxu0 %v1518
    %2612 = vmatprep.subr.mxu0 %v1517
    %2613 = vmatpush2.msra.mxu0 %v1516
    %2614 = vmatprep.subr.mxu0 %v1515
    %2615 = vmatpush2.msra.mxu0 %v1514
    %2616 = vmatprep.subr.mxu0 %v1513
    %2617 = vmatpush2.msra.mxu0 %v1512
    %2618 = vmatprep.subr.mxu0 %v1511
    %2619 = vmatpush2.msra.mxu0 %v1510
    %2620 = vmatprep.subr.mxu0 %v1509
    %2621 = vmatpush2.msra.mxu0 %v1508
    %2622 = vmatprep.subr.mxu0 %v1507
    %2623 = vmatpush2.msra.mxu0 %v1506
    %2624 = vmatprep.subr.mxu0 %v1505
    %2625 = vmatpush2.msra.mxu0 %v1504
    %2626 = vmatprep.subr.mxu0 %v1503
    %2627 = vmatpush2.msra.mxu0 %v1502
    %2628 = vmatprep.subr.mxu0 %v1501
    %2629 = vmatpush2.msra.mxu0 %v1500
    %2630 = vmatprep.subr.mxu0 %v1499
    %2631 = vmatpush2.msra.mxu0 %v1498
    %2632 = vmatprep.subr.mxu0 %v1497
    %2633 = vmatpush2.msra.mxu0 %v1496
    %2634 = vmatprep.subr.mxu0 %v1495
    %2635 = vmatpush2.msra.mxu0 %v1494
    %2636 = vmatprep.subr.mxu0 %v1493
    %2637 = vmatpush2.msra.mxu0 %v1492
    %2638 = vmatprep.subr.mxu0 %v1491
    %2639 = vmatpush2.msra.mxu0 %v1490
    %2640 = vmatprep.subr.mxu0 %v1489
    %2641 = vmatpush2.msra.mxu0 %v1488
    %2642 = vmatprep.mubr.f32.mxu0 %v555
    %2643 = vmatmul.mubr.f32.gmra.mxu0 %v419
    %v2644 = vpop.f32.mrf.mxu0
    %v2645 = vadd.f32 0.0, %v2644
    %v2646 = vpop.f32.mrf.mxu0
    %v2647 = vadd.f32 0.0, %v2646
    %2648 = vdwg.mxu0
    %2649 = vmatprep.subr.mxu0 %v1551
    %2650 = vmatpush1.msra.mxu0 %v1550
    %2651 = vmatprep.subr.mxu0 %v1549
    %2652 = vmatpush1.msra.mxu0 %v1548
    %2653 = vmatprep.subr.mxu0 %v1547
    %2654 = vmatpush1.msra.mxu0 %v1546
    %2655 = vmatprep.subr.mxu0 %v1545
    %2656 = vmatpush1.msra.mxu0 %v1544
    %2657 = vmatprep.subr.mxu0 %v1543
    %2658 = vmatpush1.msra.mxu0 %v1542
    %2659 = vmatprep.subr.mxu0 %v1541
    %2660 = vmatpush1.msra.mxu0 %v1540
    %2661 = vmatprep.subr.mxu0 %v1539
    %2662 = vmatpush1.msra.mxu0 %v1538
    %2663 = vmatprep.subr.mxu0 %v1537
    %2664 = vmatpush1.msra.mxu0 %v1536
    %2665 = vmatprep.subr.mxu0 %v1535
    %2666 = vmatpush1.msra.mxu0 %v1534
    %2667 = vmatprep.subr.mxu0 %v1533
    %2668 = vmatpush1.msra.mxu0 %v1532
    %2669 = vmatprep.subr.mxu0 %v1531
    %2670 = vmatpush1.msra.mxu0 %v1530
    %2671 = vmatprep.subr.mxu0 %v1529
    %2672 = vmatpush1.msra.mxu0 %v1528
    %2673 = vmatprep.subr.mxu0 %v1527
    %2674 = vmatpush1.msra.mxu0 %v1526
    %2675 = vmatprep.subr.mxu0 %v1525
    %2676 = vmatpush1.msra.mxu0 %v1524
    %2677 = vmatprep.subr.mxu0 %v1523
    %2678 = vmatpush1.msra.mxu0 %v1522
    %2679 = vmatprep.subr.mxu0 %v1521
    %2680 = vmatpush1.msra.mxu0 %v1520
    %2681 = vmatprep.subr.mxu0 %v1583
    %2682 = vmatpush2.msra.mxu0 %v1582
    %2683 = vmatprep.subr.mxu0 %v1581
    %2684 = vmatpush2.msra.mxu0 %v1580
    %2685 = vmatprep.subr.mxu0 %v1579
    %2686 = vmatpush2.msra.mxu0 %v1578
    %2687 = vmatprep.subr.mxu0 %v1577
    %2688 = vmatpush2.msra.mxu0 %v1576
    %2689 = vmatprep.subr.mxu0 %v1575
    %2690 = vmatpush2.msra.mxu0 %v1574
    %2691 = vmatprep.subr.mxu0 %v1573
    %2692 = vmatpush2.msra.mxu0 %v1572
    %2693 = vmatprep.subr.mxu0 %v1571
    %2694 = vmatpush2.msra.mxu0 %v1570
    %2695 = vmatprep.subr.mxu0 %v1569
    %2696 = vmatpush2.msra.mxu0 %v1568
    %2697 = vmatprep.subr.mxu0 %v1567
    %2698 = vmatpush2.msra.mxu0 %v1566
    %2699 = vmatprep.subr.mxu0 %v1565
    %2700 = vmatpush2.msra.mxu0 %v1564
    %2701 = vmatprep.subr.mxu0 %v1563
    %2702 = vmatpush2.msra.mxu0 %v1562
    %2703 = vmatprep.subr.mxu0 %v1561
    %2704 = vmatpush2.msra.mxu0 %v1560
    %2705 = vmatprep.subr.mxu0 %v1559
    %2706 = vmatpush2.msra.mxu0 %v1558
    %2707 = vmatprep.subr.mxu0 %v1557
    %2708 = vmatpush2.msra.mxu0 %v1556
    %2709 = vmatprep.subr.mxu0 %v1555
    %2710 = vmatpush2.msra.mxu0 %v1554
    %2711 = vmatprep.subr.mxu0 %v1553
    %2712 = vmatpush2.msra.mxu0 %v1552
    %2713 = vmatprep.mubr.f32.mxu0 %v559
    %2714 = vmatmul.mubr.f32.gmra.mxu0 %v423
    %v2715 = vpop.f32.mrf.mxu0
    %v2716 = vadd.f32 0.0, %v2715
    %v2717 = vpop.f32.mrf.mxu0
    %v2718 = vadd.f32 0.0, %v2717
    %2719 = vdwg.mxu0
    %v2720 = vcombine.low %v1651, %v1793
    %v2722 = vunpack.c.l.s4 1983009808
    %v2723 = vunpack.c.0.s8 %v2722
    %v2724 = vlaneseq
    %v2725 = vshrl.u32 %v2724, 7
    %v2726 = vsub.s32 %v2723, %v2725
    %v2727 = vrot.slane %v2720, %v2726
    %v2728 = vcombine.low %v1722, %v1864
    %v2730 = vunpack.c.l.s4 1983009808
    %v2731 = vunpack.c.0.s8 %v2730
    %v2732 = vlaneseq
    %v2733 = vshrl.u32 %v2732, 7
    %v2734 = vsub.s32 %v2731, %v2733
    %v2735 = vrot.slane %v2728, %v2734
    %v2736 = vcombine.low %v1935, %v2077
    %v2738 = vunpack.c.l.s4 1983009808
    %v2739 = vunpack.c.0.s8 %v2738
    %v2740 = vlaneseq
    %v2741 = vshrl.u32 %v2740, 7
    %v2742 = vsub.s32 %v2739, %v2741
    %v2743 = vrot.slane %v2736, %v2742
    %v2744 = vcombine.low %v2006, %v2148
    %v2746 = vunpack.c.l.s4 1983009808
    %v2747 = vunpack.c.0.s8 %v2746
    %v2748 = vlaneseq
    %v2749 = vshrl.u32 %v2748, 7
    %v2750 = vsub.s32 %v2747, %v2749
    %v2751 = vrot.slane %v2744, %v2750
    %v2752 = vcombine.low %v2727, %v2735
    %v2753 = vcombine.high %v2727, %v2735
    %v2755 = vunpack.c.l.s4 1934713408
    %v2756 = vunpack.c.0.s8 %v2755
    %v2757 = vlaneseq
    %v2758 = vshrl.u32 %v2757, 7
    %v2759 = vsub.s32 %v2756, %v2758
    %v2760 = vrot.slane %v2752, %v2759
    %v2762 = vunpack.c.l.s4 1934713408
    %v2763 = vunpack.c.0.s8 %v2762
    %v2764 = vlaneseq
    %v2765 = vshrl.u32 %v2764, 7
    %v2766 = vsub.s32 %v2763, %v2765
    %v2767 = vrot.slane %v2753, %v2766
    %v2768 = vcombine.low %v2743, %v2751
    %v2769 = vcombine.high %v2743, %v2751
    %v2771 = vunpack.c.l.s4 1934713408
    %v2772 = vunpack.c.0.s8 %v2771
    %v2773 = vlaneseq
    %v2774 = vshrl.u32 %v2773, 7
    %v2775 = vsub.s32 %v2772, %v2774
    %v2776 = vrot.slane %v2768, %v2775
    %v2778 = vunpack.c.l.s4 1934713408
    %v2779 = vunpack.c.0.s8 %v2778
    %v2780 = vlaneseq
    %v2781 = vshrl.u32 %v2780, 7
    %v2782 = vsub.s32 %v2779, %v2781
    %v2783 = vrot.slane %v2769, %v2782
    %v2784 = vcombine.low %v2760, %v2776
    %v2785 = vcombine.high %v2760, %v2776
    %v2786 = vcombine.low %v2767, %v2783
    %v2787 = vcombine.high %v2767, %v2783
    %v2788 = vcombine.low %v2219, %v2361
    %v2790 = vunpack.c.l.s4 1983009808
    %v2791 = vunpack.c.0.s8 %v2790
    %v2792 = vlaneseq
    %v2793 = vshrl.u32 %v2792, 7
    %v2794 = vsub.s32 %v2791, %v2793
    %v2795 = vrot.slane %v2788, %v2794
    %v2796 = vcombine.low %v2290, %v2432
    %v2798 = vunpack.c.l.s4 1983009808
    %v2799 = vunpack.c.0.s8 %v2798
    %v2800 = vlaneseq
    %v2801 = vshrl.u32 %v2800, 7
    %v2802 = vsub.s32 %v2799, %v2801
    %v2803 = vrot.slane %v2796, %v2802
    %v2804 = vcombine.low %v2503, %v2645
    %v2806 = vunpack.c.l.s4 1983009808
    %v2807 = vunpack.c.0.s8 %v2806
    %v2808 = vlaneseq
    %v2809 = vshrl.u32 %v2808, 7
    %v2810 = vsub.s32 %v2807, %v2809
    %v2811 = vrot.slane %v2804, %v2810
    %v2812 = vcombine.low %v2574, %v2716
    %v2814 = vunpack.c.l.s4 1983009808
    %v2815 = vunpack.c.0.s8 %v2814
    %v2816 = vlaneseq
    %v2817 = vshrl.u32 %v2816, 7
    %v2818 = vsub.s32 %v2815, %v2817
    %v2819 = vrot.slane %v2812, %v2818
    %v2820 = vcombine.low %v2795, %v2803
    %v2821 = vcombine.high %v2795, %v2803
    %v2823 = vunpack.c.l.s4 1934713408
    %v2824 = vunpack.c.0.s8 %v2823
    %v2825 = vlaneseq
    %v2826 = vshrl.u32 %v2825, 7
    %v2827 = vsub.s32 %v2824, %v2826
    %v2828 = vrot.slane %v2820, %v2827
    %v2830 = vunpack.c.l.s4 1934713408
    %v2831 = vunpack.c.0.s8 %v2830
    %v2832 = vlaneseq
    %v2833 = vshrl.u32 %v2832, 7
    %v2834 = vsub.s32 %v2831, %v2833
    %v2835 = vrot.slane %v2821, %v2834
    %v2836 = vcombine.low %v2811, %v2819
    %v2837 = vcombine.high %v2811, %v2819
    %v2839 = vunpack.c.l.s4 1934713408
    %v2840 = vunpack.c.0.s8 %v2839
    %v2841 = vlaneseq
    %v2842 = vshrl.u32 %v2841, 7
    %v2843 = vsub.s32 %v2840, %v2842
    %v2844 = vrot.slane %v2836, %v2843
    %v2846 = vunpack.c.l.s4 1934713408
    %v2847 = vunpack.c.0.s8 %v2846
    %v2848 = vlaneseq
    %v2849 = vshrl.u32 %v2848, 7
    %v2850 = vsub.s32 %v2847, %v2849
    %v2851 = vrot.slane %v2837, %v2850
    %v2852 = vcombine.low %v2828, %v2844
    %v2853 = vcombine.high %v2828, %v2844
    %v2854 = vcombine.low %v2835, %v2851
    %v2855 = vcombine.high %v2835, %v2851
    %v2856 = vcombine.low %v1653, %v1795
    %v2858 = vunpack.c.l.s4 1983009808
    %v2859 = vunpack.c.0.s8 %v2858
    %v2860 = vlaneseq
    %v2861 = vshrl.u32 %v2860, 7
    %v2862 = vsub.s32 %v2859, %v2861
    %v2863 = vrot.slane %v2856, %v2862
    %v2864 = vcombine.low %v1724, %v1866
    %v2866 = vunpack.c.l.s4 1983009808
    %v2867 = vunpack.c.0.s8 %v2866
    %v2868 = vlaneseq
    %v2869 = vshrl.u32 %v2868, 7
    %v2870 = vsub.s32 %v2867, %v2869
    %v2871 = vrot.slane %v2864, %v2870
    %v2872 = vcombine.low %v1937, %v2079
    %v2874 = vunpack.c.l.s4 1983009808
    %v2875 = vunpack.c.0.s8 %v2874
    %v2876 = vlaneseq
    %v2877 = vshrl.u32 %v2876, 7
    %v2878 = vsub.s32 %v2875, %v2877
    %v2879 = vrot.slane %v2872, %v2878
    %v2880 = vcombine.low %v2008, %v2150
    %v2882 = vunpack.c.l.s4 1983009808
    %v2883 = vunpack.c.0.s8 %v2882
    %v2884 = vlaneseq
    %v2885 = vshrl.u32 %v2884, 7
    %v2886 = vsub.s32 %v2883, %v2885
    %v2887 = vrot.slane %v2880, %v2886
    %v2888 = vcombine.low %v2863, %v2871
    %v2889 = vcombine.high %v2863, %v2871
    %v2891 = vunpack.c.l.s4 1934713408
    %v2892 = vunpack.c.0.s8 %v2891
    %v2893 = vlaneseq
    %v2894 = vshrl.u32 %v2893, 7
    %v2895 = vsub.s32 %v2892, %v2894
    %v2896 = vrot.slane %v2888, %v2895
    %v2898 = vunpack.c.l.s4 1934713408
    %v2899 = vunpack.c.0.s8 %v2898
    %v2900 = vlaneseq
    %v2901 = vshrl.u32 %v2900, 7
    %v2902 = vsub.s32 %v2899, %v2901
    %v2903 = vrot.slane %v2889, %v2902
    %v2904 = vcombine.low %v2879, %v2887
    %v2905 = vcombine.high %v2879, %v2887
    %v2907 = vunpack.c.l.s4 1934713408
    %v2908 = vunpack.c.0.s8 %v2907
    %v2909 = vlaneseq
    %v2910 = vshrl.u32 %v2909, 7
    %v2911 = vsub.s32 %v2908, %v2910
    %v2912 = vrot.slane %v2904, %v2911
    %v2914 = vunpack.c.l.s4 1934713408
    %v2915 = vunpack.c.0.s8 %v2914
    %v2916 = vlaneseq
    %v2917 = vshrl.u32 %v2916, 7
    %v2918 = vsub.s32 %v2915, %v2917
    %v2919 = vrot.slane %v2905, %v2918
    %v2920 = vcombine.low %v2896, %v2912
    %v2921 = vcombine.high %v2896, %v2912
    %v2922 = vcombine.low %v2903, %v2919
    %v2923 = vcombine.high %v2903, %v2919
    %v2924 = vcombine.low %v2221, %v2363
    %v2926 = vunpack.c.l.s4 1983009808
    %v2927 = vunpack.c.0.s8 %v2926
    %v2928 = vlaneseq
    %v2929 = vshrl.u32 %v2928, 7
    %v2930 = vsub.s32 %v2927, %v2929
    %v2931 = vrot.slane %v2924, %v2930
    %v2932 = vcombine.low %v2292, %v2434
    %v2934 = vunpack.c.l.s4 1983009808
    %v2935 = vunpack.c.0.s8 %v2934
    %v2936 = vlaneseq
    %v2937 = vshrl.u32 %v2936, 7
    %v2938 = vsub.s32 %v2935, %v2937
    %v2939 = vrot.slane %v2932, %v2938
    %v2940 = vcombine.low %v2505, %v2647
    %v2942 = vunpack.c.l.s4 1983009808
    %v2943 = vunpack.c.0.s8 %v2942
    %v2944 = vlaneseq
    %v2945 = vshrl.u32 %v2944, 7
    %v2946 = vsub.s32 %v2943, %v2945
    %v2947 = vrot.slane %v2940, %v2946
    %v2948 = vcombine.low %v2576, %v2718
    %v2950 = vunpack.c.l.s4 1983009808
    %v2951 = vunpack.c.0.s8 %v2950
    %v2952 = vlaneseq
    %v2953 = vshrl.u32 %v2952, 7
    %v2954 = vsub.s32 %v2951, %v2953
    %v2955 = vrot.slane %v2948, %v2954
    %v2956 = vcombine.low %v2931, %v2939
    %v2957 = vcombine.high %v2931, %v2939
    %v2959 = vunpack.c.l.s4 1934713408
    %v2960 = vunpack.c.0.s8 %v2959
    %v2961 = vlaneseq
    %v2962 = vshrl.u32 %v2961, 7
    %v2963 = vsub.s32 %v2960, %v2962
    %v2964 = vrot.slane %v2956, %v2963
    %v2966 = vunpack.c.l.s4 1934713408
    %v2967 = vunpack.c.0.s8 %v2966
    %v2968 = vlaneseq
    %v2969 = vshrl.u32 %v2968, 7
    %v2970 = vsub.s32 %v2967, %v2969
    %v2971 = vrot.slane %v2957, %v2970
    %v2972 = vcombine.low %v2947, %v2955
    %v2973 = vcombine.high %v2947, %v2955
    %v2975 = vunpack.c.l.s4 1934713408
    %v2976 = vunpack.c.0.s8 %v2975
    %v2977 = vlaneseq
    %v2978 = vshrl.u32 %v2977, 7
    %v2979 = vsub.s32 %v2976, %v2978
    %v2980 = vrot.slane %v2972, %v2979
    %v2982 = vunpack.c.l.s4 1934713408
    %v2983 = vunpack.c.0.s8 %v2982
    %v2984 = vlaneseq
    %v2985 = vshrl.u32 %v2984, 7
    %v2986 = vsub.s32 %v2983, %v2985
    %v2987 = vrot.slane %v2973, %v2986
    %v2988 = vcombine.low %v2964, %v2980
    %v2989 = vcombine.high %v2964, %v2980
    %v2990 = vcombine.low %v2971, %v2987
    %v2991 = vcombine.high %v2971, %v2987
    %v2993 = vsel %vm97, %v93, 0
    %v2996 = vsel %vm97, %v94, 0
    %v2999 = vsel %vm97, %v95, 0
    %v3002 = vsel %vm97, %v96, 0
    %3004 = vmatprep.subr.mxu0 0.0
    %3005 = vmatpush1.msra.mxu0 0.0
    %3006 = vmatprep.subr.mxu0 0.0
    %3007 = vmatpush1.msra.mxu0 0.0
    %3008 = vmatprep.subr.mxu0 0.0
    %3009 = vmatpush1.msra.mxu0 0.0
    %3010 = vmatprep.subr.mxu0 0.0
    %3011 = vmatpush1.msra.mxu0 0.0
    %3012 = vmatprep.subr.mxu0 0.0
    %3013 = vmatpush1.msra.mxu0 0.0
    %3014 = vmatprep.subr.mxu0 0.0
    %3015 = vmatpush1.msra.mxu0 0.0
    %3016 = vmatprep.subr.mxu0 0.0
    %3017 = vmatpush1.msra.mxu0 0.0
    %3018 = vmatprep.subr.mxu0 0.0
    %3019 = vmatpush1.msra.mxu0 0.0
    %3020 = vmatprep.subr.mxu0 0.0
    %3021 = vmatpush1.msra.mxu0 0.0
    %3022 = vmatprep.subr.mxu0 0.0
    %3023 = vmatpush1.msra.mxu0 0.0
    %3024 = vmatprep.subr.mxu0 0.0
    %3025 = vmatpush1.msra.mxu0 0.0
    %3026 = vmatprep.subr.mxu0 0.0
    %3027 = vmatpush1.msra.mxu0 0.0
    %3028 = vmatprep.subr.mxu0 %v2989
    %3029 = vmatpush1.msra.mxu0 %v2988
    %3030 = vmatprep.subr.mxu0 %v2921
    %3031 = vmatpush1.msra.mxu0 %v2920
    %3032 = vmatprep.subr.mxu0 %v2853
    %3033 = vmatpush1.msra.mxu0 %v2852
    %3034 = vmatprep.subr.mxu0 %v2785
    %3035 = vmatpush1.msra.mxu0 %v2784
    %3036 = vmatprep.subr.mxu0 0.0
    %3037 = vmatpush2.msra.mxu0 0.0
    %3038 = vmatprep.subr.mxu0 0.0
    %3039 = vmatpush2.msra.mxu0 0.0
    %3040 = vmatprep.subr.mxu0 0.0
    %3041 = vmatpush2.msra.mxu0 0.0
    %3042 = vmatprep.subr.mxu0 0.0
    %3043 = vmatpush2.msra.mxu0 0.0
    %3044 = vmatprep.subr.mxu0 0.0
    %3045 = vmatpush2.msra.mxu0 0.0
    %3046 = vmatprep.subr.mxu0 0.0
    %3047 = vmatpush2.msra.mxu0 0.0
    %3048 = vmatprep.subr.mxu0 0.0
    %3049 = vmatpush2.msra.mxu0 0.0
    %3050 = vmatprep.subr.mxu0 0.0
    %3051 = vmatpush2.msra.mxu0 0.0
    %3052 = vmatprep.subr.mxu0 0.0
    %3053 = vmatpush2.msra.mxu0 0.0
    %3054 = vmatprep.subr.mxu0 0.0
    %3055 = vmatpush2.msra.mxu0 0.0
    %3056 = vmatprep.subr.mxu0 0.0
    %3057 = vmatpush2.msra.mxu0 0.0
    %3058 = vmatprep.subr.mxu0 0.0
    %3059 = vmatpush2.msra.mxu0 0.0
    %3060 = vmatprep.subr.mxu0 0.0
    %3061 = vmatpush2.msra.mxu0 0.0
    %3062 = vmatprep.subr.mxu0 0.0
    %3063 = vmatpush2.msra.mxu0 0.0
    %3064 = vmatprep.subr.mxu0 0.0
    %3065 = vmatpush2.msra.mxu0 0.0
    %3066 = vmatprep.subr.mxu0 0.0
    %3067 = vmatpush2.msra.mxu0 0.0
    %3068 = vmatprep.mubr.f32.mxu0 0.0
    %3069 = vmatmul.mubr.f32.gmra.mxu0 %v2993
    %v3070 = vpop.f32.mrf.mxu0
    %v3071 = vadd.f32 0.0, %v3070
    %v3072 = vpop.f32.mrf.mxu0
    %v3073 = vadd.f32 0.0, %v3072
    %3074 = vmatprep.mubr.f32.mxu0 0.0
    %3075 = vmatmul.mubr.f32.gmra.mxu0 %v2996
    %v3076 = vpop.f32.mrf.mxu0
    %v3077 = vadd.f32 0.0, %v3076
    %v3078 = vpop.f32.mrf.mxu0
    %v3079 = vadd.f32 0.0, %v3078
    %3080 = vmatprep.mubr.f32.mxu0 0.0
    %3081 = vmatmul.mubr.f32.gmra.mxu0 %v2999
    %v3082 = vpop.f32.mrf.mxu0
    %v3083 = vadd.f32 0.0, %v3082
    %v3084 = vpop.f32.mrf.mxu0
    %v3085 = vadd.f32 0.0, %v3084
    %3086 = vmatprep.mubr.f32.mxu0 0.0
    %3087 = vmatmul.mubr.f32.gmra.mxu0 %v3002
    %v3088 = vpop.f32.mrf.mxu0
    %v3089 = vadd.f32 0.0, %v3088
    %v3090 = vpop.f32.mrf.mxu0
    %v3091 = vadd.f32 0.0, %v3090
    %3092 = vdwg.mxu0
    %3093 = vmatprep.subr.mxu0 0.0
    %3094 = vmatpush1.msra.mxu0 0.0
    %3095 = vmatprep.subr.mxu0 0.0
    %3096 = vmatpush1.msra.mxu0 0.0
    %3097 = vmatprep.subr.mxu0 0.0
    %3098 = vmatpush1.msra.mxu0 0.0
    %3099 = vmatprep.subr.mxu0 0.0
    %3100 = vmatpush1.msra.mxu0 0.0
    %3101 = vmatprep.subr.mxu0 0.0
    %3102 = vmatpush1.msra.mxu0 0.0
    %3103 = vmatprep.subr.mxu0 0.0
    %3104 = vmatpush1.msra.mxu0 0.0
    %3105 = vmatprep.subr.mxu0 0.0
    %3106 = vmatpush1.msra.mxu0 0.0
    %3107 = vmatprep.subr.mxu0 0.0
    %3108 = vmatpush1.msra.mxu0 0.0
    %3109 = vmatprep.subr.mxu0 0.0
    %3110 = vmatpush1.msra.mxu0 0.0
    %3111 = vmatprep.subr.mxu0 0.0
    %3112 = vmatpush1.msra.mxu0 0.0
    %3113 = vmatprep.subr.mxu0 0.0
    %3114 = vmatpush1.msra.mxu0 0.0
    %3115 = vmatprep.subr.mxu0 0.0
    %3116 = vmatpush1.msra.mxu0 0.0
    %3117 = vmatprep.subr.mxu0 %v2991
    %3118 = vmatpush1.msra.mxu0 %v2990
    %3119 = vmatprep.subr.mxu0 %v2923
    %3120 = vmatpush1.msra.mxu0 %v2922
    %3121 = vmatprep.subr.mxu0 %v2855
    %3122 = vmatpush1.msra.mxu0 %v2854
    %3123 = vmatprep.subr.mxu0 %v2787
    %3124 = vmatpush1.msra.mxu0 %v2786
    %3125 = vmatprep.subr.mxu0 0.0
    %3126 = vmatpush2.msra.mxu0 0.0
    %3127 = vmatprep.subr.mxu0 0.0
    %3128 = vmatpush2.msra.mxu0 0.0
    %3129 = vmatprep.subr.mxu0 0.0
    %3130 = vmatpush2.msra.mxu0 0.0
    %3131 = vmatprep.subr.mxu0 0.0
    %3132 = vmatpush2.msra.mxu0 0.0
    %3133 = vmatprep.subr.mxu0 0.0
    %3134 = vmatpush2.msra.mxu0 0.0
    %3135 = vmatprep.subr.mxu0 0.0
    %3136 = vmatpush2.msra.mxu0 0.0
    %3137 = vmatprep.subr.mxu0 0.0
    %3138 = vmatpush2.msra.mxu0 0.0
    %3139 = vmatprep.subr.mxu0 0.0
    %3140 = vmatpush2.msra.mxu0 0.0
    %3141 = vmatprep.subr.mxu0 0.0
    %3142 = vmatpush2.msra.mxu0 0.0
    %3143 = vmatprep.subr.mxu0 0.0
    %3144 = vmatpush2.msra.mxu0 0.0
    %3145 = vmatprep.subr.mxu0 0.0
    %3146 = vmatpush2.msra.mxu0 0.0
    %3147 = vmatprep.subr.mxu0 0.0
    %3148 = vmatpush2.msra.mxu0 0.0
    %3149 = vmatprep.subr.mxu0 0.0
    %3150 = vmatpush2.msra.mxu0 0.0
    %3151 = vmatprep.subr.mxu0 0.0
    %3152 = vmatpush2.msra.mxu0 0.0
    %3153 = vmatprep.subr.mxu0 0.0
    %3154 = vmatpush2.msra.mxu0 0.0
    %3155 = vmatprep.subr.mxu0 0.0
    %3156 = vmatpush2.msra.mxu0 0.0
    %3157 = vmatprep.mubr.f32.mxu0 0.0
    %3158 = vmatmul.mubr.f32.gmra.mxu0 %v2993
    %v3159 = vpop.f32.mrf.mxu0
    %v3160 = vadd.f32 0.0, %v3159
    %v3161 = vpop.f32.mrf.mxu0
    %v3162 = vadd.f32 0.0, %v3161
    %3163 = vmatprep.mubr.f32.mxu0 0.0
    %3164 = vmatmul.mubr.f32.gmra.mxu0 %v2996
    %v3165 = vpop.f32.mrf.mxu0
    %v3166 = vadd.f32 0.0, %v3165
    %v3167 = vpop.f32.mrf.mxu0
    %v3168 = vadd.f32 0.0, %v3167
    %3169 = vmatprep.mubr.f32.mxu0 0.0
    %3170 = vmatmul.mubr.f32.gmra.mxu0 %v2999
    %v3171 = vpop.f32.mrf.mxu0
    %v3172 = vadd.f32 0.0, %v3171
    %v3173 = vpop.f32.mrf.mxu0
    %v3174 = vadd.f32 0.0, %v3173
    %3175 = vmatprep.mubr.f32.mxu0 0.0
    %3176 = vmatmul.mubr.f32.gmra.mxu0 %v3002
    %v3177 = vpop.f32.mrf.mxu0
    %v3178 = vadd.f32 0.0, %v3177
    %v3179 = vpop.f32.mrf.mxu0
    %v3180 = vadd.f32 0.0, %v3179
    %3181 = vdwg.mxu0
    %3182 = vst [vmem:[#allocation10] sm:$0xff] %v3071
    %3183 = vst [vmem:[#allocation10 + $0x8] sm:$0xff] %v3073
    %3184 = vst [vmem:[#allocation10 + $0x10] sm:$0xff] %v3160
    %3185 = vst [vmem:[#allocation10 + $0x18] sm:$0xff] %v3162
    %3186 = vst [vmem:[#allocation10 + $0x20] sm:$0xff] %v3077
    %3187 = vst [vmem:[#allocation10 + $0x28] sm:$0xff] %v3079
    %3188 = vst [vmem:[#allocation10 + $0x30] sm:$0xff] %v3166
    %3189 = vst [vmem:[#allocation10 + $0x38] sm:$0xff] %v3168
    %3190 = vst [vmem:[#allocation10 + $0x40] sm:$0xff] %v3083
    %3191 = vst [vmem:[#allocation10 + $0x48] sm:$0xff] %v3085
    %3192 = vst [vmem:[#allocation10 + $0x50] sm:$0xff] %v3172
    %3193 = vst [vmem:[#allocation10 + $0x58] sm:$0xff] %v3174
    %3194 = vst [vmem:[#allocation10 + $0x60] sm:$0xff] %v3089
    %3195 = vst [vmem:[#allocation10 + $0x68] sm:$0xff] %v3091
    %3196 = vst [vmem:[#allocation10 + $0x70] sm:$0xff] %v3178
    %3197 = vst [vmem:[#allocation10 + $0x78] sm:$0xff] %v3180
    // Predicated region
    $region34: #{tpu_custom_call.1} parent=1 // pred_check
      _
    $region35: #{tpu_custom_call.1} parent=1 // pred_check_branch
      %3199 = sbr.rel (0) target = $region37
    $region36: #{tpu_custom_call.1} parent=1 // pred_region
      %s3201 = ssub.s32 2048, 2048
      %3202 = vsyncadd [#allocation4], %s3201
      %s3203 = sshll.u32 [#allocation10], 4
      %s3204 = int_to_ptr.vmem [resolvable:$true] %s3203
      %3209 = dma.vmem_to_hbm [thread:$0]  %s3204, 2048, %s4, [#allocation4], 512, 512, 32
    $region37: #{tpu_custom_call.1} parent=1 // pred_fallthru
      _
    // Predicated region
    $region38: #{tpu_custom_call.1} parent=1 // pred_check
      _
    $region39: #{tpu_custom_call.1} parent=1 // pred_check_branch
      %3211 = sbr.rel (0) target = $region41
    $region40: #{tpu_custom_call.1} parent=1 // pred_region
      %3212 = dma.done [#allocation4], 2048
    $region41: #{tpu_custom_call.1} parent=1 // pred_fallthru
      _
    %3213 = vsyncpa [#allocation3], 1
    %3214 = vsyncpa [#allocation6], 1
    %3215 = vsyncpa [#allocation9], 1
    %3216 = vsyncpa [#allocation4], 1

// kernel: tpu_custom_call.1
$region0: #{tpu_custom_call.1}
  #allocation0 [shape = 'u32[]', space=smem, size = 0x4, offset = 0x4, fixed_abs, tag = 'smem constant byte address 0x4 - core index']
  #allocation1 [shape = 'u32[144,128]{1,0:T(1,128)}', space=vmem, size = 0x12000, scoped, tag = 'internal scratch']
  %s0 = inlined_call_operand.hbm [shape: f32[32,512], index: 0, kind: input, shape index: {}]
  %s1 = inlined_call_operand.hbm [shape: f32[1,32,32], index: 1, kind: input, shape index: {}]
  %s2 = inlined_call_operand.hbm [shape: f32[1,32,32], index: 2, kind: input, shape index: {}]
  %s3 = inlined_call_operand.hbm [shape: f32[16,256,256], index: 3, kind: input, shape index: {}]
  %s4 = inlined_call_operand.hbm [shape: f32[32,512], index: 4, kind: output, shape index: {}]
  %s5 = sld [smem:[#allocation0]]
  $region42: #{tpu_custom_call.1} parent=0
    _
  %s7 = ssub.s32 1, %s5
  %s8 = scalar_select 0, %s7, %s5
  $region1: #{tpu_custom_call.1} parent=0
    #allocation2 [shape = 'u8[65536]{0}', space=vmem, size = 0x10000, scoped, tag = 'input window, operand 0, single buffered']
    #allocation3 [shape = 's32[1]{0}', space=sflag, size = 0x4, scoped, tag = 'scoped memory for tpu_custom_call.1']
    #allocation4 [shape = 's32[1]{0}', space=sflag, size = 0x4, scoped, tag = 'scoped memory for tpu_custom_call.1']
    #allocation5 [shape = 'u8[16384]{0}', space=vmem, size = 0x4000, scoped, tag = 'input window, operand 1, single buffered']
    #allocation6 [shape = 's32[1]{0}', space=sflag, size = 0x4, scoped, tag = 'scoped memory for tpu_custom_call.1']
    #allocation7 [shape = 'u8[16384]{0}', space=vmem, size = 0x4000, scoped, tag = 'input window, operand 2, single buffered']
    #allocation8 [shape = 'u8[4194304]{0}', space=vmem, size = 0x400000, scoped, tag = 'input window, operand 3, single buffered']
    #allocation9 [shape = 's32[1]{0}', space=sflag, size = 0x4, scoped, tag = 'scoped memory for tpu_custom_call.1']
    #allocation10 [shape = 'u8[65536]{0}', space=vmem, size = 0x10000, scoped, tag = 'output window, operand 0, single buffered']
    %9 = vsyncpa [#allocation3], 0
    %10 = vsyncpa [#allocation6], 0
    %11 = vsyncpa [#allocation9], 0
    %12 = vsyncpa [#allocation4], 0
    // Predicated region
    $region2: #{tpu_custom_call.1} parent=1 // pred_check
      _
    $region3: #{tpu_custom_call.1} parent=1 // pred_check_branch
      %14 = sbr.rel (0) target = $region5
    $region4: #{tpu_custom_call.1} parent=1 // pred_region
      %s16 = ssub.s32 2048, 2048
      %17 = vsyncadd [#allocation3], %s16
      %s18 = sshll.u32 [#allocation2], 4
      %s19 = int_to_ptr.vmem [resolvable:$true] %s18
      %24 = dma.hbm_to_vmem [thread:$0]  %s0, 2048, %s19, [#allocation3], 512, 512, 32
    $region5: #{tpu_custom_call.1} parent=1 // pred_fallthru
      _
    // Predicated region
    $region6: #{tpu_custom_call.1} parent=1 // pred_check
      _
    $region7: #{tpu_custom_call.1} parent=1 // pred_check_branch
      %26 = sbr.rel (0) target = $region9
    $region8: #{tpu_custom_call.1} parent=1 // pred_region
      %s28 = ssub.s32 512, 512
      %29 = vsyncadd [#allocation6], %s28
      %s30 = sshll.u32 [#allocation5], 4
      %s31 = int_to_ptr.vmem [resolvable:$true] %s30
      %36 = dma.hbm_to_vmem [thread:$0]  %s1, 512, %s31, [#allocation6], 128, 128, 8
    $region9: #{tpu_custom_call.1} parent=1 // pred_fallthru
      _
    // Predicated region
    $region10: #{tpu_custom_call.1} parent=1 // pred_check
      _
    $region11: #{tpu_custom_call.1} parent=1 // pred_check_branch
      %38 = sbr.rel (0) target = $region13
    $region12: #{tpu_custom_call.1} parent=1 // pred_region
      %s40 = ssub.s32 512, 512
      %41 = vsyncadd [#allocation6], %s40
      %s42 = sshll.u32 [#allocation7], 4
      %s43 = int_to_ptr.vmem [resolvable:$true] %s42
      %48 = dma.hbm_to_vmem [thread:$0]  %s2, 512, %s43, [#allocation6], 128, 128, 8
    $region13: #{tpu_custom_call.1} parent=1 // pred_fallthru
      _
    // Predicated region
    $region14: #{tpu_custom_call.1} parent=1 // pred_check
      _
    $region15: #{tpu_custom_call.1} parent=1 // pred_check_branch
      %50 = sbr.rel (0) target = $region17
    $region16: #{tpu_custom_call.1} parent=1 // pred_region
      %s52 = ssub.s32 131072, 131072
      %53 = vsyncadd [#allocation9], %s52
      %s54 = sshll.u32 [#allocation8], 4
      %s55 = int_to_ptr.vmem [resolvable:$true] %s54
      %60 = dma.hbm_to_vmem [thread:$0]  %s3, 131072, %s55, [#allocation9], 256, 256, 16
    $region17: #{tpu_custom_call.1} parent=1 // pred_fallthru
      _
    // Predicated region
    $region18: #{tpu_custom_call.1} parent=1 // pred_check
      _
    $region19: #{tpu_custom_call.1} parent=1 // pred_check_branch
      %62 = sbr.rel (0) target = $region21
    $region20: #{tpu_custom_call.1} parent=1 // pred_region
      %63 = dma.done [#allocation3], 2048
    $region21: #{tpu_custom_call.1} parent=1 // pred_fallthru
      _
    // Predicated region
    $region22: #{tpu_custom_call.1} parent=1 // pred_check
      _
    $region23: #{tpu_custom_call.1} parent=1 // pred_check_branch
      %65 = sbr.rel (0) target = $region25
    $region24: #{tpu_custom_call.1} parent=1 // pred_region
      %66 = dma.done [#allocation6], 512
    $region25: #{tpu_custom_call.1} parent=1 // pred_fallthru
      _
    // Predicated region
    $region26: #{tpu_custom_call.1} parent=1 // pred_check
      _
    $region27: #{tpu_custom_call.1} parent=1 // pred_check_branch
      %68 = sbr.rel (0) target = $region29
    $region28: #{tpu_custom_call.1} parent=1 // pred_region
      %69 = dma.done [#allocation6], 512
    $region29: #{tpu_custom_call.1} parent=1 // pred_fallthru
      _
    // Predicated region
    $region30: #{tpu_custom_call.1} parent=1 // pred_check
      _
    $region31: #{tpu_custom_call.1} parent=1 // pred_check_branch
      %71 = sbr.rel (0) target = $region33
    $region32: #{tpu_custom_call.1} parent=1 // pred_region
      %72 = dma.done [#allocation9], 131072
    $region33: #{tpu_custom_call.1} parent=1 // pred_fallthru
      _
    %v73 = vld [vmem:[#allocation2] sm:$0xff]
    %v74 = vld [vmem:[#allocation2 + $0x8] sm:$0xff]
    %v75 = vld [vmem:[#allocation2 + $0x10] sm:$0xff]
    %v76 = vld [vmem:[#allocation2 + $0x18] sm:$0xff]
    %v77 = vld [vmem:[#allocation2 + $0x20] sm:$0xff]
    %v78 = vld [vmem:[#allocation2 + $0x28] sm:$0xff]
    %v79 = vld [vmem:[#allocation2 + $0x30] sm:$0xff]
    %v80 = vld [vmem:[#allocation2 + $0x38] sm:$0xff]
    %v81 = vld [vmem:[#allocation2 + $0x40] sm:$0xff]
    %v82 = vld [vmem:[#allocation2 + $0x48] sm:$0xff]
    %v83 = vld [vmem:[#allocation2 + $0x50] sm:$0xff]
    %v84 = vld [vmem:[#allocation2 + $0x58] sm:$0xff]
    %v85 = vld [vmem:[#allocation2 + $0x60] sm:$0xff]
    %v86 = vld [vmem:[#allocation2 + $0x68] sm:$0xff]
    %v87 = vld [vmem:[#allocation2 + $0x70] sm:$0xff]
    %v88 = vld [vmem:[#allocation2 + $0x78] sm:$0xff]
    %v89 = vld [vmem:[#allocation5] sm:$0xff]
    %v90 = vld [vmem:[#allocation5 + $0x8] sm:$0xff]
    %v91 = vld [vmem:[#allocation5 + $0x10] sm:$0xff]
    %v92 = vld [vmem:[#allocation5 + $0x18] sm:$0xff]
    %v93 = vld [vmem:[#allocation7] sm:$0xff]
    %v94 = vld [vmem:[#allocation7 + $0x8] sm:$0xff]
    %v95 = vld [vmem:[#allocation7 + $0x10] sm:$0xff]
    %v96 = vld [vmem:[#allocation7 + $0x18] sm:$0xff]
    %vm97 = vcmask 261120
    %v99 = vsel %vm97, %v89, 0
    %v102 = vsel %vm97, %v90, 0
    %v105 = vsel %vm97, %v91, 0
    %v108 = vsel %vm97, %v92, 0
    %110 = vmatprep.subr.mxu0 0.0
    %111 = vmatpush1.msra.mxu0 0.0
    %112 = vmatprep.subr.mxu0 0.0
    %113 = vmatpush1.msra.mxu0 0.0
    %114 = vmatprep.subr.mxu0 0.0
    %115 = vmatpush1.msra.mxu0 0.0
    %116 = vmatprep.subr.mxu0 0.0
    %117 = vmatpush1.msra.mxu0 0.0
    %118 = vmatprep.subr.mxu0 0.0
    %119 = vmatpush1.msra.mxu0 0.0
    %120 = vmatprep.subr.mxu0 0.0
    %121 = vmatpush1.msra.mxu0 0.0
    %122 = vmatprep.subr.mxu0 0.0
    %123 = vmatpush1.msra.mxu0 0.0
    %124 = vmatprep.subr.mxu0 0.0
    %125 = vmatpush1.msra.mxu0 0.0
    %126 = vmatprep.subr.mxu0 0.0
    %127 = vmatpush1.msra.mxu0 0.0
    %128 = vmatprep.subr.mxu0 0.0
    %129 = vmatpush1.msra.mxu0 0.0
    %130 = vmatprep.subr.mxu0 0.0
    %131 = vmatpush1.msra.mxu0 0.0
    %132 = vmatprep.subr.mxu0 0.0
    %133 = vmatpush1.msra.mxu0 0.0
    %134 = vmatprep.subr.mxu0 %v86
    %135 = vmatpush1.msra.mxu0 %v85
    %136 = vmatprep.subr.mxu0 %v82
    %137 = vmatpush1.msra.mxu0 %v81
    %138 = vmatprep.subr.mxu0 %v78
    %139 = vmatpush1.msra.mxu0 %v77
    %140 = vmatprep.subr.mxu0 %v74
    %141 = vmatpush1.msra.mxu0 %v73
    %142 = vmatprep.subr.mxu0 0.0
    %143 = vmatpush2.msra.mxu0 0.0
    %144 = vmatprep.subr.mxu0 0.0
    %145 = vmatpush2.msra.mxu0 0.0
    %146 = vmatprep.subr.mxu0 0.0
    %147 = vmatpush2.msra.mxu0 0.0
    %148 = vmatprep.subr.mxu0 0.0
    %149 = vmatpush2.msra.mxu0 0.0
    %150 = vmatprep.subr.mxu0 0.0
    %151 = vmatpush2.msra.mxu0 0.0
    %152 = vmatprep.subr.mxu0 0.0
    %153 = vmatpush2.msra.mxu0 0.0
    %154 = vmatprep.subr.mxu0 0.0
    %155 = vmatpush2.msra.mxu0 0.0
    %156 = vmatprep.subr.mxu0 0.0
    %157 = vmatpush2.msra.mxu0 0.0
    %158 = vmatprep.subr.mxu0 0.0
    %159 = vmatpush2.msra.mxu0 0.0
    %160 = vmatprep.subr.mxu0 0.0
    %161 = vmatpush2.msra.mxu0 0.0
    %162 = vmatprep.subr.mxu0 0.0
    %163 = vmatpush2.msra.mxu0 0.0
    %164 = vmatprep.subr.mxu0 0.0
    %165 = vmatpush2.msra.mxu0 0.0
    %166 = vmatprep.subr.mxu0 0.0
    %167 = vmatpush2.msra.mxu0 0.0
    %168 = vmatprep.subr.mxu0 0.0
    %169 = vmatpush2.msra.mxu0 0.0
    %170 = vmatprep.subr.mxu0 0.0
    %171 = vmatpush2.msra.mxu0 0.0
    %172 = vmatprep.subr.mxu0 0.0
    %173 = vmatpush2.msra.mxu0 0.0
    %174 = vmatprep.mubr.f32.mxu0 0.0
    %175 = vmatmul.mubr.f32.gmra.mxu0 %v99
    %v176 = vpop.f32.mrf.mxu0
    %v177 = vadd.f32 0.0, %v176
    %v178 = vpop.f32.mrf.mxu0
    %v179 = vadd.f32 0.0, %v178
    %180 = vmatprep.mubr.f32.mxu0 0.0
    %181 = vmatmul.mubr.f32.gmra.mxu0 %v102
    %v182 = vpop.f32.mrf.mxu0
    %v183 = vadd.f32 0.0, %v182
    %v184 = vpop.f32.mrf.mxu0
    %v185 = vadd.f32 0.0, %v184
    %186 = vmatprep.mubr.f32.mxu0 0.0
    %187 = vmatmul.mubr.f32.gmra.mxu0 %v105
    %v188 = vpop.f32.mrf.mxu0
    %v189 = vadd.f32 0.0, %v188
    %v190 = vpop.f32.mrf.mxu0
    %v191 = vadd.f32 0.0, %v190
    %192 = vmatprep.mubr.f32.mxu0 0.0
    %193 = vmatmul.mubr.f32.gmra.mxu0 %v108
    %v194 = vpop.f32.mrf.mxu0
    %v195 = vadd.f32 0.0, %v194
    %v196 = vpop.f32.mrf.mxu0
    %v197 = vadd.f32 0.0, %v196
    %198 = vdwg.mxu0
    %199 = vmatprep.subr.mxu0 0.0
    %200 = vmatpush1.msra.mxu0 0.0
    %201 = vmatprep.subr.mxu0 0.0
    %202 = vmatpush1.msra.mxu0 0.0
    %203 = vmatprep.subr.mxu0 0.0
    %204 = vmatpush1.msra.mxu0 0.0
    %205 = vmatprep.subr.mxu0 0.0
    %206 = vmatpush1.msra.mxu0 0.0
    %207 = vmatprep.subr.mxu0 0.0
    %208 = vmatpush1.msra.mxu0 0.0
    %209 = vmatprep.subr.mxu0 0.0
    %210 = vmatpush1.msra.mxu0 0.0
    %211 = vmatprep.subr.mxu0 0.0
    %212 = vmatpush1.msra.mxu0 0.0
    %213 = vmatprep.subr.mxu0 0.0
    %214 = vmatpush1.msra.mxu0 0.0
    %215 = vmatprep.subr.mxu0 0.0
    %216 = vmatpush1.msra.mxu0 0.0
    %217 = vmatprep.subr.mxu0 0.0
    %218 = vmatpush1.msra.mxu0 0.0
    %219 = vmatprep.subr.mxu0 0.0
    %220 = vmatpush1.msra.mxu0 0.0
    %221 = vmatprep.subr.mxu0 0.0
    %222 = vmatpush1.msra.mxu0 0.0
    %223 = vmatprep.subr.mxu0 %v88
    %224 = vmatpush1.msra.mxu0 %v87
    %225 = vmatprep.subr.mxu0 %v84
    %226 = vmatpush1.msra.mxu0 %v83
    %227 = vmatprep.subr.mxu0 %v80
    %228 = vmatpush1.msra.mxu0 %v79
    %229 = vmatprep.subr.mxu0 %v76
    %230 = vmatpush1.msra.mxu0 %v75
    %231 = vmatprep.subr.mxu0 0.0
    %232 = vmatpush2.msra.mxu0 0.0
    %233 = vmatprep.subr.mxu0 0.0
    %234 = vmatpush2.msra.mxu0 0.0
    %235 = vmatprep.subr.mxu0 0.0
    %236 = vmatpush2.msra.mxu0 0.0
    %237 = vmatprep.subr.mxu0 0.0
    %238 = vmatpush2.msra.mxu0 0.0
    %239 = vmatprep.subr.mxu0 0.0
    %240 = vmatpush2.msra.mxu0 0.0
    %241 = vmatprep.subr.mxu0 0.0
    %242 = vmatpush2.msra.mxu0 0.0
    %243 = vmatprep.subr.mxu0 0.0
    %244 = vmatpush2.msra.mxu0 0.0
    %245 = vmatprep.subr.mxu0 0.0
    %246 = vmatpush2.msra.mxu0 0.0
    %247 = vmatprep.subr.mxu0 0.0
    %248 = vmatpush2.msra.mxu0 0.0
    %249 = vmatprep.subr.mxu0 0.0
    %250 = vmatpush2.msra.mxu0 0.0
    %251 = vmatprep.subr.mxu0 0.0
    %252 = vmatpush2.msra.mxu0 0.0
    %253 = vmatprep.subr.mxu0 0.0
    %254 = vmatpush2.msra.mxu0 0.0
    %255 = vmatprep.subr.mxu0 0.0
    %256 = vmatpush2.msra.mxu0 0.0
    %257 = vmatprep.subr.mxu0 0.0
    %258 = vmatpush2.msra.mxu0 0.0
    %259 = vmatprep.subr.mxu0 0.0
    %260 = vmatpush2.msra.mxu0 0.0
    %261 = vmatprep.subr.mxu0 0.0
    %262 = vmatpush2.msra.mxu0 0.0
    %263 = vmatprep.mubr.f32.mxu0 0.0
    %264 = vmatmul.mubr.f32.gmra.mxu0 %v99
    %v265 = vpop.f32.mrf.mxu0
    %v266 = vadd.f32 0.0, %v265
    %v267 = vpop.f32.mrf.mxu0
    %v268 = vadd.f32 0.0, %v267
    %269 = vmatprep.mubr.f32.mxu0 0.0
    %270 = vmatmul.mubr.f32.gmra.mxu0 %v102
    %v271 = vpop.f32.mrf.mxu0
    %v272 = vadd.f32 0.0, %v271
    %v273 = vpop.f32.mrf.mxu0
    %v274 = vadd.f32 0.0, %v273
    %275 = vmatprep.mubr.f32.mxu0 0.0
    %276 = vmatmul.mubr.f32.gmra.mxu0 %v105
    %v277 = vpop.f32.mrf.mxu0
    %v278 = vadd.f32 0.0, %v277
    %v279 = vpop.f32.mrf.mxu0
    %v280 = vadd.f32 0.0, %v279
    %281 = vmatprep.mubr.f32.mxu0 0.0
    %282 = vmatmul.mubr.f32.gmra.mxu0 %v108
    %v283 = vpop.f32.mrf.mxu0
    %v284 = vadd.f32 0.0, %v283
    %v285 = vpop.f32.mrf.mxu0
    %v286 = vadd.f32 0.0, %v285
    %287 = vdwg.mxu0
    %v288 = vcombine.low %v177, %v266
    %v289 = vcombine.high %v177, %v266
    %v291 = vunpack.c.l.s4 1983009808
    %v292 = vunpack.c.0.s8 %v291
    %v293 = vlaneseq
    %v294 = vshrl.u32 %v293, 7
    %v295 = vsub.s32 %v292, %v294
    %v296 = vrot.slane %v288, %v295
    %v298 = vunpack.c.l.s4 1983009808
    %v299 = vunpack.c.0.s8 %v298
    %v300 = vlaneseq
    %v301 = vshrl.u32 %v300, 7
    %v302 = vsub.s32 %v299, %v301
    %v303 = vrot.slane %v289, %v302
    %v304 = vcombine.low %v179, %v268
    %v305 = vcombine.high %v179, %v268
    %v307 = vunpack.c.l.s4 1983009808
    %v308 = vunpack.c.0.s8 %v307
    %v309 = vlaneseq
    %v310 = vshrl.u32 %v309, 7
    %v311 = vsub.s32 %v308, %v310
    %v312 = vrot.slane %v304, %v311
    %v314 = vunpack.c.l.s4 1983009808
    %v315 = vunpack.c.0.s8 %v314
    %v316 = vlaneseq
    %v317 = vshrl.u32 %v316, 7
    %v318 = vsub.s32 %v315, %v317
    %v319 = vrot.slane %v305, %v318
    %v320 = vcombine.low %v296, %v312
    %v321 = vcombine.high %v296, %v312
    %v323 = vunpack.c.l.s4 1934713408
    %v324 = vunpack.c.0.s8 %v323
    %v325 = vlaneseq
    %v326 = vshrl.u32 %v325, 7
    %v327 = vsub.s32 %v324, %v326
    %v328 = vrot.slane %v320, %v327
    %v330 = vunpack.c.l.s4 1934713408
    %v331 = vunpack.c.0.s8 %v330
    %v332 = vlaneseq
    %v333 = vshrl.u32 %v332, 7
    %v334 = vsub.s32 %v331, %v333
    %v335 = vrot.slane %v321, %v334
    %v336 = vcombine.low %v303, %v319
    %v337 = vcombine.high %v303, %v319
    %v339 = vunpack.c.l.s4 1934713408
    %v340 = vunpack.c.0.s8 %v339
    %v341 = vlaneseq
    %v342 = vshrl.u32 %v341, 7
    %v343 = vsub.s32 %v340, %v342
    %v344 = vrot.slane %v336, %v343
    %v346 = vunpack.c.l.s4 1934713408
    %v347 = vunpack.c.0.s8 %v346
    %v348 = vlaneseq
    %v349 = vshrl.u32 %v348, 7
    %v350 = vsub.s32 %v347, %v349
    %v351 = vrot.slane %v337, %v350
    %v352 = vcombine.high %v328, 0.0
    %v353 = vcombine.high %v335, 0.0
    %v354 = vcombine.high %v344, 0.0
    %v355 = vcombine.high %v351, 0.0
    %v356 = vcombine.low %v183, %v272
    %v357 = vcombine.high %v183, %v272
    %v359 = vunpack.c.l.s4 1983009808
    %v360 = vunpack.c.0.s8 %v359
    %v361 = vlaneseq
    %v362 = vshrl.u32 %v361, 7
    %v363 = vsub.s32 %v360, %v362
    %v364 = vrot.slane %v356, %v363
    %v366 = vunpack.c.l.s4 1983009808
    %v367 = vunpack.c.0.s8 %v366
    %v368 = vlaneseq
    %v369 = vshrl.u32 %v368, 7
    %v370 = vsub.s32 %v367, %v369
    %v371 = vrot.slane %v357, %v370
    %v372 = vcombine.low %v185, %v274
    %v373 = vcombine.high %v185, %v274
    %v375 = vunpack.c.l.s4 1983009808
    %v376 = vunpack.c.0.s8 %v375
    %v377 = vlaneseq
    %v378 = vshrl.u32 %v377, 7
    %v379 = vsub.s32 %v376, %v378
    %v380 = vrot.slane %v372, %v379
    %v382 = vunpack.c.l.s4 1983009808
    %v383 = vunpack.c.0.s8 %v382
    %v384 = vlaneseq
    %v385 = vshrl.u32 %v384, 7
    %v386 = vsub.s32 %v383, %v385
    %v387 = vrot.slane %v373, %v386
    %v388 = vcombine.low %v364, %v380
    %v389 = vcombine.high %v364, %v380
    %v391 = vunpack.c.l.s4 1934713408
    %v392 = vunpack.c.0.s8 %v391
    %v393 = vlaneseq
    %v394 = vshrl.u32 %v393, 7
    %v395 = vsub.s32 %v392, %v394
    %v396 = vrot.slane %v388, %v395
    %v398 = vunpack.c.l.s4 1934713408
    %v399 = vunpack.c.0.s8 %v398
    %v400 = vlaneseq
    %v401 = vshrl.u32 %v400, 7
    %v402 = vsub.s32 %v399, %v401
    %v403 = vrot.slane %v389, %v402
    %v404 = vcombine.low %v371, %v387
    %v405 = vcombine.high %v371, %v387
    %v407 = vunpack.c.l.s4 1934713408
    %v408 = vunpack.c.0.s8 %v407
    %v409 = vlaneseq
    %v410 = vshrl.u32 %v409, 7
    %v411 = vsub.s32 %v408, %v410
    %v412 = vrot.slane %v404, %v411
    %v414 = vunpack.c.l.s4 1934713408
    %v415 = vunpack.c.0.s8 %v414
    %v416 = vlaneseq
    %v417 = vshrl.u32 %v416, 7
    %v418 = vsub.s32 %v415, %v417
    %v419 = vrot.slane %v405, %v418
    %v420 = vcombine.high %v396, 0.0
    %v421 = vcombine.high %v403, 0.0
    %v422 = vcombine.high %v412, 0.0
    %v423 = vcombine.high %v419, 0.0
    %v424 = vcombine.low %v189, %v278
    %v425 = vcombine.high %v189, %v278
    %v427 = vunpack.c.l.s4 1983009808
    %v428 = vunpack.c.0.s8 %v427
    %v429 = vlaneseq
    %v430 = vshrl.u32 %v429, 7
    %v431 = vsub.s32 %v428, %v430
    %v432 = vrot.slane %v424, %v431
    %v434 = vunpack.c.l.s4 1983009808
    %v435 = vunpack.c.0.s8 %v434
    %v436 = vlaneseq
    %v437 = vshrl.u32 %v436, 7
    %v438 = vsub.s32 %v435, %v437
    %v439 = vrot.slane %v425, %v438
    %v440 = vcombine.low %v191, %v280
    %v441 = vcombine.high %v191, %v280
    %v443 = vunpack.c.l.s4 1983009808
    %v444 = vunpack.c.0.s8 %v443
    %v445 = vlaneseq
    %v446 = vshrl.u32 %v445, 7
    %v447 = vsub.s32 %v444, %v446
    %v448 = vrot.slane %v440, %v447
    %v450 = vunpack.c.l.s4 1983009808
    %v451 = vunpack.c.0.s8 %v450
    %v452 = vlaneseq
    %v453 = vshrl.u32 %v452, 7
    %v454 = vsub.s32 %v451, %v453
    %v455 = vrot.slane %v441, %v454
    %v456 = vcombine.low %v432, %v448
    %v457 = vcombine.high %v432, %v448
    %v459 = vunpack.c.l.s4 1934713408
    %v460 = vunpack.c.0.s8 %v459
    %v461 = vlaneseq
    %v462 = vshrl.u32 %v461, 7
    %v463 = vsub.s32 %v460, %v462
    %v464 = vrot.slane %v456, %v463
    %v466 = vunpack.c.l.s4 1934713408
    %v467 = vunpack.c.0.s8 %v466
    %v468 = vlaneseq
    %v469 = vshrl.u32 %v468, 7
    %v470 = vsub.s32 %v467, %v469
    %v471 = vrot.slane %v457, %v470
    %v472 = vcombine.low %v439, %v455
    %v473 = vcombine.high %v439, %v455
    %v475 = vunpack.c.l.s4 1934713408
    %v476 = vunpack.c.0.s8 %v475
    %v477 = vlaneseq
    %v478 = vshrl.u32 %v477, 7
    %v479 = vsub.s32 %v476, %v478
    %v480 = vrot.slane %v472, %v479
    %v482 = vunpack.c.l.s4 1934713408
    %v483 = vunpack.c.0.s8 %v482
    %v484 = vlaneseq
    %v485 = vshrl.u32 %v484, 7
    %v486 = vsub.s32 %v483, %v485
    %v487 = vrot.slane %v473, %v486
    %v488 = vcombine.high %v464, 0.0
    %v489 = vcombine.high %v471, 0.0
    %v490 = vcombine.high %v480, 0.0
    %v491 = vcombine.high %v487, 0.0
    %v492 = vcombine.low %v195, %v284
    %v493 = vcombine.high %v195, %v284
    %v495 = vunpack.c.l.s4 1983009808
    %v496 = vunpack.c.0.s8 %v495
    %v497 = vlaneseq
    %v498 = vshrl.u32 %v497, 7
    %v499 = vsub.s32 %v496, %v498
    %v500 = vrot.slane %v492, %v499
    %v502 = vunpack.c.l.s4 1983009808
    %v503 = vunpack.c.0.s8 %v502
    %v504 = vlaneseq
    %v505 = vshrl.u32 %v504, 7
    %v506 = vsub.s32 %v503, %v505
    %v507 = vrot.slane %v493, %v506
    %v508 = vcombine.low %v197, %v286
    %v509 = vcombine.high %v197, %v286
    %v511 = vunpack.c.l.s4 1983009808
    %v512 = vunpack.c.0.s8 %v511
    %v513 = vlaneseq
    %v514 = vshrl.u32 %v513, 7
    %v515 = vsub.s32 %v512, %v514
    %v516 = vrot.slane %v508, %v515
    %v518 = vunpack.c.l.s4 1983009808
    %v519 = vunpack.c.0.s8 %v518
    %v520 = vlaneseq
    %v521 = vshrl.u32 %v520, 7
    %v522 = vsub.s32 %v519, %v521
    %v523 = vrot.slane %v509, %v522
    %v524 = vcombine.low %v500, %v516
    %v525 = vcombine.high %v500, %v516
    %v527 = vunpack.c.l.s4 1934713408
    %v528 = vunpack.c.0.s8 %v527
    %v529 = vlaneseq
    %v530 = vshrl.u32 %v529, 7
    %v531 = vsub.s32 %v528, %v530
    %v532 = vrot.slane %v524, %v531
    %v534 = vunpack.c.l.s4 1934713408
    %v535 = vunpack.c.0.s8 %v534
    %v536 = vlaneseq
    %v537 = vshrl.u32 %v536, 7
    %v538 = vsub.s32 %v535, %v537
    %v539 = vrot.slane %v525, %v538
    %v540 = vcombine.low %v507, %v523
    %v541 = vcombine.high %v507, %v523
    %v543 = vunpack.c.l.s4 1934713408
    %v544 = vunpack.c.0.s8 %v543
    %v545 = vlaneseq
    %v546 = vshrl.u32 %v545, 7
    %v547 = vsub.s32 %v544, %v546
    %v548 = vrot.slane %v540, %v547
    %v550 = vunpack.c.l.s4 1934713408
    %v551 = vunpack.c.0.s8 %v550
    %v552 = vlaneseq
    %v553 = vshrl.u32 %v552, 7
    %v554 = vsub.s32 %v551, %v553
    %v555 = vrot.slane %v541, %v554
    %v556 = vcombine.high %v532, 0.0
    %v557 = vcombine.high %v539, 0.0
    %v558 = vcombine.high %v548, 0.0
    %v559 = vcombine.high %v555, 0.0
    %v560 = vld [vmem:[#allocation8] sm:$0xff]
    %v561 = vld [vmem:[#allocation8 + $0x8] sm:$0xff]
    %v562 = vld [vmem:[#allocation8 + $0x10] sm:$0xff]
    %v563 = vld [vmem:[#allocation8 + $0x18] sm:$0xff]
    %v564 = vld [vmem:[#allocation8 + $0x20] sm:$0xff]
    %v565 = vld [vmem:[#allocation8 + $0x28] sm:$0xff]
    %v566 = vld [vmem:[#allocation8 + $0x30] sm:$0xff]
    %v567 = vld [vmem:[#allocation8 + $0x38] sm:$0xff]
    %v568 = vld [vmem:[#allocation8 + $0x40] sm:$0xff]
    %v569 = vld [vmem:[#allocation8 + $0x48] sm:$0xff]
    %v570 = vld [vmem:[#allocation8 + $0x50] sm:$0xff]
    %v571 = vld [vmem:[#allocation8 + $0x58] sm:$0xff]
    %v572 = vld [vmem:[#allocation8 + $0x60] sm:$0xff]
    %v573 = vld [vmem:[#allocation8 + $0x68] sm:$0xff]
    %v574 = vld [vmem:[#allocation8 + $0x70] sm:$0xff]
    %v575 = vld [vmem:[#allocation8 + $0x78] sm:$0xff]
    %v576 = vld [vmem:[#allocation8 + $0x80] sm:$0xff]
    %v577 = vld [vmem:[#allocation8 + $0x88] sm:$0xff]
    %v578 = vld [vmem:[#allocation8 + $0x90] sm:$0xff]
    %v579 = vld [vmem:[#allocation8 + $0x98] sm:$0xff]
    %v580 = vld [vmem:[#allocation8 + $0xa0] sm:$0xff]
    %v581 = vld [vmem:[#allocation8 + $0xa8] sm:$0xff]
    %v582 = vld [vmem:[#allocation8 + $0xb0] sm:$0xff]
    %v583 = vld [vmem:[#allocation8 + $0xb8] sm:$0xff]
    %v584 = vld [vmem:[#allocation8 + $0xc0] sm:$0xff]
    %v585 = vld [vmem:[#allocation8 + $0xc8] sm:$0xff]
    %v586 = vld [vmem:[#allocation8 + $0xd0] sm:$0xff]
    %v587 = vld [vmem:[#allocation8 + $0xd8] sm:$0xff]
    %v588 = vld [vmem:[#allocation8 + $0xe0] sm:$0xff]
    %v589 = vld [vmem:[#allocation8 + $0xe8] sm:$0xff]
    %v590 = vld [vmem:[#allocation8 + $0xf0] sm:$0xff]
    %v591 = vld [vmem:[#allocation8 + $0xf8] sm:$0xff]
    %v592 = vld [vmem:[#allocation8 + $0x100] sm:$0xff]
    %v593 = vld [vmem:[#allocation8 + $0x108] sm:$0xff]
    %v594 = vld [vmem:[#allocation8 + $0x110] sm:$0xff]
    %v595 = vld [vmem:[#allocation8 + $0x118] sm:$0xff]
    %v596 = vld [vmem:[#allocation8 + $0x120] sm:$0xff]
    %v597 = vld [vmem:[#allocation8 + $0x128] sm:$0xff]
    %v598 = vld [vmem:[#allocation8 + $0x130] sm:$0xff]
    %v599 = vld [vmem:[#allocation8 + $0x138] sm:$0xff]
    %v600 = vld [vmem:[#allocation8 + $0x140] sm:$0xff]
    %v601 = vld [vmem:[#allocation8 + $0x148] sm:$0xff]
    %v602 = vld [vmem:[#allocation8 + $0x150] sm:$0xff]
    %v603 = vld [vmem:[#allocation8 + $0x158] sm:$0xff]
    %v604 = vld [vmem:[#allocation8 + $0x160] sm:$0xff]
    %v605 = vld [vmem:[#allocation8 + $0x168] sm:$0xff]
    %v606 = vld [vmem:[#allocation8 + $0x170] sm:$0xff]
    %v607 = vld [vmem:[#allocation8 + $0x178] sm:$0xff]
    %v608 = vld [vmem:[#allocation8 + $0x180] sm:$0xff]
    %v609 = vld [vmem:[#allocation8 + $0x188] sm:$0xff]
    %v610 = vld [vmem:[#allocation8 + $0x190] sm:$0xff]
    %v611 = vld [vmem:[#allocation8 + $0x198] sm:$0xff]
    %v612 = vld [vmem:[#allocation8 + $0x1a0] sm:$0xff]
    %v613 = vld [vmem:[#allocation8 + $0x1a8] sm:$0xff]
    %v614 = vld [vmem:[#allocation8 + $0x1b0] sm:$0xff]
    %v615 = vld [vmem:[#allocation8 + $0x1b8] sm:$0xff]
    %v616 = vld [vmem:[#allocation8 + $0x1c0] sm:$0xff]
    %v617 = vld [vmem:[#allocation8 + $0x1c8] sm:$0xff]
    %v618 = vld [vmem:[#allocation8 + $0x1d0] sm:$0xff]
    %v619 = vld [vmem:[#allocation8 + $0x1d8] sm:$0xff]
    %v620 = vld [vmem:[#allocation8 + $0x1e0] sm:$0xff]
    %v621 = vld [vmem:[#allocation8 + $0x1e8] sm:$0xff]
    %v622 = vld [vmem:[#allocation8 + $0x1f0] sm:$0xff]
    %v623 = vld [vmem:[#allocation8 + $0x1f8] sm:$0xff]
    %v624 = vld [vmem:[#allocation8 + $0x200] sm:$0xff]
    %v625 = vld [vmem:[#allocation8 + $0x208] sm:$0xff]
    %v626 = vld [vmem:[#allocation8 + $0x210] sm:$0xff]
    %v627 = vld [vmem:[#allocation8 + $0x218] sm:$0xff]
    %v628 = vld [vmem:[#allocation8 + $0x220] sm:$0xff]
    %v629 = vld [vmem:[#allocation8 + $0x228] sm:$0xff]
    %v630 = vld [vmem:[#allocation8 + $0x230] sm:$0xff]
    %v631 = vld [vmem:[#allocation8 + $0x238] sm:$0xff]
    %v632 = vld [vmem:[#allocation8 + $0x240] sm:$0xff]
    %v633 = vld [vmem:[#allocation8 + $0x248] sm:$0xff]
    %v634 = vld [vmem:[#allocation8 + $0x250] sm:$0xff]
    %v635 = vld [vmem:[#allocation8 + $0x258] sm:$0xff]
    %v636 = vld [vmem:[#allocation8 + $0x260] sm:$0xff]
    %v637 = vld [vmem:[#allocation8 + $0x268] sm:$0xff]
    %v638 = vld [vmem:[#allocation8 + $0x270] sm:$0xff]
    %v639 = vld [vmem:[#allocation8 + $0x278] sm:$0xff]
    %v640 = vld [vmem:[#allocation8 + $0x280] sm:$0xff]
    %v641 = vld [vmem:[#allocation8 + $0x288] sm:$0xff]
    %v642 = vld [vmem:[#allocation8 + $0x290] sm:$0xff]
    %v643 = vld [vmem:[#allocation8 + $0x298] sm:$0xff]
    %v644 = vld [vmem:[#allocation8 + $0x2a0] sm:$0xff]
    %v645 = vld [vmem:[#allocation8 + $0x2a8] sm:$0xff]
    %v646 = vld [vmem:[#allocation8 + $0x2b0] sm:$0xff]
    %v647 = vld [vmem:[#allocation8 + $0x2b8] sm:$0xff]
    %v648 = vld [vmem:[#allocation8 + $0x2c0] sm:$0xff]
    %v649 = vld [vmem:[#allocation8 + $0x2c8] sm:$0xff]
    %v650 = vld [vmem:[#allocation8 + $0x2d0] sm:$0xff]
    %v651 = vld [vmem:[#allocation8 + $0x2d8] sm:$0xff]
    %v652 = vld [vmem:[#allocation8 + $0x2e0] sm:$0xff]
    %v653 = vld [vmem:[#allocation8 + $0x2e8] sm:$0xff]
    %v654 = vld [vmem:[#allocation8 + $0x2f0] sm:$0xff]
    %v655 = vld [vmem:[#allocation8 + $0x2f8] sm:$0xff]
    %v656 = vld [vmem:[#allocation8 + $0x300] sm:$0xff]
    %v657 = vld [vmem:[#allocation8 + $0x308] sm:$0xff]
    %v658 = vld [vmem:[#allocation8 + $0x310] sm:$0xff]
    %v659 = vld [vmem:[#allocation8 + $0x318] sm:$0xff]
    %v660 = vld [vmem:[#allocation8 + $0x320] sm:$0xff]
    %v661 = vld [vmem:[#allocation8 + $0x328] sm:$0xff]
    %v662 = vld [vmem:[#allocation8 + $0x330] sm:$0xff]
    %v663 = vld [vmem:[#allocation8 + $0x338] sm:$0xff]
    %v664 = vld [vmem:[#allocation8 + $0x340] sm:$0xff]
    %v665 = vld [vmem:[#allocation8 + $0x348] sm:$0xff]
    %v666 = vld [vmem:[#allocation8 + $0x350] sm:$0xff]
    %v667 = vld [vmem:[#allocation8 + $0x358] sm:$0xff]
    %v668 = vld [vmem:[#allocation8 + $0x360] sm:$0xff]
    %v669 = vld [vmem:[#allocation8 + $0x368] sm:$0xff]
    %v670 = vld [vmem:[#allocation8 + $0x370] sm:$0xff]
    %v671 = vld [vmem:[#allocation8 + $0x378] sm:$0xff]
    %v672 = vld [vmem:[#allocation8 + $0x380] sm:$0xff]
    %v673 = vld [vmem:[#allocation8 + $0x388] sm:$0xff]
    %v674 = vld [vmem:[#allocation8 + $0x390] sm:$0xff]
    %v675 = vld [vmem:[#allocation8 + $0x398] sm:$0xff]
    %v676 = vld [vmem:[#allocation8 + $0x3a0] sm:$0xff]
    %v677 = vld [vmem:[#allocation8 + $0x3a8] sm:$0xff]
    %v678 = vld [vmem:[#allocation8 + $0x3b0] sm:$0xff]
    %v679 = vld [vmem:[#allocation8 + $0x3b8] sm:$0xff]
    %v680 = vld [vmem:[#allocation8 + $0x3c0] sm:$0xff]
    %v681 = vld [vmem:[#allocation8 + $0x3c8] sm:$0xff]
    %v682 = vld [vmem:[#allocation8 + $0x3d0] sm:$0xff]
    %v683 = vld [vmem:[#allocation8 + $0x3d8] sm:$0xff]
    %v684 = vld [vmem:[#allocation8 + $0x3e0] sm:$0xff]
    %v685 = vld [vmem:[#allocation8 + $0x3e8] sm:$0xff]
    %v686 = vld [vmem:[#allocation8 + $0x3f0] sm:$0xff]
    %v687 = vld [vmem:[#allocation8 + $0x3f8] sm:$0xff]
    %v688 = vld [vmem:[#allocation8 + $0x400] sm:$0xff]
    %v689 = vld [vmem:[#allocation8 + $0x408] sm:$0xff]
    %v690 = vld [vmem:[#allocation8 + $0x410] sm:$0xff]
    %v691 = vld [vmem:[#allocation8 + $0x418] sm:$0xff]
    %v692 = vld [vmem:[#allocation8 + $0x420] sm:$0xff]
    %v693 = vld [vmem:[#allocation8 + $0x428] sm:$0xff]
    %v694 = vld [vmem:[#allocation8 + $0x430] sm:$0xff]
    %v695 = vld [vmem:[#allocation8 + $0x438] sm:$0xff]
    %v696 = vld [vmem:[#allocation8 + $0x440] sm:$0xff]
    %v697 = vld [vmem:[#allocation8 + $0x448] sm:$0xff]
    %v698 = vld [vmem:[#allocation8 + $0x450] sm:$0xff]
    %v699 = vld [vmem:[#allocation8 + $0x458] sm:$0xff]
    %v700 = vld [vmem:[#allocation8 + $0x460] sm:$0xff]
    %v701 = vld [vmem:[#allocation8 + $0x468] sm:$0xff]
    %v702 = vld [vmem:[#allocation8 + $0x470] sm:$0xff]
    %v703 = vld [vmem:[#allocation8 + $0x478] sm:$0xff]
    %v704 = vld [vmem:[#allocation8 + $0x480] sm:$0xff]
    %v705 = vld [vmem:[#allocation8 + $0x488] sm:$0xff]
    %v706 = vld [vmem:[#allocation8 + $0x490] sm:$0xff]
    %v707 = vld [vmem:[#allocation8 + $0x498] sm:$0xff]
    %v708 = vld [vmem:[#allocation8 + $0x4a0] sm:$0xff]
    %v709 = vld [vmem:[#allocation8 + $0x4a8] sm:$0xff]
    %v710 = vld [vmem:[#allocation8 + $0x4b0] sm:$0xff]
    %v711 = vld [vmem:[#allocation8 + $0x4b8] sm:$0xff]
    %v712 = vld [vmem:[#allocation8 + $0x4c0] sm:$0xff]
    %v713 = vld [vmem:[#allocation8 + $0x4c8] sm:$0xff]
    %v714 = vld [vmem:[#allocation8 + $0x4d0] sm:$0xff]
    %v715 = vld [vmem:[#allocation8 + $0x4d8] sm:$0xff]
    %v716 = vld [vmem:[#allocation8 + $0x4e0] sm:$0xff]
    %v717 = vld [vmem:[#allocation8 + $0x4e8] sm:$0xff]
    %v718 = vld [vmem:[#allocation8 + $0x4f0] sm:$0xff]
    %v719 = vld [vmem:[#allocation8 + $0x4f8] sm:$0xff]
    %v720 = vld [vmem:[#allocation8 + $0x500] sm:$0xff]
    %v721 = vld [vmem:[#allocation8 + $0x508] sm:$0xff]
    %v722 = vld [vmem:[#allocation8 + $0x510] sm:$0xff]
    %v723 = vld [vmem:[#allocation8 + $0x518] sm:$0xff]
    %v724 = vld [vmem:[#allocation8 + $0x520] sm:$0xff]
    %v725 = vld [vmem:[#allocation8 + $0x528] sm:$0xff]
    %v726 = vld [vmem:[#allocation8 + $0x530] sm:$0xff]
    %v727 = vld [vmem:[#allocation8 + $0x538] sm:$0xff]
    %v728 = vld [vmem:[#allocation8 + $0x540] sm:$0xff]
    %v729 = vld [vmem:[#allocation8 + $0x548] sm:$0xff]
    %v730 = vld [vmem:[#allocation8 + $0x550] sm:$0xff]
    %v731 = vld [vmem:[#allocation8 + $0x558] sm:$0xff]
    %v732 = vld [vmem:[#allocation8 + $0x560] sm:$0xff]
    %v733 = vld [vmem:[#allocation8 + $0x568] sm:$0xff]
    %v734 = vld [vmem:[#allocation8 + $0x570] sm:$0xff]
    %v735 = vld [vmem:[#allocation8 + $0x578] sm:$0xff]
    %v736 = vld [vmem:[#allocation8 + $0x580] sm:$0xff]
    %v737 = vld [vmem:[#allocation8 + $0x588] sm:$0xff]
    %v738 = vld [vmem:[#allocation8 + $0x590] sm:$0xff]
    %v739 = vld [vmem:[#allocation8 + $0x598] sm:$0xff]
    %v740 = vld [vmem:[#allocation8 + $0x5a0] sm:$0xff]
    %v741 = vld [vmem:[#allocation8 + $0x5a8] sm:$0xff]
    %v742 = vld [vmem:[#allocation8 + $0x5b0] sm:$0xff]
    %v743 = vld [vmem:[#allocation8 + $0x5b8] sm:$0xff]
    %v744 = vld [vmem:[#allocation8 + $0x5c0] sm:$0xff]
    %v745 = vld [vmem:[#allocation8 + $0x5c8] sm:$0xff]
    %v746 = vld [vmem:[#allocation8 + $0x5d0] sm:$0xff]
    %v747 = vld [vmem:[#allocation8 + $0x5d8] sm:$0xff]
    %v748 = vld [vmem:[#allocation8 + $0x5e0] sm:$0xff]
    %v749 = vld [vmem:[#allocation8 + $0x5e8] sm:$0xff]
    %v750 = vld [vmem:[#allocation8 + $0x5f0] sm:$0xff]
    %v751 = vld [vmem:[#allocation8 + $0x5f8] sm:$0xff]
    %v752 = vld [vmem:[#allocation8 + $0x600] sm:$0xff]
    %v753 = vld [vmem:[#allocation8 + $0x608] sm:$0xff]
    %v754 = vld [vmem:[#allocation8 + $0x610] sm:$0xff]
    %v755 = vld [vmem:[#allocation8 + $0x618] sm:$0xff]
    %v756 = vld [vmem:[#allocation8 + $0x620] sm:$0xff]
    %v757 = vld [vmem:[#allocation8 + $0x628] sm:$0xff]
    %v758 = vld [vmem:[#allocation8 + $0x630] sm:$0xff]
    %v759 = vld [vmem:[#allocation8 + $0x638] sm:$0xff]
    %v760 = vld [vmem:[#allocation8 + $0x640] sm:$0xff]
    %v761 = vld [vmem:[#allocation8 + $0x648] sm:$0xff]
    %v762 = vld [vmem:[#allocation8 + $0x650] sm:$0xff]
    %v763 = vld [vmem:[#allocation8 + $0x658] sm:$0xff]
    %v764 = vld [vmem:[#allocation8 + $0x660] sm:$0xff]
    %v765 = vld [vmem:[#allocation8 + $0x668] sm:$0xff]
    %v766 = vld [vmem:[#allocation8 + $0x670] sm:$0xff]
    %v767 = vld [vmem:[#allocation8 + $0x678] sm:$0xff]
    %v768 = vld [vmem:[#allocation8 + $0x680] sm:$0xff]
    %v769 = vld [vmem:[#allocation8 + $0x688] sm:$0xff]
    %v770 = vld [vmem:[#allocation8 + $0x690] sm:$0xff]
    %v771 = vld [vmem:[#allocation8 + $0x698] sm:$0xff]
    %v772 = vld [vmem:[#allocation8 + $0x6a0] sm:$0xff]
    %v773 = vld [vmem:[#allocation8 + $0x6a8] sm:$0xff]
    %v774 = vld [vmem:[#allocation8 + $0x6b0] sm:$0xff]
    %v775 = vld [vmem:[#allocation8 + $0x6b8] sm:$0xff]
    %v776 = vld [vmem:[#allocation8 + $0x6c0] sm:$0xff]
    %v777 = vld [vmem:[#allocation8 + $0x6c8] sm:$0xff]
    %v778 = vld [vmem:[#allocation8 + $0x6d0] sm:$0xff]
    %v779 = vld [vmem:[#allocation8 + $0x6d8] sm:$0xff]
    %v780 = vld [vmem:[#allocation8 + $0x6e0] sm:$0xff]
    %v781 = vld [vmem:[#allocation8 + $0x6e8] sm:$0xff]
    %v782 = vld [vmem:[#allocation8 + $0x6f0] sm:$0xff]
    %v783 = vld [vmem:[#allocation8 + $0x6f8] sm:$0xff]
    %v784 = vld [vmem:[#allocation8 + $0x700] sm:$0xff]
    %v785 = vld [vmem:[#allocation8 + $0x708] sm:$0xff]
    %v786 = vld [vmem:[#allocation8 + $0x710] sm:$0xff]
    %v787 = vld [vmem:[#allocation8 + $0x718] sm:$0xff]
    %v788 = vld [vmem:[#allocation8 + $0x720] sm:$0xff]
    %v789 = vld [vmem:[#allocation8 + $0x728] sm:$0xff]
    %v790 = vld [vmem:[#allocation8 + $0x730] sm:$0xff]
    %v791 = vld [vmem:[#allocation8 + $0x738] sm:$0xff]
    %v792 = vld [vmem:[#allocation8 + $0x740] sm:$0xff]
    %v793 = vld [vmem:[#allocation8 + $0x748] sm:$0xff]
    %v794 = vld [vmem:[#allocation8 + $0x750] sm:$0xff]
    %v795 = vld [vmem:[#allocation8 + $0x758] sm:$0xff]
    %v796 = vld [vmem:[#allocation8 + $0x760] sm:$0xff]
    %v797 = vld [vmem:[#allocation8 + $0x768] sm:$0xff]
    %v798 = vld [vmem:[#allocation8 + $0x770] sm:$0xff]
    %v799 = vld [vmem:[#allocation8 + $0x778] sm:$0xff]
    %v800 = vld [vmem:[#allocation8 + $0x780] sm:$0xff]
    %v801 = vld [vmem:[#allocation8 + $0x788] sm:$0xff]
    %v802 = vld [vmem:[#allocation8 + $0x790] sm:$0xff]
    %v803 = vld [vmem:[#allocation8 + $0x798] sm:$0xff]
    %v804 = vld [vmem:[#allocation8 + $0x7a0] sm:$0xff]
    %v805 = vld [vmem:[#allocation8 + $0x7a8] sm:$0xff]
    %v806 = vld [vmem:[#allocation8 + $0x7b0] sm:$0xff]
    %v807 = vld [vmem:[#allocation8 + $0x7b8] sm:$0xff]
    %v808 = vld [vmem:[#allocation8 + $0x7c0] sm:$0xff]
    %v809 = vld [vmem:[#allocation8 + $0x7c8] sm:$0xff]
    %v810 = vld [vmem:[#allocation8 + $0x7d0] sm:$0xff]
    %v811 = vld [vmem:[#allocation8 + $0x7d8] sm:$0xff]
    %v812 = vld [vmem:[#allocation8 + $0x7e0] sm:$0xff]
    %v813 = vld [vmem:[#allocation8 + $0x7e8] sm:$0xff]
    %v814 = vld [vmem:[#allocation8 + $0x7f0] sm:$0xff]
    %v815 = vld [vmem:[#allocation8 + $0x7f8] sm:$0xff]
    %v816 = vld [vmem:[#allocation8 + $0x800] sm:$0xff]
    %v817 = vld [vmem:[#allocation8 + $0x808] sm:$0xff]
    %v818 = vld [vmem:[#allocation8 + $0x810] sm:$0xff]
    %v819 = vld [vmem:[#allocation8 + $0x818] sm:$0xff]
    %v820 = vld [vmem:[#allocation8 + $0x820] sm:$0xff]
    %v821 = vld [vmem:[#allocation8 + $0x828] sm:$0xff]
    %v822 = vld [vmem:[#allocation8 + $0x830] sm:$0xff]
    %v823 = vld [vmem:[#allocation8 + $0x838] sm:$0xff]
    %v824 = vld [vmem:[#allocation8 + $0x840] sm:$0xff]
    %v825 = vld [vmem:[#allocation8 + $0x848] sm:$0xff]
    %v826 = vld [vmem:[#allocation8 + $0x850] sm:$0xff]
    %v827 = vld [vmem:[#allocation8 + $0x858] sm:$0xff]
    %v828 = vld [vmem:[#allocation8 + $0x860] sm:$0xff]
    %v829 = vld [vmem:[#allocation8 + $0x868] sm:$0xff]
    %v830 = vld [vmem:[#allocation8 + $0x870] sm:$0xff]
    %v831 = vld [vmem:[#allocation8 + $0x878] sm:$0xff]
    %v832 = vld [vmem:[#allocation8 + $0x880] sm:$0xff]
    %v833 = vld [vmem:[#allocation8 + $0x888] sm:$0xff]
    %v834 = vld [vmem:[#allocation8 + $0x890] sm:$0xff]
    %v835 = vld [vmem:[#allocation8 + $0x898] sm:$0xff]
    %v836 = vld [vmem:[#allocation8 + $0x8a0] sm:$0xff]
    %v837 = vld [vmem:[#allocation8 + $0x8a8] sm:$0xff]
    %v838 = vld [vmem:[#allocation8 + $0x8b0] sm:$0xff]
    %v839 = vld [vmem:[#allocation8 + $0x8b8] sm:$0xff]
    %v840 = vld [vmem:[#allocation8 + $0x8c0] sm:$0xff]
    %v841 = vld [vmem:[#allocation8 + $0x8c8] sm:$0xff]
    %v842 = vld [vmem:[#allocation8 + $0x8d0] sm:$0xff]
    %v843 = vld [vmem:[#allocation8 + $0x8d8] sm:$0xff]
    %v844 = vld [vmem:[#allocation8 + $0x8e0] sm:$0xff]
    %v845 = vld [vmem:[#allocation8 + $0x8e8] sm:$0xff]
    %v846 = vld [vmem:[#allocation8 + $0x8f0] sm:$0xff]
    %v847 = vld [vmem:[#allocation8 + $0x8f8] sm:$0xff]
    %v848 = vld [vmem:[#allocation8 + $0x900] sm:$0xff]
    %v849 = vld [vmem:[#allocation8 + $0x908] sm:$0xff]
    %v850 = vld [vmem:[#allocation8 + $0x910] sm:$0xff]
    %v851 = vld [vmem:[#allocation8 + $0x918] sm:$0xff]
    %v852 = vld [vmem:[#allocation8 + $0x920] sm:$0xff]
    %v853 = vld [vmem:[#allocation8 + $0x928] sm:$0xff]
    %v854 = vld [vmem:[#allocation8 + $0x930] sm:$0xff]
    %v855 = vld [vmem:[#allocation8 + $0x938] sm:$0xff]
    %v856 = vld [vmem:[#allocation8 + $0x940] sm:$0xff]
    %v857 = vld [vmem:[#allocation8 + $0x948] sm:$0xff]
    %v858 = vld [vmem:[#allocation8 + $0x950] sm:$0xff]
    %v859 = vld [vmem:[#allocation8 + $0x958] sm:$0xff]
    %v860 = vld [vmem:[#allocation8 + $0x960] sm:$0xff]
    %v861 = vld [vmem:[#allocation8 + $0x968] sm:$0xff]
    %v862 = vld [vmem:[#allocation8 + $0x970] sm:$0xff]
    %v863 = vld [vmem:[#allocation8 + $0x978] sm:$0xff]
    %v864 = vld [vmem:[#allocation8 + $0x980] sm:$0xff]
    %v865 = vld [vmem:[#allocation8 + $0x988] sm:$0xff]
    %v866 = vld [vmem:[#allocation8 + $0x990] sm:$0xff]
    %v867 = vld [vmem:[#allocation8 + $0x998] sm:$0xff]
    %v868 = vld [vmem:[#allocation8 + $0x9a0] sm:$0xff]
    %v869 = vld [vmem:[#allocation8 + $0x9a8] sm:$0xff]
    %v870 = vld [vmem:[#allocation8 + $0x9b0] sm:$0xff]
    %v871 = vld [vmem:[#allocation8 + $0x9b8] sm:$0xff]
    %v872 = vld [vmem:[#allocation8 + $0x9c0] sm:$0xff]
    %v873 = vld [vmem:[#allocation8 + $0x9c8] sm:$0xff]
    %v874 = vld [vmem:[#allocation8 + $0x9d0] sm:$0xff]
    %v875 = vld [vmem:[#allocation8 + $0x9d8] sm:$0xff]
    %v876 = vld [vmem:[#allocation8 + $0x9e0] sm:$0xff]
    %v877 = vld [vmem:[#allocation8 + $0x9e8] sm:$0xff]
    %v878 = vld [vmem:[#allocation8 + $0x9f0] sm:$0xff]
    %v879 = vld [vmem:[#allocation8 + $0x9f8] sm:$0xff]
    %v880 = vld [vmem:[#allocation8 + $0xa00] sm:$0xff]
    %v881 = vld [vmem:[#allocation8 + $0xa08] sm:$0xff]
    %v882 = vld [vmem:[#allocation8 + $0xa10] sm:$0xff]
    %v883 = vld [vmem:[#allocation8 + $0xa18] sm:$0xff]
    %v884 = vld [vmem:[#allocation8 + $0xa20] sm:$0xff]
    %v885 = vld [vmem:[#allocation8 + $0xa28] sm:$0xff]
    %v886 = vld [vmem:[#allocation8 + $0xa30] sm:$0xff]
    %v887 = vld [vmem:[#allocation8 + $0xa38] sm:$0xff]
    %v888 = vld [vmem:[#allocation8 + $0xa40] sm:$0xff]
    %v889 = vld [vmem:[#allocation8 + $0xa48] sm:$0xff]
    %v890 = vld [vmem:[#allocation8 + $0xa50] sm:$0xff]
    %v891 = vld [vmem:[#allocation8 + $0xa58] sm:$0xff]
    %v892 = vld [vmem:[#allocation8 + $0xa60] sm:$0xff]
    %v893 = vld [vmem:[#allocation8 + $0xa68] sm:$0xff]
    %v894 = vld [vmem:[#allocation8 + $0xa70] sm:$0xff]
    %v895 = vld [vmem:[#allocation8 + $0xa78] sm:$0xff]
    %v896 = vld [vmem:[#allocation8 + $0xa80] sm:$0xff]
    %v897 = vld [vmem:[#allocation8 + $0xa88] sm:$0xff]
    %v898 = vld [vmem:[#allocation8 + $0xa90] sm:$0xff]
    %v899 = vld [vmem:[#allocation8 + $0xa98] sm:$0xff]
    %v900 = vld [vmem:[#allocation8 + $0xaa0] sm:$0xff]
    %v901 = vld [vmem:[#allocation8 + $0xaa8] sm:$0xff]
    %v902 = vld [vmem:[#allocation8 + $0xab0] sm:$0xff]
    %v903 = vld [vmem:[#allocation8 + $0xab8] sm:$0xff]
    %v904 = vld [vmem:[#allocation8 + $0xac0] sm:$0xff]
    %v905 = vld [vmem:[#allocation8 + $0xac8] sm:$0xff]
    %v906 = vld [vmem:[#allocation8 + $0xad0] sm:$0xff]
    %v907 = vld [vmem:[#allocation8 + $0xad8] sm:$0xff]
    %v908 = vld [vmem:[#allocation8 + $0xae0] sm:$0xff]
    %v909 = vld [vmem:[#allocation8 + $0xae8] sm:$0xff]
    %v910 = vld [vmem:[#allocation8 + $0xaf0] sm:$0xff]
    %v911 = vld [vmem:[#allocation8 + $0xaf8] sm:$0xff]
    %v912 = vld [vmem:[#allocation8 + $0xb00] sm:$0xff]
    %v913 = vld [vmem:[#allocation8 + $0xb08] sm:$0xff]
    %v914 = vld [vmem:[#allocation8 + $0xb10] sm:$0xff]
    %v915 = vld [vmem:[#allocation8 + $0xb18] sm:$0xff]
    %v916 = vld [vmem:[#allocation8 + $0xb20] sm:$0xff]
    %v917 = vld [vmem:[#allocation8 + $0xb28] sm:$0xff]
    %v918 = vld [vmem:[#allocation8 + $0xb30] sm:$0xff]
    %v919 = vld [vmem:[#allocation8 + $0xb38] sm:$0xff]
    %v920 = vld [vmem:[#allocation8 + $0xb40] sm:$0xff]
    %v921 = vld [vmem:[#allocation8 + $0xb48] sm:$0xff]
    %v922 = vld [vmem:[#allocation8 + $0xb50] sm:$0xff]
    %v923 = vld [vmem:[#allocation8 + $0xb58] sm:$0xff]
    %v924 = vld [vmem:[#allocation8 + $0xb60] sm:$0xff]
    %v925 = vld [vmem:[#allocation8 + $0xb68] sm:$0xff]
    %v926 = vld [vmem:[#allocation8 + $0xb70] sm:$0xff]
    %v927 = vld [vmem:[#allocation8 + $0xb78] sm:$0xff]
    %v928 = vld [vmem:[#allocation8 + $0xb80] sm:$0xff]
    %v929 = vld [vmem:[#allocation8 + $0xb88] sm:$0xff]
    %v930 = vld [vmem:[#allocation8 + $0xb90] sm:$0xff]
    %v931 = vld [vmem:[#allocation8 + $0xb98] sm:$0xff]
    %v932 = vld [vmem:[#allocation8 + $0xba0] sm:$0xff]
    %v933 = vld [vmem:[#allocation8 + $0xba8] sm:$0xff]
    %v934 = vld [vmem:[#allocation8 + $0xbb0] sm:$0xff]
    %v935 = vld [vmem:[#allocation8 + $0xbb8] sm:$0xff]
    %v936 = vld [vmem:[#allocation8 + $0xbc0] sm:$0xff]
    %v937 = vld [vmem:[#allocation8 + $0xbc8] sm:$0xff]
    %v938 = vld [vmem:[#allocation8 + $0xbd0] sm:$0xff]
    %v939 = vld [vmem:[#allocation8 + $0xbd8] sm:$0xff]
    %v940 = vld [vmem:[#allocation8 + $0xbe0] sm:$0xff]
    %v941 = vld [vmem:[#allocation8 + $0xbe8] sm:$0xff]
    %v942 = vld [vmem:[#allocation8 + $0xbf0] sm:$0xff]
    %v943 = vld [vmem:[#allocation8 + $0xbf8] sm:$0xff]
    %v944 = vld [vmem:[#allocation8 + $0xc00] sm:$0xff]
    %v945 = vld [vmem:[#allocation8 + $0xc08] sm:$0xff]
    %v946 = vld [vmem:[#allocation8 + $0xc10] sm:$0xff]
    %v947 = vld [vmem:[#allocation8 + $0xc18] sm:$0xff]
    %v948 = vld [vmem:[#allocation8 + $0xc20] sm:$0xff]
    %v949 = vld [vmem:[#allocation8 + $0xc28] sm:$0xff]
    %v950 = vld [vmem:[#allocation8 + $0xc30] sm:$0xff]
    %v951 = vld [vmem:[#allocation8 + $0xc38] sm:$0xff]
    %v952 = vld [vmem:[#allocation8 + $0xc40] sm:$0xff]
    %v953 = vld [vmem:[#allocation8 + $0xc48] sm:$0xff]
    %v954 = vld [vmem:[#allocation8 + $0xc50] sm:$0xff]
    %v955 = vld [vmem:[#allocation8 + $0xc58] sm:$0xff]
    %v956 = vld [vmem:[#allocation8 + $0xc60] sm:$0xff]
    %v957 = vld [vmem:[#allocation8 + $0xc68] sm:$0xff]
    %v958 = vld [vmem:[#allocation8 + $0xc70] sm:$0xff]
    %v959 = vld [vmem:[#allocation8 + $0xc78] sm:$0xff]
    %v960 = vld [vmem:[#allocation8 + $0xc80] sm:$0xff]
    %v961 = vld [vmem:[#allocation8 + $0xc88] sm:$0xff]
    %v962 = vld [vmem:[#allocation8 + $0xc90] sm:$0xff]
    %v963 = vld [vmem:[#allocation8 + $0xc98] sm:$0xff]
    %v964 = vld [vmem:[#allocation8 + $0xca0] sm:$0xff]
    %v965 = vld [vmem:[#allocation8 + $0xca8] sm:$0xff]
    %v966 = vld [vmem:[#allocation8 + $0xcb0] sm:$0xff]
    %v967 = vld [vmem:[#allocation8 + $0xcb8] sm:$0xff]
    %v968 = vld [vmem:[#allocation8 + $0xcc0] sm:$0xff]
    %v969 = vld [vmem:[#allocation8 + $0xcc8] sm:$0xff]
    %v970 = vld [vmem:[#allocation8 + $0xcd0] sm:$0xff]
    %v971 = vld [vmem:[#allocation8 + $0xcd8] sm:$0xff]
    %v972 = vld [vmem:[#allocation8 + $0xce0] sm:$0xff]
    %v973 = vld [vmem:[#allocation8 + $0xce8] sm:$0xff]
    %v974 = vld [vmem:[#allocation8 + $0xcf0] sm:$0xff]
    %v975 = vld [vmem:[#allocation8 + $0xcf8] sm:$0xff]
    %v976 = vld [vmem:[#allocation8 + $0xd00] sm:$0xff]
    %v977 = vld [vmem:[#allocation8 + $0xd08] sm:$0xff]
    %v978 = vld [vmem:[#allocation8 + $0xd10] sm:$0xff]
    %v979 = vld [vmem:[#allocation8 + $0xd18] sm:$0xff]
    %v980 = vld [vmem:[#allocation8 + $0xd20] sm:$0xff]
    %v981 = vld [vmem:[#allocation8 + $0xd28] sm:$0xff]
    %v982 = vld [vmem:[#allocation8 + $0xd30] sm:$0xff]
    %v983 = vld [vmem:[#allocation8 + $0xd38] sm:$0xff]
    %v984 = vld [vmem:[#allocation8 + $0xd40] sm:$0xff]
    %v985 = vld [vmem:[#allocation8 + $0xd48] sm:$0xff]
    %v986 = vld [vmem:[#allocation8 + $0xd50] sm:$0xff]
    %v987 = vld [vmem:[#allocation8 + $0xd58] sm:$0xff]
    %v988 = vld [vmem:[#allocation8 + $0xd60] sm:$0xff]
    %v989 = vld [vmem:[#allocation8 + $0xd68] sm:$0xff]
    %v990 = vld [vmem:[#allocation8 + $0xd70] sm:$0xff]
    %v991 = vld [vmem:[#allocation8 + $0xd78] sm:$0xff]
    %v992 = vld [vmem:[#allocation8 + $0xd80] sm:$0xff]
    %v993 = vld [vmem:[#allocation8 + $0xd88] sm:$0xff]
    %v994 = vld [vmem:[#allocation8 + $0xd90] sm:$0xff]
    %v995 = vld [vmem:[#allocation8 + $0xd98] sm:$0xff]
    %v996 = vld [vmem:[#allocation8 + $0xda0] sm:$0xff]
    %v997 = vld [vmem:[#allocation8 + $0xda8] sm:$0xff]
    %v998 = vld [vmem:[#allocation8 + $0xdb0] sm:$0xff]
    %v999 = vld [vmem:[#allocation8 + $0xdb8] sm:$0xff]
    %v1000 = vld [vmem:[#allocation8 + $0xdc0] sm:$0xff]
    %v1001 = vld [vmem:[#allocation8 + $0xdc8] sm:$0xff]
    %v1002 = vld [vmem:[#allocation8 + $0xdd0] sm:$0xff]
    %v1003 = vld [vmem:[#allocation8 + $0xdd8] sm:$0xff]
    %v1004 = vld [vmem:[#allocation8 + $0xde0] sm:$0xff]
    %v1005 = vld [vmem:[#allocation8 + $0xde8] sm:$0xff]
    %v1006 = vld [vmem:[#allocation8 + $0xdf0] sm:$0xff]
    %v1007 = vld [vmem:[#allocation8 + $0xdf8] sm:$0xff]
    %v1008 = vld [vmem:[#allocation8 + $0xe00] sm:$0xff]
    %v1009 = vld [vmem:[#allocation8 + $0xe08] sm:$0xff]
    %v1010 = vld [vmem:[#allocation8 + $0xe10] sm:$0xff]
    %v1011 = vld [vmem:[#allocation8 + $0xe18] sm:$0xff]
    %v1012 = vld [vmem:[#allocation8 + $0xe20] sm:$0xff]
    %v1013 = vld [vmem:[#allocation8 + $0xe28] sm:$0xff]
    %v1014 = vld [vmem:[#allocation8 + $0xe30] sm:$0xff]
    %v1015 = vld [vmem:[#allocation8 + $0xe38] sm:$0xff]
    %v1016 = vld [vmem:[#allocation8 + $0xe40] sm:$0xff]
    %v1017 = vld [vmem:[#allocation8 + $0xe48] sm:$0xff]
    %v1018 = vld [vmem:[#allocation8 + $0xe50] sm:$0xff]
    %v1019 = vld [vmem:[#allocation8 + $0xe58] sm:$0xff]
    %v1020 = vld [vmem:[#allocation8 + $0xe60] sm:$0xff]
    %v1021 = vld [vmem:[#allocation8 + $0xe68] sm:$0xff]
    %v1022 = vld [vmem:[#allocation8 + $0xe70] sm:$0xff]
    %v1023 = vld [vmem:[#allocation8 + $0xe78] sm:$0xff]
    %v1024 = vld [vmem:[#allocation8 + $0xe80] sm:$0xff]
    %v1025 = vld [vmem:[#allocation8 + $0xe88] sm:$0xff]
    %v1026 = vld [vmem:[#allocation8 + $0xe90] sm:$0xff]
    %v1027 = vld [vmem:[#allocation8 + $0xe98] sm:$0xff]
    %v1028 = vld [vmem:[#allocation8 + $0xea0] sm:$0xff]
    %v1029 = vld [vmem:[#allocation8 + $0xea8] sm:$0xff]
    %v1030 = vld [vmem:[#allocation8 + $0xeb0] sm:$0xff]
    %v1031 = vld [vmem:[#allocation8 + $0xeb8] sm:$0xff]
    %v1032 = vld [vmem:[#allocation8 + $0xec0] sm:$0xff]
    %v1033 = vld [vmem:[#allocation8 + $0xec8] sm:$0xff]
    %v1034 = vld [vmem:[#allocation8 + $0xed0] sm:$0xff]
    %v1035 = vld [vmem:[#allocation8 + $0xed8] sm:$0xff]
    %v1036 = vld [vmem:[#allocation8 + $0xee0] sm:$0xff]
    %v1037 = vld [vmem:[#allocation8 + $0xee8] sm:$0xff]
    %v1038 = vld [vmem:[#allocation8 + $0xef0] sm:$0xff]
    %v1039 = vld [vmem:[#allocation8 + $0xef8] sm:$0xff]
    %v1040 = vld [vmem:[#allocation8 + $0xf00] sm:$0xff]
    %v1041 = vld [vmem:[#allocation8 + $0xf08] sm:$0xff]
    %v1042 = vld [vmem:[#allocation8 + $0xf10] sm:$0xff]
    %v1043 = vld [vmem:[#allocation8 + $0xf18] sm:$0xff]
    %v1044 = vld [vmem:[#allocation8 + $0xf20] sm:$0xff]
    %v1045 = vld [vmem:[#allocation8 + $0xf28] sm:$0xff]
    %v1046 = vld [vmem:[#allocation8 + $0xf30] sm:$0xff]
    %v1047 = vld [vmem:[#allocation8 + $0xf38] sm:$0xff]
    %v1048 = vld [vmem:[#allocation8 + $0xf40] sm:$0xff]
    %v1049 = vld [vmem:[#allocation8 + $0xf48] sm:$0xff]
    %v1050 = vld [vmem:[#allocation8 + $0xf50] sm:$0xff]
    %v1051 = vld [vmem:[#allocation8 + $0xf58] sm:$0xff]
    %v1052 = vld [vmem:[#allocation8 + $0xf60] sm:$0xff]
    %v1053 = vld [vmem:[#allocation8 + $0xf68] sm:$0xff]
    %v1054 = vld [vmem:[#allocation8 + $0xf70] sm:$0xff]
    %v1055 = vld [vmem:[#allocation8 + $0xf78] sm:$0xff]
    %v1056 = vld [vmem:[#allocation8 + $0xf80] sm:$0xff]
    %v1057 = vld [vmem:[#allocation8 + $0xf88] sm:$0xff]
    %v1058 = vld [vmem:[#allocation8 + $0xf90] sm:$0xff]
    %v1059 = vld [vmem:[#allocation8 + $0xf98] sm:$0xff]
    %v1060 = vld [vmem:[#allocation8 + $0xfa0] sm:$0xff]
    %v1061 = vld [vmem:[#allocation8 + $0xfa8] sm:$0xff]
    %v1062 = vld [vmem:[#allocation8 + $0xfb0] sm:$0xff]
    %v1063 = vld [vmem:[#allocation8 + $0xfb8] sm:$0xff]
    %v1064 = vld [vmem:[#allocation8 + $0xfc0] sm:$0xff]
    %v1065 = vld [vmem:[#allocation8 + $0xfc8] sm:$0xff]
    %v1066 = vld [vmem:[#allocation8 + $0xfd0] sm:$0xff]
    %v1067 = vld [vmem:[#allocation8 + $0xfd8] sm:$0xff]
    %v1068 = vld [vmem:[#allocation8 + $0xfe0] sm:$0xff]
    %v1069 = vld [vmem:[#allocation8 + $0xfe8] sm:$0xff]
    %v1070 = vld [vmem:[#allocation8 + $0xff0] sm:$0xff]
    %v1071 = vld [vmem:[#allocation8 + $0xff8] sm:$0xff]
    %v1072 = vld [vmem:[#allocation8 + $0x1000] sm:$0xff]
    %v1073 = vld [vmem:[#allocation8 + $0x1008] sm:$0xff]
    %v1074 = vld [vmem:[#allocation8 + $0x1010] sm:$0xff]
    %v1075 = vld [vmem:[#allocation8 + $0x1018] sm:$0xff]
    %v1076 = vld [vmem:[#allocation8 + $0x1020] sm:$0xff]
    %v1077 = vld [vmem:[#allocation8 + $0x1028] sm:$0xff]
    %v1078 = vld [vmem:[#allocation8 + $0x1030] sm:$0xff]
    %v1079 = vld [vmem:[#allocation8 + $0x1038] sm:$0xff]
    %v1080 = vld [vmem:[#allocation8 + $0x1040] sm:$0xff]
    %v1081 = vld [vmem:[#allocation8 + $0x1048] sm:$0xff]
    %v1082 = vld [vmem:[#allocation8 + $0x1050] sm:$0xff]
    %v1083 = vld [vmem:[#allocation8 + $0x1058] sm:$0xff]
    %v1084 = vld [vmem:[#allocation8 + $0x1060] sm:$0xff]
    %v1085 = vld [vmem:[#allocation8 + $0x1068] sm:$0xff]
    %v1086 = vld [vmem:[#allocation8 + $0x1070] sm:$0xff]
    %v1087 = vld [vmem:[#allocation8 + $0x1078] sm:$0xff]
    %v1088 = vld [vmem:[#allocation8 + $0x1080] sm:$0xff]
    %v1089 = vld [vmem:[#allocation8 + $0x1088] sm:$0xff]
    %v1090 = vld [vmem:[#allocation8 + $0x1090] sm:$0xff]
    %v1091 = vld [vmem:[#allocation8 + $0x1098] sm:$0xff]
    %v1092 = vld [vmem:[#allocation8 + $0x10a0] sm:$0xff]
    %v1093 = vld [vmem:[#allocation8 + $0x10a8] sm:$0xff]
    %v1094 = vld [vmem:[#allocation8 + $0x10b0] sm:$0xff]
    %v1095 = vld [vmem:[#allocation8 + $0x10b8] sm:$0xff]
    %v1096 = vld [vmem:[#allocation8 + $0x10c0] sm:$0xff]
    %v1097 = vld [vmem:[#allocation8 + $0x10c8] sm:$0xff]
    %v1098 = vld [vmem:[#allocation8 + $0x10d0] sm:$0xff]
    %v1099 = vld [vmem:[#allocation8 + $0x10d8] sm:$0xff]
    %v1100 = vld [vmem:[#allocation8 + $0x10e0] sm:$0xff]
    %v1101 = vld [vmem:[#allocation8 + $0x10e8] sm:$0xff]
    %v1102 = vld [vmem:[#allocation8 + $0x10f0] sm:$0xff]
    %v1103 = vld [vmem:[#allocation8 + $0x10f8] sm:$0xff]
    %v1104 = vld [vmem:[#allocation8 + $0x1100] sm:$0xff]
    %v1105 = vld [vmem:[#allocation8 + $0x1108] sm:$0xff]
    %v1106 = vld [vmem:[#allocation8 + $0x1110] sm:$0xff]
    %v1107 = vld [vmem:[#allocation8 + $0x1118] sm:$0xff]
    %v1108 = vld [vmem:[#allocation8 + $0x1120] sm:$0xff]
    %v1109 = vld [vmem:[#allocation8 + $0x1128] sm:$0xff]
    %v1110 = vld [vmem:[#allocation8 + $0x1130] sm:$0xff]
    %v1111 = vld [vmem:[#allocation8 + $0x1138] sm:$0xff]
    %v1112 = vld [vmem:[#allocation8 + $0x1140] sm:$0xff]
    %v1113 = vld [vmem:[#allocation8 + $0x1148] sm:$0xff]
    %v1114 = vld [vmem:[#allocation8 + $0x1150] sm:$0xff]
    %v1115 = vld [vmem:[#allocation8 + $0x1158] sm:$0xff]
    %v1116 = vld [vmem:[#allocation8 + $0x1160] sm:$0xff]
    %v1117 = vld [vmem:[#allocation8 + $0x1168] sm:$0xff]
    %v1118 = vld [vmem:[#allocation8 + $0x1170] sm:$0xff]
    %v1119 = vld [vmem:[#allocation8 + $0x1178] sm:$0xff]
    %v1120 = vld [vmem:[#allocation8 + $0x1180] sm:$0xff]
    %v1121 = vld [vmem:[#allocation8 + $0x1188] sm:$0xff]
    %v1122 = vld [vmem:[#allocation8 + $0x1190] sm:$0xff]
    %v1123 = vld [vmem:[#allocation8 + $0x1198] sm:$0xff]
    %v1124 = vld [vmem:[#allocation8 + $0x11a0] sm:$0xff]
    %v1125 = vld [vmem:[#allocation8 + $0x11a8] sm:$0xff]
    %v1126 = vld [vmem:[#allocation8 + $0x11b0] sm:$0xff]
    %v1127 = vld [vmem:[#allocation8 + $0x11b8] sm:$0xff]
    %v1128 = vld [vmem:[#allocation8 + $0x11c0] sm:$0xff]
    %v1129 = vld [vmem:[#allocation8 + $0x11c8] sm:$0xff]
    %v1130 = vld [vmem:[#allocation8 + $0x11d0] sm:$0xff]
    %v1131 = vld [vmem:[#allocation8 + $0x11d8] sm:$0xff]
    %v1132 = vld [vmem:[#allocation8 + $0x11e0] sm:$0xff]
    %v1133 = vld [vmem:[#allocation8 + $0x11e8] sm:$0xff]
    %v1134 = vld [vmem:[#allocation8 + $0x11f0] sm:$0xff]
    %v1135 = vld [vmem:[#allocation8 + $0x11f8] sm:$0xff]
    %v1136 = vld [vmem:[#allocation8 + $0x1200] sm:$0xff]
    %v1137 = vld [vmem:[#allocation8 + $0x1208] sm:$0xff]
    %v1138 = vld [vmem:[#allocation8 + $0x1210] sm:$0xff]
    %v1139 = vld [vmem:[#allocation8 + $0x1218] sm:$0xff]
    %v1140 = vld [vmem:[#allocation8 + $0x1220] sm:$0xff]
    %v1141 = vld [vmem:[#allocation8 + $0x1228] sm:$0xff]
    %v1142 = vld [vmem:[#allocation8 + $0x1230] sm:$0xff]
    %v1143 = vld [vmem:[#allocation8 + $0x1238] sm:$0xff]
    %v1144 = vld [vmem:[#allocation8 + $0x1240] sm:$0xff]
    %v1145 = vld [vmem:[#allocation8 + $0x1248] sm:$0xff]
    %v1146 = vld [vmem:[#allocation8 + $0x1250] sm:$0xff]
    %v1147 = vld [vmem:[#allocation8 + $0x1258] sm:$0xff]
    %v1148 = vld [vmem:[#allocation8 + $0x1260] sm:$0xff]
    %v1149 = vld [vmem:[#allocation8 + $0x1268] sm:$0xff]
    %v1150 = vld [vmem:[#allocation8 + $0x1270] sm:$0xff]
    %v1151 = vld [vmem:[#allocation8 + $0x1278] sm:$0xff]
    %v1152 = vld [vmem:[#allocation8 + $0x1280] sm:$0xff]
    %v1153 = vld [vmem:[#allocation8 + $0x1288] sm:$0xff]
    %v1154 = vld [vmem:[#allocation8 + $0x1290] sm:$0xff]
    %v1155 = vld [vmem:[#allocation8 + $0x1298] sm:$0xff]
    %v1156 = vld [vmem:[#allocation8 + $0x12a0] sm:$0xff]
    %v1157 = vld [vmem:[#allocation8 + $0x12a8] sm:$0xff]
    %v1158 = vld [vmem:[#allocation8 + $0x12b0] sm:$0xff]
    %v1159 = vld [vmem:[#allocation8 + $0x12b8] sm:$0xff]
    %v1160 = vld [vmem:[#allocation8 + $0x12c0] sm:$0xff]
    %v1161 = vld [vmem:[#allocation8 + $0x12c8] sm:$0xff]
    %v1162 = vld [vmem:[#allocation8 + $0x12d0] sm:$0xff]
    %v1163 = vld [vmem:[#allocation8 + $0x12d8] sm:$0xff]
    %v1164 = vld [vmem:[#allocation8 + $0x12e0] sm:$0xff]
    %v1165 = vld [vmem:[#allocation8 + $0x12e8] sm:$0xff]
    %v1166 = vld [vmem:[#allocation8 + $0x12f0] sm:$0xff]
    %v1167 = vld [vmem:[#allocation8 + $0x12f8] sm:$0xff]
    %v1168 = vld [vmem:[#allocation8 + $0x1300] sm:$0xff]
    %v1169 = vld [vmem:[#allocation8 + $0x1308] sm:$0xff]
    %v1170 = vld [vmem:[#allocation8 + $0x1310] sm:$0xff]
    %v1171 = vld [vmem:[#allocation8 + $0x1318] sm:$0xff]
    %v1172 = vld [vmem:[#allocation8 + $0x1320] sm:$0xff]
    %v1173 = vld [vmem:[#allocation8 + $0x1328] sm:$0xff]
    %v1174 = vld [vmem:[#allocation8 + $0x1330] sm:$0xff]
    %v1175 = vld [vmem:[#allocation8 + $0x1338] sm:$0xff]
    %v1176 = vld [vmem:[#allocation8 + $0x1340] sm:$0xff]
    %v1177 = vld [vmem:[#allocation8 + $0x1348] sm:$0xff]
    %v1178 = vld [vmem:[#allocation8 + $0x1350] sm:$0xff]
    %v1179 = vld [vmem:[#allocation8 + $0x1358] sm:$0xff]
    %v1180 = vld [vmem:[#allocation8 + $0x1360] sm:$0xff]
    %v1181 = vld [vmem:[#allocation8 + $0x1368] sm:$0xff]
    %v1182 = vld [vmem:[#allocation8 + $0x1370] sm:$0xff]
    %v1183 = vld [vmem:[#allocation8 + $0x1378] sm:$0xff]
    %v1184 = vld [vmem:[#allocation8 + $0x1380] sm:$0xff]
    %v1185 = vld [vmem:[#allocation8 + $0x1388] sm:$0xff]
    %v1186 = vld [vmem:[#allocation8 + $0x1390] sm:$0xff]
    %v1187 = vld [vmem:[#allocation8 + $0x1398] sm:$0xff]
    %v1188 = vld [vmem:[#allocation8 + $0x13a0] sm:$0xff]
    %v1189 = vld [vmem:[#allocation8 + $0x13a8] sm:$0xff]
    %v1190 = vld [vmem:[#allocation8 + $0x13b0] sm:$0xff]
    %v1191 = vld [vmem:[#allocation8 + $0x13b8] sm:$0xff]
    %v1192 = vld [vmem:[#allocation8 + $0x13c0] sm:$0xff]
    %v1193 = vld [vmem:[#allocation8 + $0x13c8] sm:$0xff]
    %v1194 = vld [vmem:[#allocation8 + $0x13d0] sm:$0xff]
    %v1195 = vld [vmem:[#allocation8 + $0x13d8] sm:$0xff]
    %v1196 = vld [vmem:[#allocation8 + $0x13e0] sm:$0xff]
    %v1197 = vld [vmem:[#allocation8 + $0x13e8] sm:$0xff]
    %v1198 = vld [vmem:[#allocation8 + $0x13f0] sm:$0xff]
    %v1199 = vld [vmem:[#allocation8 + $0x13f8] sm:$0xff]
    %v1200 = vld [vmem:[#allocation8 + $0x1400] sm:$0xff]
    %v1201 = vld [vmem:[#allocation8 + $0x1408] sm:$0xff]
    %v1202 = vld [vmem:[#allocation8 + $0x1410] sm:$0xff]
    %v1203 = vld [vmem:[#allocation8 + $0x1418] sm:$0xff]
    %v1204 = vld [vmem:[#allocation8 + $0x1420] sm:$0xff]
    %v1205 = vld [vmem:[#allocation8 + $0x1428] sm:$0xff]
    %v1206 = vld [vmem:[#allocation8 + $0x1430] sm:$0xff]
    %v1207 = vld [vmem:[#allocation8 + $0x1438] sm:$0xff]
    %v1208 = vld [vmem:[#allocation8 + $0x1440] sm:$0xff]
    %v1209 = vld [vmem:[#allocation8 + $0x1448] sm:$0xff]
    %v1210 = vld [vmem:[#allocation8 + $0x1450] sm:$0xff]
    %v1211 = vld [vmem:[#allocation8 + $0x1458] sm:$0xff]
    %v1212 = vld [vmem:[#allocation8 + $0x1460] sm:$0xff]
    %v1213 = vld [vmem:[#allocation8 + $0x1468] sm:$0xff]
    %v1214 = vld [vmem:[#allocation8 + $0x1470] sm:$0xff]
    %v1215 = vld [vmem:[#allocation8 + $0x1478] sm:$0xff]
    %v1216 = vld [vmem:[#allocation8 + $0x1480] sm:$0xff]
    %v1217 = vld [vmem:[#allocation8 + $0x1488] sm:$0xff]
    %v1218 = vld [vmem:[#allocation8 + $0x1490] sm:$0xff]
    %v1219 = vld [vmem:[#allocation8 + $0x1498] sm:$0xff]
    %v1220 = vld [vmem:[#allocation8 + $0x14a0] sm:$0xff]
    %v1221 = vld [vmem:[#allocation8 + $0x14a8] sm:$0xff]
    %v1222 = vld [vmem:[#allocation8 + $0x14b0] sm:$0xff]
    %v1223 = vld [vmem:[#allocation8 + $0x14b8] sm:$0xff]
    %v1224 = vld [vmem:[#allocation8 + $0x14c0] sm:$0xff]
    %v1225 = vld [vmem:[#allocation8 + $0x14c8] sm:$0xff]
    %v1226 = vld [vmem:[#allocation8 + $0x14d0] sm:$0xff]
    %v1227 = vld [vmem:[#allocation8 + $0x14d8] sm:$0xff]
    %v1228 = vld [vmem:[#allocation8 + $0x14e0] sm:$0xff]
    %v1229 = vld [vmem:[#allocation8 + $0x14e8] sm:$0xff]
    %v1230 = vld [vmem:[#allocation8 + $0x14f0] sm:$0xff]
    %v1231 = vld [vmem:[#allocation8 + $0x14f8] sm:$0xff]
    %v1232 = vld [vmem:[#allocation8 + $0x1500] sm:$0xff]
    %v1233 = vld [vmem:[#allocation8 + $0x1508] sm:$0xff]
    %v1234 = vld [vmem:[#allocation8 + $0x1510] sm:$0xff]
    %v1235 = vld [vmem:[#allocation8 + $0x1518] sm:$0xff]
    %v1236 = vld [vmem:[#allocation8 + $0x1520] sm:$0xff]
    %v1237 = vld [vmem:[#allocation8 + $0x1528] sm:$0xff]
    %v1238 = vld [vmem:[#allocation8 + $0x1530] sm:$0xff]
    %v1239 = vld [vmem:[#allocation8 + $0x1538] sm:$0xff]
    %v1240 = vld [vmem:[#allocation8 + $0x1540] sm:$0xff]
    %v1241 = vld [vmem:[#allocation8 + $0x1548] sm:$0xff]
    %v1242 = vld [vmem:[#allocation8 + $0x1550] sm:$0xff]
    %v1243 = vld [vmem:[#allocation8 + $0x1558] sm:$0xff]
    %v1244 = vld [vmem:[#allocation8 + $0x1560] sm:$0xff]
    %v1245 = vld [vmem:[#allocation8 + $0x1568] sm:$0xff]
    %v1246 = vld [vmem:[#allocation8 + $0x1570] sm:$0xff]
    %v1247 = vld [vmem:[#allocation8 + $0x1578] sm:$0xff]
    %v1248 = vld [vmem:[#allocation8 + $0x1580] sm:$0xff]
    %v1249 = vld [vmem:[#allocation8 + $0x1588] sm:$0xff]
    %v1250 = vld [vmem:[#allocation8 + $0x1590] sm:$0xff]
    %v1251 = vld [vmem:[#allocation8 + $0x1598] sm:$0xff]
    %v1252 = vld [vmem:[#allocation8 + $0x15a0] sm:$0xff]
    %v1253 = vld [vmem:[#allocation8 + $0x15a8] sm:$0xff]
    %v1254 = vld [vmem:[#allocation8 + $0x15b0] sm:$0xff]
    %v1255 = vld [vmem:[#allocation8 + $0x15b8] sm:$0xff]
    %v1256 = vld [vmem:[#allocation8 + $0x15c0] sm:$0xff]
    %v1257 = vld [vmem:[#allocation8 + $0x15c8] sm:$0xff]
    %v1258 = vld [vmem:[#allocation8 + $0x15d0] sm:$0xff]
    %v1259 = vld [vmem:[#allocation8 + $0x15d8] sm:$0xff]
    %v1260 = vld [vmem:[#allocation8 + $0x15e0] sm:$0xff]
    %v1261 = vld [vmem:[#allocation8 + $0x15e8] sm:$0xff]
    %v1262 = vld [vmem:[#allocation8 + $0x15f0] sm:$0xff]
    %v1263 = vld [vmem:[#allocation8 + $0x15f8] sm:$0xff]
    %v1264 = vld [vmem:[#allocation8 + $0x1600] sm:$0xff]
    %v1265 = vld [vmem:[#allocation8 + $0x1608] sm:$0xff]
    %v1266 = vld [vmem:[#allocation8 + $0x1610] sm:$0xff]
    %v1267 = vld [vmem:[#allocation8 + $0x1618] sm:$0xff]
    %v1268 = vld [vmem:[#allocation8 + $0x1620] sm:$0xff]
    %v1269 = vld [vmem:[#allocation8 + $0x1628] sm:$0xff]
    %v1270 = vld [vmem:[#allocation8 + $0x1630] sm:$0xff]
    %v1271 = vld [vmem:[#allocation8 + $0x1638] sm:$0xff]
    %v1272 = vld [vmem:[#allocation8 + $0x1640] sm:$0xff]
    %v1273 = vld [vmem:[#allocation8 + $0x1648] sm:$0xff]
    %v1274 = vld [vmem:[#allocation8 + $0x1650] sm:$0xff]
    %v1275 = vld [vmem:[#allocation8 + $0x1658] sm:$0xff]
    %v1276 = vld [vmem:[#allocation8 + $0x1660] sm:$0xff]
    %v1277 = vld [vmem:[#allocation8 + $0x1668] sm:$0xff]
    %v1278 = vld [vmem:[#allocation8 + $0x1670] sm:$0xff]
    %v1279 = vld [vmem:[#allocation8 + $0x1678] sm:$0xff]
    %v1280 = vld [vmem:[#allocation8 + $0x1680] sm:$0xff]
    %v1281 = vld [vmem:[#allocation8 + $0x1688] sm:$0xff]
    %v1282 = vld [vmem:[#allocation8 + $0x1690] sm:$0xff]
    %v1283 = vld [vmem:[#allocation8 + $0x1698] sm:$0xff]
    %v1284 = vld [vmem:[#allocation8 + $0x16a0] sm:$0xff]
    %v1285 = vld [vmem:[#allocation8 + $0x16a8] sm:$0xff]
    %v1286 = vld [vmem:[#allocation8 + $0x16b0] sm:$0xff]
    %v1287 = vld [vmem:[#allocation8 + $0x16b8] sm:$0xff]
    %v1288 = vld [vmem:[#allocation8 + $0x16c0] sm:$0xff]
    %v1289 = vld [vmem:[#allocation8 + $0x16c8] sm:$0xff]
    %v1290 = vld [vmem:[#allocation8 + $0x16d0] sm:$0xff]
    %v1291 = vld [vmem:[#allocation8 + $0x16d8] sm:$0xff]
    %v1292 = vld [vmem:[#allocation8 + $0x16e0] sm:$0xff]
    %v1293 = vld [vmem:[#allocation8 + $0x16e8] sm:$0xff]
    %v1294 = vld [vmem:[#allocation8 + $0x16f0] sm:$0xff]
    %v1295 = vld [vmem:[#allocation8 + $0x16f8] sm:$0xff]
    %v1296 = vld [vmem:[#allocation8 + $0x1700] sm:$0xff]
    %v1297 = vld [vmem:[#allocation8 + $0x1708] sm:$0xff]
    %v1298 = vld [vmem:[#allocation8 + $0x1710] sm:$0xff]
    %v1299 = vld [vmem:[#allocation8 + $0x1718] sm:$0xff]
    %v1300 = vld [vmem:[#allocation8 + $0x1720] sm:$0xff]
    %v1301 = vld [vmem:[#allocation8 + $0x1728] sm:$0xff]
    %v1302 = vld [vmem:[#allocation8 + $0x1730] sm:$0xff]
    %v1303 = vld [vmem:[#allocation8 + $0x1738] sm:$0xff]
    %v1304 = vld [vmem:[#allocation8 + $0x1740] sm:$0xff]
    %v1305 = vld [vmem:[#allocation8 + $0x1748] sm:$0xff]
    %v1306 = vld [vmem:[#allocation8 + $0x1750] sm:$0xff]
    %v1307 = vld [vmem:[#allocation8 + $0x1758] sm:$0xff]
    %v1308 = vld [vmem:[#allocation8 + $0x1760] sm:$0xff]
    %v1309 = vld [vmem:[#allocation8 + $0x1768] sm:$0xff]
    %v1310 = vld [vmem:[#allocation8 + $0x1770] sm:$0xff]
    %v1311 = vld [vmem:[#allocation8 + $0x1778] sm:$0xff]
    %v1312 = vld [vmem:[#allocation8 + $0x1780] sm:$0xff]
    %v1313 = vld [vmem:[#allocation8 + $0x1788] sm:$0xff]
    %v1314 = vld [vmem:[#allocation8 + $0x1790] sm:$0xff]
    %v1315 = vld [vmem:[#allocation8 + $0x1798] sm:$0xff]
    %v1316 = vld [vmem:[#allocation8 + $0x17a0] sm:$0xff]
    %v1317 = vld [vmem:[#allocation8 + $0x17a8] sm:$0xff]
    %v1318 = vld [vmem:[#allocation8 + $0x17b0] sm:$0xff]
    %v1319 = vld [vmem:[#allocation8 + $0x17b8] sm:$0xff]
    %v1320 = vld [vmem:[#allocation8 + $0x17c0] sm:$0xff]
    %v1321 = vld [vmem:[#allocation8 + $0x17c8] sm:$0xff]
    %v1322 = vld [vmem:[#allocation8 + $0x17d0] sm:$0xff]
    %v1323 = vld [vmem:[#allocation8 + $0x17d8] sm:$0xff]
    %v1324 = vld [vmem:[#allocation8 + $0x17e0] sm:$0xff]
    %v1325 = vld [vmem:[#allocation8 + $0x17e8] sm:$0xff]
    %v1326 = vld [vmem:[#allocation8 + $0x17f0] sm:$0xff]
    %v1327 = vld [vmem:[#allocation8 + $0x17f8] sm:$0xff]
    %v1328 = vld [vmem:[#allocation8 + $0x1800] sm:$0xff]
    %v1329 = vld [vmem:[#allocation8 + $0x1808] sm:$0xff]
    %v1330 = vld [vmem:[#allocation8 + $0x1810] sm:$0xff]
    %v1331 = vld [vmem:[#allocation8 + $0x1818] sm:$0xff]
    %v1332 = vld [vmem:[#allocation8 + $0x1820] sm:$0xff]
    %v1333 = vld [vmem:[#allocation8 + $0x1828] sm:$0xff]
    %v1334 = vld [vmem:[#allocation8 + $0x1830] sm:$0xff]
    %v1335 = vld [vmem:[#allocation8 + $0x1838] sm:$0xff]
    %v1336 = vld [vmem:[#allocation8 + $0x1840] sm:$0xff]
    %v1337 = vld [vmem:[#allocation8 + $0x1848] sm:$0xff]
    %v1338 = vld [vmem:[#allocation8 + $0x1850] sm:$0xff]
    %v1339 = vld [vmem:[#allocation8 + $0x1858] sm:$0xff]
    %v1340 = vld [vmem:[#allocation8 + $0x1860] sm:$0xff]
    %v1341 = vld [vmem:[#allocation8 + $0x1868] sm:$0xff]
    %v1342 = vld [vmem:[#allocation8 + $0x1870] sm:$0xff]
    %v1343 = vld [vmem:[#allocation8 + $0x1878] sm:$0xff]
    %v1344 = vld [vmem:[#allocation8 + $0x1880] sm:$0xff]
    %v1345 = vld [vmem:[#allocation8 + $0x1888] sm:$0xff]
    %v1346 = vld [vmem:[#allocation8 + $0x1890] sm:$0xff]
    %v1347 = vld [vmem:[#allocation8 + $0x1898] sm:$0xff]
    %v1348 = vld [vmem:[#allocation8 + $0x18a0] sm:$0xff]
    %v1349 = vld [vmem:[#allocation8 + $0x18a8] sm:$0xff]
    %v1350 = vld [vmem:[#allocation8 + $0x18b0] sm:$0xff]
    %v1351 = vld [vmem:[#allocation8 + $0x18b8] sm:$0xff]
    %v1352 = vld [vmem:[#allocation8 + $0x18c0] sm:$0xff]
    %v1353 = vld [vmem:[#allocation8 + $0x18c8] sm:$0xff]
    %v1354 = vld [vmem:[#allocation8 + $0x18d0] sm:$0xff]
    %v1355 = vld [vmem:[#allocation8 + $0x18d8] sm:$0xff]
    %v1356 = vld [vmem:[#allocation8 + $0x18e0] sm:$0xff]
    %v1357 = vld [vmem:[#allocation8 + $0x18e8] sm:$0xff]
    %v1358 = vld [vmem:[#allocation8 + $0x18f0] sm:$0xff]
    %v1359 = vld [vmem:[#allocation8 + $0x18f8] sm:$0xff]
    %v1360 = vld [vmem:[#allocation8 + $0x1900] sm:$0xff]
    %v1361 = vld [vmem:[#allocation8 + $0x1908] sm:$0xff]
    %v1362 = vld [vmem:[#allocation8 + $0x1910] sm:$0xff]
    %v1363 = vld [vmem:[#allocation8 + $0x1918] sm:$0xff]
    %v1364 = vld [vmem:[#allocation8 + $0x1920] sm:$0xff]
    %v1365 = vld [vmem:[#allocation8 + $0x1928] sm:$0xff]
    %v1366 = vld [vmem:[#allocation8 + $0x1930] sm:$0xff]
    %v1367 = vld [vmem:[#allocation8 + $0x1938] sm:$0xff]
    %v1368 = vld [vmem:[#allocation8 + $0x1940] sm:$0xff]
    %v1369 = vld [vmem:[#allocation8 + $0x1948] sm:$0xff]
    %v1370 = vld [vmem:[#allocation8 + $0x1950] sm:$0xff]
    %v1371 = vld [vmem:[#allocation8 + $0x1958] sm:$0xff]
    %v1372 = vld [vmem:[#allocation8 + $0x1960] sm:$0xff]
    %v1373 = vld [vmem:[#allocation8 + $0x1968] sm:$0xff]
    %v1374 = vld [vmem:[#allocation8 + $0x1970] sm:$0xff]
    %v1375 = vld [vmem:[#allocation8 + $0x1978] sm:$0xff]
    %v1376 = vld [vmem:[#allocation8 + $0x1980] sm:$0xff]
    %v1377 = vld [vmem:[#allocation8 + $0x1988] sm:$0xff]
    %v1378 = vld [vmem:[#allocation8 + $0x1990] sm:$0xff]
    %v1379 = vld [vmem:[#allocation8 + $0x1998] sm:$0xff]
    %v1380 = vld [vmem:[#allocation8 + $0x19a0] sm:$0xff]
    %v1381 = vld [vmem:[#allocation8 + $0x19a8] sm:$0xff]
    %v1382 = vld [vmem:[#allocation8 + $0x19b0] sm:$0xff]
    %v1383 = vld [vmem:[#allocation8 + $0x19b8] sm:$0xff]
    %v1384 = vld [vmem:[#allocation8 + $0x19c0] sm:$0xff]
    %v1385 = vld [vmem:[#allocation8 + $0x19c8] sm:$0xff]
    %v1386 = vld [vmem:[#allocation8 + $0x19d0] sm:$0xff]
    %v1387 = vld [vmem:[#allocation8 + $0x19d8] sm:$0xff]
    %v1388 = vld [vmem:[#allocation8 + $0x19e0] sm:$0xff]
    %v1389 = vld [vmem:[#allocation8 + $0x19e8] sm:$0xff]
    %v1390 = vld [vmem:[#allocation8 + $0x19f0] sm:$0xff]
    %v1391 = vld [vmem:[#allocation8 + $0x19f8] sm:$0xff]
    %v1392 = vld [vmem:[#allocation8 + $0x1a00] sm:$0xff]
    %v1393 = vld [vmem:[#allocation8 + $0x1a08] sm:$0xff]
    %v1394 = vld [vmem:[#allocation8 + $0x1a10] sm:$0xff]
    %v1395 = vld [vmem:[#allocation8 + $0x1a18] sm:$0xff]
    %v1396 = vld [vmem:[#allocation8 + $0x1a20] sm:$0xff]
    %v1397 = vld [vmem:[#allocation8 + $0x1a28] sm:$0xff]
    %v1398 = vld [vmem:[#allocation8 + $0x1a30] sm:$0xff]
    %v1399 = vld [vmem:[#allocation8 + $0x1a38] sm:$0xff]
    %v1400 = vld [vmem:[#allocation8 + $0x1a40] sm:$0xff]
    %v1401 = vld [vmem:[#allocation8 + $0x1a48] sm:$0xff]
    %v1402 = vld [vmem:[#allocation8 + $0x1a50] sm:$0xff]
    %v1403 = vld [vmem:[#allocation8 + $0x1a58] sm:$0xff]
    %v1404 = vld [vmem:[#allocation8 + $0x1a60] sm:$0xff]
    %v1405 = vld [vmem:[#allocation8 + $0x1a68] sm:$0xff]
    %v1406 = vld [vmem:[#allocation8 + $0x1a70] sm:$0xff]
    %v1407 = vld [vmem:[#allocation8 + $0x1a78] sm:$0xff]
    %v1408 = vld [vmem:[#allocation8 + $0x1a80] sm:$0xff]
    %v1409 = vld [vmem:[#allocation8 + $0x1a88] sm:$0xff]
    %v1410 = vld [vmem:[#allocation8 + $0x1a90] sm:$0xff]
    %v1411 = vld [vmem:[#allocation8 + $0x1a98] sm:$0xff]
    %v1412 = vld [vmem:[#allocation8 + $0x1aa0] sm:$0xff]
    %v1413 = vld [vmem:[#allocation8 + $0x1aa8] sm:$0xff]
    %v1414 = vld [vmem:[#allocation8 + $0x1ab0] sm:$0xff]
    %v1415 = vld [vmem:[#allocation8 + $0x1ab8] sm:$0xff]
    %v1416 = vld [vmem:[#allocation8 + $0x1ac0] sm:$0xff]
    %v1417 = vld [vmem:[#allocation8 + $0x1ac8] sm:$0xff]
    %v1418 = vld [vmem:[#allocation8 + $0x1ad0] sm:$0xff]
    %v1419 = vld [vmem:[#allocation8 + $0x1ad8] sm:$0xff]
    %v1420 = vld [vmem:[#allocation8 + $0x1ae0] sm:$0xff]
    %v1421 = vld [vmem:[#allocation8 + $0x1ae8] sm:$0xff]
    %v1422 = vld [vmem:[#allocation8 + $0x1af0] sm:$0xff]
    %v1423 = vld [vmem:[#allocation8 + $0x1af8] sm:$0xff]
    %v1424 = vld [vmem:[#allocation8 + $0x1b00] sm:$0xff]
    %v1425 = vld [vmem:[#allocation8 + $0x1b08] sm:$0xff]
    %v1426 = vld [vmem:[#allocation8 + $0x1b10] sm:$0xff]
    %v1427 = vld [vmem:[#allocation8 + $0x1b18] sm:$0xff]
    %v1428 = vld [vmem:[#allocation8 + $0x1b20] sm:$0xff]
    %v1429 = vld [vmem:[#allocation8 + $0x1b28] sm:$0xff]
    %v1430 = vld [vmem:[#allocation8 + $0x1b30] sm:$0xff]
    %v1431 = vld [vmem:[#allocation8 + $0x1b38] sm:$0xff]
    %v1432 = vld [vmem:[#allocation8 + $0x1b40] sm:$0xff]
    %v1433 = vld [vmem:[#allocation8 + $0x1b48] sm:$0xff]
    %v1434 = vld [vmem:[#allocation8 + $0x1b50] sm:$0xff]
    %v1435 = vld [vmem:[#allocation8 + $0x1b58] sm:$0xff]
    %v1436 = vld [vmem:[#allocation8 + $0x1b60] sm:$0xff]
    %v1437 = vld [vmem:[#allocation8 + $0x1b68] sm:$0xff]
    %v1438 = vld [vmem:[#allocation8 + $0x1b70] sm:$0xff]
    %v1439 = vld [vmem:[#allocation8 + $0x1b78] sm:$0xff]
    %v1440 = vld [vmem:[#allocation8 + $0x1b80] sm:$0xff]
    %v1441 = vld [vmem:[#allocation8 + $0x1b88] sm:$0xff]
    %v1442 = vld [vmem:[#allocation8 + $0x1b90] sm:$0xff]
    %v1443 = vld [vmem:[#allocation8 + $0x1b98] sm:$0xff]
    %v1444 = vld [vmem:[#allocation8 + $0x1ba0] sm:$0xff]
    %v1445 = vld [vmem:[#allocation8 + $0x1ba8] sm:$0xff]
    %v1446 = vld [vmem:[#allocation8 + $0x1bb0] sm:$0xff]
    %v1447 = vld [vmem:[#allocation8 + $0x1bb8] sm:$0xff]
    %v1448 = vld [vmem:[#allocation8 + $0x1bc0] sm:$0xff]
    %v1449 = vld [vmem:[#allocation8 + $0x1bc8] sm:$0xff]
    %v1450 = vld [vmem:[#allocation8 + $0x1bd0] sm:$0xff]
    %v1451 = vld [vmem:[#allocation8 + $0x1bd8] sm:$0xff]
    %v1452 = vld [vmem:[#allocation8 + $0x1be0] sm:$0xff]
    %v1453 = vld [vmem:[#allocation8 + $0x1be8] sm:$0xff]
    %v1454 = vld [vmem:[#allocation8 + $0x1bf0] sm:$0xff]
    %v1455 = vld [vmem:[#allocation8 + $0x1bf8] sm:$0xff]
    %v1456 = vld [vmem:[#allocation8 + $0x1c00] sm:$0xff]
    %v1457 = vld [vmem:[#allocation8 + $0x1c08] sm:$0xff]
    %v1458 = vld [vmem:[#allocation8 + $0x1c10] sm:$0xff]
    %v1459 = vld [vmem:[#allocation8 + $0x1c18] sm:$0xff]
    %v1460 = vld [vmem:[#allocation8 + $0x1c20] sm:$0xff]
    %v1461 = vld [vmem:[#allocation8 + $0x1c28] sm:$0xff]
    %v1462 = vld [vmem:[#allocation8 + $0x1c30] sm:$0xff]
    %v1463 = vld [vmem:[#allocation8 + $0x1c38] sm:$0xff]
    %v1464 = vld [vmem:[#allocation8 + $0x1c40] sm:$0xff]
    %v1465 = vld [vmem:[#allocation8 + $0x1c48] sm:$0xff]
    %v1466 = vld [vmem:[#allocation8 + $0x1c50] sm:$0xff]
    %v1467 = vld [vmem:[#allocation8 + $0x1c58] sm:$0xff]
    %v1468 = vld [vmem:[#allocation8 + $0x1c60] sm:$0xff]
    %v1469 = vld [vmem:[#allocation8 + $0x1c68] sm:$0xff]
    %v1470 = vld [vmem:[#allocation8 + $0x1c70] sm:$0xff]
    %v1471 = vld [vmem:[#allocation8 + $0x1c78] sm:$0xff]
    %v1472 = vld [vmem:[#allocation8 + $0x1c80] sm:$0xff]
    %v1473 = vld [vmem:[#allocation8 + $0x1c88] sm:$0xff]
    %v1474 = vld [vmem:[#allocation8 + $0x1c90] sm:$0xff]
    %v1475 = vld [vmem:[#allocation8 + $0x1c98] sm:$0xff]
    %v1476 = vld [vmem:[#allocation8 + $0x1ca0] sm:$0xff]
    %v1477 = vld [vmem:[#allocation8 + $0x1ca8] sm:$0xff]
    %v1478 = vld [vmem:[#allocation8 + $0x1cb0] sm:$0xff]
    %v1479 = vld [vmem:[#allocation8 + $0x1cb8] sm:$0xff]
    %v1480 = vld [vmem:[#allocation8 + $0x1cc0] sm:$0xff]
    %v1481 = vld [vmem:[#allocation8 + $0x1cc8] sm:$0xff]
    %v1482 = vld [vmem:[#allocation8 + $0x1cd0] sm:$0xff]
    %v1483 = vld [vmem:[#allocation8 + $0x1cd8] sm:$0xff]
    %v1484 = vld [vmem:[#allocation8 + $0x1ce0] sm:$0xff]
    %v1485 = vld [vmem:[#allocation8 + $0x1ce8] sm:$0xff]
    %v1486 = vld [vmem:[#allocation8 + $0x1cf0] sm:$0xff]
    %v1487 = vld [vmem:[#allocation8 + $0x1cf8] sm:$0xff]
    %v1488 = vld [vmem:[#allocation8 + $0x1d00] sm:$0xff]
    %v1489 = vld [vmem:[#allocation8 + $0x1d08] sm:$0xff]
    %v1490 = vld [vmem:[#allocation8 + $0x1d10] sm:$0xff]
    %v1491 = vld [vmem:[#allocation8 + $0x1d18] sm:$0xff]
    %v1492 = vld [vmem:[#allocation8 + $0x1d20] sm:$0xff]
    %v1493 = vld [vmem:[#allocation8 + $0x1d28] sm:$0xff]
    %v1494 = vld [vmem:[#allocation8 + $0x1d30] sm:$0xff]
    %v1495 = vld [vmem:[#allocation8 + $0x1d38] sm:$0xff]
    %v1496 = vld [vmem:[#allocation8 + $0x1d40] sm:$0xff]
    %v1497 = vld [vmem:[#allocation8 + $0x1d48] sm:$0xff]
    %v1498 = vld [vmem:[#allocation8 + $0x1d50] sm:$0xff]
    %v1499 = vld [vmem:[#allocation8 + $0x1d58] sm:$0xff]
    %v1500 = vld [vmem:[#allocation8 + $0x1d60] sm:$0xff]
    %v1501 = vld [vmem:[#allocation8 + $0x1d68] sm:$0xff]
    %v1502 = vld [vmem:[#allocation8 + $0x1d70] sm:$0xff]
    %v1503 = vld [vmem:[#allocation8 + $0x1d78] sm:$0xff]
    %v1504 = vld [vmem:[#allocation8 + $0x1d80] sm:$0xff]
    %v1505 = vld [vmem:[#allocation8 + $0x1d88] sm:$0xff]
    %v1506 = vld [vmem:[#allocation8 + $0x1d90] sm:$0xff]
    %v1507 = vld [vmem:[#allocation8 + $0x1d98] sm:$0xff]
    %v1508 = vld [vmem:[#allocation8 + $0x1da0] sm:$0xff]
    %v1509 = vld [vmem:[#allocation8 + $0x1da8] sm:$0xff]
    %v1510 = vld [vmem:[#allocation8 + $0x1db0] sm:$0xff]
    %v1511 = vld [vmem:[#allocation8 + $0x1db8] sm:$0xff]
    %v1512 = vld [vmem:[#allocation8 + $0x1dc0] sm:$0xff]
    %v1513 = vld [vmem:[#allocation8 + $0x1dc8] sm:$0xff]
    %v1514 = vld [vmem:[#allocation8 + $0x1dd0] sm:$0xff]
    %v1515 = vld [vmem:[#allocation8 + $0x1dd8] sm:$0xff]
    %v1516 = vld [vmem:[#allocation8 + $0x1de0] sm:$0xff]
    %v1517 = vld [vmem:[#allocation8 + $0x1de8] sm:$0xff]
    %v1518 = vld [vmem:[#allocation8 + $0x1df0] sm:$0xff]
    %v1519 = vld [vmem:[#allocation8 + $0x1df8] sm:$0xff]
    %v1520 = vld [vmem:[#allocation8 + $0x1e00] sm:$0xff]
    %v1521 = vld [vmem:[#allocation8 + $0x1e08] sm:$0xff]
    %v1522 = vld [vmem:[#allocation8 + $0x1e10] sm:$0xff]
    %v1523 = vld [vmem:[#allocation8 + $0x1e18] sm:$0xff]
    %v1524 = vld [vmem:[#allocation8 + $0x1e20] sm:$0xff]
    %v1525 = vld [vmem:[#allocation8 + $0x1e28] sm:$0xff]
    %v1526 = vld [vmem:[#allocation8 + $0x1e30] sm:$0xff]
    %v1527 = vld [vmem:[#allocation8 + $0x1e38] sm:$0xff]
    %v1528 = vld [vmem:[#allocation8 + $0x1e40] sm:$0xff]
    %v1529 = vld [vmem:[#allocation8 + $0x1e48] sm:$0xff]
    %v1530 = vld [vmem:[#allocation8 + $0x1e50] sm:$0xff]
    %v1531 = vld [vmem:[#allocation8 + $0x1e58] sm:$0xff]
    %v1532 = vld [vmem:[#allocation8 + $0x1e60] sm:$0xff]
    %v1533 = vld [vmem:[#allocation8 + $0x1e68] sm:$0xff]
    %v1534 = vld [vmem:[#allocation8 + $0x1e70] sm:$0xff]
    %v1535 = vld [vmem:[#allocation8 + $0x1e78] sm:$0xff]
    %v1536 = vld [vmem:[#allocation8 + $0x1e80] sm:$0xff]
    %v1537 = vld [vmem:[#allocation8 + $0x1e88] sm:$0xff]
    %v1538 = vld [vmem:[#allocation8 + $0x1e90] sm:$0xff]
    %v1539 = vld [vmem:[#allocation8 + $0x1e98] sm:$0xff]
    %v1540 = vld [vmem:[#allocation8 + $0x1ea0] sm:$0xff]
    %v1541 = vld [vmem:[#allocation8 + $0x1ea8] sm:$0xff]
    %v1542 = vld [vmem:[#allocation8 + $0x1eb0] sm:$0xff]
    %v1543 = vld [vmem:[#allocation8 + $0x1eb8] sm:$0xff]
    %v1544 = vld [vmem:[#allocation8 + $0x1ec0] sm:$0xff]
    %v1545 = vld [vmem:[#allocation8 + $0x1ec8] sm:$0xff]
    %v1546 = vld [vmem:[#allocation8 + $0x1ed0] sm:$0xff]
    %v1547 = vld [vmem:[#allocation8 + $0x1ed8] sm:$0xff]
    %v1548 = vld [vmem:[#allocation8 + $0x1ee0] sm:$0xff]
    %v1549 = vld [vmem:[#allocation8 + $0x1ee8] sm:$0xff]
    %v1550 = vld [vmem:[#allocation8 + $0x1ef0] sm:$0xff]
    %v1551 = vld [vmem:[#allocation8 + $0x1ef8] sm:$0xff]
    %v1552 = vld [vmem:[#allocation8 + $0x1f00] sm:$0xff]
    %v1553 = vld [vmem:[#allocation8 + $0x1f08] sm:$0xff]
    %v1554 = vld [vmem:[#allocation8 + $0x1f10] sm:$0xff]
    %v1555 = vld [vmem:[#allocation8 + $0x1f18] sm:$0xff]
    %v1556 = vld [vmem:[#allocation8 + $0x1f20] sm:$0xff]
    %v1557 = vld [vmem:[#allocation8 + $0x1f28] sm:$0xff]
    %v1558 = vld [vmem:[#allocation8 + $0x1f30] sm:$0xff]
    %v1559 = vld [vmem:[#allocation8 + $0x1f38] sm:$0xff]
    %v1560 = vld [vmem:[#allocation8 + $0x1f40] sm:$0xff]
    %v1561 = vld [vmem:[#allocation8 + $0x1f48] sm:$0xff]
    %v1562 = vld [vmem:[#allocation8 + $0x1f50] sm:$0xff]
    %v1563 = vld [vmem:[#allocation8 + $0x1f58] sm:$0xff]
    %v1564 = vld [vmem:[#allocation8 + $0x1f60] sm:$0xff]
    %v1565 = vld [vmem:[#allocation8 + $0x1f68] sm:$0xff]
    %v1566 = vld [vmem:[#allocation8 + $0x1f70] sm:$0xff]
    %v1567 = vld [vmem:[#allocation8 + $0x1f78] sm:$0xff]
    %v1568 = vld [vmem:[#allocation8 + $0x1f80] sm:$0xff]
    %v1569 = vld [vmem:[#allocation8 + $0x1f88] sm:$0xff]
    %v1570 = vld [vmem:[#allocation8 + $0x1f90] sm:$0xff]
    %v1571 = vld [vmem:[#allocation8 + $0x1f98] sm:$0xff]
    %v1572 = vld [vmem:[#allocation8 + $0x1fa0] sm:$0xff]
    %v1573 = vld [vmem:[#allocation8 + $0x1fa8] sm:$0xff]
    %v1574 = vld [vmem:[#allocation8 + $0x1fb0] sm:$0xff]
    %v1575 = vld [vmem:[#allocation8 + $0x1fb8] sm:$0xff]
    %v1576 = vld [vmem:[#allocation8 + $0x1fc0] sm:$0xff]
    %v1577 = vld [vmem:[#allocation8 + $0x1fc8] sm:$0xff]
    %v1578 = vld [vmem:[#allocation8 + $0x1fd0] sm:$0xff]
    %v1579 = vld [vmem:[#allocation8 + $0x1fd8] sm:$0xff]
    %v1580 = vld [vmem:[#allocation8 + $0x1fe0] sm:$0xff]
    %v1581 = vld [vmem:[#allocation8 + $0x1fe8] sm:$0xff]
    %v1582 = vld [vmem:[#allocation8 + $0x1ff0] sm:$0xff]
    %v1583 = vld [vmem:[#allocation8 + $0x1ff8] sm:$0xff]
    %1584 = vmatprep.subr.mxu0 %v591
    %1585 = vmatpush1.msra.mxu0 %v590
    %1586 = vmatprep.subr.mxu0 %v589
    %1587 = vmatpush1.msra.mxu0 %v588
    %1588 = vmatprep.subr.mxu0 %v587
    %1589 = vmatpush1.msra.mxu0 %v586
    %1590 = vmatprep.subr.mxu0 %v585
    %1591 = vmatpush1.msra.mxu0 %v584
    %1592 = vmatprep.subr.mxu0 %v583
    %1593 = vmatpush1.msra.mxu0 %v582
    %1594 = vmatprep.subr.mxu0 %v581
    %1595 = vmatpush1.msra.mxu0 %v580
    %1596 = vmatprep.subr.mxu0 %v579
    %1597 = vmatpush1.msra.mxu0 %v578
    %1598 = vmatprep.subr.mxu0 %v577
    %1599 = vmatpush1.msra.mxu0 %v576
    %1600 = vmatprep.subr.mxu0 %v575
    %1601 = vmatpush1.msra.mxu0 %v574
    %1602 = vmatprep.subr.mxu0 %v573
    %1603 = vmatpush1.msra.mxu0 %v572
    %1604 = vmatprep.subr.mxu0 %v571
    %1605 = vmatpush1.msra.mxu0 %v570
    %1606 = vmatprep.subr.mxu0 %v569
    %1607 = vmatpush1.msra.mxu0 %v568
    %1608 = vmatprep.subr.mxu0 %v567
    %1609 = vmatpush1.msra.mxu0 %v566
    %1610 = vmatprep.subr.mxu0 %v565
    %1611 = vmatpush1.msra.mxu0 %v564
    %1612 = vmatprep.subr.mxu0 %v563
    %1613 = vmatpush1.msra.mxu0 %v562
    %1614 = vmatprep.subr.mxu0 %v561
    %1615 = vmatpush1.msra.mxu0 %v560
    %1616 = vmatprep.subr.mxu0 %v623
    %1617 = vmatpush2.msra.mxu0 %v622
    %1618 = vmatprep.subr.mxu0 %v621
    %1619 = vmatpush2.msra.mxu0 %v620
    %1620 = vmatprep.subr.mxu0 %v619
    %1621 = vmatpush2.msra.mxu0 %v618
    %1622 = vmatprep.subr.mxu0 %v617
    %1623 = vmatpush2.msra.mxu0 %v616
    %1624 = vmatprep.subr.mxu0 %v615
    %1625 = vmatpush2.msra.mxu0 %v614
    %1626 = vmatprep.subr.mxu0 %v613
    %1627 = vmatpush2.msra.mxu0 %v612
    %1628 = vmatprep.subr.mxu0 %v611
    %1629 = vmatpush2.msra.mxu0 %v610
    %1630 = vmatprep.subr.mxu0 %v609
    %1631 = vmatpush2.msra.mxu0 %v608
    %1632 = vmatprep.subr.mxu0 %v607
    %1633 = vmatpush2.msra.mxu0 %v606
    %1634 = vmatprep.subr.mxu0 %v605
    %1635 = vmatpush2.msra.mxu0 %v604
    %1636 = vmatprep.subr.mxu0 %v603
    %1637 = vmatpush2.msra.mxu0 %v602
    %1638 = vmatprep.subr.mxu0 %v601
    %1639 = vmatpush2.msra.mxu0 %v600
    %1640 = vmatprep.subr.mxu0 %v599
    %1641 = vmatpush2.msra.mxu0 %v598
    %1642 = vmatprep.subr.mxu0 %v597
    %1643 = vmatpush2.msra.mxu0 %v596
    %1644 = vmatprep.subr.mxu0 %v595
    %1645 = vmatpush2.msra.mxu0 %v594
    %1646 = vmatprep.subr.mxu0 %v593
    %1647 = vmatpush2.msra.mxu0 %v592
    %1648 = vmatprep.mubr.f32.mxu0 %v464
    %1649 = vmatmul.mubr.f32.gmra.mxu0 %v328
    %v1650 = vpop.f32.mrf.mxu0
    %v1651 = vadd.f32 0.0, %v1650
    %v1652 = vpop.f32.mrf.mxu0
    %v1653 = vadd.f32 0.0, %v1652
    %1654 = vdwg.mxu0
    %1655 = vmatprep.subr.mxu0 %v655
    %1656 = vmatpush1.msra.mxu0 %v654
    %1657 = vmatprep.subr.mxu0 %v653
    %1658 = vmatpush1.msra.mxu0 %v652
    %1659 = vmatprep.subr.mxu0 %v651
    %1660 = vmatpush1.msra.mxu0 %v650
    %1661 = vmatprep.subr.mxu0 %v649
    %1662 = vmatpush1.msra.mxu0 %v648
    %1663 = vmatprep.subr.mxu0 %v647
    %1664 = vmatpush1.msra.mxu0 %v646
    %1665 = vmatprep.subr.mxu0 %v645
    %1666 = vmatpush1.msra.mxu0 %v644
    %1667 = vmatprep.subr.mxu0 %v643
    %1668 = vmatpush1.msra.mxu0 %v642
    %1669 = vmatprep.subr.mxu0 %v641
    %1670 = vmatpush1.msra.mxu0 %v640
    %1671 = vmatprep.subr.mxu0 %v639
    %1672 = vmatpush1.msra.mxu0 %v638
    %1673 = vmatprep.subr.mxu0 %v637
    %1674 = vmatpush1.msra.mxu0 %v636
    %1675 = vmatprep.subr.mxu0 %v635
    %1676 = vmatpush1.msra.mxu0 %v634
    %1677 = vmatprep.subr.mxu0 %v633
    %1678 = vmatpush1.msra.mxu0 %v632
    %1679 = vmatprep.subr.mxu0 %v631
    %1680 = vmatpush1.msra.mxu0 %v630
    %1681 = vmatprep.subr.mxu0 %v629
    %1682 = vmatpush1.msra.mxu0 %v628
    %1683 = vmatprep.subr.mxu0 %v627
    %1684 = vmatpush1.msra.mxu0 %v626
    %1685 = vmatprep.subr.mxu0 %v625
    %1686 = vmatpush1.msra.mxu0 %v624
    %1687 = vmatprep.subr.mxu0 %v687
    %1688 = vmatpush2.msra.mxu0 %v686
    %1689 = vmatprep.subr.mxu0 %v685
    %1690 = vmatpush2.msra.mxu0 %v684
    %1691 = vmatprep.subr.mxu0 %v683
    %1692 = vmatpush2.msra.mxu0 %v682
    %1693 = vmatprep.subr.mxu0 %v681
    %1694 = vmatpush2.msra.mxu0 %v680
    %1695 = vmatprep.subr.mxu0 %v679
    %1696 = vmatpush2.msra.mxu0 %v678
    %1697 = vmatprep.subr.mxu0 %v677
    %1698 = vmatpush2.msra.mxu0 %v676
    %1699 = vmatprep.subr.mxu0 %v675
    %1700 = vmatpush2.msra.mxu0 %v674
    %1701 = vmatprep.subr.mxu0 %v673
    %1702 = vmatpush2.msra.mxu0 %v672
    %1703 = vmatprep.subr.mxu0 %v671
    %1704 = vmatpush2.msra.mxu0 %v670
    %1705 = vmatprep.subr.mxu0 %v669
    %1706 = vmatpush2.msra.mxu0 %v668
    %1707 = vmatprep.subr.mxu0 %v667
    %1708 = vmatpush2.msra.mxu0 %v666
    %1709 = vmatprep.subr.mxu0 %v665
    %1710 = vmatpush2.msra.mxu0 %v664
    %1711 = vmatprep.subr.mxu0 %v663
    %1712 = vmatpush2.msra.mxu0 %v662
    %1713 = vmatprep.subr.mxu0 %v661
    %1714 = vmatpush2.msra.mxu0 %v660
    %1715 = vmatprep.subr.mxu0 %v659
    %1716 = vmatpush2.msra.mxu0 %v658
    %1717 = vmatprep.subr.mxu0 %v657
    %1718 = vmatpush2.msra.mxu0 %v656
    %1719 = vmatprep.mubr.f32.mxu0 %v488
    %1720 = vmatmul.mubr.f32.gmra.mxu0 %v352
    %v1721 = vpop.f32.mrf.mxu0
    %v1722 = vadd.f32 0.0, %v1721
    %v1723 = vpop.f32.mrf.mxu0
    %v1724 = vadd.f32 0.0, %v1723
    %1725 = vdwg.mxu0
    %1726 = vmatprep.subr.mxu0 %v719
    %1727 = vmatpush1.msra.mxu0 %v718
    %1728 = vmatprep.subr.mxu0 %v717
    %1729 = vmatpush1.msra.mxu0 %v716
    %1730 = vmatprep.subr.mxu0 %v715
    %1731 = vmatpush1.msra.mxu0 %v714
    %1732 = vmatprep.subr.mxu0 %v713
    %1733 = vmatpush1.msra.mxu0 %v712
    %1734 = vmatprep.subr.mxu0 %v711
    %1735 = vmatpush1.msra.mxu0 %v710
    %1736 = vmatprep.subr.mxu0 %v709
    %1737 = vmatpush1.msra.mxu0 %v708
    %1738 = vmatprep.subr.mxu0 %v707
    %1739 = vmatpush1.msra.mxu0 %v706
    %1740 = vmatprep.subr.mxu0 %v705
    %1741 = vmatpush1.msra.mxu0 %v704
    %1742 = vmatprep.subr.mxu0 %v703
    %1743 = vmatpush1.msra.mxu0 %v702
    %1744 = vmatprep.subr.mxu0 %v701
    %1745 = vmatpush1.msra.mxu0 %v700
    %1746 = vmatprep.subr.mxu0 %v699
    %1747 = vmatpush1.msra.mxu0 %v698
    %1748 = vmatprep.subr.mxu0 %v697
    %1749 = vmatpush1.msra.mxu0 %v696
    %1750 = vmatprep.subr.mxu0 %v695
    %1751 = vmatpush1.msra.mxu0 %v694
    %1752 = vmatprep.subr.mxu0 %v693
    %1753 = vmatpush1.msra.mxu0 %v692
    %1754 = vmatprep.subr.mxu0 %v691
    %1755 = vmatpush1.msra.mxu0 %v690
    %1756 = vmatprep.subr.mxu0 %v689
    %1757 = vmatpush1.msra.mxu0 %v688
    %1758 = vmatprep.subr.mxu0 %v751
    %1759 = vmatpush2.msra.mxu0 %v750
    %1760 = vmatprep.subr.mxu0 %v749
    %1761 = vmatpush2.msra.mxu0 %v748
    %1762 = vmatprep.subr.mxu0 %v747
    %1763 = vmatpush2.msra.mxu0 %v746
    %1764 = vmatprep.subr.mxu0 %v745
    %1765 = vmatpush2.msra.mxu0 %v744
    %1766 = vmatprep.subr.mxu0 %v743
    %1767 = vmatpush2.msra.mxu0 %v742
    %1768 = vmatprep.subr.mxu0 %v741
    %1769 = vmatpush2.msra.mxu0 %v740
    %1770 = vmatprep.subr.mxu0 %v739
    %1771 = vmatpush2.msra.mxu0 %v738
    %1772 = vmatprep.subr.mxu0 %v737
    %1773 = vmatpush2.msra.mxu0 %v736
    %1774 = vmatprep.subr.mxu0 %v735
    %1775 = vmatpush2.msra.mxu0 %v734
    %1776 = vmatprep.subr.mxu0 %v733
    %1777 = vmatpush2.msra.mxu0 %v732
    %1778 = vmatprep.subr.mxu0 %v731
    %1779 = vmatpush2.msra.mxu0 %v730
    %1780 = vmatprep.subr.mxu0 %v729
    %1781 = vmatpush2.msra.mxu0 %v728
    %1782 = vmatprep.subr.mxu0 %v727
    %1783 = vmatpush2.msra.mxu0 %v726
    %1784 = vmatprep.subr.mxu0 %v725
    %1785 = vmatpush2.msra.mxu0 %v724
    %1786 = vmatprep.subr.mxu0 %v723
    %1787 = vmatpush2.msra.mxu0 %v722
    %1788 = vmatprep.subr.mxu0 %v721
    %1789 = vmatpush2.msra.mxu0 %v720
    %1790 = vmatprep.mubr.f32.mxu0 %v471
    %1791 = vmatmul.mubr.f32.gmra.mxu0 %v335
    %v1792 = vpop.f32.mrf.mxu0
    %v1793 = vadd.f32 0.0, %v1792
    %v1794 = vpop.f32.mrf.mxu0
    %v1795 = vadd.f32 0.0, %v1794
    %1796 = vdwg.mxu0
    %1797 = vmatprep.subr.mxu0 %v783
    %1798 = vmatpush1.msra.mxu0 %v782
    %1799 = vmatprep.subr.mxu0 %v781
    %1800 = vmatpush1.msra.mxu0 %v780
    %1801 = vmatprep.subr.mxu0 %v779
    %1802 = vmatpush1.msra.mxu0 %v778
    %1803 = vmatprep.subr.mxu0 %v777
    %1804 = vmatpush1.msra.mxu0 %v776
    %1805 = vmatprep.subr.mxu0 %v775
    %1806 = vmatpush1.msra.mxu0 %v774
    %1807 = vmatprep.subr.mxu0 %v773
    %1808 = vmatpush1.msra.mxu0 %v772
    %1809 = vmatprep.subr.mxu0 %v771
    %1810 = vmatpush1.msra.mxu0 %v770
    %1811 = vmatprep.subr.mxu0 %v769
    %1812 = vmatpush1.msra.mxu0 %v768
    %1813 = vmatprep.subr.mxu0 %v767
    %1814 = vmatpush1.msra.mxu0 %v766
    %1815 = vmatprep.subr.mxu0 %v765
    %1816 = vmatpush1.msra.mxu0 %v764
    %1817 = vmatprep.subr.mxu0 %v763
    %1818 = vmatpush1.msra.mxu0 %v762
    %1819 = vmatprep.subr.mxu0 %v761
    %1820 = vmatpush1.msra.mxu0 %v760
    %1821 = vmatprep.subr.mxu0 %v759
    %1822 = vmatpush1.msra.mxu0 %v758
    %1823 = vmatprep.subr.mxu0 %v757
    %1824 = vmatpush1.msra.mxu0 %v756
    %1825 = vmatprep.subr.mxu0 %v755
    %1826 = vmatpush1.msra.mxu0 %v754
    %1827 = vmatprep.subr.mxu0 %v753
    %1828 = vmatpush1.msra.mxu0 %v752
    %1829 = vmatprep.subr.mxu0 %v815
    %1830 = vmatpush2.msra.mxu0 %v814
    %1831 = vmatprep.subr.mxu0 %v813
    %1832 = vmatpush2.msra.mxu0 %v812
    %1833 = vmatprep.subr.mxu0 %v811
    %1834 = vmatpush2.msra.mxu0 %v810
    %1835 = vmatprep.subr.mxu0 %v809
    %1836 = vmatpush2.msra.mxu0 %v808
    %1837 = vmatprep.subr.mxu0 %v807
    %1838 = vmatpush2.msra.mxu0 %v806
    %1839 = vmatprep.subr.mxu0 %v805
    %1840 = vmatpush2.msra.mxu0 %v804
    %1841 = vmatprep.subr.mxu0 %v803
    %1842 = vmatpush2.msra.mxu0 %v802
    %1843 = vmatprep.subr.mxu0 %v801
    %1844 = vmatpush2.msra.mxu0 %v800
    %1845 = vmatprep.subr.mxu0 %v799
    %1846 = vmatpush2.msra.mxu0 %v798
    %1847 = vmatprep.subr.mxu0 %v797
    %1848 = vmatpush2.msra.mxu0 %v796
    %1849 = vmatprep.subr.mxu0 %v795
    %1850 = vmatpush2.msra.mxu0 %v794
    %1851 = vmatprep.subr.mxu0 %v793
    %1852 = vmatpush2.msra.mxu0 %v792
    %1853 = vmatprep.subr.mxu0 %v791
    %1854 = vmatpush2.msra.mxu0 %v790
    %1855 = vmatprep.subr.mxu0 %v789
    %1856 = vmatpush2.msra.mxu0 %v788
    %1857 = vmatprep.subr.mxu0 %v787
    %1858 = vmatpush2.msra.mxu0 %v786
    %1859 = vmatprep.subr.mxu0 %v785
    %1860 = vmatpush2.msra.mxu0 %v784
    %1861 = vmatprep.mubr.f32.mxu0 %v489
    %1862 = vmatmul.mubr.f32.gmra.mxu0 %v353
    %v1863 = vpop.f32.mrf.mxu0
    %v1864 = vadd.f32 0.0, %v1863
    %v1865 = vpop.f32.mrf.mxu0
    %v1866 = vadd.f32 0.0, %v1865
    %1867 = vdwg.mxu0
    %1868 = vmatprep.subr.mxu0 %v847
    %1869 = vmatpush1.msra.mxu0 %v846
    %1870 = vmatprep.subr.mxu0 %v845
    %1871 = vmatpush1.msra.mxu0 %v844
    %1872 = vmatprep.subr.mxu0 %v843
    %1873 = vmatpush1.msra.mxu0 %v842
    %1874 = vmatprep.subr.mxu0 %v841
    %1875 = vmatpush1.msra.mxu0 %v840
    %1876 = vmatprep.subr.mxu0 %v839
    %1877 = vmatpush1.msra.mxu0 %v838
    %1878 = vmatprep.subr.mxu0 %v837
    %1879 = vmatpush1.msra.mxu0 %v836
    %1880 = vmatprep.subr.mxu0 %v835
    %1881 = vmatpush1.msra.mxu0 %v834
    %1882 = vmatprep.subr.mxu0 %v833
    %1883 = vmatpush1.msra.mxu0 %v832
    %1884 = vmatprep.subr.mxu0 %v831
    %1885 = vmatpush1.msra.mxu0 %v830
    %1886 = vmatprep.subr.mxu0 %v829
    %1887 = vmatpush1.msra.mxu0 %v828
    %1888 = vmatprep.subr.mxu0 %v827
    %1889 = vmatpush1.msra.mxu0 %v826
    %1890 = vmatprep.subr.mxu0 %v825
    %1891 = vmatpush1.msra.mxu0 %v824
    %1892 = vmatprep.subr.mxu0 %v823
    %1893 = vmatpush1.msra.mxu0 %v822
    %1894 = vmatprep.subr.mxu0 %v821
    %1895 = vmatpush1.msra.mxu0 %v820
    %1896 = vmatprep.subr.mxu0 %v819
    %1897 = vmatpush1.msra.mxu0 %v818
    %1898 = vmatprep.subr.mxu0 %v817
    %1899 = vmatpush1.msra.mxu0 %v816
    %1900 = vmatprep.subr.mxu0 %v879
    %1901 = vmatpush2.msra.mxu0 %v878
    %1902 = vmatprep.subr.mxu0 %v877
    %1903 = vmatpush2.msra.mxu0 %v876
    %1904 = vmatprep.subr.mxu0 %v875
    %1905 = vmatpush2.msra.mxu0 %v874
    %1906 = vmatprep.subr.mxu0 %v873
    %1907 = vmatpush2.msra.mxu0 %v872
    %1908 = vmatprep.subr.mxu0 %v871
    %1909 = vmatpush2.msra.mxu0 %v870
    %1910 = vmatprep.subr.mxu0 %v869
    %1911 = vmatpush2.msra.mxu0 %v868
    %1912 = vmatprep.subr.mxu0 %v867
    %1913 = vmatpush2.msra.mxu0 %v866
    %1914 = vmatprep.subr.mxu0 %v865
    %1915 = vmatpush2.msra.mxu0 %v864
    %1916 = vmatprep.subr.mxu0 %v863
    %1917 = vmatpush2.msra.mxu0 %v862
    %1918 = vmatprep.subr.mxu0 %v861
    %1919 = vmatpush2.msra.mxu0 %v860
    %1920 = vmatprep.subr.mxu0 %v859
    %1921 = vmatpush2.msra.mxu0 %v858
    %1922 = vmatprep.subr.mxu0 %v857
    %1923 = vmatpush2.msra.mxu0 %v856
    %1924 = vmatprep.subr.mxu0 %v855
    %1925 = vmatpush2.msra.mxu0 %v854
    %1926 = vmatprep.subr.mxu0 %v853
    %1927 = vmatpush2.msra.mxu0 %v852
    %1928 = vmatprep.subr.mxu0 %v851
    %1929 = vmatpush2.msra.mxu0 %v850
    %1930 = vmatprep.subr.mxu0 %v849
    %1931 = vmatpush2.msra.mxu0 %v848
    %1932 = vmatprep.mubr.f32.mxu0 %v480
    %1933 = vmatmul.mubr.f32.gmra.mxu0 %v344
    %v1934 = vpop.f32.mrf.mxu0
    %v1935 = vadd.f32 0.0, %v1934
    %v1936 = vpop.f32.mrf.mxu0
    %v1937 = vadd.f32 0.0, %v1936
    %1938 = vdwg.mxu0
    %1939 = vmatprep.subr.mxu0 %v911
    %1940 = vmatpush1.msra.mxu0 %v910
    %1941 = vmatprep.subr.mxu0 %v909
    %1942 = vmatpush1.msra.mxu0 %v908
    %1943 = vmatprep.subr.mxu0 %v907
    %1944 = vmatpush1.msra.mxu0 %v906
    %1945 = vmatprep.subr.mxu0 %v905
    %1946 = vmatpush1.msra.mxu0 %v904
    %1947 = vmatprep.subr.mxu0 %v903
    %1948 = vmatpush1.msra.mxu0 %v902
    %1949 = vmatprep.subr.mxu0 %v901
    %1950 = vmatpush1.msra.mxu0 %v900
    %1951 = vmatprep.subr.mxu0 %v899
    %1952 = vmatpush1.msra.mxu0 %v898
    %1953 = vmatprep.subr.mxu0 %v897
    %1954 = vmatpush1.msra.mxu0 %v896
    %1955 = vmatprep.subr.mxu0 %v895
    %1956 = vmatpush1.msra.mxu0 %v894
    %1957 = vmatprep.subr.mxu0 %v893
    %1958 = vmatpush1.msra.mxu0 %v892
    %1959 = vmatprep.subr.mxu0 %v891
    %1960 = vmatpush1.msra.mxu0 %v890
    %1961 = vmatprep.subr.mxu0 %v889
    %1962 = vmatpush1.msra.mxu0 %v888
    %1963 = vmatprep.subr.mxu0 %v887
    %1964 = vmatpush1.msra.mxu0 %v886
    %1965 = vmatprep.subr.mxu0 %v885
    %1966 = vmatpush1.msra.mxu0 %v884
    %1967 = vmatprep.subr.mxu0 %v883
    %1968 = vmatpush1.msra.mxu0 %v882
    %1969 = vmatprep.subr.mxu0 %v881
    %1970 = vmatpush1.msra.mxu0 %v880
    %1971 = vmatprep.subr.mxu0 %v943
    %1972 = vmatpush2.msra.mxu0 %v942
    %1973 = vmatprep.subr.mxu0 %v941
    %1974 = vmatpush2.msra.mxu0 %v940
    %1975 = vmatprep.subr.mxu0 %v939
    %1976 = vmatpush2.msra.mxu0 %v938
    %1977 = vmatprep.subr.mxu0 %v937
    %1978 = vmatpush2.msra.mxu0 %v936
    %1979 = vmatprep.subr.mxu0 %v935
    %1980 = vmatpush2.msra.mxu0 %v934
    %1981 = vmatprep.subr.mxu0 %v933
    %1982 = vmatpush2.msra.mxu0 %v932
    %1983 = vmatprep.subr.mxu0 %v931
    %1984 = vmatpush2.msra.mxu0 %v930
    %1985 = vmatprep.subr.mxu0 %v929
    %1986 = vmatpush2.msra.mxu0 %v928
    %1987 = vmatprep.subr.mxu0 %v927
    %1988 = vmatpush2.msra.mxu0 %v926
    %1989 = vmatprep.subr.mxu0 %v925
    %1990 = vmatpush2.msra.mxu0 %v924
    %1991 = vmatprep.subr.mxu0 %v923
    %1992 = vmatpush2.msra.mxu0 %v922
    %1993 = vmatprep.subr.mxu0 %v921
    %1994 = vmatpush2.msra.mxu0 %v920
    %1995 = vmatprep.subr.mxu0 %v919
    %1996 = vmatpush2.msra.mxu0 %v918
    %1997 = vmatprep.subr.mxu0 %v917
    %1998 = vmatpush2.msra.mxu0 %v916
    %1999 = vmatprep.subr.mxu0 %v915
    %2000 = vmatpush2.msra.mxu0 %v914
    %2001 = vmatprep.subr.mxu0 %v913
    %2002 = vmatpush2.msra.mxu0 %v912
    %2003 = vmatprep.mubr.f32.mxu0 %v490
    %2004 = vmatmul.mubr.f32.gmra.mxu0 %v354
    %v2005 = vpop.f32.mrf.mxu0
    %v2006 = vadd.f32 0.0, %v2005
    %v2007 = vpop.f32.mrf.mxu0
    %v2008 = vadd.f32 0.0, %v2007
    %2009 = vdwg.mxu0
    %2010 = vmatprep.subr.mxu0 %v975
    %2011 = vmatpush1.msra.mxu0 %v974
    %2012 = vmatprep.subr.mxu0 %v973
    %2013 = vmatpush1.msra.mxu0 %v972
    %2014 = vmatprep.subr.mxu0 %v971
    %2015 = vmatpush1.msra.mxu0 %v970
    %2016 = vmatprep.subr.mxu0 %v969
    %2017 = vmatpush1.msra.mxu0 %v968
    %2018 = vmatprep.subr.mxu0 %v967
    %2019 = vmatpush1.msra.mxu0 %v966
    %2020 = vmatprep.subr.mxu0 %v965
    %2021 = vmatpush1.msra.mxu0 %v964
    %2022 = vmatprep.subr.mxu0 %v963
    %2023 = vmatpush1.msra.mxu0 %v962
    %2024 = vmatprep.subr.mxu0 %v961
    %2025 = vmatpush1.msra.mxu0 %v960
    %2026 = vmatprep.subr.mxu0 %v959
    %2027 = vmatpush1.msra.mxu0 %v958
    %2028 = vmatprep.subr.mxu0 %v957
    %2029 = vmatpush1.msra.mxu0 %v956
    %2030 = vmatprep.subr.mxu0 %v955
    %2031 = vmatpush1.msra.mxu0 %v954
    %2032 = vmatprep.subr.mxu0 %v953
    %2033 = vmatpush1.msra.mxu0 %v952
    %2034 = vmatprep.subr.mxu0 %v951
    %2035 = vmatpush1.msra.mxu0 %v950
    %2036 = vmatprep.subr.mxu0 %v949
    %2037 = vmatpush1.msra.mxu0 %v948
    %2038 = vmatprep.subr.mxu0 %v947
    %2039 = vmatpush1.msra.mxu0 %v946
    %2040 = vmatprep.subr.mxu0 %v945
    %2041 = vmatpush1.msra.mxu0 %v944
    %2042 = vmatprep.subr.mxu0 %v1007
    %2043 = vmatpush2.msra.mxu0 %v1006
    %2044 = vmatprep.subr.mxu0 %v1005
    %2045 = vmatpush2.msra.mxu0 %v1004
    %2046 = vmatprep.subr.mxu0 %v1003
    %2047 = vmatpush2.msra.mxu0 %v1002
    %2048 = vmatprep.subr.mxu0 %v1001
    %2049 = vmatpush2.msra.mxu0 %v1000
    %2050 = vmatprep.subr.mxu0 %v999
    %2051 = vmatpush2.msra.mxu0 %v998
    %2052 = vmatprep.subr.mxu0 %v997
    %2053 = vmatpush2.msra.mxu0 %v996
    %2054 = vmatprep.subr.mxu0 %v995
    %2055 = vmatpush2.msra.mxu0 %v994
    %2056 = vmatprep.subr.mxu0 %v993
    %2057 = vmatpush2.msra.mxu0 %v992
    %2058 = vmatprep.subr.mxu0 %v991
    %2059 = vmatpush2.msra.mxu0 %v990
    %2060 = vmatprep.subr.mxu0 %v989
    %2061 = vmatpush2.msra.mxu0 %v988
    %2062 = vmatprep.subr.mxu0 %v987
    %2063 = vmatpush2.msra.mxu0 %v986
    %2064 = vmatprep.subr.mxu0 %v985
    %2065 = vmatpush2.msra.mxu0 %v984
    %2066 = vmatprep.subr.mxu0 %v983
    %2067 = vmatpush2.msra.mxu0 %v982
    %2068 = vmatprep.subr.mxu0 %v981
    %2069 = vmatpush2.msra.mxu0 %v980
    %2070 = vmatprep.subr.mxu0 %v979
    %2071 = vmatpush2.msra.mxu0 %v978
    %2072 = vmatprep.subr.mxu0 %v977
    %2073 = vmatpush2.msra.mxu0 %v976
    %2074 = vmatprep.mubr.f32.mxu0 %v487
    %2075 = vmatmul.mubr.f32.gmra.mxu0 %v351
    %v2076 = vpop.f32.mrf.mxu0
    %v2077 = vadd.f32 0.0, %v2076
    %v2078 = vpop.f32.mrf.mxu0
    %v2079 = vadd.f32 0.0, %v2078
    %2080 = vdwg.mxu0
    %2081 = vmatprep.subr.mxu0 %v1039
    %2082 = vmatpush1.msra.mxu0 %v1038
    %2083 = vmatprep.subr.mxu0 %v1037
    %2084 = vmatpush1.msra.mxu0 %v1036
    %2085 = vmatprep.subr.mxu0 %v1035
    %2086 = vmatpush1.msra.mxu0 %v1034
    %2087 = vmatprep.subr.mxu0 %v1033
    %2088 = vmatpush1.msra.mxu0 %v1032
    %2089 = vmatprep.subr.mxu0 %v1031
    %2090 = vmatpush1.msra.mxu0 %v1030
    %2091 = vmatprep.subr.mxu0 %v1029
    %2092 = vmatpush1.msra.mxu0 %v1028
    %2093 = vmatprep.subr.mxu0 %v1027
    %2094 = vmatpush1.msra.mxu0 %v1026
    %2095 = vmatprep.subr.mxu0 %v1025
    %2096 = vmatpush1.msra.mxu0 %v1024
    %2097 = vmatprep.subr.mxu0 %v1023
    %2098 = vmatpush1.msra.mxu0 %v1022
    %2099 = vmatprep.subr.mxu0 %v1021
    %2100 = vmatpush1.msra.mxu0 %v1020
    %2101 = vmatprep.subr.mxu0 %v1019
    %2102 = vmatpush1.msra.mxu0 %v1018
    %2103 = vmatprep.subr.mxu0 %v1017
    %2104 = vmatpush1.msra.mxu0 %v1016
    %2105 = vmatprep.subr.mxu0 %v1015
    %2106 = vmatpush1.msra.mxu0 %v1014
    %2107 = vmatprep.subr.mxu0 %v1013
    %2108 = vmatpush1.msra.mxu0 %v1012
    %2109 = vmatprep.subr.mxu0 %v1011
    %2110 = vmatpush1.msra.mxu0 %v1010
    %2111 = vmatprep.subr.mxu0 %v1009
    %2112 = vmatpush1.msra.mxu0 %v1008
    %2113 = vmatprep.subr.mxu0 %v1071
    %2114 = vmatpush2.msra.mxu0 %v1070
    %2115 = vmatprep.subr.mxu0 %v1069
    %2116 = vmatpush2.msra.mxu0 %v1068
    %2117 = vmatprep.subr.mxu0 %v1067
    %2118 = vmatpush2.msra.mxu0 %v1066
    %2119 = vmatprep.subr.mxu0 %v1065
    %2120 = vmatpush2.msra.mxu0 %v1064
    %2121 = vmatprep.subr.mxu0 %v1063
    %2122 = vmatpush2.msra.mxu0 %v1062
    %2123 = vmatprep.subr.mxu0 %v1061
    %2124 = vmatpush2.msra.mxu0 %v1060
    %2125 = vmatprep.subr.mxu0 %v1059
    %2126 = vmatpush2.msra.mxu0 %v1058
    %2127 = vmatprep.subr.mxu0 %v1057
    %2128 = vmatpush2.msra.mxu0 %v1056
    %2129 = vmatprep.subr.mxu0 %v1055
    %2130 = vmatpush2.msra.mxu0 %v1054
    %2131 = vmatprep.subr.mxu0 %v1053
    %2132 = vmatpush2.msra.mxu0 %v1052
    %2133 = vmatprep.subr.mxu0 %v1051
    %2134 = vmatpush2.msra.mxu0 %v1050
    %2135 = vmatprep.subr.mxu0 %v1049
    %2136 = vmatpush2.msra.mxu0 %v1048
    %2137 = vmatprep.subr.mxu0 %v1047
    %2138 = vmatpush2.msra.mxu0 %v1046
    %2139 = vmatprep.subr.mxu0 %v1045
    %2140 = vmatpush2.msra.mxu0 %v1044
    %2141 = vmatprep.subr.mxu0 %v1043
    %2142 = vmatpush2.msra.mxu0 %v1042
    %2143 = vmatprep.subr.mxu0 %v1041
    %2144 = vmatpush2.msra.mxu0 %v1040
    %2145 = vmatprep.mubr.f32.mxu0 %v491
    %2146 = vmatmul.mubr.f32.gmra.mxu0 %v355
    %v2147 = vpop.f32.mrf.mxu0
    %v2148 = vadd.f32 0.0, %v2147
    %v2149 = vpop.f32.mrf.mxu0
    %v2150 = vadd.f32 0.0, %v2149
    %2151 = vdwg.mxu0
    %2152 = vmatprep.subr.mxu0 %v1103
    %2153 = vmatpush1.msra.mxu0 %v1102
    %2154 = vmatprep.subr.mxu0 %v1101
    %2155 = vmatpush1.msra.mxu0 %v1100
    %2156 = vmatprep.subr.mxu0 %v1099
    %2157 = vmatpush1.msra.mxu0 %v1098
    %2158 = vmatprep.subr.mxu0 %v1097
    %2159 = vmatpush1.msra.mxu0 %v1096
    %2160 = vmatprep.subr.mxu0 %v1095
    %2161 = vmatpush1.msra.mxu0 %v1094
    %2162 = vmatprep.subr.mxu0 %v1093
    %2163 = vmatpush1.msra.mxu0 %v1092
    %2164 = vmatprep.subr.mxu0 %v1091
    %2165 = vmatpush1.msra.mxu0 %v1090
    %2166 = vmatprep.subr.mxu0 %v1089
    %2167 = vmatpush1.msra.mxu0 %v1088
    %2168 = vmatprep.subr.mxu0 %v1087
    %2169 = vmatpush1.msra.mxu0 %v1086
    %2170 = vmatprep.subr.mxu0 %v1085
    %2171 = vmatpush1.msra.mxu0 %v1084
    %2172 = vmatprep.subr.mxu0 %v1083
    %2173 = vmatpush1.msra.mxu0 %v1082
    %2174 = vmatprep.subr.mxu0 %v1081
    %2175 = vmatpush1.msra.mxu0 %v1080
    %2176 = vmatprep.subr.mxu0 %v1079
    %2177 = vmatpush1.msra.mxu0 %v1078
    %2178 = vmatprep.subr.mxu0 %v1077
    %2179 = vmatpush1.msra.mxu0 %v1076
    %2180 = vmatprep.subr.mxu0 %v1075
    %2181 = vmatpush1.msra.mxu0 %v1074
    %2182 = vmatprep.subr.mxu0 %v1073
    %2183 = vmatpush1.msra.mxu0 %v1072
    %2184 = vmatprep.subr.mxu0 %v1135
    %2185 = vmatpush2.msra.mxu0 %v1134
    %2186 = vmatprep.subr.mxu0 %v1133
    %2187 = vmatpush2.msra.mxu0 %v1132
    %2188 = vmatprep.subr.mxu0 %v1131
    %2189 = vmatpush2.msra.mxu0 %v1130
    %2190 = vmatprep.subr.mxu0 %v1129
    %2191 = vmatpush2.msra.mxu0 %v1128
    %2192 = vmatprep.subr.mxu0 %v1127
    %2193 = vmatpush2.msra.mxu0 %v1126
    %2194 = vmatprep.subr.mxu0 %v1125
    %2195 = vmatpush2.msra.mxu0 %v1124
    %2196 = vmatprep.subr.mxu0 %v1123
    %2197 = vmatpush2.msra.mxu0 %v1122
    %2198 = vmatprep.subr.mxu0 %v1121
    %2199 = vmatpush2.msra.mxu0 %v1120
    %2200 = vmatprep.subr.mxu0 %v1119
    %2201 = vmatpush2.msra.mxu0 %v1118
    %2202 = vmatprep.subr.mxu0 %v1117
    %2203 = vmatpush2.msra.mxu0 %v1116
    %2204 = vmatprep.subr.mxu0 %v1115
    %2205 = vmatpush2.msra.mxu0 %v1114
    %2206 = vmatprep.subr.mxu0 %v1113
    %2207 = vmatpush2.msra.mxu0 %v1112
    %2208 = vmatprep.subr.mxu0 %v1111
    %2209 = vmatpush2.msra.mxu0 %v1110
    %2210 = vmatprep.subr.mxu0 %v1109
    %2211 = vmatpush2.msra.mxu0 %v1108
    %2212 = vmatprep.subr.mxu0 %v1107
    %2213 = vmatpush2.msra.mxu0 %v1106
    %2214 = vmatprep.subr.mxu0 %v1105
    %2215 = vmatpush2.msra.mxu0 %v1104
    %2216 = vmatprep.mubr.f32.mxu0 %v532
    %2217 = vmatmul.mubr.f32.gmra.mxu0 %v396
    %v2218 = vpop.f32.mrf.mxu0
    %v2219 = vadd.f32 0.0, %v2218
    %v2220 = vpop.f32.mrf.mxu0
    %v2221 = vadd.f32 0.0, %v2220
    %2222 = vdwg.mxu0
    %2223 = vmatprep.subr.mxu0 %v1167
    %2224 = vmatpush1.msra.mxu0 %v1166
    %2225 = vmatprep.subr.mxu0 %v1165
    %2226 = vmatpush1.msra.mxu0 %v1164
    %2227 = vmatprep.subr.mxu0 %v1163
    %2228 = vmatpush1.msra.mxu0 %v1162
    %2229 = vmatprep.subr.mxu0 %v1161
    %2230 = vmatpush1.msra.mxu0 %v1160
    %2231 = vmatprep.subr.mxu0 %v1159
    %2232 = vmatpush1.msra.mxu0 %v1158
    %2233 = vmatprep.subr.mxu0 %v1157
    %2234 = vmatpush1.msra.mxu0 %v1156
    %2235 = vmatprep.subr.mxu0 %v1155
    %2236 = vmatpush1.msra.mxu0 %v1154
    %2237 = vmatprep.subr.mxu0 %v1153
    %2238 = vmatpush1.msra.mxu0 %v1152
    %2239 = vmatprep.subr.mxu0 %v1151
    %2240 = vmatpush1.msra.mxu0 %v1150
    %2241 = vmatprep.subr.mxu0 %v1149
    %2242 = vmatpush1.msra.mxu0 %v1148
    %2243 = vmatprep.subr.mxu0 %v1147
    %2244 = vmatpush1.msra.mxu0 %v1146
    %2245 = vmatprep.subr.mxu0 %v1145
    %2246 = vmatpush1.msra.mxu0 %v1144
    %2247 = vmatprep.subr.mxu0 %v1143
    %2248 = vmatpush1.msra.mxu0 %v1142
    %2249 = vmatprep.subr.mxu0 %v1141
    %2250 = vmatpush1.msra.mxu0 %v1140
    %2251 = vmatprep.subr.mxu0 %v1139
    %2252 = vmatpush1.msra.mxu0 %v1138
    %2253 = vmatprep.subr.mxu0 %v1137
    %2254 = vmatpush1.msra.mxu0 %v1136
    %2255 = vmatprep.subr.mxu0 %v1199
    %2256 = vmatpush2.msra.mxu0 %v1198
    %2257 = vmatprep.subr.mxu0 %v1197
    %2258 = vmatpush2.msra.mxu0 %v1196
    %2259 = vmatprep.subr.mxu0 %v1195
    %2260 = vmatpush2.msra.mxu0 %v1194
    %2261 = vmatprep.subr.mxu0 %v1193
    %2262 = vmatpush2.msra.mxu0 %v1192
    %2263 = vmatprep.subr.mxu0 %v1191
    %2264 = vmatpush2.msra.mxu0 %v1190
    %2265 = vmatprep.subr.mxu0 %v1189
    %2266 = vmatpush2.msra.mxu0 %v1188
    %2267 = vmatprep.subr.mxu0 %v1187
    %2268 = vmatpush2.msra.mxu0 %v1186
    %2269 = vmatprep.subr.mxu0 %v1185
    %2270 = vmatpush2.msra.mxu0 %v1184
    %2271 = vmatprep.subr.mxu0 %v1183
    %2272 = vmatpush2.msra.mxu0 %v1182
    %2273 = vmatprep.subr.mxu0 %v1181
    %2274 = vmatpush2.msra.mxu0 %v1180
    %2275 = vmatprep.subr.mxu0 %v1179
    %2276 = vmatpush2.msra.mxu0 %v1178
    %2277 = vmatprep.subr.mxu0 %v1177
    %2278 = vmatpush2.msra.mxu0 %v1176
    %2279 = vmatprep.subr.mxu0 %v1175
    %2280 = vmatpush2.msra.mxu0 %v1174
    %2281 = vmatprep.subr.mxu0 %v1173
    %2282 = vmatpush2.msra.mxu0 %v1172
    %2283 = vmatprep.subr.mxu0 %v1171
    %2284 = vmatpush2.msra.mxu0 %v1170
    %2285 = vmatprep.subr.mxu0 %v1169
    %2286 = vmatpush2.msra.mxu0 %v1168
    %2287 = vmatprep.mubr.f32.mxu0 %v556
    %2288 = vmatmul.mubr.f32.gmra.mxu0 %v420
    %v2289 = vpop.f32.mrf.mxu0
    %v2290 = vadd.f32 0.0, %v2289
    %v2291 = vpop.f32.mrf.mxu0
    %v2292 = vadd.f32 0.0, %v2291
    %2293 = vdwg.mxu0
    %2294 = vmatprep.subr.mxu0 %v1231
    %2295 = vmatpush1.msra.mxu0 %v1230
    %2296 = vmatprep.subr.mxu0 %v1229
    %2297 = vmatpush1.msra.mxu0 %v1228
    %2298 = vmatprep.subr.mxu0 %v1227
    %2299 = vmatpush1.msra.mxu0 %v1226
    %2300 = vmatprep.subr.mxu0 %v1225
    %2301 = vmatpush1.msra.mxu0 %v1224
    %2302 = vmatprep.subr.mxu0 %v1223
    %2303 = vmatpush1.msra.mxu0 %v1222
    %2304 = vmatprep.subr.mxu0 %v1221
    %2305 = vmatpush1.msra.mxu0 %v1220
    %2306 = vmatprep.subr.mxu0 %v1219
    %2307 = vmatpush1.msra.mxu0 %v1218
    %2308 = vmatprep.subr.mxu0 %v1217
    %2309 = vmatpush1.msra.mxu0 %v1216
    %2310 = vmatprep.subr.mxu0 %v1215
    %2311 = vmatpush1.msra.mxu0 %v1214
    %2312 = vmatprep.subr.mxu0 %v1213
    %2313 = vmatpush1.msra.mxu0 %v1212
    %2314 = vmatprep.subr.mxu0 %v1211
    %2315 = vmatpush1.msra.mxu0 %v1210
    %2316 = vmatprep.subr.mxu0 %v1209
    %2317 = vmatpush1.msra.mxu0 %v1208
    %2318 = vmatprep.subr.mxu0 %v1207
    %2319 = vmatpush1.msra.mxu0 %v1206
    %2320 = vmatprep.subr.mxu0 %v1205
    %2321 = vmatpush1.msra.mxu0 %v1204
    %2322 = vmatprep.subr.mxu0 %v1203
    %2323 = vmatpush1.msra.mxu0 %v1202
    %2324 = vmatprep.subr.mxu0 %v1201
    %2325 = vmatpush1.msra.mxu0 %v1200
    %2326 = vmatprep.subr.mxu0 %v1263
    %2327 = vmatpush2.msra.mxu0 %v1262
    %2328 = vmatprep.subr.mxu0 %v1261
    %2329 = vmatpush2.msra.mxu0 %v1260
    %2330 = vmatprep.subr.mxu0 %v1259
    %2331 = vmatpush2.msra.mxu0 %v1258
    %2332 = vmatprep.subr.mxu0 %v1257
    %2333 = vmatpush2.msra.mxu0 %v1256
    %2334 = vmatprep.subr.mxu0 %v1255
    %2335 = vmatpush2.msra.mxu0 %v1254
    %2336 = vmatprep.subr.mxu0 %v1253
    %2337 = vmatpush2.msra.mxu0 %v1252
    %2338 = vmatprep.subr.mxu0 %v1251
    %2339 = vmatpush2.msra.mxu0 %v1250
    %2340 = vmatprep.subr.mxu0 %v1249
    %2341 = vmatpush2.msra.mxu0 %v1248
    %2342 = vmatprep.subr.mxu0 %v1247
    %2343 = vmatpush2.msra.mxu0 %v1246
    %2344 = vmatprep.subr.mxu0 %v1245
    %2345 = vmatpush2.msra.mxu0 %v1244
    %2346 = vmatprep.subr.mxu0 %v1243
    %2347 = vmatpush2.msra.mxu0 %v1242
    %2348 = vmatprep.subr.mxu0 %v1241
    %2349 = vmatpush2.msra.mxu0 %v1240
    %2350 = vmatprep.subr.mxu0 %v1239
    %2351 = vmatpush2.msra.mxu0 %v1238
    %2352 = vmatprep.subr.mxu0 %v1237
    %2353 = vmatpush2.msra.mxu0 %v1236
    %2354 = vmatprep.subr.mxu0 %v1235
    %2355 = vmatpush2.msra.mxu0 %v1234
    %2356 = vmatprep.subr.mxu0 %v1233
    %2357 = vmatpush2.msra.mxu0 %v1232
    %2358 = vmatprep.mubr.f32.mxu0 %v539
    %2359 = vmatmul.mubr.f32.gmra.mxu0 %v403
    %v2360 = vpop.f32.mrf.mxu0
    %v2361 = vadd.f32 0.0, %v2360
    %v2362 = vpop.f32.mrf.mxu0
    %v2363 = vadd.f32 0.0, %v2362
    %2364 = vdwg.mxu0
    %2365 = vmatprep.subr.mxu0 %v1295
    %2366 = vmatpush1.msra.mxu0 %v1294
    %2367 = vmatprep.subr.mxu0 %v1293
    %2368 = vmatpush1.msra.mxu0 %v1292
    %2369 = vmatprep.subr.mxu0 %v1291
    %2370 = vmatpush1.msra.mxu0 %v1290
    %2371 = vmatprep.subr.mxu0 %v1289
    %2372 = vmatpush1.msra.mxu0 %v1288
    %2373 = vmatprep.subr.mxu0 %v1287
    %2374 = vmatpush1.msra.mxu0 %v1286
    %2375 = vmatprep.subr.mxu0 %v1285
    %2376 = vmatpush1.msra.mxu0 %v1284
    %2377 = vmatprep.subr.mxu0 %v1283
    %2378 = vmatpush1.msra.mxu0 %v1282
    %2379 = vmatprep.subr.mxu0 %v1281
    %2380 = vmatpush1.msra.mxu0 %v1280
    %2381 = vmatprep.subr.mxu0 %v1279
    %2382 = vmatpush1.msra.mxu0 %v1278
    %2383 = vmatprep.subr.mxu0 %v1277
    %2384 = vmatpush1.msra.mxu0 %v1276
    %2385 = vmatprep.subr.mxu0 %v1275
    %2386 = vmatpush1.msra.mxu0 %v1274
    %2387 = vmatprep.subr.mxu0 %v1273
    %2388 = vmatpush1.msra.mxu0 %v1272
    %2389 = vmatprep.subr.mxu0 %v1271
    %2390 = vmatpush1.msra.mxu0 %v1270
    %2391 = vmatprep.subr.mxu0 %v1269
    %2392 = vmatpush1.msra.mxu0 %v1268
    %2393 = vmatprep.subr.mxu0 %v1267
    %2394 = vmatpush1.msra.mxu0 %v1266
    %2395 = vmatprep.subr.mxu0 %v1265
    %2396 = vmatpush1.msra.mxu0 %v1264
    %2397 = vmatprep.subr.mxu0 %v1327
    %2398 = vmatpush2.msra.mxu0 %v1326
    %2399 = vmatprep.subr.mxu0 %v1325
    %2400 = vmatpush2.msra.mxu0 %v1324
    %2401 = vmatprep.subr.mxu0 %v1323
    %2402 = vmatpush2.msra.mxu0 %v1322
    %2403 = vmatprep.subr.mxu0 %v1321
    %2404 = vmatpush2.msra.mxu0 %v1320
    %2405 = vmatprep.subr.mxu0 %v1319
    %2406 = vmatpush2.msra.mxu0 %v1318
    %2407 = vmatprep.subr.mxu0 %v1317
    %2408 = vmatpush2.msra.mxu0 %v1316
    %2409 = vmatprep.subr.mxu0 %v1315
    %2410 = vmatpush2.msra.mxu0 %v1314
    %2411 = vmatprep.subr.mxu0 %v1313
    %2412 = vmatpush2.msra.mxu0 %v1312
    %2413 = vmatprep.subr.mxu0 %v1311
    %2414 = vmatpush2.msra.mxu0 %v1310
    %2415 = vmatprep.subr.mxu0 %v1309
    %2416 = vmatpush2.msra.mxu0 %v1308
    %2417 = vmatprep.subr.mxu0 %v1307
    %2418 = vmatpush2.msra.mxu0 %v1306
    %2419 = vmatprep.subr.mxu0 %v1305
    %2420 = vmatpush2.msra.mxu0 %v1304
    %2421 = vmatprep.subr.mxu0 %v1303
    %2422 = vmatpush2.msra.mxu0 %v1302
    %2423 = vmatprep.subr.mxu0 %v1301
    %2424 = vmatpush2.msra.mxu0 %v1300
    %2425 = vmatprep.subr.mxu0 %v1299
    %2426 = vmatpush2.msra.mxu0 %v1298
    %2427 = vmatprep.subr.mxu0 %v1297
    %2428 = vmatpush2.msra.mxu0 %v1296
    %2429 = vmatprep.mubr.f32.mxu0 %v557
    %2430 = vmatmul.mubr.f32.gmra.mxu0 %v421
    %v2431 = vpop.f32.mrf.mxu0
    %v2432 = vadd.f32 0.0, %v2431
    %v2433 = vpop.f32.mrf.mxu0
    %v2434 = vadd.f32 0.0, %v2433
    %2435 = vdwg.mxu0
    %2436 = vmatprep.subr.mxu0 %v1359
    %2437 = vmatpush1.msra.mxu0 %v1358
    %2438 = vmatprep.subr.mxu0 %v1357
    %2439 = vmatpush1.msra.mxu0 %v1356
    %2440 = vmatprep.subr.mxu0 %v1355
    %2441 = vmatpush1.msra.mxu0 %v1354
    %2442 = vmatprep.subr.mxu0 %v1353
    %2443 = vmatpush1.msra.mxu0 %v1352
    %2444 = vmatprep.subr.mxu0 %v1351
    %2445 = vmatpush1.msra.mxu0 %v1350
    %2446 = vmatprep.subr.mxu0 %v1349
    %2447 = vmatpush1.msra.mxu0 %v1348
    %2448 = vmatprep.subr.mxu0 %v1347
    %2449 = vmatpush1.msra.mxu0 %v1346
    %2450 = vmatprep.subr.mxu0 %v1345
    %2451 = vmatpush1.msra.mxu0 %v1344
    %2452 = vmatprep.subr.mxu0 %v1343
    %2453 = vmatpush1.msra.mxu0 %v1342
    %2454 = vmatprep.subr.mxu0 %v1341
    %2455 = vmatpush1.msra.mxu0 %v1340
    %2456 = vmatprep.subr.mxu0 %v1339
    %2457 = vmatpush1.msra.mxu0 %v1338
    %2458 = vmatprep.subr.mxu0 %v1337
    %2459 = vmatpush1.msra.mxu0 %v1336
    %2460 = vmatprep.subr.mxu0 %v1335
    %2461 = vmatpush1.msra.mxu0 %v1334
    %2462 = vmatprep.subr.mxu0 %v1333
    %2463 = vmatpush1.msra.mxu0 %v1332
    %2464 = vmatprep.subr.mxu0 %v1331
    %2465 = vmatpush1.msra.mxu0 %v1330
    %2466 = vmatprep.subr.mxu0 %v1329
    %2467 = vmatpush1.msra.mxu0 %v1328
    %2468 = vmatprep.subr.mxu0 %v1391
    %2469 = vmatpush2.msra.mxu0 %v1390
    %2470 = vmatprep.subr.mxu0 %v1389
    %2471 = vmatpush2.msra.mxu0 %v1388
    %2472 = vmatprep.subr.mxu0 %v1387
    %2473 = vmatpush2.msra.mxu0 %v1386
    %2474 = vmatprep.subr.mxu0 %v1385
    %2475 = vmatpush2.msra.mxu0 %v1384
    %2476 = vmatprep.subr.mxu0 %v1383
    %2477 = vmatpush2.msra.mxu0 %v1382
    %2478 = vmatprep.subr.mxu0 %v1381
    %2479 = vmatpush2.msra.mxu0 %v1380
    %2480 = vmatprep.subr.mxu0 %v1379
    %2481 = vmatpush2.msra.mxu0 %v1378
    %2482 = vmatprep.subr.mxu0 %v1377
    %2483 = vmatpush2.msra.mxu0 %v1376
    %2484 = vmatprep.subr.mxu0 %v1375
    %2485 = vmatpush2.msra.mxu0 %v1374
    %2486 = vmatprep.subr.mxu0 %v1373
    %2487 = vmatpush2.msra.mxu0 %v1372
    %2488 = vmatprep.subr.mxu0 %v1371
    %2489 = vmatpush2.msra.mxu0 %v1370
    %2490 = vmatprep.subr.mxu0 %v1369
    %2491 = vmatpush2.msra.mxu0 %v1368
    %2492 = vmatprep.subr.mxu0 %v1367
    %2493 = vmatpush2.msra.mxu0 %v1366
    %2494 = vmatprep.subr.mxu0 %v1365
    %2495 = vmatpush2.msra.mxu0 %v1364
    %2496 = vmatprep.subr.mxu0 %v1363
    %2497 = vmatpush2.msra.mxu0 %v1362
    %2498 = vmatprep.subr.mxu0 %v1361
    %2499 = vmatpush2.msra.mxu0 %v1360
    %2500 = vmatprep.mubr.f32.mxu0 %v548
    %2501 = vmatmul.mubr.f32.gmra.mxu0 %v412
    %v2502 = vpop.f32.mrf.mxu0
    %v2503 = vadd.f32 0.0, %v2502
    %v2504 = vpop.f32.mrf.mxu0
    %v2505 = vadd.f32 0.0, %v2504
    %2506 = vdwg.mxu0
    %2507 = vmatprep.subr.mxu0 %v1423
    %2508 = vmatpush1.msra.mxu0 %v1422
    %2509 = vmatprep.subr.mxu0 %v1421
    %2510 = vmatpush1.msra.mxu0 %v1420
    %2511 = vmatprep.subr.mxu0 %v1419
    %2512 = vmatpush1.msra.mxu0 %v1418
    %2513 = vmatprep.subr.mxu0 %v1417
    %2514 = vmatpush1.msra.mxu0 %v1416
    %2515 = vmatprep.subr.mxu0 %v1415
    %2516 = vmatpush1.msra.mxu0 %v1414
    %2517 = vmatprep.subr.mxu0 %v1413
    %2518 = vmatpush1.msra.mxu0 %v1412
    %2519 = vmatprep.subr.mxu0 %v1411
    %2520 = vmatpush1.msra.mxu0 %v1410
    %2521 = vmatprep.subr.mxu0 %v1409
    %2522 = vmatpush1.msra.mxu0 %v1408
    %2523 = vmatprep.subr.mxu0 %v1407
    %2524 = vmatpush1.msra.mxu0 %v1406
    %2525 = vmatprep.subr.mxu0 %v1405
    %2526 = vmatpush1.msra.mxu0 %v1404
    %2527 = vmatprep.subr.mxu0 %v1403
    %2528 = vmatpush1.msra.mxu0 %v1402
    %2529 = vmatprep.subr.mxu0 %v1401
    %2530 = vmatpush1.msra.mxu0 %v1400
    %2531 = vmatprep.subr.mxu0 %v1399
    %2532 = vmatpush1.msra.mxu0 %v1398
    %2533 = vmatprep.subr.mxu0 %v1397
    %2534 = vmatpush1.msra.mxu0 %v1396
    %2535 = vmatprep.subr.mxu0 %v1395
    %2536 = vmatpush1.msra.mxu0 %v1394
    %2537 = vmatprep.subr.mxu0 %v1393
    %2538 = vmatpush1.msra.mxu0 %v1392
    %2539 = vmatprep.subr.mxu0 %v1455
    %2540 = vmatpush2.msra.mxu0 %v1454
    %2541 = vmatprep.subr.mxu0 %v1453
    %2542 = vmatpush2.msra.mxu0 %v1452
    %2543 = vmatprep.subr.mxu0 %v1451
    %2544 = vmatpush2.msra.mxu0 %v1450
    %2545 = vmatprep.subr.mxu0 %v1449
    %2546 = vmatpush2.msra.mxu0 %v1448
    %2547 = vmatprep.subr.mxu0 %v1447
    %2548 = vmatpush2.msra.mxu0 %v1446
    %2549 = vmatprep.subr.mxu0 %v1445
    %2550 = vmatpush2.msra.mxu0 %v1444
    %2551 = vmatprep.subr.mxu0 %v1443
    %2552 = vmatpush2.msra.mxu0 %v1442
    %2553 = vmatprep.subr.mxu0 %v1441
    %2554 = vmatpush2.msra.mxu0 %v1440
    %2555 = vmatprep.subr.mxu0 %v1439
    %2556 = vmatpush2.msra.mxu0 %v1438
    %2557 = vmatprep.subr.mxu0 %v1437
    %2558 = vmatpush2.msra.mxu0 %v1436
    %2559 = vmatprep.subr.mxu0 %v1435
    %2560 = vmatpush2.msra.mxu0 %v1434
    %2561 = vmatprep.subr.mxu0 %v1433
    %2562 = vmatpush2.msra.mxu0 %v1432
    %2563 = vmatprep.subr.mxu0 %v1431
    %2564 = vmatpush2.msra.mxu0 %v1430
    %2565 = vmatprep.subr.mxu0 %v1429
    %2566 = vmatpush2.msra.mxu0 %v1428
    %2567 = vmatprep.subr.mxu0 %v1427
    %2568 = vmatpush2.msra.mxu0 %v1426
    %2569 = vmatprep.subr.mxu0 %v1425
    %2570 = vmatpush2.msra.mxu0 %v1424
    %2571 = vmatprep.mubr.f32.mxu0 %v558
    %2572 = vmatmul.mubr.f32.gmra.mxu0 %v422
    %v2573 = vpop.f32.mrf.mxu0
    %v2574 = vadd.f32 0.0, %v2573
    %v2575 = vpop.f32.mrf.mxu0
    %v2576 = vadd.f32 0.0, %v2575
    %2577 = vdwg.mxu0
    %2578 = vmatprep.subr.mxu0 %v1487
    %2579 = vmatpush1.msra.mxu0 %v1486
    %2580 = vmatprep.subr.mxu0 %v1485
    %2581 = vmatpush1.msra.mxu0 %v1484
    %2582 = vmatprep.subr.mxu0 %v1483
    %2583 = vmatpush1.msra.mxu0 %v1482
    %2584 = vmatprep.subr.mxu0 %v1481
    %2585 = vmatpush1.msra.mxu0 %v1480
    %2586 = vmatprep.subr.mxu0 %v1479
    %2587 = vmatpush1.msra.mxu0 %v1478
    %2588 = vmatprep.subr.mxu0 %v1477
    %2589 = vmatpush1.msra.mxu0 %v1476
    %2590 = vmatprep.subr.mxu0 %v1475
    %2591 = vmatpush1.msra.mxu0 %v1474
    %2592 = vmatprep.subr.mxu0 %v1473
    %2593 = vmatpush1.msra.mxu0 %v1472
    %2594 = vmatprep.subr.mxu0 %v1471
    %2595 = vmatpush1.msra.mxu0 %v1470
    %2596 = vmatprep.subr.mxu0 %v1469
    %2597 = vmatpush1.msra.mxu0 %v1468
    %2598 = vmatprep.subr.mxu0 %v1467
    %2599 = vmatpush1.msra.mxu0 %v1466
    %2600 = vmatprep.subr.mxu0 %v1465
    %2601 = vmatpush1.msra.mxu0 %v1464
    %2602 = vmatprep.subr.mxu0 %v1463
    %2603 = vmatpush1.msra.mxu0 %v1462
    %2604 = vmatprep.subr.mxu0 %v1461
    %2605 = vmatpush1.msra.mxu0 %v1460
    %2606 = vmatprep.subr.mxu0 %v1459
    %2607 = vmatpush1.msra.mxu0 %v1458
    %2608 = vmatprep.subr.mxu0 %v1457
    %2609 = vmatpush1.msra.mxu0 %v1456
    %2610 = vmatprep.subr.mxu0 %v1519
    %2611 = vmatpush2.msra.mxu0 %v1518
    %2612 = vmatprep.subr.mxu0 %v1517
    %2613 = vmatpush2.msra.mxu0 %v1516
    %2614 = vmatprep.subr.mxu0 %v1515
    %2615 = vmatpush2.msra.mxu0 %v1514
    %2616 = vmatprep.subr.mxu0 %v1513
    %2617 = vmatpush2.msra.mxu0 %v1512
    %2618 = vmatprep.subr.mxu0 %v1511
    %2619 = vmatpush2.msra.mxu0 %v1510
    %2620 = vmatprep.subr.mxu0 %v1509
    %2621 = vmatpush2.msra.mxu0 %v1508
    %2622 = vmatprep.subr.mxu0 %v1507
    %2623 = vmatpush2.msra.mxu0 %v1506
    %2624 = vmatprep.subr.mxu0 %v1505
    %2625 = vmatpush2.msra.mxu0 %v1504
    %2626 = vmatprep.subr.mxu0 %v1503
    %2627 = vmatpush2.msra.mxu0 %v1502
    %2628 = vmatprep.subr.mxu0 %v1501
    %2629 = vmatpush2.msra.mxu0 %v1500
    %2630 = vmatprep.subr.mxu0 %v1499
    %2631 = vmatpush2.msra.mxu0 %v1498
    %2632 = vmatprep.subr.mxu0 %v1497
    %2633 = vmatpush2.msra.mxu0 %v1496
    %2634 = vmatprep.subr.mxu0 %v1495
    %2635 = vmatpush2.msra.mxu0 %v1494
    %2636 = vmatprep.subr.mxu0 %v1493
    %2637 = vmatpush2.msra.mxu0 %v1492
    %2638 = vmatprep.subr.mxu0 %v1491
    %2639 = vmatpush2.msra.mxu0 %v1490
    %2640 = vmatprep.subr.mxu0 %v1489
    %2641 = vmatpush2.msra.mxu0 %v1488
    %2642 = vmatprep.mubr.f32.mxu0 %v555
    %2643 = vmatmul.mubr.f32.gmra.mxu0 %v419
    %v2644 = vpop.f32.mrf.mxu0
    %v2645 = vadd.f32 0.0, %v2644
    %v2646 = vpop.f32.mrf.mxu0
    %v2647 = vadd.f32 0.0, %v2646
    %2648 = vdwg.mxu0
    %2649 = vmatprep.subr.mxu0 %v1551
    %2650 = vmatpush1.msra.mxu0 %v1550
    %2651 = vmatprep.subr.mxu0 %v1549
    %2652 = vmatpush1.msra.mxu0 %v1548
    %2653 = vmatprep.subr.mxu0 %v1547
    %2654 = vmatpush1.msra.mxu0 %v1546
    %2655 = vmatprep.subr.mxu0 %v1545
    %2656 = vmatpush1.msra.mxu0 %v1544
    %2657 = vmatprep.subr.mxu0 %v1543
    %2658 = vmatpush1.msra.mxu0 %v1542
    %2659 = vmatprep.subr.mxu0 %v1541
    %2660 = vmatpush1.msra.mxu0 %v1540
    %2661 = vmatprep.subr.mxu0 %v1539
    %2662 = vmatpush1.msra.mxu0 %v1538
    %2663 = vmatprep.subr.mxu0 %v1537
    %2664 = vmatpush1.msra.mxu0 %v1536
    %2665 = vmatprep.subr.mxu0 %v1535
    %2666 = vmatpush1.msra.mxu0 %v1534
    %2667 = vmatprep.subr.mxu0 %v1533
    %2668 = vmatpush1.msra.mxu0 %v1532
    %2669 = vmatprep.subr.mxu0 %v1531
    %2670 = vmatpush1.msra.mxu0 %v1530
    %2671 = vmatprep.subr.mxu0 %v1529
    %2672 = vmatpush1.msra.mxu0 %v1528
    %2673 = vmatprep.subr.mxu0 %v1527
    %2674 = vmatpush1.msra.mxu0 %v1526
    %2675 = vmatprep.subr.mxu0 %v1525
    %2676 = vmatpush1.msra.mxu0 %v1524
    %2677 = vmatprep.subr.mxu0 %v1523
    %2678 = vmatpush1.msra.mxu0 %v1522
    %2679 = vmatprep.subr.mxu0 %v1521
    %2680 = vmatpush1.msra.mxu0 %v1520
    %2681 = vmatprep.subr.mxu0 %v1583
    %2682 = vmatpush2.msra.mxu0 %v1582
    %2683 = vmatprep.subr.mxu0 %v1581
    %2684 = vmatpush2.msra.mxu0 %v1580
    %2685 = vmatprep.subr.mxu0 %v1579
    %2686 = vmatpush2.msra.mxu0 %v1578
    %2687 = vmatprep.subr.mxu0 %v1577
    %2688 = vmatpush2.msra.mxu0 %v1576
    %2689 = vmatprep.subr.mxu0 %v1575
    %2690 = vmatpush2.msra.mxu0 %v1574
    %2691 = vmatprep.subr.mxu0 %v1573
    %2692 = vmatpush2.msra.mxu0 %v1572
    %2693 = vmatprep.subr.mxu0 %v1571
    %2694 = vmatpush2.msra.mxu0 %v1570
    %2695 = vmatprep.subr.mxu0 %v1569
    %2696 = vmatpush2.msra.mxu0 %v1568
    %2697 = vmatprep.subr.mxu0 %v1567
    %2698 = vmatpush2.msra.mxu0 %v1566
    %2699 = vmatprep.subr.mxu0 %v1565
    %2700 = vmatpush2.msra.mxu0 %v1564
    %2701 = vmatprep.subr.mxu0 %v1563
    %2702 = vmatpush2.msra.mxu0 %v1562
    %2703 = vmatprep.subr.mxu0 %v1561
    %2704 = vmatpush2.msra.mxu0 %v1560
    %2705 = vmatprep.subr.mxu0 %v1559
    %2706 = vmatpush2.msra.mxu0 %v1558
    %2707 = vmatprep.subr.mxu0 %v1557
    %2708 = vmatpush2.msra.mxu0 %v1556
    %2709 = vmatprep.subr.mxu0 %v1555
    %2710 = vmatpush2.msra.mxu0 %v1554
    %2711 = vmatprep.subr.mxu0 %v1553
    %2712 = vmatpush2.msra.mxu0 %v1552
    %2713 = vmatprep.mubr.f32.mxu0 %v559
    %2714 = vmatmul.mubr.f32.gmra.mxu0 %v423
    %v2715 = vpop.f32.mrf.mxu0
    %v2716 = vadd.f32 0.0, %v2715
    %v2717 = vpop.f32.mrf.mxu0
    %v2718 = vadd.f32 0.0, %v2717
    %2719 = vdwg.mxu0
    %v2720 = vcombine.low %v1651, %v1793
    %v2722 = vunpack.c.l.s4 1983009808
    %v2723 = vunpack.c.0.s8 %v2722
    %v2724 = vlaneseq
    %v2725 = vshrl.u32 %v2724, 7
    %v2726 = vsub.s32 %v2723, %v2725
    %v2727 = vrot.slane %v2720, %v2726
    %v2728 = vcombine.low %v1722, %v1864
    %v2730 = vunpack.c.l.s4 1983009808
    %v2731 = vunpack.c.0.s8 %v2730
    %v2732 = vlaneseq
    %v2733 = vshrl.u32 %v2732, 7
    %v2734 = vsub.s32 %v2731, %v2733
    %v2735 = vrot.slane %v2728, %v2734
    %v2736 = vcombine.low %v1935, %v2077
    %v2738 = vunpack.c.l.s4 1983009808
    %v2739 = vunpack.c.0.s8 %v2738
    %v2740 = vlaneseq
    %v2741 = vshrl.u32 %v2740, 7
    %v2742 = vsub.s32 %v2739, %v2741
    %v2743 = vrot.slane %v2736, %v2742
    %v2744 = vcombine.low %v2006, %v2148
    %v2746 = vunpack.c.l.s4 1983009808
    %v2747 = vunpack.c.0.s8 %v2746
    %v2748 = vlaneseq
    %v2749 = vshrl.u32 %v2748, 7
    %v2750 = vsub.s32 %v2747, %v2749
    %v2751 = vrot.slane %v2744, %v2750
    %v2752 = vcombine.low %v2727, %v2735
    %v2753 = vcombine.high %v2727, %v2735
    %v2755 = vunpack.c.l.s4 1934713408
    %v2756 = vunpack.c.0.s8 %v2755
    %v2757 = vlaneseq
    %v2758 = vshrl.u32 %v2757, 7
    %v2759 = vsub.s32 %v2756, %v2758
    %v2760 = vrot.slane %v2752, %v2759
    %v2762 = vunpack.c.l.s4 1934713408
    %v2763 = vunpack.c.0.s8 %v2762
    %v2764 = vlaneseq
    %v2765 = vshrl.u32 %v2764, 7
    %v2766 = vsub.s32 %v2763, %v2765
    %v2767 = vrot.slane %v2753, %v2766
    %v2768 = vcombine.low %v2743, %v2751
    %v2769 = vcombine.high %v2743, %v2751
    %v2771 = vunpack.c.l.s4 1934713408
    %v2772 = vunpack.c.0.s8 %v2771
    %v2773 = vlaneseq
    %v2774 = vshrl.u32 %v2773, 7
    %v2775 = vsub.s32 %v2772, %v2774
    %v2776 = vrot.slane %v2768, %v2775
    %v2778 = vunpack.c.l.s4 1934713408
    %v2779 = vunpack.c.0.s8 %v2778
    %v2780 = vlaneseq
    %v2781 = vshrl.u32 %v2780, 7
    %v2782 = vsub.s32 %v2779, %v2781
    %v2783 = vrot.slane %v2769, %v2782
    %v2784 = vcombine.low %v2760, %v2776
    %v2785 = vcombine.high %v2760, %v2776
    %v2786 = vcombine.low %v2767, %v2783
    %v2787 = vcombine.high %v2767, %v2783
    %v2788 = vcombine.low %v2219, %v2361
    %v2790 = vunpack.c.l.s4 1983009808
    %v2791 = vunpack.c.0.s8 %v2790
    %v2792 = vlaneseq
    %v2793 = vshrl.u32 %v2792, 7
    %v2794 = vsub.s32 %v2791, %v2793
    %v2795 = vrot.slane %v2788, %v2794
    %v2796 = vcombine.low %v2290, %v2432
    %v2798 = vunpack.c.l.s4 1983009808
    %v2799 = vunpack.c.0.s8 %v2798
    %v2800 = vlaneseq
    %v2801 = vshrl.u32 %v2800, 7
    %v2802 = vsub.s32 %v2799, %v2801
    %v2803 = vrot.slane %v2796, %v2802
    %v2804 = vcombine.low %v2503, %v2645
    %v2806 = vunpack.c.l.s4 1983009808
    %v2807 = vunpack.c.0.s8 %v2806
    %v2808 = vlaneseq
    %v2809 = vshrl.u32 %v2808, 7
    %v2810 = vsub.s32 %v2807, %v2809
    %v2811 = vrot.slane %v2804, %v2810
    %v2812 = vcombine.low %v2574, %v2716
    %v2814 = vunpack.c.l.s4 1983009808
    %v2815 = vunpack.c.0.s8 %v2814
    %v2816 = vlaneseq
    %v2817 = vshrl.u32 %v2816, 7
    %v2818 = vsub.s32 %v2815, %v2817
    %v2819 = vrot.slane %v2812, %v2818
    %v2820 = vcombine.low %v2795, %v2803
    %v2821 = vcombine.high %v2795, %v2803
    %v2823 = vunpack.c.l.s4 1934713408
    %v2824 = vunpack.c.0.s8 %v2823
    %v2825 = vlaneseq
    %v2826 = vshrl.u32 %v2825, 7
    %v2827 = vsub.s32 %v2824, %v2826
    %v2828 = vrot.slane %v2820, %v2827
    %v2830 = vunpack.c.l.s4 1934713408
    %v2831 = vunpack.c.0.s8 %v2830
    %v2832 = vlaneseq
    %v2833 = vshrl.u32 %v2832, 7
    %v2834 = vsub.s32 %v2831, %v2833
    %v2835 = vrot.slane %v2821, %v2834
    %v2836 = vcombine.low %v2811, %v2819
    %v2837 = vcombine.high %v2811, %v2819
    %v2839 = vunpack.c.l.s4 1934713408
    %v2840 = vunpack.c.0.s8 %v2839
    %v2841 = vlaneseq
    %v2842 = vshrl.u32 %v2841, 7
    %v2843 = vsub.s32 %v2840, %v2842
    %v2844 = vrot.slane %v2836, %v2843
    %v2846 = vunpack.c.l.s4 1934713408
    %v2847 = vunpack.c.0.s8 %v2846
    %v2848 = vlaneseq
    %v2849 = vshrl.u32 %v2848, 7
    %v2850 = vsub.s32 %v2847, %v2849
    %v2851 = vrot.slane %v2837, %v2850
    %v2852 = vcombine.low %v2828, %v2844
    %v2853 = vcombine.high %v2828, %v2844
    %v2854 = vcombine.low %v2835, %v2851
    %v2855 = vcombine.high %v2835, %v2851
    %v2856 = vcombine.low %v1653, %v1795
    %v2858 = vunpack.c.l.s4 1983009808
    %v2859 = vunpack.c.0.s8 %v2858
    %v2860 = vlaneseq
    %v2861 = vshrl.u32 %v2860, 7
    %v2862 = vsub.s32 %v2859, %v2861
    %v2863 = vrot.slane %v2856, %v2862
    %v2864 = vcombine.low %v1724, %v1866
    %v2866 = vunpack.c.l.s4 1983009808
    %v2867 = vunpack.c.0.s8 %v2866
    %v2868 = vlaneseq
    %v2869 = vshrl.u32 %v2868, 7
    %v2870 = vsub.s32 %v2867, %v2869
    %v2871 = vrot.slane %v2864, %v2870
    %v2872 = vcombine.low %v1937, %v2079
    %v2874 = vunpack.c.l.s4 1983009808
    %v2875 = vunpack.c.0.s8 %v2874
    %v2876 = vlaneseq
    %v2877 = vshrl.u32 %v2876, 7
    %v2878 = vsub.s32 %v2875, %v2877
    %v2879 = vrot.slane %v2872, %v2878
    %v2880 = vcombine.low %v2008, %v2150
    %v2882 = vunpack.c.l.s4 1983009808
    %v2883 = vunpack.c.0.s8 %v2882
    %v2884 = vlaneseq
    %v2885 = vshrl.u32 %v2884, 7
    %v2886 = vsub.s32 %v2883, %v2885
    %v2887 = vrot.slane %v2880, %v2886
    %v2888 = vcombine.low %v2863, %v2871
    %v2889 = vcombine.high %v2863, %v2871
    %v2891 = vunpack.c.l.s4 1934713408
    %v2892 = vunpack.c.0.s8 %v2891
    %v2893 = vlaneseq
    %v2894 = vshrl.u32 %v2893, 7
    %v2895 = vsub.s32 %v2892, %v2894
    %v2896 = vrot.slane %v2888, %v2895
    %v2898 = vunpack.c.l.s4 1934713408
    %v2899 = vunpack.c.0.s8 %v2898
    %v2900 = vlaneseq
    %v2901 = vshrl.u32 %v2900, 7
    %v2902 = vsub.s32 %v2899, %v2901
    %v2903 = vrot.slane %v2889, %v2902
    %v2904 = vcombine.low %v2879, %v2887
    %v2905 = vcombine.high %v2879, %v2887
    %v2907 = vunpack.c.l.s4 1934713408
    %v2908 = vunpack.c.0.s8 %v2907
    %v2909 = vlaneseq
    %v2910 = vshrl.u32 %v2909, 7
    %v2911 = vsub.s32 %v2908, %v2910
    %v2912 = vrot.slane %v2904, %v2911
    %v2914 = vunpack.c.l.s4 1934713408
    %v2915 = vunpack.c.0.s8 %v2914
    %v2916 = vlaneseq
    %v2917 = vshrl.u32 %v2916, 7
    %v2918 = vsub.s32 %v2915, %v2917
    %v2919 = vrot.slane %v2905, %v2918
    %v2920 = vcombine.low %v2896, %v2912
    %v2921 = vcombine.high %v2896, %v2912
    %v2922 = vcombine.low %v2903, %v2919
    %v2923 = vcombine.high %v2903, %v2919
    %v2924 = vcombine.low %v2221, %v2363
    %v2926 = vunpack.c.l.s4 1983009808
    %v2927 = vunpack.c.0.s8 %v2926
    %v2928 = vlaneseq
    %v2929 = vshrl.u32 %v2928, 7
    %v2930 = vsub.s32 %v2927, %v2929
    %v2931 = vrot.slane %v2924, %v2930
    %v2932 = vcombine.low %v2292, %v2434
    %v2934 = vunpack.c.l.s4 1983009808
    %v2935 = vunpack.c.0.s8 %v2934
    %v2936 = vlaneseq
    %v2937 = vshrl.u32 %v2936, 7
    %v2938 = vsub.s32 %v2935, %v2937
    %v2939 = vrot.slane %v2932, %v2938
    %v2940 = vcombine.low %v2505, %v2647
    %v2942 = vunpack.c.l.s4 1983009808
    %v2943 = vunpack.c.0.s8 %v2942
    %v2944 = vlaneseq
    %v2945 = vshrl.u32 %v2944, 7
    %v2946 = vsub.s32 %v2943, %v2945
    %v2947 = vrot.slane %v2940, %v2946
    %v2948 = vcombine.low %v2576, %v2718
    %v2950 = vunpack.c.l.s4 1983009808
    %v2951 = vunpack.c.0.s8 %v2950
    %v2952 = vlaneseq
    %v2953 = vshrl.u32 %v2952, 7
    %v2954 = vsub.s32 %v2951, %v2953
    %v2955 = vrot.slane %v2948, %v2954
    %v2956 = vcombine.low %v2931, %v2939
    %v2957 = vcombine.high %v2931, %v2939
    %v2959 = vunpack.c.l.s4 1934713408
    %v2960 = vunpack.c.0.s8 %v2959
    %v2961 = vlaneseq
    %v2962 = vshrl.u32 %v2961, 7
    %v2963 = vsub.s32 %v2960, %v2962
    %v2964 = vrot.slane %v2956, %v2963
    %v2966 = vunpack.c.l.s4 1934713408
    %v2967 = vunpack.c.0.s8 %v2966
    %v2968 = vlaneseq
    %v2969 = vshrl.u32 %v2968, 7
    %v2970 = vsub.s32 %v2967, %v2969
    %v2971 = vrot.slane %v2957, %v2970
    %v2972 = vcombine.low %v2947, %v2955
    %v2973 = vcombine.high %v2947, %v2955
    %v2975 = vunpack.c.l.s4 1934713408
    %v2976 = vunpack.c.0.s8 %v2975
    %v2977 = vlaneseq
    %v2978 = vshrl.u32 %v2977, 7
    %v2979 = vsub.s32 %v2976, %v2978
    %v2980 = vrot.slane %v2972, %v2979
    %v2982 = vunpack.c.l.s4 1934713408
    %v2983 = vunpack.c.0.s8 %v2982
    %v2984 = vlaneseq
    %v2985 = vshrl.u32 %v2984, 7
    %v2986 = vsub.s32 %v2983, %v2985
    %v2987 = vrot.slane %v2973, %v2986
    %v2988 = vcombine.low %v2964, %v2980
    %v2989 = vcombine.high %v2964, %v2980
    %v2990 = vcombine.low %v2971, %v2987
    %v2991 = vcombine.high %v2971, %v2987
    %v2993 = vsel %vm97, %v93, 0
    %v2996 = vsel %vm97, %v94, 0
    %v2999 = vsel %vm97, %v95, 0
    %v3002 = vsel %vm97, %v96, 0
    %3004 = vmatprep.subr.mxu0 0.0
    %3005 = vmatpush1.msra.mxu0 0.0
    %3006 = vmatprep.subr.mxu0 0.0
    %3007 = vmatpush1.msra.mxu0 0.0
    %3008 = vmatprep.subr.mxu0 0.0
    %3009 = vmatpush1.msra.mxu0 0.0
    %3010 = vmatprep.subr.mxu0 0.0
    %3011 = vmatpush1.msra.mxu0 0.0
    %3012 = vmatprep.subr.mxu0 0.0
    %3013 = vmatpush1.msra.mxu0 0.0
    %3014 = vmatprep.subr.mxu0 0.0
    %3015 = vmatpush1.msra.mxu0 0.0
    %3016 = vmatprep.subr.mxu0 0.0
    %3017 = vmatpush1.msra.mxu0 0.0
    %3018 = vmatprep.subr.mxu0 0.0
    %3019 = vmatpush1.msra.mxu0 0.0
    %3020 = vmatprep.subr.mxu0 0.0
    %3021 = vmatpush1.msra.mxu0 0.0
    %3022 = vmatprep.subr.mxu0 0.0
    %3023 = vmatpush1.msra.mxu0 0.0
    %3024 = vmatprep.subr.mxu0 0.0
    %3025 = vmatpush1.msra.mxu0 0.0
    %3026 = vmatprep.subr.mxu0 0.0
    %3027 = vmatpush1.msra.mxu0 0.0
    %3028 = vmatprep.subr.mxu0 %v2989
    %3029 = vmatpush1.msra.mxu0 %v2988
    %3030 = vmatprep.subr.mxu0 %v2921
    %3031 = vmatpush1.msra.mxu0 %v2920
    %3032 = vmatprep.subr.mxu0 %v2853
    %3033 = vmatpush1.msra.mxu0 %v2852
    %3034 = vmatprep.subr.mxu0 %v2785
    %3035 = vmatpush1.msra.mxu0 %v2784
    %3036 = vmatprep.subr.mxu0 0.0
    %3037 = vmatpush2.msra.mxu0 0.0
    %3038 = vmatprep.subr.mxu0 0.0
    %3039 = vmatpush2.msra.mxu0 0.0
    %3040 = vmatprep.subr.mxu0 0.0
    %3041 = vmatpush2.msra.mxu0 0.0
    %3042 = vmatprep.subr.mxu0 0.0
    %3043 = vmatpush2.msra.mxu0 0.0
    %3044 = vmatprep.subr.mxu0 0.0
    %3045 = vmatpush2.msra.mxu0 0.0
    %3046 = vmatprep.subr.mxu0 0.0
    %3047 = vmatpush2.msra.mxu0 0.0
    %3048 = vmatprep.subr.mxu0 0.0
    %3049 = vmatpush2.msra.mxu0 0.0
    %3050 = vmatprep.subr.mxu0 0.0
    %3051 = vmatpush2.msra.mxu0 0.0
    %3052 = vmatprep.subr.mxu0 0.0
    %3053 = vmatpush2.msra.mxu0 0.0
    %3054 = vmatprep.subr.mxu0 0.0
    %3055 = vmatpush2.msra.mxu0 0.0
    %3056 = vmatprep.subr.mxu0 0.0
    %3057 = vmatpush2.msra.mxu0 0.0
    %3058 = vmatprep.subr.mxu0 0.0
    %3059 = vmatpush2.msra.mxu0 0.0
    %3060 = vmatprep.subr.mxu0 0.0
    %3061 = vmatpush2.msra.mxu0 0.0
    %3062 = vmatprep.subr.mxu0 0.0
    %3063 = vmatpush2.msra.mxu0 0.0
    %3064 = vmatprep.subr.mxu0 0.0
    %3065 = vmatpush2.msra.mxu0 0.0
    %3066 = vmatprep.subr.mxu0 0.0
    %3067 = vmatpush2.msra.mxu0 0.0
    %3068 = vmatprep.mubr.f32.mxu0 0.0
    %3069 = vmatmul.mubr.f32.gmra.mxu0 %v2993
    %v3070 = vpop.f32.mrf.mxu0
    %v3071 = vadd.f32 0.0, %v3070
    %v3072 = vpop.f32.mrf.mxu0
    %v3073 = vadd.f32 0.0, %v3072
    %3074 = vmatprep.mubr.f32.mxu0 0.0
    %3075 = vmatmul.mubr.f32.gmra.mxu0 %v2996
    %v3076 = vpop.f32.mrf.mxu0
    %v3077 = vadd.f32 0.0, %v3076
    %v3078 = vpop.f32.mrf.mxu0
    %v3079 = vadd.f32 0.0, %v3078
    %3080 = vmatprep.mubr.f32.mxu0 0.0
    %3081 = vmatmul.mubr.f32.gmra.mxu0 %v2999
    %v3082 = vpop.f32.mrf.mxu0
    %v3083 = vadd.f32 0.0, %v3082
    %v3084 = vpop.f32.mrf.mxu0
    %v3085 = vadd.f32 0.0, %v3084
    %3086 = vmatprep.mubr.f32.mxu0 0.0
    %3087 = vmatmul.mubr.f32.gmra.mxu0 %v3002
    %v3088 = vpop.f32.mrf.mxu0
    %v3089 = vadd.f32 0.0, %v3088
    %v3090 = vpop.f32.mrf.mxu0
    %v3091 = vadd.f32 0.0, %v3090
    %3092 = vdwg.mxu0
    %3093 = vmatprep.subr.mxu0 0.0
    %3094 = vmatpush1.msra.mxu0 0.0
    %3095 = vmatprep.subr.mxu0 0.0
    %3096 = vmatpush1.msra.mxu0 0.0
    %3097 = vmatprep.subr.mxu0 0.0
    %3098 = vmatpush1.msra.mxu0 0.0
    %3099 = vmatprep.subr.mxu0 0.0
    %3100 = vmatpush1.msra.mxu0 0.0
    %3101 = vmatprep.subr.mxu0 0.0
    %3102 = vmatpush1.msra.mxu0 0.0
    %3103 = vmatprep.subr.mxu0 0.0
    %3104 = vmatpush1.msra.mxu0 0.0
    %3105 = vmatprep.subr.mxu0 0.0
    %3106 = vmatpush1.msra.mxu0 0.0
    %3107 = vmatprep.subr.mxu0 0.0
    %3108 = vmatpush1.msra.mxu0 0.0
    %3109 = vmatprep.subr.mxu0 0.0
    %3110 = vmatpush1.msra.mxu0 0.0
    %3111 = vmatprep.subr.mxu0 0.0
    %3112 = vmatpush1.msra.mxu0 0.0
    %3113 = vmatprep.subr.mxu0 0.0
    %3114 = vmatpush1.msra.mxu0 0.0
    %3115 = vmatprep.subr.mxu0 0.0
    %3116 = vmatpush1.msra.mxu0 0.0
    %3117 = vmatprep.subr.mxu0 %v2991
    %3118 = vmatpush1.msra.mxu0 %v2990
    %3119 = vmatprep.subr.mxu0 %v2923
    %3120 = vmatpush1.msra.mxu0 %v2922
    %3121 = vmatprep.subr.mxu0 %v2855
    %3122 = vmatpush1.msra.mxu0 %v2854
    %3123 = vmatprep.subr.mxu0 %v2787
    %3124 = vmatpush1.msra.mxu0 %v2786
    %3125 = vmatprep.subr.mxu0 0.0
    %3126 = vmatpush2.msra.mxu0 0.0
    %3127 = vmatprep.subr.mxu0 0.0
    %3128 = vmatpush2.msra.mxu0 0.0
    %3129 = vmatprep.subr.mxu0 0.0
    %3130 = vmatpush2.msra.mxu0 0.0
    %3131 = vmatprep.subr.mxu0 0.0
    %3132 = vmatpush2.msra.mxu0 0.0
    %3133 = vmatprep.subr.mxu0 0.0
    %3134 = vmatpush2.msra.mxu0 0.0
    %3135 = vmatprep.subr.mxu0 0.0
    %3136 = vmatpush2.msra.mxu0 0.0
    %3137 = vmatprep.subr.mxu0 0.0
    %3138 = vmatpush2.msra.mxu0 0.0
    %3139 = vmatprep.subr.mxu0 0.0
    %3140 = vmatpush2.msra.mxu0 0.0
    %3141 = vmatprep.subr.mxu0 0.0
    %3142 = vmatpush2.msra.mxu0 0.0
    %3143 = vmatprep.subr.mxu0 0.0
    %3144 = vmatpush2.msra.mxu0 0.0
    %3145 = vmatprep.subr.mxu0 0.0
    %3146 = vmatpush2.msra.mxu0 0.0
    %3147 = vmatprep.subr.mxu0 0.0
    %3148 = vmatpush2.msra.mxu0 0.0
    %3149 = vmatprep.subr.mxu0 0.0
    %3150 = vmatpush2.msra.mxu0 0.0
    %3151 = vmatprep.subr.mxu0 0.0
    %3152 = vmatpush2.msra.mxu0 0.0
    %3153 = vmatprep.subr.mxu0 0.0
    %3154 = vmatpush2.msra.mxu0 0.0
    %3155 = vmatprep.subr.mxu0 0.0
    %3156 = vmatpush2.msra.mxu0 0.0
    %3157 = vmatprep.mubr.f32.mxu0 0.0
    %3158 = vmatmul.mubr.f32.gmra.mxu0 %v2993
    %v3159 = vpop.f32.mrf.mxu0
    %v3160 = vadd.f32 0.0, %v3159
    %v3161 = vpop.f32.mrf.mxu0
    %v3162 = vadd.f32 0.0, %v3161
    %3163 = vmatprep.mubr.f32.mxu0 0.0
    %3164 = vmatmul.mubr.f32.gmra.mxu0 %v2996
    %v3165 = vpop.f32.mrf.mxu0
    %v3166 = vadd.f32 0.0, %v3165
    %v3167 = vpop.f32.mrf.mxu0
    %v3168 = vadd.f32 0.0, %v3167
    %3169 = vmatprep.mubr.f32.mxu0 0.0
    %3170 = vmatmul.mubr.f32.gmra.mxu0 %v2999
    %v3171 = vpop.f32.mrf.mxu0
    %v3172 = vadd.f32 0.0, %v3171
    %v3173 = vpop.f32.mrf.mxu0
    %v3174 = vadd.f32 0.0, %v3173
    %3175 = vmatprep.mubr.f32.mxu0 0.0
    %3176 = vmatmul.mubr.f32.gmra.mxu0 %v3002
    %v3177 = vpop.f32.mrf.mxu0
    %v3178 = vadd.f32 0.0, %v3177
    %v3179 = vpop.f32.mrf.mxu0
    %v3180 = vadd.f32 0.0, %v3179
    %3181 = vdwg.mxu0
    %3182 = vst [vmem:[#allocation10] sm:$0xff] %v3071
    %3183 = vst [vmem:[#allocation10 + $0x8] sm:$0xff] %v3073
    %3184 = vst [vmem:[#allocation10 + $0x10] sm:$0xff] %v3160
    %3185 = vst [vmem:[#allocation10 + $0x18] sm:$0xff] %v3162
    %3186 = vst [vmem:[#allocation10 + $0x20] sm:$0xff] %v3077
    %3187 = vst [vmem:[#allocation10 + $0x28] sm:$0xff] %v3079
    %3188 = vst [vmem:[#allocation10 + $0x30] sm:$0xff] %v3166
    %3189 = vst [vmem:[#allocation10 + $0x38] sm:$0xff] %v3168
    %3190 = vst [vmem:[#allocation10 + $0x40] sm:$0xff] %v3083
    %3191 = vst [vmem:[#allocation10 + $0x48] sm:$0xff] %v3085
    %3192 = vst [vmem:[#allocation10 + $0x50] sm:$0xff] %v3172
    %3193 = vst [vmem:[#allocation10 + $0x58] sm:$0xff] %v3174
    %3194 = vst [vmem:[#allocation10 + $0x60] sm:$0xff] %v3089
    %3195 = vst [vmem:[#allocation10 + $0x68] sm:$0xff] %v3091
    %3196 = vst [vmem:[#allocation10 + $0x70] sm:$0xff] %v3178
    %3197 = vst [vmem:[#allocation10 + $0x78] sm:$0xff] %v3180
    // Predicated region
    $region34: #{tpu_custom_call.1} parent=1 // pred_check
      _
    $region35: #{tpu_custom_call.1} parent=1 // pred_check_branch
      %3199 = sbr.rel (0) target = $region37
    $region36: #{tpu_custom_call.1} parent=1 // pred_region
      %s3201 = ssub.s32 2048, 2048
      %3202 = vsyncadd [#allocation4], %s3201
      %s3203 = sshll.u32 [#allocation10], 4
      %s3204 = int_to_ptr.vmem [resolvable:$true] %s3203
      %3209 = dma.vmem_to_hbm [thread:$0]  %s3204, 2048, %s4, [#allocation4], 512, 512, 32
    $region37: #{tpu_custom_call.1} parent=1 // pred_fallthru
      _
    // Predicated region
    $region38: #{tpu_custom_call.1} parent=1 // pred_check
      _
    $region39: #{tpu_custom_call.1} parent=1 // pred_check_branch
      %3211 = sbr.rel (0) target = $region41
    $region40: #{tpu_custom_call.1} parent=1 // pred_region
      %3212 = dma.done [#allocation4], 2048
    $region41: #{tpu_custom_call.1} parent=1 // pred_fallthru
      _
    %3213 = vsyncpa [#allocation3], 1
    %3214 = vsyncpa [#allocation6], 1
    %3215 = vsyncpa [#allocation9], 1
    %3216 = vsyncpa [#allocation4], 1

</llo_original>
